<compile_context>
chip_gen: v5e
topology: v5e:2x2
jax: 0.10.0
libtpu: 0.0.40
codegen_flags: <defaults>
</compile_context>

<pallas_src>
import functools

import numpy as np
import jax
import jax.numpy as jnp
from jax.experimental import pallas as pl
from jax.experimental.pallas import tpu as pltpu


def _round_up(a, b):
    return -(-a // b) * b


# ----------------------------------------------------------------------------
# Pallas kernels
# ----------------------------------------------------------------------------
def _matmul_bias_kernel(x_ref, w_ref, b_ref, o_ref, *, relu):
    acc = jnp.dot(x_ref[...], w_ref[...], preferred_element_type=jnp.float32)
    acc = acc + b_ref[...]
    if relu:
        acc = jnp.maximum(acc, 0.0)
    o_ref[...] = acc.astype(o_ref.dtype)


def pallas_matmul_bias(x, w, b, relu=False, out_dtype=jnp.float32, tm=128):
    """(M, K) @ (K, N) + b with optional fused ReLU.

    bf16 inputs / f32 accumulation.  M is rounded up only to the minimal
    8-sublane multiple; N is padded to a lane-dense multiple of 128 (weights
    are pre-padded at init, so this is a no-op on the hot path)."""
    M, K = x.shape
    K2, N = w.shape
    assert K == K2
    Np = _round_up(N, 128)
    if Np != N:
        w = jnp.pad(w, ((0, 0), (0, Np - N)))
        b = jnp.pad(b, ((0, Np - N),))
    Mp = _round_up(M, 8)
    tm_eff = min(tm, Mp)
    Mp = _round_up(Mp, tm_eff)
    xp = x.astype(jnp.bfloat16)
    if Mp != M:
        xp = jnp.pad(xp, ((0, Mp - M), (0, 0)))
    wp = w.astype(jnp.bfloat16)
    bp = b.astype(jnp.float32).reshape(1, Np)
    out_bytes = jnp.dtype(out_dtype).itemsize
    out = pl.pallas_call(
        functools.partial(_matmul_bias_kernel, relu=relu),
        out_shape=jax.ShapeDtypeStruct((Mp, Np), out_dtype),
        grid=(Mp // tm_eff,),
        in_specs=[
            pl.BlockSpec((tm_eff, K), lambda i: (i, 0)),
            pl.BlockSpec((K, Np), lambda i: (0, 0)),
            pl.BlockSpec((1, Np), lambda i: (0, 0)),
        ],
        out_specs=pl.BlockSpec((tm_eff, Np), lambda i: (i, 0)),
        compiler_params=pltpu.CompilerParams(dimension_semantics=("parallel",)),
        cost_estimate=pl.CostEstimate(
            flops=2 * Mp * K * Np, transcendentals=0,
            bytes_accessed=Mp * K * 2 + K * Np * 2 + Np * 4 + Mp * Np * out_bytes),
    )(xp, wp, bp)
    if Mp != M or Np != N:
        out = out[:M, :N]
    return out


def _conv_relu_pool_kernel(x_ref, w_ref, b_ref, o_ref):
    # im2col rows arrive grouped so every 4 consecutive rows are the 4 members
    # of one 2x2 pooling window -> bias + ReLU + max-pool fused in the epilogue.
    acc = jnp.dot(x_ref[...], w_ref[...], preferred_element_type=jnp.float32)
    acc = jnp.maximum(acc + b_ref[...], 0.0)
    tm, n = acc.shape
    o_ref[...] = jnp.max(acc.reshape(tm // 4, 4, n), axis=1).astype(o_ref.dtype)


def _decode_clip_kernel(anc_ref, loc_ref, o_ref, *, img_h, img_w):
    # (4, TL) layout: rows (y1, x1, y2, x2) / (dy, dx, dh, dw); anchors on lanes.
    a = anc_ref[...]
    l = loc_ref[...]
    ah = a[2:3, :] - a[0:1, :]
    aw = a[3:4, :] - a[1:2, :]
    acy = a[0:1, :] + 0.5 * ah
    acx = a[1:2, :] + 0.5 * aw
    cy = l[0:1, :] * ah + acy
    cx = l[1:2, :] * aw + acx
    dmax = float(np.log(1000.0 / 16.0))            # torchvision-style clamp
    h = jnp.exp(jnp.minimum(l[2:3, :], dmax)) * ah
    w = jnp.exp(jnp.minimum(l[3:4, :], dmax)) * aw
    o_ref[0:1, :] = jnp.clip(cy - 0.5 * h, 0.0, img_h)
    o_ref[1:2, :] = jnp.clip(cx - 0.5 * w, 0.0, img_w)
    o_ref[2:3, :] = jnp.clip(cy + 0.5 * h, 0.0, img_h)
    o_ref[3:4, :] = jnp.clip(cx + 0.5 * w, 0.0, img_w)


def pallas_loc2bbox_clip(anchors_4n, locs_n4, img_h, img_w, tl=512):
    """Decode RPN deltas against anchors and clip to the image (loc2bbox)."""
    N = anchors_4n.shape[1]
    Np = _round_up(N, tl)
    anc = anchors_4n.astype(jnp.float32)
    loc = locs_n4.T.astype(jnp.float32)
    if Np != N:
        anc = jnp.pad(anc, ((0, 0), (0, Np - N)))
        loc = jnp.pad(loc, ((0, 0), (0, Np - N)))
    out = pl.pallas_call(
        functools.partial(_decode_clip_kernel, img_h=float(img_h), img_w=float(img_w)),
        out_shape=jax.ShapeDtypeStruct((4, Np), jnp.float32),
        grid=(Np // tl,),
        in_specs=[
            pl.BlockSpec((4, tl), lambda i: (0, i)),
            pl.BlockSpec((4, tl), lambda i: (0, i)),
        ],
        out_specs=pl.BlockSpec((4, tl), lambda i: (0, i)),
        compiler_params=pltpu.CompilerParams(dimension_semantics=("parallel",)),
        cost_estimate=pl.CostEstimate(flops=30 * Np, transcendentals=2 * Np,
                                      bytes_accessed=3 * 4 * Np * 4),
    )(anc, loc)
    return out[:, :N].T


# ----------------------------------------------------------------------------
# Glue (im2col / conv wrappers / anchors / RoI sampling)
# ----------------------------------------------------------------------------
def _im2col(x, kh, kw, pad):
    """x: (B, H, W, C) -> (B, Ho, Wo, kh*kw*C), stride 1."""
    B, H, W, C = x.shape
    xp = jnp.pad(x, ((0, 0), (pad, pad), (pad, pad), (0, 0)))
    Ho = H + 2 * pad - kh + 1
    Wo = W + 2 * pad - kw + 1
    cols = [xp[:, i:i + Ho, j:j + Wo, :] for i in range(kh) for j in range(kw)]
    return jnp.concatenate(cols, axis=-1), Ho, Wo


def conv2d_relu(x, w4, b):
    """3x3 / pad 1 / stride 1 conv + bias + ReLU (NHWC, bf16 MXU matmul)."""
    kh, kw, Cin, Cout = w4.shape
    B = x.shape[0]
    patches, Ho, Wo = _im2col(x.astype(jnp.bfloat16), kh, kw, pad=1)
    out = pallas_matmul_bias(
        patches.reshape(B * Ho * Wo, kh * kw * Cin),
        w4.reshape(kh * kw * Cin, Cout), b,
        relu=True, out_dtype=jnp.bfloat16)
    return out.reshape(B, Ho, Wo, Cout)


def conv2d_relu_pool2x2(x, w4, b, tm=128):
    """3x3 conv + bias + ReLU + 2x2 max-pool fused into one Pallas kernel.

    im2col rows are pre-ordered as (ho, wo, dh, dw) so each group of 4 rows is
    one 2x2 pooling window; the kernel stores the pooled tile directly and the
    full-resolution conv output never touches HBM."""
    kh, kw, Cin, Cout = w4.shape
    B, H, W, _ = x.shape
    assert B == 1
    patches, Ho, Wo = _im2col(x.astype(jnp.bfloat16), kh, kw, pad=1)
    assert Ho % 2 == 0 and Wo % 2 == 0
    K = kh * kw * Cin
    p = patches[0].reshape(Ho // 2, 2, Wo // 2, 2, K)
    p = jnp.transpose(p, (0, 2, 1, 3, 4)).reshape(Ho * Wo, K)
    M = Ho * Wo
    assert M % tm == 0 and tm % 4 == 0
    w2 = w4.reshape(K, Cout).astype(jnp.bfloat16)
    out = pl.pallas_call(
        _conv_relu_pool_kernel,
        out_shape=jax.ShapeDtypeStruct((M // 4, Cout), jnp.bfloat16),
        grid=(M // tm,),
        in_specs=[
            pl.BlockSpec((tm, K), lambda i: (i, 0)),
            pl.BlockSpec((K, Cout), lambda i: (0, 0)),
            pl.BlockSpec((1, Cout), lambda i: (0, 0)),
        ],
        out_specs=pl.BlockSpec((tm // 4, Cout), lambda i: (i, 0)),
        compiler_params=pltpu.CompilerParams(dimension_semantics=("parallel",)),
        cost_estimate=pl.CostEstimate(
            flops=2 * M * K * Cout, transcendentals=0,
            bytes_accessed=M * K * 2 + K * Cout * 2 + Cout * 4 + (M // 4) * Cout * 2),
    )(p, w2, b.astype(jnp.float32).reshape(1, Cout))
    return out.reshape(1, Ho // 2, Wo // 2, Cout)


def generate_anchors(feat_h, feat_w, feat_stride,
                     ratios=(0.5, 1.0, 2.0), scales=(2.0, 4.0, 8.0)):
    base = float(feat_stride)
    ab = []
    for r in ratios:
        for s in scales:
            h = base * s * np.sqrt(r)
            w = base * s * np.sqrt(1.0 / r)
            ab.append([-h / 2.0, -w / 2.0, h / 2.0, w / 2.0])
    ab = np.asarray(ab, dtype=np.float32)                      # (A, 4)
    sy = np.arange(feat_h, dtype=np.float32) * feat_stride
    sx = np.arange(feat_w, dtype=np.float32) * feat_stride
    sy, sx = np.meshgrid(sy, sx, indexing="ij")
    shifts = np.stack([sy.ravel(), sx.ravel(), sy.ravel(), sx.ravel()], axis=1)
    anchors = (shifts[:, None, :] + ab[None, :, :]).reshape(-1, 4)
    return jnp.asarray(anchors.T)                              # (4, H*W*A)


def roi_pool(feature, rois, pool_size, spatial_scale):
    """feature: (H, W, C), rois: (R, 4) in image coords -> (R, P*P*C).

    Output is in (P, P, C) flatten order; the NCHW permutation the torch head
    expects is folded into fc1_w at init so no runtime transpose is needed."""
    # TODO(synk): exact adaptive-max RoIPooling (variable-size bins + max) is
    # replaced by fixed bin-center nearest-neighbor sampling via an XLA gather.
    H, W, C = feature.shape
    y1 = rois[:, 0] * spatial_scale
    x1 = rois[:, 1] * spatial_scale
    y2 = rois[:, 2] * spatial_scale
    x2 = rois[:, 3] * spatial_scale
    bins = (jnp.arange(pool_size, dtype=jnp.float32) + 0.5) / pool_size
    ys = y1[:, None] + bins[None, :] * (y2 - y1)[:, None]       # (R, P)
    xs = x1[:, None] + bins[None, :] * (x2 - x1)[:, None]       # (R, P)
    yi = jnp.clip(jnp.floor(ys), 0, H - 1).astype(jnp.int32)
    xi = jnp.clip(jnp.floor(xs), 0, W - 1).astype(jnp.int32)
    pooled = feature[yi[:, :, None], xi[:, None, :], :]         # (R, P, P, C)
    return pooled.reshape(rois.shape[0], -1)


# ----------------------------------------------------------------------------
# Parameters (deterministic synthetic init; heads pre-fused & N-padded, bf16)
# ----------------------------------------------------------------------------
def init_params(key, n_class=21, n_anchor=9, c_feat=128, pool=7, fc_dim=128):
    ks = jax.random.split(key, 8)

    def w(k, shape, std=0.05):
        return jax.random.normal(k, shape, jnp.float32) * std

    def fuse_heads(ws, bs, n_to=128):
        # Concatenate paired heads along N and zero-pad to a lane-dense multiple
        # of 128 -> one matmul, unmasked full-lane stores; sliced after the call.
        wcat = jnp.concatenate(ws, axis=1)
        bcat = jnp.concatenate(bs, axis=0)
        padn = _round_up(wcat.shape[1], n_to) - wcat.shape[1]
        if padn:
            wcat = jnp.pad(wcat, ((0, 0), (0, padn)))
            bcat = jnp.pad(bcat, ((0, padn),))
        return wcat.astype(jnp.bfloat16), bcat.astype(jnp.float32)

    rpn_head_w, rpn_head_b = fuse_heads(
        [w(ks[2], (c_feat, n_anchor * 4), 0.01), w(ks[3], (c_feat, n_anchor * 2), 0.01)],
        [jnp.zeros((n_anchor * 4,), jnp.float32), jnp.zeros((n_anchor * 2,), jnp.float32)])
    cls_head_w, cls_head_b = fuse_heads(
        [w(ks[6], (fc_dim, n_class * 4), 0.001), w(ks[7], (fc_dim, n_class), 0.01)],
        [jnp.zeros((n_class * 4,), jnp.float32), jnp.zeros((n_class,), jnp.float32)])

    return dict(
        ext_conv_w=w(ks[0], (3, 3, 3, c_feat)).astype(jnp.bfloat16),
        ext_conv_b=jnp.zeros((c_feat,), jnp.float32),
        rpn_conv_w=w(ks[1], (3, 3, c_feat, c_feat)).astype(jnp.bfloat16),
        rpn_conv_b=jnp.zeros((c_feat,), jnp.float32),
        rpn_head_w=rpn_head_w, rpn_head_b=rpn_head_b,
        # fc1_w consumes the RoI-pooled tensor in its natural (P, P, C) flatten
        # order (torch's NCHW flatten permutation is folded into the weight).
        fc1_w=w(ks[4], (pool * pool * c_feat, fc_dim)).astype(jnp.bfloat16),
        fc1_b=jnp.zeros((fc_dim,), jnp.float32),
        fc2_w=w(ks[5], (fc_dim, fc_dim)).astype(jnp.bfloat16),
        fc2_b=jnp.zeros((fc_dim,), jnp.float32),
        cls_head_w=cls_head_w, cls_head_b=cls_head_b,
    )


# ----------------------------------------------------------------------------
# FasterRCNN.forward : x -> (roi_cls_locs, roi_scores, rois, roi_indices)
# ----------------------------------------------------------------------------
def faster_rcnn_forward(params, x_nchw, scale=1.0,
                        n_rois=16, n_class=21, n_anchor=9, pool=7):
    B, C, H, W = x_nchw.shape
    assert B == 1, "canonical Faster R-CNN forward runs with batch size 1"
    x = jnp.transpose(x_nchw, (0, 2, 3, 1)).astype(jnp.bfloat16)   # NCHW -> NHWC

    # ---- extractor (VGG-ish): conv3x3 + ReLU + 2x2 maxpool, fused in-kernel ----
    feature = conv2d_relu_pool2x2(x, params["ext_conv_w"], params["ext_conv_b"])
    _, fh, fw, cf = feature.shape                                  # (1, H/2, W/2, C)
    feat_stride = H // fh

    # ---- RPN: conv3x3 + ReLU, then ONE fused (loc|score) 1x1 head matmul ----
    h = conv2d_relu(feature, params["rpn_conv_w"], params["rpn_conv_b"])
    h_flat = h.reshape(fh * fw, cf)
    rpn_out = pallas_matmul_bias(h_flat, params["rpn_head_w"], params["rpn_head_b"])
    rpn_locs = rpn_out[:, : n_anchor * 4].reshape(-1, 4)           # (H*W*A, 4)
    rpn_scores = rpn_out[:, n_anchor * 4: n_anchor * 6].reshape(-1, 2)

    anchors_4n = generate_anchors(fh, fw, feat_stride)             # (4, H*W*A)
    proposals = pallas_loc2bbox_clip(anchors_4n, rpn_locs, H, W)   # decoded + clipped

    fg_prob = jax.nn.softmax(rpn_scores, axis=-1)[:, 1]
    # TODO(synk): ProposalCreator's NMS / min_size filtering is data-dependent
    # control flow with no clean Pallas equivalent; proposals are selected by
    # top-k foreground score instead.
    _, keep = jax.lax.top_k(fg_prob, n_rois)
    rois = proposals[keep]                                         # (R, 4)
    roi_indices = jnp.zeros((n_rois,), jnp.int32)

    # ---- head: RoIPool(7x7) + fc + fc + ONE fused (cls_loc|score) matmul ----
    pooled = roi_pool(feature[0], rois, pool, 1.0 / feat_stride)   # (R, P*P*C)
    h1 = pallas_matmul_bias(pooled, params["fc1_w"], params["fc1_b"],
                            relu=True, out_dtype=jnp.bfloat16)
    h2 = pallas_matmul_bias(h1, params["fc2_w"], params["fc2_b"],
                            relu=True, out_dtype=jnp.bfloat16)
    head_out = pallas_matmul_bias(h2, params["cls_head_w"], params["cls_head_b"])
    roi_cls_locs = head_out[:, : n_class * 4]                      # (R, C*4)
    roi_scores = head_out[:, n_class * 4: n_class * 5]             # (R, C)
    return roi_cls_locs, roi_scores, rois, roi_indices


if __name__ == "__main__":
    key = jax.random.PRNGKey(0)
    pkey, xkey = jax.random.split(key)
    params = init_params(pkey)
    x = jax.random.normal(xkey, (1, 3, 32, 32), jnp.float32)       # NCHW, like torch
    fwd = jax.jit(faster_rcnn_forward)
    outs = fwd(params, x)
    roi_cls_locs, roi_scores, rois, roi_indices = jax.block_until_ready(outs)
    assert roi_cls_locs.shape == (16, 21 * 4)
    assert roi_scores.shape == (16, 21)
    assert rois.shape == (16, 4)
    assert roi_indices.shape == (16,)
    assert bool(jnp.all(jnp.isfinite(roi_cls_locs))) and bool(jnp.all(jnp.isfinite(roi_scores)))
    print("KERNEL_OK")
</pallas_src>

<mosaic_0001>
module attributes {stable_mosaic.version = 11 : i64} {
  func.func @_conv_relu_pool_kernel(%arg0: i32, %arg1: memref<128x27xbf16, #tpu.memory_space<vmem>>, %arg2: memref<27x128xbf16, #tpu.memory_space<vmem>>, %arg3: memref<1x128xf32, #tpu.memory_space<vmem>>, %arg4: memref<32x128xbf16, #tpu.memory_space<vmem>>) attributes {dimension_semantics = [#tpu.dimension_semantics<parallel>], iteration_bounds = array<i64: 8>, scalar_prefetch = 0 : i64, scratch_operands = 0 : i64, tpu.core_type = #tpu.core_type<tc>, window_params = [{transform_indices = @transform_0, window_bounds = array<i64: 128, 27>}, {pipeline_mode = #tpu.pipeline_mode<synchronous>, transform_indices = @transform_1, window_bounds = array<i64: 27, 128>}, {pipeline_mode = #tpu.pipeline_mode<synchronous>, transform_indices = @transform_2, window_bounds = array<i64: 1, 128>}, {transform_indices = @transform_3, window_bounds = array<i64: 32, 128>}]} {
    %c0 = arith.constant 0 : index
    %c0_0 = arith.constant 0 : index
    %0 = vector.load %arg1[%c0, %c0_0] : memref<128x27xbf16, #tpu.memory_space<vmem>>, vector<128x27xbf16>
    %c0_1 = arith.constant 0 : index
    %c0_2 = arith.constant 0 : index
    %1 = vector.load %arg2[%c0_1, %c0_2] : memref<27x128xbf16, #tpu.memory_space<vmem>>, vector<27x128xbf16>
    %cst = arith.constant dense<0.000000e+00> : vector<128x128xf32>
    %2 = tpu.matmul %0, %1, %cst {dimension_numbers = #tpu.dot_dimension_numbers<[1], [0], [0], [1], [0, 0, 1, 1], [], []>} : vector<128x27xbf16>, vector<27x128xbf16>, vector<128x128xf32> -> vector<128x128xf32>
    %c0_3 = arith.constant 0 : index
    %c0_4 = arith.constant 0 : index
    %3 = vector.load %arg3[%c0_3, %c0_4] : memref<1x128xf32, #tpu.memory_space<vmem>>, vector<1x128xf32>
    %4 = vector.broadcast %3 : vector<1x128xf32> to vector<128x128xf32>
    %5 = arith.addf %2, %4 : vector<128x128xf32>
    %cst_5 = arith.constant 0.000000e+00 : f32
    %6 = vector.broadcast %cst_5 : f32 to vector<128x128xf32>
    %7 = arith.maximumf %5, %6 : vector<128x128xf32>
    %8 = vector.shape_cast %7 : vector<128x128xf32> to vector<32x4x128xf32>
    %cst_6 = arith.constant dense<0xFF800000> : vector<32x128xf32>
    %9 = vector.multi_reduction <maximumf>, %8, %cst_6 [1] : vector<32x4x128xf32> to vector<32x128xf32>
    %10 = arith.truncf %9 : vector<32x128xf32> to vector<32x128xbf16>
    %c0_7 = arith.constant 0 : index
    %c0_8 = arith.constant 0 : index
    %11 = vector.load %arg4[%c0_7, %c0_8] : memref<32x128xbf16, #tpu.memory_space<vmem>>, vector<32x128xbf16>
    tpu.vector_store %arg4[%c0_7, %c0_8], %10 {strides = array<i32>} : memref<32x128xbf16, #tpu.memory_space<vmem>>, vector<32x128xbf16>,
    return
  }
  func.func @transform_0(%arg0: i32) -> (i32, i32) {
    %c0_i32 = arith.constant 0 : i32
    %c0_i32_0 = arith.constant 0 : i32
    return %arg0, %c0_i32 : i32, i32
  }
  func.func @transform_1(%arg0: i32) -> (i32, i32) {
    %c0_i32 = arith.constant 0 : i32
    %c0_i32_0 = arith.constant 0 : i32
    %c0_i32_1 = arith.constant 0 : i32
    return %c0_i32, %c0_i32_0 : i32, i32
  }
  func.func @transform_2(%arg0: i32) -> (i32, i32) {
    %c0_i32 = arith.constant 0 : i32
    %c0_i32_0 = arith.constant 0 : i32
    %c0_i32_1 = arith.constant 0 : i32
    return %c0_i32, %c0_i32_0 : i32, i32
  }
  func.func @transform_3(%arg0: i32) -> (i32, i32) {
    %c0_i32 = arith.constant 0 : i32
    %c0_i32_0 = arith.constant 0 : i32
    return %arg0, %c0_i32 : i32, i32
  }
}

module attributes {stable_mosaic.version = 11 : i64} {
  func.func @_matmul_bias_kernel(%arg0: i32, %arg1: memref<128x1152xbf16, #tpu.memory_space<vmem>>, %arg2: memref<1152x128xbf16, #tpu.memory_space<vmem>>, %arg3: memref<1x128xf32, #tpu.memory_space<vmem>>, %arg4: memref<128x128xbf16, #tpu.memory_space<vmem>>) attributes {dimension_semantics = [#tpu.dimension_semantics<parallel>], iteration_bounds = array<i64: 2>, scalar_prefetch = 0 : i64, scratch_operands = 0 : i64, tpu.core_type = #tpu.core_type<tc>, window_params = [{transform_indices = @transform_0, window_bounds = array<i64: 128, 1152>}, {pipeline_mode = #tpu.pipeline_mode<synchronous>, transform_indices = @transform_1, window_bounds = array<i64: 1152, 128>}, {pipeline_mode = #tpu.pipeline_mode<synchronous>, transform_indices = @transform_2, window_bounds = array<i64: 1, 128>}, {transform_indices = @transform_3, window_bounds = array<i64: 128, 128>}]} {
    %c0 = arith.constant 0 : index
    %c0_0 = arith.constant 0 : index
    %0 = vector.load %arg1[%c0, %c0_0] : memref<128x1152xbf16, #tpu.memory_space<vmem>>, vector<128x1152xbf16>
    %c0_1 = arith.constant 0 : index
    %c0_2 = arith.constant 0 : index
    %1 = vector.load %arg2[%c0_1, %c0_2] : memref<1152x128xbf16, #tpu.memory_space<vmem>>, vector<1152x128xbf16>
    %cst = arith.constant dense<0.000000e+00> : vector<128x128xf32>
    %2 = tpu.matmul %0, %1, %cst {dimension_numbers = #tpu.dot_dimension_numbers<[1], [0], [0], [1], [0, 0, 1, 1], [], []>} : vector<128x1152xbf16>, vector<1152x128xbf16>, vector<128x128xf32> -> vector<128x128xf32>
    %c0_3 = arith.constant 0 : index
    %c0_4 = arith.constant 0 : index
    %3 = vector.load %arg3[%c0_3, %c0_4] : memref<1x128xf32, #tpu.memory_space<vmem>>, vector<1x128xf32>
    %4 = vector.broadcast %3 : vector<1x128xf32> to vector<128x128xf32>
    %5 = arith.addf %2, %4 : vector<128x128xf32>
    %cst_5 = arith.constant 0.000000e+00 : f32
    %6 = vector.broadcast %cst_5 : f32 to vector<128x128xf32>
    %7 = arith.maximumf %5, %6 : vector<128x128xf32>
    %8 = arith.truncf %7 : vector<128x128xf32> to vector<128x128xbf16>
    %c0_6 = arith.constant 0 : index
    %c0_7 = arith.constant 0 : index
    %9 = vector.load %arg4[%c0_6, %c0_7] : memref<128x128xbf16, #tpu.memory_space<vmem>>, vector<128x128xbf16>
    tpu.vector_store %arg4[%c0_6, %c0_7], %8 {strides = array<i32>} : memref<128x128xbf16, #tpu.memory_space<vmem>>, vector<128x128xbf16>,
    return
  }
  func.func @transform_0(%arg0: i32) -> (i32, i32) {
    %c0_i32 = arith.constant 0 : i32
    %c0_i32_0 = arith.constant 0 : i32
    return %arg0, %c0_i32 : i32, i32
  }
  func.func @transform_1(%arg0: i32) -> (i32, i32) {
    %c0_i32 = arith.constant 0 : i32
    %c0_i32_0 = arith.constant 0 : i32
    %c0_i32_1 = arith.constant 0 : i32
    return %c0_i32, %c0_i32_0 : i32, i32
  }
  func.func @transform_2(%arg0: i32) -> (i32, i32) {
    %c0_i32 = arith.constant 0 : i32
    %c0_i32_0 = arith.constant 0 : i32
    %c0_i32_1 = arith.constant 0 : i32
    return %c0_i32, %c0_i32_0 : i32, i32
  }
  func.func @transform_3(%arg0: i32) -> (i32, i32) {
    %c0_i32 = arith.constant 0 : i32
    %c0_i32_0 = arith.constant 0 : i32
    return %arg0, %c0_i32 : i32, i32
  }
}

module attributes {stable_mosaic.version = 11 : i64} {
  func.func @_matmul_bias_kernel(%arg0: i32, %arg1: memref<128x128xbf16, #tpu.memory_space<vmem>>, %arg2: memref<128x128xbf16, #tpu.memory_space<vmem>>, %arg3: memref<1x128xf32, #tpu.memory_space<vmem>>, %arg4: memref<128x128xf32, #tpu.memory_space<vmem>>) attributes {dimension_semantics = [#tpu.dimension_semantics<parallel>], iteration_bounds = array<i64: 2>, scalar_prefetch = 0 : i64, scratch_operands = 0 : i64, tpu.core_type = #tpu.core_type<tc>, window_params = [{transform_indices = @transform_0, window_bounds = array<i64: 128, 128>}, {pipeline_mode = #tpu.pipeline_mode<synchronous>, transform_indices = @transform_1, window_bounds = array<i64: 128, 128>}, {pipeline_mode = #tpu.pipeline_mode<synchronous>, transform_indices = @transform_2, window_bounds = array<i64: 1, 128>}, {transform_indices = @transform_3, window_bounds = array<i64: 128, 128>}]} {
    %c0 = arith.constant 0 : index
    %c0_0 = arith.constant 0 : index
    %0 = vector.load %arg1[%c0, %c0_0] : memref<128x128xbf16, #tpu.memory_space<vmem>>, vector<128x128xbf16>
    %c0_1 = arith.constant 0 : index
    %c0_2 = arith.constant 0 : index
    %1 = vector.load %arg2[%c0_1, %c0_2] : memref<128x128xbf16, #tpu.memory_space<vmem>>, vector<128x128xbf16>
    %cst = arith.constant dense<0.000000e+00> : vector<128x128xf32>
    %2 = tpu.matmul %0, %1, %cst {dimension_numbers = #tpu.dot_dimension_numbers<[1], [0], [0], [1], [0, 0, 1, 1], [], []>} : vector<128x128xbf16>, vector<128x128xbf16>, vector<128x128xf32> -> vector<128x128xf32>
    %c0_3 = arith.constant 0 : index
    %c0_4 = arith.constant 0 : index
    %3 = vector.load %arg3[%c0_3, %c0_4] : memref<1x128xf32, #tpu.memory_space<vmem>>, vector<1x128xf32>
    %4 = vector.broadcast %3 : vector<1x128xf32> to vector<128x128xf32>
    %5 = arith.addf %2, %4 : vector<128x128xf32>
    %c0_5 = arith.constant 0 : index
    %c0_6 = arith.constant 0 : index
    %6 = vector.load %arg4[%c0_5, %c0_6] : memref<128x128xf32, #tpu.memory_space<vmem>>, vector<128x128xf32>
    tpu.vector_store %arg4[%c0_5, %c0_6], %5 {strides = array<i32>} : memref<128x128xf32, #tpu.memory_space<vmem>>, vector<128x128xf32>,
    return
  }
  func.func @transform_0(%arg0: i32) -> (i32, i32) {
    %c0_i32 = arith.constant 0 : i32
    %c0_i32_0 = arith.constant 0 : i32
    return %arg0, %c0_i32 : i32, i32
  }
  func.func @transform_1(%arg0: i32) -> (i32, i32) {
    %c0_i32 = arith.constant 0 : i32
    %c0_i32_0 = arith.constant 0 : i32
    %c0_i32_1 = arith.constant 0 : i32
    return %c0_i32, %c0_i32_0 : i32, i32
  }
  func.func @transform_2(%arg0: i32) -> (i32, i32) {
    %c0_i32 = arith.constant 0 : i32
    %c0_i32_0 = arith.constant 0 : i32
    %c0_i32_1 = arith.constant 0 : i32
    return %c0_i32, %c0_i32_0 : i32, i32
  }
  func.func @transform_3(%arg0: i32) -> (i32, i32) {
    %c0_i32 = arith.constant 0 : i32
    %c0_i32_0 = arith.constant 0 : i32
    return %arg0, %c0_i32 : i32, i32
  }
}

module attributes {stable_mosaic.version = 11 : i64} {
  func.func @_decode_clip_kernel(%arg0: i32, %arg1: memref<4x512xf32, #tpu.memory_space<vmem>>, %arg2: memref<4x512xf32, #tpu.memory_space<vmem>>, %arg3: memref<4x512xf32, #tpu.memory_space<vmem>>) attributes {dimension_semantics = [#tpu.dimension_semantics<parallel>], iteration_bounds = array<i64: 5>, scalar_prefetch = 0 : i64, scratch_operands = 0 : i64, tpu.core_type = #tpu.core_type<tc>, window_params = [{transform_indices = @transform_0, window_bounds = array<i64: 4, 512>}, {transform_indices = @transform_1, window_bounds = array<i64: 4, 512>}, {transform_indices = @transform_2, window_bounds = array<i64: 4, 512>}]} {
    %c0 = arith.constant 0 : index
    %c0_0 = arith.constant 0 : index
    %0 = vector.load %arg1[%c0, %c0_0] : memref<4x512xf32, #tpu.memory_space<vmem>>, vector<4x512xf32>
    %c0_1 = arith.constant 0 : index
    %c0_2 = arith.constant 0 : index
    %1 = vector.load %arg2[%c0_1, %c0_2] : memref<4x512xf32, #tpu.memory_space<vmem>>, vector<4x512xf32>
    %2 = vector.extract_strided_slice %0 {offsets = [2, 0], sizes = [1, 512], strides = [1, 1]} : vector<4x512xf32> to vector<1x512xf32>
    %3 = vector.extract_strided_slice %0 {offsets = [0, 0], sizes = [1, 512], strides = [1, 1]} : vector<4x512xf32> to vector<1x512xf32>
    %4 = arith.subf %2, %3 : vector<1x512xf32>
    %5 = vector.extract_strided_slice %0 {offsets = [3, 0], sizes = [1, 512], strides = [1, 1]} : vector<4x512xf32> to vector<1x512xf32>
    %6 = vector.extract_strided_slice %0 {offsets = [1, 0], sizes = [1, 512], strides = [1, 1]} : vector<4x512xf32> to vector<1x512xf32>
    %7 = arith.subf %5, %6 : vector<1x512xf32>
    %8 = vector.extract_strided_slice %0 {offsets = [0, 0], sizes = [1, 512], strides = [1, 1]} : vector<4x512xf32> to vector<1x512xf32>
    %cst = arith.constant 5.000000e-01 : f32
    %9 = vector.broadcast %cst : f32 to vector<1x512xf32>
    %10 = arith.mulf %9, %4 : vector<1x512xf32>
    %11 = arith.addf %8, %10 : vector<1x512xf32>
    %12 = vector.extract_strided_slice %0 {offsets = [1, 0], sizes = [1, 512], strides = [1, 1]} : vector<4x512xf32> to vector<1x512xf32>
    %cst_3 = arith.constant 5.000000e-01 : f32
    %13 = vector.broadcast %cst_3 : f32 to vector<1x512xf32>
    %14 = arith.mulf %13, %7 : vector<1x512xf32>
    %15 = arith.addf %12, %14 : vector<1x512xf32>
    %16 = vector.extract_strided_slice %1 {offsets = [0, 0], sizes = [1, 512], strides = [1, 1]} : vector<4x512xf32> to vector<1x512xf32>
    %17 = arith.mulf %16, %4 : vector<1x512xf32>
    %18 = arith.addf %17, %11 : vector<1x512xf32>
    %19 = vector.extract_strided_slice %1 {offsets = [1, 0], sizes = [1, 512], strides = [1, 1]} : vector<4x512xf32> to vector<1x512xf32>
    %20 = arith.mulf %19, %7 : vector<1x512xf32>
    %21 = arith.addf %20, %15 : vector<1x512xf32>
    %22 = vector.extract_strided_slice %1 {offsets = [2, 0], sizes = [1, 512], strides = [1, 1]} : vector<4x512xf32> to vector<1x512xf32>
    %cst_4 = arith.constant 4.13516665 : f32
    %23 = vector.broadcast %cst_4 : f32 to vector<1x512xf32>
    %24 = arith.minimumf %22, %23 : vector<1x512xf32>
    %25 = math.exp %24 : vector<1x512xf32>
    %26 = arith.mulf %25, %4 : vector<1x512xf32>
    %27 = vector.extract_strided_slice %1 {offsets = [3, 0], sizes = [1, 512], strides = [1, 1]} : vector<4x512xf32> to vector<1x512xf32>
    %cst_5 = arith.constant 4.13516665 : f32
    %28 = vector.broadcast %cst_5 : f32 to vector<1x512xf32>
    %29 = arith.minimumf %27, %28 : vector<1x512xf32>
    %30 = math.exp %29 : vector<1x512xf32>
    %31 = arith.mulf %30, %7 : vector<1x512xf32>
    %cst_6 = arith.constant 5.000000e-01 : f32
    %32 = vector.broadcast %cst_6 : f32 to vector<1x512xf32>
    %33 = arith.mulf %32, %26 : vector<1x512xf32>
    %34 = arith.subf %18, %33 : vector<1x512xf32>
    %cst_7 = arith.constant 0.000000e+00 : f32
    %cst_8 = arith.constant 3.200000e+01 : f32
    %35 = vector.broadcast %cst_7 : f32 to vector<1x512xf32>
    %36 = arith.maximumf %35, %34 : vector<1x512xf32>
    %37 = vector.broadcast %cst_8 : f32 to vector<1x512xf32>
    %38 = arith.minimumf %37, %36 : vector<1x512xf32>
    %c0_9 = arith.constant 0 : index
    %c0_10 = arith.constant 0 : index
    %39 = vector.load %arg3[%c0_9, %c0_10] : memref<4x512xf32, #tpu.memory_space<vmem>>, vector<1x512xf32>
    tpu.vector_store %arg3[%c0_9, %c0_10], %38 {strides = array<i32>} : memref<4x512xf32, #tpu.memory_space<vmem>>, vector<1x512xf32>,
    %cst_11 = arith.constant 5.000000e-01 : f32
    %40 = vector.broadcast %cst_11 : f32 to vector<1x512xf32>
    %41 = arith.mulf %40, %31 : vector<1x512xf32>
    %42 = arith.subf %21, %41 : vector<1x512xf32>
    %cst_12 = arith.constant 0.000000e+00 : f32
    %cst_13 = arith.constant 3.200000e+01 : f32
    %43 = vector.broadcast %cst_12 : f32 to vector<1x512xf32>
    %44 = arith.maximumf %43, %42 : vector<1x512xf32>
    %45 = vector.broadcast %cst_13 : f32 to vector<1x512xf32>
    %46 = arith.minimumf %45, %44 : vector<1x512xf32>
    %c1 = arith.constant 1 : index
    %c0_14 = arith.constant 0 : index
    %47 = vector.load %arg3[%c1, %c0_14] : memref<4x512xf32, #tpu.memory_space<vmem>>, vector<1x512xf32>
    tpu.vector_store %arg3[%c1, %c0_14], %46 {strides = array<i32>} : memref<4x512xf32, #tpu.memory_space<vmem>>, vector<1x512xf32>,
    %cst_15 = arith.constant 5.000000e-01 : f32
    %48 = vector.broadcast %cst_15 : f32 to vector<1x512xf32>
    %49 = arith.mulf %48, %26 : vector<1x512xf32>
    %50 = arith.addf %18, %49 : vector<1x512xf32>
    %cst_16 = arith.constant 0.000000e+00 : f32
    %cst_17 = arith.constant 3.200000e+01 : f32
    %51 = vector.broadcast %cst_16 : f32 to vector<1x512xf32>
    %52 = arith.maximumf %51, %50 : vector<1x512xf32>
    %53 = vector.broadcast %cst_17 : f32 to vector<1x512xf32>
    %54 = arith.minimumf %53, %52 : vector<1x512xf32>
    %c2 = arith.constant 2 : index
    %c0_18 = arith.constant 0 : index
    %55 = vector.load %arg3[%c2, %c0_18] : memref<4x512xf32, #tpu.memory_space<vmem>>, vector<1x512xf32>
    tpu.vector_store %arg3[%c2, %c0_18], %54 {strides = array<i32>} : memref<4x512xf32, #tpu.memory_space<vmem>>, vector<1x512xf32>,
    %cst_19 = arith.constant 5.000000e-01 : f32
    %56 = vector.broadcast %cst_19 : f32 to vector<1x512xf32>
    %57 = arith.mulf %56, %31 : vector<1x512xf32>
    %58 = arith.addf %21, %57 : vector<1x512xf32>
    %cst_20 = arith.constant 0.000000e+00 : f32
    %cst_21 = arith.constant 3.200000e+01 : f32
    %59 = vector.broadcast %cst_20 : f32 to vector<1x512xf32>
    %60 = arith.maximumf %59, %58 : vector<1x512xf32>
    %61 = vector.broadcast %cst_21 : f32 to vector<1x512xf32>
    %62 = arith.minimumf %61, %60 : vector<1x512xf32>
    %c3 = arith.constant 3 : index
    %c0_22 = arith.constant 0 : index
    %63 = vector.load %arg3[%c3, %c0_22] : memref<4x512xf32, #tpu.memory_space<vmem>>, vector<1x512xf32>
    tpu.vector_store %arg3[%c3, %c0_22], %62 {strides = array<i32>} : memref<4x512xf32, #tpu.memory_space<vmem>>, vector<1x512xf32>,
    return
  }
  func.func @transform_0(%arg0: i32) -> (i32, i32) {
    %c0_i32 = arith.constant 0 : i32
    %c0_i32_0 = arith.constant 0 : i32
    return %c0_i32, %arg0 : i32, i32
  }
  func.func @transform_1(%arg0: i32) -> (i32, i32) {
    %c0_i32 = arith.constant 0 : i32
    %c0_i32_0 = arith.constant 0 : i32
    return %c0_i32, %arg0 : i32, i32
  }
  func.func @transform_2(%arg0: i32) -> (i32, i32) {
    %c0_i32 = arith.constant 0 : i32
    %c0_i32_0 = arith.constant 0 : i32
    return %c0_i32, %arg0 : i32, i32
  }
}

module attributes {stable_mosaic.version = 11 : i64} {
  func.func @_matmul_bias_kernel(%arg0: i32, %arg1: memref<16x6272xbf16, #tpu.memory_space<vmem>>, %arg2: memref<6272x128xbf16, #tpu.memory_space<vmem>>, %arg3: memref<1x128xf32, #tpu.memory_space<vmem>>, %arg4: memref<16x128xbf16, #tpu.memory_space<vmem>>) attributes {dimension_semantics = [#tpu.dimension_semantics<parallel>], iteration_bounds = array<i64: 1>, scalar_prefetch = 0 : i64, scratch_operands = 0 : i64, tpu.core_type = #tpu.core_type<tc>, window_params = [{transform_indices = @transform_0, window_bounds = array<i64: 16, 6272>}, {pipeline_mode = #tpu.pipeline_mode<synchronous>, transform_indices = @transform_1, window_bounds = array<i64: 6272, 128>}, {pipeline_mode = #tpu.pipeline_mode<synchronous>, transform_indices = @transform_2, window_bounds = array<i64: 1, 128>}, {transform_indices = @transform_3, window_bounds = array<i64: 16, 128>}]} {
    %c0 = arith.constant 0 : index
    %c0_0 = arith.constant 0 : index
    %0 = vector.load %arg1[%c0, %c0_0] : memref<16x6272xbf16, #tpu.memory_space<vmem>>, vector<16x6272xbf16>
    %c0_1 = arith.constant 0 : index
    %c0_2 = arith.constant 0 : index
    %1 = vector.load %arg2[%c0_1, %c0_2] : memref<6272x128xbf16, #tpu.memory_space<vmem>>, vector<6272x128xbf16>
    %cst = arith.constant dense<0.000000e+00> : vector<16x128xf32>
    %2 = tpu.matmul %0, %1, %cst {dimension_numbers = #tpu.dot_dimension_numbers<[1], [0], [0], [1], [0, 0, 1, 1], [], []>} : vector<16x6272xbf16>, vector<6272x128xbf16>, vector<16x128xf32> -> vector<16x128xf32>
    %c0_3 = arith.constant 0 : index
    %c0_4 = arith.constant 0 : index
    %3 = vector.load %arg3[%c0_3, %c0_4] : memref<1x128xf32, #tpu.memory_space<vmem>>, vector<1x128xf32>
    %4 = vector.broadcast %3 : vector<1x128xf32> to vector<16x128xf32>
    %5 = arith.addf %2, %4 : vector<16x128xf32>
    %cst_5 = arith.constant 0.000000e+00 : f32
    %6 = vector.broadcast %cst_5 : f32 to vector<16x128xf32>
    %7 = arith.maximumf %5, %6 : vector<16x128xf32>
    %8 = arith.truncf %7 : vector<16x128xf32> to vector<16x128xbf16>
    %c0_6 = arith.constant 0 : index
    %c0_7 = arith.constant 0 : index
    %9 = vector.load %arg4[%c0_6, %c0_7] : memref<16x128xbf16, #tpu.memory_space<vmem>>, vector<16x128xbf16>
    tpu.vector_store %arg4[%c0_6, %c0_7], %8 {strides = array<i32>} : memref<16x128xbf16, #tpu.memory_space<vmem>>, vector<16x128xbf16>,
    return
  }
  func.func @transform_0(%arg0: i32) -> (i32, i32) {
    %c0_i32 = arith.constant 0 : i32
    %c0_i32_0 = arith.constant 0 : i32
    return %arg0, %c0_i32 : i32, i32
  }
  func.func @transform_1(%arg0: i32) -> (i32, i32) {
    %c0_i32 = arith.constant 0 : i32
    %c0_i32_0 = arith.constant 0 : i32
    %c0_i32_1 = arith.constant 0 : i32
    return %c0_i32, %c0_i32_0 : i32, i32
  }
  func.func @transform_2(%arg0: i32) -> (i32, i32) {
    %c0_i32 = arith.constant 0 : i32
    %c0_i32_0 = arith.constant 0 : i32
    %c0_i32_1 = arith.constant 0 : i32
    return %c0_i32, %c0_i32_0 : i32, i32
  }
  func.func @transform_3(%arg0: i32) -> (i32, i32) {
    %c0_i32 = arith.constant 0 : i32
    %c0_i32_0 = arith.constant 0 : i32
    return %arg0, %c0_i32 : i32, i32
  }
}

module attributes {stable_mosaic.version = 11 : i64} {
  func.func @_matmul_bias_kernel(%arg0: i32, %arg1: memref<16x128xbf16, #tpu.memory_space<vmem>>, %arg2: memref<128x128xbf16, #tpu.memory_space<vmem>>, %arg3: memref<1x128xf32, #tpu.memory_space<vmem>>, %arg4: memref<16x128xbf16, #tpu.memory_space<vmem>>) attributes {dimension_semantics = [#tpu.dimension_semantics<parallel>], iteration_bounds = array<i64: 1>, scalar_prefetch = 0 : i64, scratch_operands = 0 : i64, tpu.core_type = #tpu.core_type<tc>, window_params = [{transform_indices = @transform_0, window_bounds = array<i64: 16, 128>}, {pipeline_mode = #tpu.pipeline_mode<synchronous>, transform_indices = @transform_1, window_bounds = array<i64: 128, 128>}, {pipeline_mode = #tpu.pipeline_mode<synchronous>, transform_indices = @transform_2, window_bounds = array<i64: 1, 128>}, {transform_indices = @transform_3, window_bounds = array<i64: 16, 128>}]} {
    %c0 = arith.constant 0 : index
    %c0_0 = arith.constant 0 : index
    %0 = vector.load %arg1[%c0, %c0_0] : memref<16x128xbf16, #tpu.memory_space<vmem>>, vector<16x128xbf16>
    %c0_1 = arith.constant 0 : index
    %c0_2 = arith.constant 0 : index
    %1 = vector.load %arg2[%c0_1, %c0_2] : memref<128x128xbf16, #tpu.memory_space<vmem>>, vector<128x128xbf16>
    %cst = arith.constant dense<0.000000e+00> : vector<16x128xf32>
    %2 = tpu.matmul %0, %1, %cst {dimension_numbers = #tpu.dot_dimension_numbers<[1], [0], [0], [1], [0, 0, 1, 1], [], []>} : vector<16x128xbf16>, vector<128x128xbf16>, vector<16x128xf32> -> vector<16x128xf32>
    %c0_3 = arith.constant 0 : index
    %c0_4 = arith.constant 0 : index
    %3 = vector.load %arg3[%c0_3, %c0_4] : memref<1x128xf32, #tpu.memory_space<vmem>>, vector<1x128xf32>
    %4 = vector.broadcast %3 : vector<1x128xf32> to vector<16x128xf32>
    %5 = arith.addf %2, %4 : vector<16x128xf32>
    %cst_5 = arith.constant 0.000000e+00 : f32
    %6 = vector.broadcast %cst_5 : f32 to vector<16x128xf32>
    %7 = arith.maximumf %5, %6 : vector<16x128xf32>
    %8 = arith.truncf %7 : vector<16x128xf32> to vector<16x128xbf16>
    %c0_6 = arith.constant 0 : index
    %c0_7 = arith.constant 0 : index
    %9 = vector.load %arg4[%c0_6, %c0_7] : memref<16x128xbf16, #tpu.memory_space<vmem>>, vector<16x128xbf16>
    tpu.vector_store %arg4[%c0_6, %c0_7], %8 {strides = array<i32>} : memref<16x128xbf16, #tpu.memory_space<vmem>>, vector<16x128xbf16>,
    return
  }
  func.func @transform_0(%arg0: i32) -> (i32, i32) {
    %c0_i32 = arith.constant 0 : i32
    %c0_i32_0 = arith.constant 0 : i32
    return %arg0, %c0_i32 : i32, i32
  }
  func.func @transform_1(%arg0: i32) -> (i32, i32) {
    %c0_i32 = arith.constant 0 : i32
    %c0_i32_0 = arith.constant 0 : i32
    %c0_i32_1 = arith.constant 0 : i32
    return %c0_i32, %c0_i32_0 : i32, i32
  }
  func.func @transform_2(%arg0: i32) -> (i32, i32) {
    %c0_i32 = arith.constant 0 : i32
    %c0_i32_0 = arith.constant 0 : i32
    %c0_i32_1 = arith.constant 0 : i32
    return %c0_i32, %c0_i32_0 : i32, i32
  }
  func.func @transform_3(%arg0: i32) -> (i32, i32) {
    %c0_i32 = arith.constant 0 : i32
    %c0_i32_0 = arith.constant 0 : i32
    return %arg0, %c0_i32 : i32, i32
  }
}

module attributes {stable_mosaic.version = 11 : i64} {
  func.func @_matmul_bias_kernel(%arg0: i32, %arg1: memref<16x128xbf16, #tpu.memory_space<vmem>>, %arg2: memref<128x128xbf16, #tpu.memory_space<vmem>>, %arg3: memref<1x128xf32, #tpu.memory_space<vmem>>, %arg4: memref<16x128xf32, #tpu.memory_space<vmem>>) attributes {dimension_semantics = [#tpu.dimension_semantics<parallel>], iteration_bounds = array<i64: 1>, scalar_prefetch = 0 : i64, scratch_operands = 0 : i64, tpu.core_type = #tpu.core_type<tc>, window_params = [{transform_indices = @transform_0, window_bounds = array<i64: 16, 128>}, {pipeline_mode = #tpu.pipeline_mode<synchronous>, transform_indices = @transform_1, window_bounds = array<i64: 128, 128>}, {pipeline_mode = #tpu.pipeline_mode<synchronous>, transform_indices = @transform_2, window_bounds = array<i64: 1, 128>}, {transform_indices = @transform_3, window_bounds = array<i64: 16, 128>}]} {
    %c0 = arith.constant 0 : index
    %c0_0 = arith.constant 0 : index
    %0 = vector.load %arg1[%c0, %c0_0] : memref<16x128xbf16, #tpu.memory_space<vmem>>, vector<16x128xbf16>
    %c0_1 = arith.constant 0 : index
    %c0_2 = arith.constant 0 : index
    %1 = vector.load %arg2[%c0_1, %c0_2] : memref<128x128xbf16, #tpu.memory_space<vmem>>, vector<128x128xbf16>
    %cst = arith.constant dense<0.000000e+00> : vector<16x128xf32>
    %2 = tpu.matmul %0, %1, %cst {dimension_numbers = #tpu.dot_dimension_numbers<[1], [0], [0], [1], [0, 0, 1, 1], [], []>} : vector<16x128xbf16>, vector<128x128xbf16>, vector<16x128xf32> -> vector<16x128xf32>
    %c0_3 = arith.constant 0 : index
    %c0_4 = arith.constant 0 : index
    %3 = vector.load %arg3[%c0_3, %c0_4] : memref<1x128xf32, #tpu.memory_space<vmem>>, vector<1x128xf32>
    %4 = vector.broadcast %3 : vector<1x128xf32> to vector<16x128xf32>
    %5 = arith.addf %2, %4 : vector<16x128xf32>
    %c0_5 = arith.constant 0 : index
    %c0_6 = arith.constant 0 : index
    %6 = vector.load %arg4[%c0_5, %c0_6] : memref<16x128xf32, #tpu.memory_space<vmem>>, vector<16x128xf32>
    tpu.vector_store %arg4[%c0_5, %c0_6], %5 {strides = array<i32>} : memref<16x128xf32, #tpu.memory_space<vmem>>, vector<16x128xf32>,
    return
  }
  func.func @transform_0(%arg0: i32) -> (i32, i32) {
    %c0_i32 = arith.constant 0 : i32
    %c0_i32_0 = arith.constant 0 : i32
    return %arg0, %c0_i32 : i32, i32
  }
  func.func @transform_1(%arg0: i32) -> (i32, i32) {
    %c0_i32 = arith.constant 0 : i32
    %c0_i32_0 = arith.constant 0 : i32
    %c0_i32_1 = arith.constant 0 : i32
    return %c0_i32, %c0_i32_0 : i32, i32
  }
  func.func @transform_2(%arg0: i32) -> (i32, i32) {
    %c0_i32 = arith.constant 0 : i32
    %c0_i32_0 = arith.constant 0 : i32
    %c0_i32_1 = arith.constant 0 : i32
    return %c0_i32, %c0_i32_0 : i32, i32
  }
  func.func @transform_3(%arg0: i32) -> (i32, i32) {
    %c0_i32 = arith.constant 0 : i32
    %c0_i32_0 = arith.constant 0 : i32
    return %arg0, %c0_i32 : i32, i32
  }
}

</mosaic_0001>

<llo_original>
// kernel: faster_rcnn_forward.7
$region0: #{faster_rcnn_forward.7}
  #allocation0 [shape = 'u32[]', space=smem, size = 0x4, offset = 0x4, fixed_abs, tag = 'smem constant byte address 0x4 - core index']
  #allocation1 [shape = 'u32[72,128]{1,0:T(1,128)}', space=vmem, size = 0x9000, scoped, tag = 'internal scratch']
  %s0 = inlined_call_operand.vmem [shape: bf16[1024,27], index: 0, kind: input, shape index: {}]
  %s1 = inlined_call_operand.vmem [shape: bf16[27,128], index: 1, kind: input, shape index: {}]
  %s2 = inlined_call_operand.vmem [shape: f32[1,128], index: 2, kind: input, shape index: {}]
  %s3 = inlined_call_operand.vmem [shape: bf16[256,128], index: 3, kind: output, shape index: {}]
  %s4 = sld [smem:[#allocation0]]
  $region45: #{faster_rcnn_forward.7} parent=0
    _
  %s6 = ssub.s32 1, %s4
  %s7 = scalar_select 0, %s6, %s4
  loop: start=0, step=1, limit=10
  $region2: #{faster_rcnn_forward.7} parent=0 // loop_pre_header
    _
  $region3: #{faster_rcnn_forward.7} parent=0 // loop_header
    %s9 = sphi 0, %s13
    %p10 = scmp.ge.s32.totalorder %s9, 10
    %s19 = sphi 0, %s21
    %s22 = sphi 0, %s19
    %s23 = sphi 0, %s22
    %s39 = sphi 0, %s23
    %s43 = sphi 0, %s43
    %s45 = sphi 0, %s43
    %s46 = sphi 0, %s45
    %s60 = sphi 0, %s46
    %s64 = sphi 0, %s64
    %s66 = sphi 0, %s64
    %s67 = sphi 0, %s66
    %s81 = sphi 0, %s67
    %s87 = sphi 0, %s89
    %s90 = sphi 0, %s87
    %s91 = sphi 0, %s90
    %s107 = sphi 0, %s91
  $region4: #{faster_rcnn_forward.7} parent=0 // loop_header_branch
    %12 = sbr.rel (%p10) target = $region8
  $region5: #{faster_rcnn_forward.7} parent=0 // loop_body
    %s14 = ssub.s32 %s9, 1
    %s15 = ssub.s32 %s9, 2
    %s16 = sadd.s32 %s9, 1
    %s17 = ssub.s32 %s9, %s16
    %p18 = scmp.eq.s32.totalorder %s17, 0
    %s20 = sadd.s32 %s19, 1
    %s21 = scalar_select %p18, %s19, %s20
    %p24 = pneg %p18
    %p25 = scmp.eq.s32.totalorder %s9, 7
    %p26 = por %p24, %p25
    %p27 = scmp.ne.s32.totalorder %s19, %s22
    %p28 = scmp.eq.s32.totalorder %s9, 0
    %p29 = por %p27, %p28
    %p30 = scmp.ne.s32.totalorder %s19, %s22
    %p31 = scmp.eq.s32.totalorder %s14, 7
    %p32 = por %p30, %p31
    %p33 = scmp.ne.s32.totalorder %s22, %s23
    %p34 = scmp.eq.s32.totalorder %s14, 0
    %p35 = por %p33, %p34
    %p36 = scmp.ne.s32.totalorder %s22, %s23
    %p37 = scmp.eq.s32.totalorder %s15, 7
    %p38 = por %p36, %p37
    %p40 = scmp.ne.s32.totalorder %s23, %s39
    %p41 = scmp.eq.s32.totalorder %s15, 0
    %p42 = por %p40, %p41
    %s44 = sadd.s32 %s43, 1
    %p47 = scmp.eq.s32.totalorder %s9, 7
    %p48 = scmp.ne.s32.totalorder %s43, %s45
    %p49 = scmp.eq.s32.totalorder %s9, 0
    %p50 = por %p48, %p49
    %p51 = scmp.ne.s32.totalorder %s43, %s45
    %p52 = scmp.eq.s32.totalorder %s14, 7
    %p53 = por %p51, %p52
    %p54 = scmp.ne.s32.totalorder %s45, %s46
    %p55 = scmp.eq.s32.totalorder %s14, 0
    %p56 = por %p54, %p55
    %p57 = scmp.ne.s32.totalorder %s45, %s46
    %p58 = scmp.eq.s32.totalorder %s15, 7
    %p59 = por %p57, %p58
    %p61 = scmp.ne.s32.totalorder %s46, %s60
    %p62 = scmp.eq.s32.totalorder %s15, 0
    %p63 = por %p61, %p62
    %s65 = sadd.s32 %s64, 1
    %p68 = scmp.eq.s32.totalorder %s9, 7
    %p69 = scmp.ne.s32.totalorder %s64, %s66
    %p70 = scmp.eq.s32.totalorder %s9, 0
    %p71 = por %p69, %p70
    %p72 = scmp.ne.s32.totalorder %s64, %s66
    %p73 = scmp.eq.s32.totalorder %s14, 7
    %p74 = por %p72, %p73
    %p75 = scmp.ne.s32.totalorder %s66, %s67
    %p76 = scmp.eq.s32.totalorder %s14, 0
    %p77 = por %p75, %p76
    %p78 = scmp.ne.s32.totalorder %s66, %s67
    %p79 = scmp.eq.s32.totalorder %s15, 7
    %p80 = por %p78, %p79
    %p82 = scmp.ne.s32.totalorder %s67, %s81
    %p83 = scmp.eq.s32.totalorder %s15, 0
    %p84 = por %p82, %p83
    %s85 = ssub.s32 %s9, %s16
    %p86 = scmp.eq.s32.totalorder %s85, 0
    %s88 = sadd.s32 %s87, 1
    %s89 = scalar_select %p86, %s87, %s88
    %p92 = pneg %p86
    %p93 = scmp.eq.s32.totalorder %s9, 7
    %p94 = por %p92, %p93
    %p95 = scmp.ne.s32.totalorder %s87, %s90
    %p96 = scmp.eq.s32.totalorder %s9, 0
    %p97 = por %p95, %p96
    %p98 = scmp.ne.s32.totalorder %s87, %s90
    %p99 = scmp.eq.s32.totalorder %s14, 7
    %p100 = por %p98, %p99
    %p101 = scmp.ne.s32.totalorder %s90, %s91
    %p102 = scmp.eq.s32.totalorder %s14, 0
    %p103 = por %p101, %p102
    %p104 = scmp.ne.s32.totalorder %s90, %s91
    %p105 = scmp.eq.s32.totalorder %s15, 7
    %p106 = por %p104, %p105
    %p108 = scmp.ne.s32.totalorder %s91, %s107
    %p109 = scmp.eq.s32.totalorder %s15, 0
    %p110 = por %p108, %p109
    %p111 = scmp.le.s32.totalorder 1, %s9
    %p112 = scmp.lt.s32.totalorder %s9, 9
    %p113 = pnand %p111, %p112
    %p114 = pneg %p113
    // Predicated region
    $region9: #{faster_rcnn_forward.7} parent=5 // pred_check
      _
    $region10: #{faster_rcnn_forward.7} parent=5 // pred_check_branch
      %116 = sbr.rel (%p113) target = $region12
    $region11: #{faster_rcnn_forward.7} parent=5 // pred_region
      %s117 = ssub.s32 %s9, 1
      // Predicated region
      $region13: #{faster_rcnn_forward.7} parent=11 // pred_check
        %p118 = pneg %p56
      $region14: #{faster_rcnn_forward.7} parent=11 // pred_check_branch
        %120 = sbr.rel (%p118) target = $region16
      $region15: #{faster_rcnn_forward.7} parent=11 // pred_region
        _
      $region16: #{faster_rcnn_forward.7} parent=11 // pred_fallthru
        _
      // Predicated region
      $region17: #{faster_rcnn_forward.7} parent=11 // pred_check
        %p121 = pneg %p77
      $region18: #{faster_rcnn_forward.7} parent=11 // pred_check_branch
        %123 = sbr.rel (%p121) target = $region20
      $region19: #{faster_rcnn_forward.7} parent=11 // pred_region
        _
      $region20: #{faster_rcnn_forward.7} parent=11 // pred_fallthru
        _
    $region12: #{faster_rcnn_forward.7} parent=5 // pred_fallthru
      _
    %p124 = scmp.lt.s32.totalorder %s9, 8
    // Predicated region
    $region21: #{faster_rcnn_forward.7} parent=5 // pred_check
      %p125 = pneg %p124
    $region22: #{faster_rcnn_forward.7} parent=5 // pred_check_branch
      %127 = sbr.rel (%p125) target = $region24
    $region23: #{faster_rcnn_forward.7} parent=5 // pred_region
      // Predicated region
      $region25: #{faster_rcnn_forward.7} parent=23 // pred_check
        %p128 = pneg %p29
      $region26: #{faster_rcnn_forward.7} parent=23 // pred_check_branch
        %130 = sbr.rel (%p128) target = $region28
      $region27: #{faster_rcnn_forward.7} parent=23 // pred_region
        %s131 = smul.u32 16, %s9
        %p132 = scmp.lt.s32.totalorder %s131, 127
        %s133 = scalar_select %p132, %s131, 127
        %s134 = smul.addr %s133, 4
        %s135 = scalar_lea.vmem %s0, %s134
        %s136 = smul.u32 16, %s9
      $region28: #{faster_rcnn_forward.7} parent=23 // pred_fallthru
        _
    $region24: #{faster_rcnn_forward.7} parent=5 // pred_fallthru
      _
    %p137 = scmp.le.s32.totalorder 1, %s9
    %p138 = scmp.lt.s32.totalorder %s9, 9
    %p139 = pnand %p137, %p138
    %p140 = pneg %p139
    // Predicated region
    $region29: #{faster_rcnn_forward.7} parent=5 // pred_check
      _
    $region30: #{faster_rcnn_forward.7} parent=5 // pred_check_branch
      %142 = sbr.rel (%p139) target = $region32
    $region31: #{faster_rcnn_forward.7} parent=5 // pred_region
      %s143 = ssub.s32 %s9, 1
      %s144 = smul.u32 16, %s14
      %p145 = scmp.lt.s32.totalorder %s144, 127
      %s146 = scalar_select %p145, %s144, 127
      %s147 = smul.addr %s146, 4
      %s148 = scalar_lea.vmem %s0, %s147
      %p149 = pneg %p35
      %p150 = pneg %p32
      %p151 = pneg %p56
      %p152 = pneg %p53
      %p153 = pneg %p77
      %p154 = pneg %p74
      %p155 = pneg %p103
      %p156 = pneg %p100
      %s157 = smul.u32 4, %s14
      %p158 = scmp.lt.s32.totalorder %s157, 31
      %s159 = scalar_select %p158, %s157, 31
      %s160 = smul.addr %s159, 4
      %s161 = scalar_lea.vmem %s3, %s160
      %s162 = smul.u32 16, %s14
      %p163 = scmp.lt.s32.totalorder %s162, 127
      %s164 = scalar_select %p163, %s162, 127
      %s165 = smul.addr %s164, 4
      %s166 = scalar_lea.vmem %s0, %s165
      %s167 = smul.u32 16, %s14
      %s168 = smul.u32 4, %s14
      %p169 = scmp.lt.s32.totalorder %s168, 31
      %s170 = scalar_select %p169, %s168, 31
      %s171 = smul.addr %s170, 4
      %s172 = scalar_lea.vmem %s3, %s171
      %s173 = smul.u32 4, %s14
      %v175 = vld [vmem:[%s166] sm:$0xf]
      %v176 = vld [vmem:[%s166 + $0x4] sm:$0xf]
      %v177 = vld [vmem:[%s166 + $0x8] sm:$0xf]
      %v178 = vld [vmem:[%s166 + $0xc] sm:$0xf]
      %v179 = vld [vmem:[%s166 + $0x10] sm:$0xf]
      %v180 = vld [vmem:[%s166 + $0x14] sm:$0xf]
      %v181 = vld [vmem:[%s166 + $0x18] sm:$0xf]
      %v182 = vld [vmem:[%s166 + $0x1c] sm:$0xf]
      %v183 = vld [vmem:[%s166 + $0x20] sm:$0xf]
      %v184 = vld [vmem:[%s166 + $0x24] sm:$0xf]
      %v185 = vld [vmem:[%s166 + $0x28] sm:$0xf]
      %v186 = vld [vmem:[%s166 + $0x2c] sm:$0xf]
      %v187 = vld [vmem:[%s166 + $0x30] sm:$0xf]
      %v188 = vld [vmem:[%s166 + $0x34] sm:$0xf]
      %v189 = vld [vmem:[%s166 + $0x38] sm:$0xf]
      %v190 = vld [vmem:[%s166 + $0x3c] sm:$0xf]
      %v191 = vld [vmem:[%s1] sm:$0xf]
      %v192 = vld [vmem:[%s1 + $0x4] sm:$0xf]
      %v193 = vld [vmem:[%s1 + $0x8] sm:$0xf]
      %v194 = vld [vmem:[%s1 + $0xc] sm:$0x3]
      %v195 = vld [vmem:[%s2] sm:$0x1]
      %v197 = vperm.slane %v195, 0
      %v215 = vunpack.c.l.b16 %v175
      %v216 = vunpack.c.l.b16 %v176
      %v217 = vunpack.c.l.b16 %v177
      %v218 = vunpack.c.l.b16 %v178
      %v219 = vunpack.c.l.b16 %v179
      %v220 = vunpack.c.l.b16 %v180
      %v221 = vunpack.c.l.b16 %v181
      %v222 = vunpack.c.l.b16 %v182
      %v223 = vunpack.c.l.b16 %v183
      %v224 = vunpack.c.l.b16 %v184
      %v225 = vunpack.c.l.b16 %v185
      %v226 = vunpack.c.l.b16 %v186
      %v227 = vunpack.c.l.b16 %v187
      %v228 = vunpack.c.l.b16 %v188
      %v229 = vunpack.c.l.b16 %v189
      %v230 = vunpack.c.l.b16 %v190
      %v231 = vpack.c.b16 %v216, %v215
      %v232 = vpack.c.b16 %v218, %v217
      %v233 = vpack.c.b16 %v220, %v219
      %v234 = vpack.c.b16 %v222, %v221
      %v235 = vpack.c.b16 %v224, %v223
      %v236 = vpack.c.b16 %v226, %v225
      %v237 = vpack.c.b16 %v228, %v227
      %v238 = vpack.c.b16 %v230, %v229
      %v243 = vunpack.c.l.b16 %v191
      %v244 = vunpack.c.l.b16 %v192
      %v245 = vunpack.c.l.b16 %v193
      %v246 = vunpack.c.l.b16 %v194
      %v247 = vpack.c.b16 %v244, %v243
      %v248 = vpack.c.b16 %v246, %v245
      %vm250 = vcmask 220160
      %v252 = vsel %vm250, %v231, 0
      %v255 = vsel %vm250, %v232, 0
      %v258 = vsel %vm250, %v233, 0
      %v261 = vsel %vm250, %v234, 0
      %v264 = vsel %vm250, %v235, 0
      %v267 = vsel %vm250, %v236, 0
      %v270 = vsel %vm250, %v237, 0
      %v273 = vsel %vm250, %v238, 0
      %vm275 = vcmask 1044480
      %vm276 = vcmask 1045504
      %v277 = vsel %vm275, 4294967295, 65535
      %v278 = vsel %vm276, %v277, 0
      %v280 = vand.u32 %v248, %v278
      %282 = vmatpush.bf16.msra.mxu0 0
      %283 = vmatpush.bf16.msra.mxu0 0
      %284 = vmatpush.bf16.msra.mxu0 0
      %285 = vmatpush.bf16.msra.mxu0 0
      %286 = vmatpush.bf16.msra.mxu0 0
      %287 = vmatpush.bf16.msra.mxu0 0
      %288 = vmatpush.bf16.msra.mxu0 %v280
      %289 = vmatpush.bf16.msra.mxu0 %v247
      %290 = vmatmul.bf16.gmra.mxu0 %v252
      %v291 = vpop.f32.mrf.mxu0
      %v292 = vadd.f32 %v197, %v291
      %v293 = vpop.f32.mrf.mxu0
      %v294 = vadd.f32 %v197, %v293
      %295 = vmatmul.bf16.gmra.mxu0 %v255
      %v296 = vpop.f32.mrf.mxu0
      %v297 = vadd.f32 %v197, %v296
      %v298 = vpop.f32.mrf.mxu0
      %v299 = vadd.f32 %v197, %v298
      %300 = vmatmul.bf16.gmra.mxu0 %v258
      %v301 = vpop.f32.mrf.mxu0
      %v302 = vadd.f32 %v197, %v301
      %v303 = vpop.f32.mrf.mxu0
      %v304 = vadd.f32 %v197, %v303
      %305 = vmatmul.bf16.gmra.mxu0 %v261
      %v306 = vpop.f32.mrf.mxu0
      %v307 = vadd.f32 %v197, %v306
      %v308 = vpop.f32.mrf.mxu0
      %v309 = vadd.f32 %v197, %v308
      %310 = vmatmul.bf16.gmra.mxu0 %v264
      %v311 = vpop.f32.mrf.mxu0
      %v312 = vadd.f32 %v197, %v311
      %v313 = vpop.f32.mrf.mxu0
      %v314 = vadd.f32 %v197, %v313
      %315 = vmatmul.bf16.gmra.mxu0 %v267
      %v316 = vpop.f32.mrf.mxu0
      %v317 = vadd.f32 %v197, %v316
      %v318 = vpop.f32.mrf.mxu0
      %v319 = vadd.f32 %v197, %v318
      %320 = vmatmul.bf16.gmra.mxu0 %v270
      %v321 = vpop.f32.mrf.mxu0
      %v322 = vadd.f32 %v197, %v321
      %v323 = vpop.f32.mrf.mxu0
      %v324 = vadd.f32 %v197, %v323
      %325 = vmatmul.bf16.gmra.mxu0 %v273
      %v326 = vpop.f32.mrf.mxu0
      %v327 = vadd.f32 %v197, %v326
      %v328 = vpop.f32.mrf.mxu0
      %v329 = vadd.f32 %v197, %v328
      %330 = vdwg.mxu0
      %v331 = vmax.f32 %v292, 0.0
      %v332 = vmax.f32 %v294, 0.0
      %v333 = vmax.f32 %v297, 0.0
      %v334 = vmax.f32 %v299, 0.0
      %v335 = vmax.f32 %v302, 0.0
      %v336 = vmax.f32 %v304, 0.0
      %v337 = vmax.f32 %v307, 0.0
      %v338 = vmax.f32 %v309, 0.0
      %v339 = vmax.f32 %v312, 0.0
      %v340 = vmax.f32 %v314, 0.0
      %v341 = vmax.f32 %v317, 0.0
      %v342 = vmax.f32 %v319, 0.0
      %v343 = vmax.f32 %v322, 0.0
      %v344 = vmax.f32 %v324, 0.0
      %v345 = vmax.f32 %v327, 0.0
      %v346 = vmax.f32 %v329, 0.0
      %v363 = vrot.slane %v331, 4
      %v364 = vrot.slane %v332, 4
      %v365 = vrot.slane %v333, 4
      %v366 = vrot.slane %v334, 4
      %v367 = vrot.slane %v335, 4
      %v368 = vrot.slane %v336, 4
      %v369 = vrot.slane %v337, 4
      %v370 = vrot.slane %v338, 4
      %v371 = vrot.slane %v339, 4
      %v372 = vrot.slane %v340, 4
      %v373 = vrot.slane %v341, 4
      %v374 = vrot.slane %v342, 4
      %v375 = vrot.slane %v343, 4
      %v376 = vrot.slane %v344, 4
      %v377 = vrot.slane %v345, 4
      %v378 = vrot.slane %v346, 4
      %vm395 = vcmask 1043456
      %v396 = vsel %vm395, %v331, -inf
      %v397 = vrot.slane %v396, 4
      %v398 = vmax.f32 %v396, %v397
      %v399 = vrot.slane %v398, 2
      %v400 = vmax.f32 %v398, %v399
      %v401 = vrot.slane %v400, 1
      %v402 = vmax.f32 %v400, %v401
      %v403 = vsel %vm395, %v363, -inf
      %v404 = vrot.slane %v403, 4
      %v405 = vmax.f32 %v403, %v404
      %v406 = vrot.slane %v405, 2
      %v407 = vmax.f32 %v405, %v406
      %v408 = vrot.slane %v407, 1
      %v409 = vmax.f32 %v407, %v408
      %v410 = vsel %vm395, %v332, -inf
      %v411 = vrot.slane %v410, 4
      %v412 = vmax.f32 %v410, %v411
      %v413 = vrot.slane %v412, 2
      %v414 = vmax.f32 %v412, %v413
      %v415 = vrot.slane %v414, 1
      %v416 = vmax.f32 %v414, %v415
      %v417 = vsel %vm395, %v364, -inf
      %v418 = vrot.slane %v417, 4
      %v419 = vmax.f32 %v417, %v418
      %v420 = vrot.slane %v419, 2
      %v421 = vmax.f32 %v419, %v420
      %v422 = vrot.slane %v421, 1
      %v423 = vmax.f32 %v421, %v422
      %v424 = vsel %vm395, %v333, -inf
      %v425 = vrot.slane %v424, 4
      %v426 = vmax.f32 %v424, %v425
      %v427 = vrot.slane %v426, 2
      %v428 = vmax.f32 %v426, %v427
      %v429 = vrot.slane %v428, 1
      %v430 = vmax.f32 %v428, %v429
      %v431 = vsel %vm395, %v365, -inf
      %v432 = vrot.slane %v431, 4
      %v433 = vmax.f32 %v431, %v432
      %v434 = vrot.slane %v433, 2
      %v435 = vmax.f32 %v433, %v434
      %v436 = vrot.slane %v435, 1
      %v437 = vmax.f32 %v435, %v436
      %v438 = vsel %vm395, %v334, -inf
      %v439 = vrot.slane %v438, 4
      %v440 = vmax.f32 %v438, %v439
      %v441 = vrot.slane %v440, 2
      %v442 = vmax.f32 %v440, %v441
      %v443 = vrot.slane %v442, 1
      %v444 = vmax.f32 %v442, %v443
      %v445 = vsel %vm395, %v366, -inf
      %v446 = vrot.slane %v445, 4
      %v447 = vmax.f32 %v445, %v446
      %v448 = vrot.slane %v447, 2
      %v449 = vmax.f32 %v447, %v448
      %v450 = vrot.slane %v449, 1
      %v451 = vmax.f32 %v449, %v450
      %v452 = vsel %vm395, %v335, -inf
      %v453 = vrot.slane %v452, 4
      %v454 = vmax.f32 %v452, %v453
      %v455 = vrot.slane %v454, 2
      %v456 = vmax.f32 %v454, %v455
      %v457 = vrot.slane %v456, 1
      %v458 = vmax.f32 %v456, %v457
      %v459 = vsel %vm395, %v367, -inf
      %v460 = vrot.slane %v459, 4
      %v461 = vmax.f32 %v459, %v460
      %v462 = vrot.slane %v461, 2
      %v463 = vmax.f32 %v461, %v462
      %v464 = vrot.slane %v463, 1
      %v465 = vmax.f32 %v463, %v464
      %v466 = vsel %vm395, %v336, -inf
      %v467 = vrot.slane %v466, 4
      %v468 = vmax.f32 %v466, %v467
      %v469 = vrot.slane %v468, 2
      %v470 = vmax.f32 %v468, %v469
      %v471 = vrot.slane %v470, 1
      %v472 = vmax.f32 %v470, %v471
      %v473 = vsel %vm395, %v368, -inf
      %v474 = vrot.slane %v473, 4
      %v475 = vmax.f32 %v473, %v474
      %v476 = vrot.slane %v475, 2
      %v477 = vmax.f32 %v475, %v476
      %v478 = vrot.slane %v477, 1
      %v479 = vmax.f32 %v477, %v478
      %v480 = vsel %vm395, %v337, -inf
      %v481 = vrot.slane %v480, 4
      %v482 = vmax.f32 %v480, %v481
      %v483 = vrot.slane %v482, 2
      %v484 = vmax.f32 %v482, %v483
      %v485 = vrot.slane %v484, 1
      %v486 = vmax.f32 %v484, %v485
      %v487 = vsel %vm395, %v369, -inf
      %v488 = vrot.slane %v487, 4
      %v489 = vmax.f32 %v487, %v488
      %v490 = vrot.slane %v489, 2
      %v491 = vmax.f32 %v489, %v490
      %v492 = vrot.slane %v491, 1
      %v493 = vmax.f32 %v491, %v492
      %v494 = vsel %vm395, %v338, -inf
      %v495 = vrot.slane %v494, 4
      %v496 = vmax.f32 %v494, %v495
      %v497 = vrot.slane %v496, 2
      %v498 = vmax.f32 %v496, %v497
      %v499 = vrot.slane %v498, 1
      %v500 = vmax.f32 %v498, %v499
      %v501 = vsel %vm395, %v370, -inf
      %v502 = vrot.slane %v501, 4
      %v503 = vmax.f32 %v501, %v502
      %v504 = vrot.slane %v503, 2
      %v505 = vmax.f32 %v503, %v504
      %v506 = vrot.slane %v505, 1
      %v507 = vmax.f32 %v505, %v506
      %v508 = vsel %vm395, %v339, -inf
      %v509 = vrot.slane %v508, 4
      %v510 = vmax.f32 %v508, %v509
      %v511 = vrot.slane %v510, 2
      %v512 = vmax.f32 %v510, %v511
      %v513 = vrot.slane %v512, 1
      %v514 = vmax.f32 %v512, %v513
      %v515 = vsel %vm395, %v371, -inf
      %v516 = vrot.slane %v515, 4
      %v517 = vmax.f32 %v515, %v516
      %v518 = vrot.slane %v517, 2
      %v519 = vmax.f32 %v517, %v518
      %v520 = vrot.slane %v519, 1
      %v521 = vmax.f32 %v519, %v520
      %v522 = vsel %vm395, %v340, -inf
      %v523 = vrot.slane %v522, 4
      %v524 = vmax.f32 %v522, %v523
      %v525 = vrot.slane %v524, 2
      %v526 = vmax.f32 %v524, %v525
      %v527 = vrot.slane %v526, 1
      %v528 = vmax.f32 %v526, %v527
      %v529 = vsel %vm395, %v372, -inf
      %v530 = vrot.slane %v529, 4
      %v531 = vmax.f32 %v529, %v530
      %v532 = vrot.slane %v531, 2
      %v533 = vmax.f32 %v531, %v532
      %v534 = vrot.slane %v533, 1
      %v535 = vmax.f32 %v533, %v534
      %v536 = vsel %vm395, %v341, -inf
      %v537 = vrot.slane %v536, 4
      %v538 = vmax.f32 %v536, %v537
      %v539 = vrot.slane %v538, 2
      %v540 = vmax.f32 %v538, %v539
      %v541 = vrot.slane %v540, 1
      %v542 = vmax.f32 %v540, %v541
      %v543 = vsel %vm395, %v373, -inf
      %v544 = vrot.slane %v543, 4
      %v545 = vmax.f32 %v543, %v544
      %v546 = vrot.slane %v545, 2
      %v547 = vmax.f32 %v545, %v546
      %v548 = vrot.slane %v547, 1
      %v549 = vmax.f32 %v547, %v548
      %v550 = vsel %vm395, %v342, -inf
      %v551 = vrot.slane %v550, 4
      %v552 = vmax.f32 %v550, %v551
      %v553 = vrot.slane %v552, 2
      %v554 = vmax.f32 %v552, %v553
      %v555 = vrot.slane %v554, 1
      %v556 = vmax.f32 %v554, %v555
      %v557 = vsel %vm395, %v374, -inf
      %v558 = vrot.slane %v557, 4
      %v559 = vmax.f32 %v557, %v558
      %v560 = vrot.slane %v559, 2
      %v561 = vmax.f32 %v559, %v560
      %v562 = vrot.slane %v561, 1
      %v563 = vmax.f32 %v561, %v562
      %v564 = vsel %vm395, %v343, -inf
      %v565 = vrot.slane %v564, 4
      %v566 = vmax.f32 %v564, %v565
      %v567 = vrot.slane %v566, 2
      %v568 = vmax.f32 %v566, %v567
      %v569 = vrot.slane %v568, 1
      %v570 = vmax.f32 %v568, %v569
      %v571 = vsel %vm395, %v375, -inf
      %v572 = vrot.slane %v571, 4
      %v573 = vmax.f32 %v571, %v572
      %v574 = vrot.slane %v573, 2
      %v575 = vmax.f32 %v573, %v574
      %v576 = vrot.slane %v575, 1
      %v577 = vmax.f32 %v575, %v576
      %v578 = vsel %vm395, %v344, -inf
      %v579 = vrot.slane %v578, 4
      %v580 = vmax.f32 %v578, %v579
      %v581 = vrot.slane %v580, 2
      %v582 = vmax.f32 %v580, %v581
      %v583 = vrot.slane %v582, 1
      %v584 = vmax.f32 %v582, %v583
      %v585 = vsel %vm395, %v376, -inf
      %v586 = vrot.slane %v585, 4
      %v587 = vmax.f32 %v585, %v586
      %v588 = vrot.slane %v587, 2
      %v589 = vmax.f32 %v587, %v588
      %v590 = vrot.slane %v589, 1
      %v591 = vmax.f32 %v589, %v590
      %v592 = vsel %vm395, %v345, -inf
      %v593 = vrot.slane %v592, 4
      %v594 = vmax.f32 %v592, %v593
      %v595 = vrot.slane %v594, 2
      %v596 = vmax.f32 %v594, %v595
      %v597 = vrot.slane %v596, 1
      %v598 = vmax.f32 %v596, %v597
      %v599 = vsel %vm395, %v377, -inf
      %v600 = vrot.slane %v599, 4
      %v601 = vmax.f32 %v599, %v600
      %v602 = vrot.slane %v601, 2
      %v603 = vmax.f32 %v601, %v602
      %v604 = vrot.slane %v603, 1
      %v605 = vmax.f32 %v603, %v604
      %v606 = vsel %vm395, %v346, -inf
      %v607 = vrot.slane %v606, 4
      %v608 = vmax.f32 %v606, %v607
      %v609 = vrot.slane %v608, 2
      %v610 = vmax.f32 %v608, %v609
      %v611 = vrot.slane %v610, 1
      %v612 = vmax.f32 %v610, %v611
      %v613 = vsel %vm395, %v378, -inf
      %v614 = vrot.slane %v613, 4
      %v615 = vmax.f32 %v613, %v614
      %v616 = vrot.slane %v615, 2
      %v617 = vmax.f32 %v615, %v616
      %v618 = vrot.slane %v617, 1
      %v619 = vmax.f32 %v617, %v618
      %v620 = vpack.c.bf16 %v402, %v402
      %v621 = vpack.c.bf16 %v409, %v409
      %v622 = vpack.c.bf16 %v416, %v416
      %v623 = vpack.c.bf16 %v423, %v423
      %v624 = vpack.c.bf16 %v430, %v430
      %v625 = vpack.c.bf16 %v437, %v437
      %v626 = vpack.c.bf16 %v444, %v444
      %v627 = vpack.c.bf16 %v451, %v451
      %v628 = vpack.c.bf16 %v458, %v458
      %v629 = vpack.c.bf16 %v465, %v465
      %v630 = vpack.c.bf16 %v472, %v472
      %v631 = vpack.c.bf16 %v479, %v479
      %v632 = vpack.c.bf16 %v486, %v486
      %v633 = vpack.c.bf16 %v493, %v493
      %v634 = vpack.c.bf16 %v500, %v500
      %v635 = vpack.c.bf16 %v507, %v507
      %v636 = vpack.c.bf16 %v514, %v514
      %v637 = vpack.c.bf16 %v521, %v521
      %v638 = vpack.c.bf16 %v528, %v528
      %v639 = vpack.c.bf16 %v535, %v535
      %v640 = vpack.c.bf16 %v542, %v542
      %v641 = vpack.c.bf16 %v549, %v549
      %v642 = vpack.c.bf16 %v556, %v556
      %v643 = vpack.c.bf16 %v563, %v563
      %v644 = vpack.c.bf16 %v570, %v570
      %v645 = vpack.c.bf16 %v577, %v577
      %v646 = vpack.c.bf16 %v584, %v584
      %v647 = vpack.c.bf16 %v591, %v591
      %v648 = vpack.c.bf16 %v598, %v598
      %v649 = vpack.c.bf16 %v605, %v605
      %v650 = vpack.c.bf16 %v612, %v612
      %v651 = vpack.c.bf16 %v619, %v619
      %v684 = vunpack.c.l.b16 %v620
      %v685 = vunpack.c.l.b16 %v621
      %v686 = vunpack.c.l.b16 %v622
      %v687 = vunpack.c.l.b16 %v623
      %v688 = vunpack.c.l.b16 %v624
      %v689 = vunpack.c.l.b16 %v625
      %v690 = vunpack.c.l.b16 %v626
      %v691 = vunpack.c.l.b16 %v627
      %v692 = vunpack.c.l.b16 %v628
      %v693 = vunpack.c.l.b16 %v629
      %v694 = vunpack.c.l.b16 %v630
      %v695 = vunpack.c.l.b16 %v631
      %v696 = vunpack.c.l.b16 %v632
      %v697 = vunpack.c.l.b16 %v633
      %v698 = vunpack.c.l.b16 %v634
      %v699 = vunpack.c.l.b16 %v635
      %v700 = vunpack.c.l.b16 %v636
      %v701 = vunpack.c.l.b16 %v637
      %v702 = vunpack.c.l.b16 %v638
      %v703 = vunpack.c.l.b16 %v639
      %v704 = vunpack.c.l.b16 %v640
      %v705 = vunpack.c.l.b16 %v641
      %v706 = vunpack.c.l.b16 %v642
      %v707 = vunpack.c.l.b16 %v643
      %v708 = vunpack.c.l.b16 %v644
      %v709 = vunpack.c.l.b16 %v645
      %v710 = vunpack.c.l.b16 %v646
      %v711 = vunpack.c.l.b16 %v647
      %v712 = vunpack.c.l.b16 %v648
      %v713 = vunpack.c.l.b16 %v649
      %v714 = vunpack.c.l.b16 %v650
      %v715 = vunpack.c.l.b16 %v651
      %vm716 = vcmask 1041409
      %v717 = vsel %vm716, %v685, %v684
      %vm718 = vcmask 1042434
      %v719 = vsel %vm718, %v686, %v717
      %vm720 = vcmask 1043459
      %v721 = vsel %vm720, %v687, %v719
      %vm722 = vcmask 1044484
      %v723 = vsel %vm722, %v688, %v721
      %vm724 = vcmask 1045509
      %v725 = vsel %vm724, %v689, %v723
      %vm726 = vcmask 1046534
      %v727 = vsel %vm726, %v690, %v725
      %vm728 = vcmask 1047559
      %v729 = vsel %vm728, %v691, %v727
      %v730 = vsel %vm716, %v693, %v692
      %v731 = vsel %vm718, %v694, %v730
      %v732 = vsel %vm720, %v695, %v731
      %v733 = vsel %vm722, %v696, %v732
      %v734 = vsel %vm724, %v697, %v733
      %v735 = vsel %vm726, %v698, %v734
      %v736 = vsel %vm728, %v699, %v735
      %v737 = vsel %vm716, %v701, %v700
      %v738 = vsel %vm718, %v702, %v737
      %v739 = vsel %vm720, %v703, %v738
      %v740 = vsel %vm722, %v704, %v739
      %v741 = vsel %vm724, %v705, %v740
      %v742 = vsel %vm726, %v706, %v741
      %v743 = vsel %vm728, %v707, %v742
      %v744 = vsel %vm716, %v709, %v708
      %v745 = vsel %vm718, %v710, %v744
      %v746 = vsel %vm720, %v711, %v745
      %v747 = vsel %vm722, %v712, %v746
      %v748 = vsel %vm724, %v713, %v747
      %v749 = vsel %vm726, %v714, %v748
      %v750 = vsel %vm728, %v715, %v749
      %v751 = vpack.c.b16 %v729, %v729
      %v752 = vpack.c.b16 %v736, %v736
      %v753 = vpack.c.b16 %v743, %v743
      %v754 = vpack.c.b16 %v750, %v750
      %759 = vst [vmem:[%s172] sm:$0xf] %v751
      %760 = vst [vmem:[%s172 + $0x4] sm:$0xf] %v752
      %761 = vst [vmem:[%s172 + $0x8] sm:$0xf] %v753
      %762 = vst [vmem:[%s172 + $0xc] sm:$0xf] %v754
      %s763 = smul.u32 4, %s14
      %p764 = scmp.lt.s32.totalorder %s763, 31
      %s765 = scalar_select %p764, %s763, 31
      %s766 = smul.addr %s765, 4
      %s767 = scalar_lea.vmem %s3, %s766
      // Predicated region
      $region33: #{faster_rcnn_forward.7} parent=31 // pred_check
        %p768 = pneg %p100
      $region34: #{faster_rcnn_forward.7} parent=31 // pred_check_branch
        %770 = sbr.rel (%p768) target = $region36
      $region35: #{faster_rcnn_forward.7} parent=31 // pred_region
        %s771 = smul.u32 4, %s14
      $region36: #{faster_rcnn_forward.7} parent=31 // pred_fallthru
        _
    $region32: #{faster_rcnn_forward.7} parent=5 // pred_fallthru
      _
    %p772 = scmp.le.s32.totalorder 2, %s9
    // Predicated region
    $region37: #{faster_rcnn_forward.7} parent=5 // pred_check
      %p773 = pneg %p772
    $region38: #{faster_rcnn_forward.7} parent=5 // pred_check_branch
      %775 = sbr.rel (%p773) target = $region40
    $region39: #{faster_rcnn_forward.7} parent=5 // pred_region
      %s776 = ssub.s32 %s9, 2
      // Predicated region
      $region41: #{faster_rcnn_forward.7} parent=39 // pred_check
        %p777 = pneg %p106
      $region42: #{faster_rcnn_forward.7} parent=39 // pred_check_branch
        %779 = sbr.rel (%p777) target = $region44
      $region43: #{faster_rcnn_forward.7} parent=39 // pred_region
        %s780 = smul.u32 4, %s15
        %p781 = scmp.lt.s32.totalorder %s780, 31
        %s782 = scalar_select %p781, %s780, 31
        %s783 = smul.addr %s782, 4
        %s784 = scalar_lea.vmem %s3, %s783
      $region44: #{faster_rcnn_forward.7} parent=39 // pred_fallthru
        _
    $region40: #{faster_rcnn_forward.7} parent=5 // pred_fallthru
      _
  $region6: #{faster_rcnn_forward.7} parent=0 // loop_footer
    %s13 = sadd.s32 1, %s9
  $region7: #{faster_rcnn_forward.7} parent=0 // loop_footer_branch
    %8 = sbr.rel target = $region3
  $region8: #{faster_rcnn_forward.7} parent=0 // loop_exit
    _

// kernel: faster_rcnn_forward.9
$region0: #{faster_rcnn_forward.9}
  #allocation0 [shape = 'u32[]', space=smem, size = 0x4, offset = 0x4, fixed_abs, tag = 'smem constant byte address 0x4 - core index']
  #allocation1 [shape = 'u32[72,128]{1,0:T(1,128)}', space=vmem, size = 0x9000, scoped, tag = 'internal scratch']
  %s0 = inlined_call_operand.vmem [shape: bf16[256,128], index: 0, kind: input, shape index: {}]
  %s1 = inlined_call_operand.vmem [shape: bf16[128,128], index: 1, kind: input, shape index: {}]
  %s2 = inlined_call_operand.vmem [shape: f32[1,128], index: 2, kind: input, shape index: {}]
  %s3 = inlined_call_operand.vmem [shape: f32[256,128], index: 3, kind: output, shape index: {}]
  %s4 = sld [smem:[#allocation0]]
  $region45: #{faster_rcnn_forward.9} parent=0
    _
  %s6 = ssub.s32 1, %s4
  %s7 = scalar_select 0, %s6, %s4
  loop: start=0, step=1, limit=4
  $region2: #{faster_rcnn_forward.9} parent=0 // loop_pre_header
    _
  $region3: #{faster_rcnn_forward.9} parent=0 // loop_header
    %s9 = sphi 0, %s13
    %p10 = scmp.ge.s32.totalorder %s9, 4
    %s19 = sphi 0, %s21
    %s22 = sphi 0, %s19
    %s23 = sphi 0, %s22
    %s39 = sphi 0, %s23
    %s43 = sphi 0, %s43
    %s45 = sphi 0, %s43
    %s46 = sphi 0, %s45
    %s60 = sphi 0, %s46
    %s64 = sphi 0, %s64
    %s66 = sphi 0, %s64
    %s67 = sphi 0, %s66
    %s81 = sphi 0, %s67
    %s87 = sphi 0, %s89
    %s90 = sphi 0, %s87
    %s91 = sphi 0, %s90
    %s107 = sphi 0, %s91
  $region4: #{faster_rcnn_forward.9} parent=0 // loop_header_branch
    %12 = sbr.rel (%p10) target = $region8
  $region5: #{faster_rcnn_forward.9} parent=0 // loop_body
    %s14 = ssub.s32 %s9, 1
    %s15 = ssub.s32 %s9, 2
    %s16 = sadd.s32 %s9, 1
    %s17 = ssub.s32 %s9, %s16
    %p18 = scmp.eq.s32.totalorder %s17, 0
    %s20 = sadd.s32 %s19, 1
    %s21 = scalar_select %p18, %s19, %s20
    %p24 = pneg %p18
    %p25 = scmp.eq.s32.totalorder %s9, 1
    %p26 = por %p24, %p25
    %p27 = scmp.ne.s32.totalorder %s19, %s22
    %p28 = scmp.eq.s32.totalorder %s9, 0
    %p29 = por %p27, %p28
    %p30 = scmp.ne.s32.totalorder %s19, %s22
    %p31 = scmp.eq.s32.totalorder %s14, 1
    %p32 = por %p30, %p31
    %p33 = scmp.ne.s32.totalorder %s22, %s23
    %p34 = scmp.eq.s32.totalorder %s14, 0
    %p35 = por %p33, %p34
    %p36 = scmp.ne.s32.totalorder %s22, %s23
    %p37 = scmp.eq.s32.totalorder %s15, 1
    %p38 = por %p36, %p37
    %p40 = scmp.ne.s32.totalorder %s23, %s39
    %p41 = scmp.eq.s32.totalorder %s15, 0
    %p42 = por %p40, %p41
    %s44 = sadd.s32 %s43, 1
    %p47 = scmp.eq.s32.totalorder %s9, 1
    %p48 = scmp.ne.s32.totalorder %s43, %s45
    %p49 = scmp.eq.s32.totalorder %s9, 0
    %p50 = por %p48, %p49
    %p51 = scmp.ne.s32.totalorder %s43, %s45
    %p52 = scmp.eq.s32.totalorder %s14, 1
    %p53 = por %p51, %p52
    %p54 = scmp.ne.s32.totalorder %s45, %s46
    %p55 = scmp.eq.s32.totalorder %s14, 0
    %p56 = por %p54, %p55
    %p57 = scmp.ne.s32.totalorder %s45, %s46
    %p58 = scmp.eq.s32.totalorder %s15, 1
    %p59 = por %p57, %p58
    %p61 = scmp.ne.s32.totalorder %s46, %s60
    %p62 = scmp.eq.s32.totalorder %s15, 0
    %p63 = por %p61, %p62
    %s65 = sadd.s32 %s64, 1
    %p68 = scmp.eq.s32.totalorder %s9, 1
    %p69 = scmp.ne.s32.totalorder %s64, %s66
    %p70 = scmp.eq.s32.totalorder %s9, 0
    %p71 = por %p69, %p70
    %p72 = scmp.ne.s32.totalorder %s64, %s66
    %p73 = scmp.eq.s32.totalorder %s14, 1
    %p74 = por %p72, %p73
    %p75 = scmp.ne.s32.totalorder %s66, %s67
    %p76 = scmp.eq.s32.totalorder %s14, 0
    %p77 = por %p75, %p76
    %p78 = scmp.ne.s32.totalorder %s66, %s67
    %p79 = scmp.eq.s32.totalorder %s15, 1
    %p80 = por %p78, %p79
    %p82 = scmp.ne.s32.totalorder %s67, %s81
    %p83 = scmp.eq.s32.totalorder %s15, 0
    %p84 = por %p82, %p83
    %s85 = ssub.s32 %s9, %s16
    %p86 = scmp.eq.s32.totalorder %s85, 0
    %s88 = sadd.s32 %s87, 1
    %s89 = scalar_select %p86, %s87, %s88
    %p92 = pneg %p86
    %p93 = scmp.eq.s32.totalorder %s9, 1
    %p94 = por %p92, %p93
    %p95 = scmp.ne.s32.totalorder %s87, %s90
    %p96 = scmp.eq.s32.totalorder %s9, 0
    %p97 = por %p95, %p96
    %p98 = scmp.ne.s32.totalorder %s87, %s90
    %p99 = scmp.eq.s32.totalorder %s14, 1
    %p100 = por %p98, %p99
    %p101 = scmp.ne.s32.totalorder %s90, %s91
    %p102 = scmp.eq.s32.totalorder %s14, 0
    %p103 = por %p101, %p102
    %p104 = scmp.ne.s32.totalorder %s90, %s91
    %p105 = scmp.eq.s32.totalorder %s15, 1
    %p106 = por %p104, %p105
    %p108 = scmp.ne.s32.totalorder %s91, %s107
    %p109 = scmp.eq.s32.totalorder %s15, 0
    %p110 = por %p108, %p109
    %p111 = scmp.le.s32.totalorder 1, %s9
    %p112 = scmp.lt.s32.totalorder %s9, 3
    %p113 = pnand %p111, %p112
    %p114 = pneg %p113
    // Predicated region
    $region9: #{faster_rcnn_forward.9} parent=5 // pred_check
      _
    $region10: #{faster_rcnn_forward.9} parent=5 // pred_check_branch
      %116 = sbr.rel (%p113) target = $region12
    $region11: #{faster_rcnn_forward.9} parent=5 // pred_region
      %s117 = ssub.s32 %s9, 1
      // Predicated region
      $region13: #{faster_rcnn_forward.9} parent=11 // pred_check
        %p118 = pneg %p56
      $region14: #{faster_rcnn_forward.9} parent=11 // pred_check_branch
        %120 = sbr.rel (%p118) target = $region16
      $region15: #{faster_rcnn_forward.9} parent=11 // pred_region
        _
      $region16: #{faster_rcnn_forward.9} parent=11 // pred_fallthru
        _
      // Predicated region
      $region17: #{faster_rcnn_forward.9} parent=11 // pred_check
        %p121 = pneg %p77
      $region18: #{faster_rcnn_forward.9} parent=11 // pred_check_branch
        %123 = sbr.rel (%p121) target = $region20
      $region19: #{faster_rcnn_forward.9} parent=11 // pred_region
        _
      $region20: #{faster_rcnn_forward.9} parent=11 // pred_fallthru
        _
    $region12: #{faster_rcnn_forward.9} parent=5 // pred_fallthru
      _
    %p124 = scmp.lt.s32.totalorder %s9, 2
    // Predicated region
    $region21: #{faster_rcnn_forward.9} parent=5 // pred_check
      %p125 = pneg %p124
    $region22: #{faster_rcnn_forward.9} parent=5 // pred_check_branch
      %127 = sbr.rel (%p125) target = $region24
    $region23: #{faster_rcnn_forward.9} parent=5 // pred_region
      // Predicated region
      $region25: #{faster_rcnn_forward.9} parent=23 // pred_check
        %p128 = pneg %p29
      $region26: #{faster_rcnn_forward.9} parent=23 // pred_check_branch
        %130 = sbr.rel (%p128) target = $region28
      $region27: #{faster_rcnn_forward.9} parent=23 // pred_region
        %s131 = smul.u32 16, %s9
        %p132 = scmp.lt.s32.totalorder %s131, 31
        %s133 = scalar_select %p132, %s131, 31
        %s134 = smul.addr %s133, 4
        %s135 = scalar_lea.vmem %s0, %s134
        %s136 = smul.u32 16, %s9
      $region28: #{faster_rcnn_forward.9} parent=23 // pred_fallthru
        _
    $region24: #{faster_rcnn_forward.9} parent=5 // pred_fallthru
      _
    %p137 = scmp.le.s32.totalorder 1, %s9
    %p138 = scmp.lt.s32.totalorder %s9, 3
    %p139 = pnand %p137, %p138
    %p140 = pneg %p139
    // Predicated region
    $region29: #{faster_rcnn_forward.9} parent=5 // pred_check
      _
    $region30: #{faster_rcnn_forward.9} parent=5 // pred_check_branch
      %142 = sbr.rel (%p139) target = $region32
    $region31: #{faster_rcnn_forward.9} parent=5 // pred_region
      %s143 = ssub.s32 %s9, 1
      %s144 = smul.u32 16, %s14
      %p145 = scmp.lt.s32.totalorder %s144, 31
      %s146 = scalar_select %p145, %s144, 31
      %s147 = smul.addr %s146, 4
      %s148 = scalar_lea.vmem %s0, %s147
      %p149 = pneg %p35
      %p150 = pneg %p32
      %p151 = pneg %p56
      %p152 = pneg %p53
      %p153 = pneg %p77
      %p154 = pneg %p74
      %p155 = pneg %p103
      %p156 = pneg %p100
      %s157 = smul.u32 16, %s14
      %p158 = scmp.lt.s32.totalorder %s157, 31
      %s159 = scalar_select %p158, %s157, 31
      %s160 = smul.addr %s159, 8
      %s161 = scalar_lea.vmem %s3, %s160
      %s162 = smul.u32 16, %s14
      %p163 = scmp.lt.s32.totalorder %s162, 31
      %s164 = scalar_select %p163, %s162, 31
      %s165 = smul.addr %s164, 4
      %s166 = scalar_lea.vmem %s0, %s165
      %s167 = smul.u32 16, %s14
      %s168 = smul.u32 16, %s14
      %p169 = scmp.lt.s32.totalorder %s168, 31
      %s170 = scalar_select %p169, %s168, 31
      %s171 = smul.addr %s170, 8
      %s172 = scalar_lea.vmem %s3, %s171
      %s173 = smul.u32 16, %s14
      %v174 = vld [vmem:[%s166] sm:$0xf]
      %v175 = vld [vmem:[%s166 + $0x4] sm:$0xf]
      %v176 = vld [vmem:[%s166 + $0x8] sm:$0xf]
      %v177 = vld [vmem:[%s166 + $0xc] sm:$0xf]
      %v178 = vld [vmem:[%s166 + $0x10] sm:$0xf]
      %v179 = vld [vmem:[%s166 + $0x14] sm:$0xf]
      %v180 = vld [vmem:[%s166 + $0x18] sm:$0xf]
      %v181 = vld [vmem:[%s166 + $0x1c] sm:$0xf]
      %v182 = vld [vmem:[%s166 + $0x20] sm:$0xf]
      %v183 = vld [vmem:[%s166 + $0x24] sm:$0xf]
      %v184 = vld [vmem:[%s166 + $0x28] sm:$0xf]
      %v185 = vld [vmem:[%s166 + $0x2c] sm:$0xf]
      %v186 = vld [vmem:[%s166 + $0x30] sm:$0xf]
      %v187 = vld [vmem:[%s166 + $0x34] sm:$0xf]
      %v188 = vld [vmem:[%s166 + $0x38] sm:$0xf]
      %v189 = vld [vmem:[%s166 + $0x3c] sm:$0xf]
      %v190 = vld [vmem:[%s1] sm:$0xf]
      %v191 = vld [vmem:[%s1 + $0x4] sm:$0xf]
      %v192 = vld [vmem:[%s1 + $0x8] sm:$0xf]
      %v193 = vld [vmem:[%s1 + $0xc] sm:$0xf]
      %v194 = vld [vmem:[%s1 + $0x10] sm:$0xf]
      %v195 = vld [vmem:[%s1 + $0x14] sm:$0xf]
      %v196 = vld [vmem:[%s1 + $0x18] sm:$0xf]
      %v197 = vld [vmem:[%s1 + $0x1c] sm:$0xf]
      %v198 = vld [vmem:[%s1 + $0x20] sm:$0xf]
      %v199 = vld [vmem:[%s1 + $0x24] sm:$0xf]
      %v200 = vld [vmem:[%s1 + $0x28] sm:$0xf]
      %v201 = vld [vmem:[%s1 + $0x2c] sm:$0xf]
      %v202 = vld [vmem:[%s1 + $0x30] sm:$0xf]
      %v203 = vld [vmem:[%s1 + $0x34] sm:$0xf]
      %v204 = vld [vmem:[%s1 + $0x38] sm:$0xf]
      %v205 = vld [vmem:[%s1 + $0x3c] sm:$0xf]
      %v206 = vld [vmem:[%s2] sm:$0x1]
      %v208 = vperm.slane %v206, 0
      %v226 = vunpack.c.l.b16 %v174
      %v227 = vunpack.c.l.b16 %v175
      %v228 = vunpack.c.l.b16 %v176
      %v229 = vunpack.c.l.b16 %v177
      %v230 = vunpack.c.l.b16 %v178
      %v231 = vunpack.c.l.b16 %v179
      %v232 = vunpack.c.l.b16 %v180
      %v233 = vunpack.c.l.b16 %v181
      %v234 = vunpack.c.l.b16 %v182
      %v235 = vunpack.c.l.b16 %v183
      %v236 = vunpack.c.l.b16 %v184
      %v237 = vunpack.c.l.b16 %v185
      %v238 = vunpack.c.l.b16 %v186
      %v239 = vunpack.c.l.b16 %v187
      %v240 = vunpack.c.l.b16 %v188
      %v241 = vunpack.c.l.b16 %v189
      %v242 = vpack.c.b16 %v227, %v226
      %v243 = vpack.c.b16 %v229, %v228
      %v244 = vpack.c.b16 %v231, %v230
      %v245 = vpack.c.b16 %v233, %v232
      %v246 = vpack.c.b16 %v235, %v234
      %v247 = vpack.c.b16 %v237, %v236
      %v248 = vpack.c.b16 %v239, %v238
      %v249 = vpack.c.b16 %v241, %v240
      %v274 = vunpack.c.l.b16 %v190
      %v275 = vunpack.c.l.b16 %v191
      %v276 = vunpack.c.l.b16 %v192
      %v277 = vunpack.c.l.b16 %v193
      %v278 = vunpack.c.l.b16 %v194
      %v279 = vunpack.c.l.b16 %v195
      %v280 = vunpack.c.l.b16 %v196
      %v281 = vunpack.c.l.b16 %v197
      %v282 = vunpack.c.l.b16 %v198
      %v283 = vunpack.c.l.b16 %v199
      %v284 = vunpack.c.l.b16 %v200
      %v285 = vunpack.c.l.b16 %v201
      %v286 = vunpack.c.l.b16 %v202
      %v287 = vunpack.c.l.b16 %v203
      %v288 = vunpack.c.l.b16 %v204
      %v289 = vunpack.c.l.b16 %v205
      %v290 = vpack.c.b16 %v275, %v274
      %v291 = vpack.c.b16 %v277, %v276
      %v292 = vpack.c.b16 %v279, %v278
      %v293 = vpack.c.b16 %v281, %v280
      %v294 = vpack.c.b16 %v283, %v282
      %v295 = vpack.c.b16 %v285, %v284
      %v296 = vpack.c.b16 %v287, %v286
      %v297 = vpack.c.b16 %v289, %v288
      %306 = vmatpush.bf16.msra.mxu0 %v297
      %307 = vmatpush.bf16.msra.mxu0 %v296
      %308 = vmatpush.bf16.msra.mxu0 %v295
      %309 = vmatpush.bf16.msra.mxu0 %v294
      %310 = vmatpush.bf16.msra.mxu0 %v293
      %311 = vmatpush.bf16.msra.mxu0 %v292
      %312 = vmatpush.bf16.msra.mxu0 %v291
      %313 = vmatpush.bf16.msra.mxu0 %v290
      %314 = vmatmul.bf16.gmra.mxu0 %v242
      %v315 = vpop.f32.mrf.mxu0
      %v316 = vadd.f32 %v208, %v315
      %v317 = vpop.f32.mrf.mxu0
      %v318 = vadd.f32 %v208, %v317
      %319 = vmatmul.bf16.gmra.mxu0 %v243
      %v320 = vpop.f32.mrf.mxu0
      %v321 = vadd.f32 %v208, %v320
      %v322 = vpop.f32.mrf.mxu0
      %v323 = vadd.f32 %v208, %v322
      %324 = vmatmul.bf16.gmra.mxu0 %v244
      %v325 = vpop.f32.mrf.mxu0
      %v326 = vadd.f32 %v208, %v325
      %v327 = vpop.f32.mrf.mxu0
      %v328 = vadd.f32 %v208, %v327
      %329 = vmatmul.bf16.gmra.mxu0 %v245
      %v330 = vpop.f32.mrf.mxu0
      %v331 = vadd.f32 %v208, %v330
      %v332 = vpop.f32.mrf.mxu0
      %v333 = vadd.f32 %v208, %v332
      %334 = vmatmul.bf16.gmra.mxu0 %v246
      %v335 = vpop.f32.mrf.mxu0
      %v336 = vadd.f32 %v208, %v335
      %v337 = vpop.f32.mrf.mxu0
      %v338 = vadd.f32 %v208, %v337
      %339 = vmatmul.bf16.gmra.mxu0 %v247
      %v340 = vpop.f32.mrf.mxu0
      %v341 = vadd.f32 %v208, %v340
      %v342 = vpop.f32.mrf.mxu0
      %v343 = vadd.f32 %v208, %v342
      %344 = vmatmul.bf16.gmra.mxu0 %v248
      %v345 = vpop.f32.mrf.mxu0
      %v346 = vadd.f32 %v208, %v345
      %v347 = vpop.f32.mrf.mxu0
      %v348 = vadd.f32 %v208, %v347
      %349 = vmatmul.bf16.gmra.mxu0 %v249
      %v350 = vpop.f32.mrf.mxu0
      %v351 = vadd.f32 %v208, %v350
      %v352 = vpop.f32.mrf.mxu0
      %v353 = vadd.f32 %v208, %v352
      %354 = vdwg.mxu0
      %355 = vst [vmem:[%s172] sm:$0xff] %v316
      %356 = vst [vmem:[%s172 + $0x8] sm:$0xff] %v318
      %357 = vst [vmem:[%s172 + $0x10] sm:$0xff] %v321
      %358 = vst [vmem:[%s172 + $0x18] sm:$0xff] %v323
      %359 = vst [vmem:[%s172 + $0x20] sm:$0xff] %v326
      %360 = vst [vmem:[%s172 + $0x28] sm:$0xff] %v328
      %361 = vst [vmem:[%s172 + $0x30] sm:$0xff] %v331
      %362 = vst [vmem:[%s172 + $0x38] sm:$0xff] %v333
      %363 = vst [vmem:[%s172 + $0x40] sm:$0xff] %v336
      %364 = vst [vmem:[%s172 + $0x48] sm:$0xff] %v338
      %365 = vst [vmem:[%s172 + $0x50] sm:$0xff] %v341
      %366 = vst [vmem:[%s172 + $0x58] sm:$0xff] %v343
      %367 = vst [vmem:[%s172 + $0x60] sm:$0xff] %v346
      %368 = vst [vmem:[%s172 + $0x68] sm:$0xff] %v348
      %369 = vst [vmem:[%s172 + $0x70] sm:$0xff] %v351
      %370 = vst [vmem:[%s172 + $0x78] sm:$0xff] %v353
      %s371 = smul.u32 16, %s14
      %p372 = scmp.lt.s32.totalorder %s371, 31
      %s373 = scalar_select %p372, %s371, 31
      %s374 = smul.addr %s373, 8
      %s375 = scalar_lea.vmem %s3, %s374
      // Predicated region
      $region33: #{faster_rcnn_forward.9} parent=31 // pred_check
        %p376 = pneg %p100
      $region34: #{faster_rcnn_forward.9} parent=31 // pred_check_branch
        %378 = sbr.rel (%p376) target = $region36
      $region35: #{faster_rcnn_forward.9} parent=31 // pred_region
        %s379 = smul.u32 16, %s14
      $region36: #{faster_rcnn_forward.9} parent=31 // pred_fallthru
        _
    $region32: #{faster_rcnn_forward.9} parent=5 // pred_fallthru
      _
    %p380 = scmp.le.s32.totalorder 2, %s9
    // Predicated region
    $region37: #{faster_rcnn_forward.9} parent=5 // pred_check
      %p381 = pneg %p380
    $region38: #{faster_rcnn_forward.9} parent=5 // pred_check_branch
      %383 = sbr.rel (%p381) target = $region40
    $region39: #{faster_rcnn_forward.9} parent=5 // pred_region
      %s384 = ssub.s32 %s9, 2
      // Predicated region
      $region41: #{faster_rcnn_forward.9} parent=39 // pred_check
        %p385 = pneg %p106
      $region42: #{faster_rcnn_forward.9} parent=39 // pred_check_branch
        %387 = sbr.rel (%p385) target = $region44
      $region43: #{faster_rcnn_forward.9} parent=39 // pred_region
        %s388 = smul.u32 16, %s15
        %p389 = scmp.lt.s32.totalorder %s388, 31
        %s390 = scalar_select %p389, %s388, 31
        %s391 = smul.addr %s390, 8
        %s392 = scalar_lea.vmem %s3, %s391
      $region44: #{faster_rcnn_forward.9} parent=39 // pred_fallthru
        _
    $region40: #{faster_rcnn_forward.9} parent=5 // pred_fallthru
      _
  $region6: #{faster_rcnn_forward.9} parent=0 // loop_footer
    %s13 = sadd.s32 1, %s9
  $region7: #{faster_rcnn_forward.9} parent=0 // loop_footer_branch
    %8 = sbr.rel target = $region3
  $region8: #{faster_rcnn_forward.9} parent=0 // loop_exit
    _

// kernel: faster_rcnn_forward.8
$region0: #{faster_rcnn_forward.8}
  #allocation0 [shape = 'u32[]', space=smem, size = 0x4, offset = 0x4, fixed_abs, tag = 'smem constant byte address 0x4 - core index']
  #allocation1 [shape = 'u32[72,128]{1,0:T(1,128)}', space=vmem, size = 0x9000, scoped, tag = 'internal scratch']
  %s0 = inlined_call_operand.vmem [shape: bf16[256,1152], index: 0, kind: input, shape index: {}]
  %s1 = inlined_call_operand.vmem [shape: bf16[1152,128], index: 1, kind: input, shape index: {}]
  %s2 = inlined_call_operand.vmem [shape: f32[1,128], index: 2, kind: input, shape index: {}]
  %s3 = inlined_call_operand.vmem [shape: bf16[256,128], index: 3, kind: output, shape index: {}]
  %s4 = sld [smem:[#allocation0]]
  $region45: #{faster_rcnn_forward.8} parent=0
    _
  %s6 = ssub.s32 1, %s4
  %s7 = scalar_select 0, %s6, %s4
  loop: start=0, step=1, limit=4
  $region2: #{faster_rcnn_forward.8} parent=0 // loop_pre_header
    _
  $region3: #{faster_rcnn_forward.8} parent=0 // loop_header
    %s9 = sphi 0, %s13
    %p10 = scmp.ge.s32.totalorder %s9, 4
    %s19 = sphi 0, %s21
    %s22 = sphi 0, %s19
    %s23 = sphi 0, %s22
    %s39 = sphi 0, %s23
    %s43 = sphi 0, %s43
    %s45 = sphi 0, %s43
    %s46 = sphi 0, %s45
    %s60 = sphi 0, %s46
    %s64 = sphi 0, %s64
    %s66 = sphi 0, %s64
    %s67 = sphi 0, %s66
    %s81 = sphi 0, %s67
    %s87 = sphi 0, %s89
    %s90 = sphi 0, %s87
    %s91 = sphi 0, %s90
    %s107 = sphi 0, %s91
  $region4: #{faster_rcnn_forward.8} parent=0 // loop_header_branch
    %12 = sbr.rel (%p10) target = $region8
  $region5: #{faster_rcnn_forward.8} parent=0 // loop_body
    %s14 = ssub.s32 %s9, 1
    %s15 = ssub.s32 %s9, 2
    %s16 = sadd.s32 %s9, 1
    %s17 = ssub.s32 %s9, %s16
    %p18 = scmp.eq.s32.totalorder %s17, 0
    %s20 = sadd.s32 %s19, 1
    %s21 = scalar_select %p18, %s19, %s20
    %p24 = pneg %p18
    %p25 = scmp.eq.s32.totalorder %s9, 1
    %p26 = por %p24, %p25
    %p27 = scmp.ne.s32.totalorder %s19, %s22
    %p28 = scmp.eq.s32.totalorder %s9, 0
    %p29 = por %p27, %p28
    %p30 = scmp.ne.s32.totalorder %s19, %s22
    %p31 = scmp.eq.s32.totalorder %s14, 1
    %p32 = por %p30, %p31
    %p33 = scmp.ne.s32.totalorder %s22, %s23
    %p34 = scmp.eq.s32.totalorder %s14, 0
    %p35 = por %p33, %p34
    %p36 = scmp.ne.s32.totalorder %s22, %s23
    %p37 = scmp.eq.s32.totalorder %s15, 1
    %p38 = por %p36, %p37
    %p40 = scmp.ne.s32.totalorder %s23, %s39
    %p41 = scmp.eq.s32.totalorder %s15, 0
    %p42 = por %p40, %p41
    %s44 = sadd.s32 %s43, 1
    %p47 = scmp.eq.s32.totalorder %s9, 1
    %p48 = scmp.ne.s32.totalorder %s43, %s45
    %p49 = scmp.eq.s32.totalorder %s9, 0
    %p50 = por %p48, %p49
    %p51 = scmp.ne.s32.totalorder %s43, %s45
    %p52 = scmp.eq.s32.totalorder %s14, 1
    %p53 = por %p51, %p52
    %p54 = scmp.ne.s32.totalorder %s45, %s46
    %p55 = scmp.eq.s32.totalorder %s14, 0
    %p56 = por %p54, %p55
    %p57 = scmp.ne.s32.totalorder %s45, %s46
    %p58 = scmp.eq.s32.totalorder %s15, 1
    %p59 = por %p57, %p58
    %p61 = scmp.ne.s32.totalorder %s46, %s60
    %p62 = scmp.eq.s32.totalorder %s15, 0
    %p63 = por %p61, %p62
    %s65 = sadd.s32 %s64, 1
    %p68 = scmp.eq.s32.totalorder %s9, 1
    %p69 = scmp.ne.s32.totalorder %s64, %s66
    %p70 = scmp.eq.s32.totalorder %s9, 0
    %p71 = por %p69, %p70
    %p72 = scmp.ne.s32.totalorder %s64, %s66
    %p73 = scmp.eq.s32.totalorder %s14, 1
    %p74 = por %p72, %p73
    %p75 = scmp.ne.s32.totalorder %s66, %s67
    %p76 = scmp.eq.s32.totalorder %s14, 0
    %p77 = por %p75, %p76
    %p78 = scmp.ne.s32.totalorder %s66, %s67
    %p79 = scmp.eq.s32.totalorder %s15, 1
    %p80 = por %p78, %p79
    %p82 = scmp.ne.s32.totalorder %s67, %s81
    %p83 = scmp.eq.s32.totalorder %s15, 0
    %p84 = por %p82, %p83
    %s85 = ssub.s32 %s9, %s16
    %p86 = scmp.eq.s32.totalorder %s85, 0
    %s88 = sadd.s32 %s87, 1
    %s89 = scalar_select %p86, %s87, %s88
    %p92 = pneg %p86
    %p93 = scmp.eq.s32.totalorder %s9, 1
    %p94 = por %p92, %p93
    %p95 = scmp.ne.s32.totalorder %s87, %s90
    %p96 = scmp.eq.s32.totalorder %s9, 0
    %p97 = por %p95, %p96
    %p98 = scmp.ne.s32.totalorder %s87, %s90
    %p99 = scmp.eq.s32.totalorder %s14, 1
    %p100 = por %p98, %p99
    %p101 = scmp.ne.s32.totalorder %s90, %s91
    %p102 = scmp.eq.s32.totalorder %s14, 0
    %p103 = por %p101, %p102
    %p104 = scmp.ne.s32.totalorder %s90, %s91
    %p105 = scmp.eq.s32.totalorder %s15, 1
    %p106 = por %p104, %p105
    %p108 = scmp.ne.s32.totalorder %s91, %s107
    %p109 = scmp.eq.s32.totalorder %s15, 0
    %p110 = por %p108, %p109
    %p111 = scmp.le.s32.totalorder 1, %s9
    %p112 = scmp.lt.s32.totalorder %s9, 3
    %p113 = pnand %p111, %p112
    %p114 = pneg %p113
    // Predicated region
    $region9: #{faster_rcnn_forward.8} parent=5 // pred_check
      _
    $region10: #{faster_rcnn_forward.8} parent=5 // pred_check_branch
      %116 = sbr.rel (%p113) target = $region12
    $region11: #{faster_rcnn_forward.8} parent=5 // pred_region
      %s117 = ssub.s32 %s9, 1
      // Predicated region
      $region13: #{faster_rcnn_forward.8} parent=11 // pred_check
        %p118 = pneg %p56
      $region14: #{faster_rcnn_forward.8} parent=11 // pred_check_branch
        %120 = sbr.rel (%p118) target = $region16
      $region15: #{faster_rcnn_forward.8} parent=11 // pred_region
        _
      $region16: #{faster_rcnn_forward.8} parent=11 // pred_fallthru
        _
      // Predicated region
      $region17: #{faster_rcnn_forward.8} parent=11 // pred_check
        %p121 = pneg %p77
      $region18: #{faster_rcnn_forward.8} parent=11 // pred_check_branch
        %123 = sbr.rel (%p121) target = $region20
      $region19: #{faster_rcnn_forward.8} parent=11 // pred_region
        _
      $region20: #{faster_rcnn_forward.8} parent=11 // pred_fallthru
        _
    $region12: #{faster_rcnn_forward.8} parent=5 // pred_fallthru
      _
    %p124 = scmp.lt.s32.totalorder %s9, 2
    // Predicated region
    $region21: #{faster_rcnn_forward.8} parent=5 // pred_check
      %p125 = pneg %p124
    $region22: #{faster_rcnn_forward.8} parent=5 // pred_check_branch
      %127 = sbr.rel (%p125) target = $region24
    $region23: #{faster_rcnn_forward.8} parent=5 // pred_region
      // Predicated region
      $region25: #{faster_rcnn_forward.8} parent=23 // pred_check
        %p128 = pneg %p29
      $region26: #{faster_rcnn_forward.8} parent=23 // pred_check_branch
        %130 = sbr.rel (%p128) target = $region28
      $region27: #{faster_rcnn_forward.8} parent=23 // pred_region
        %s131 = smul.u32 16, %s9
        %p132 = scmp.lt.s32.totalorder %s131, 31
        %s133 = scalar_select %p132, %s131, 31
        %s134 = smul.addr %s133, 9
        %s135 = smul.addr %s134, 4
        %s136 = scalar_lea.vmem %s0, %s135
        %s137 = smul.u32 16, %s9
      $region28: #{faster_rcnn_forward.8} parent=23 // pred_fallthru
        _
    $region24: #{faster_rcnn_forward.8} parent=5 // pred_fallthru
      _
    %p138 = scmp.le.s32.totalorder 1, %s9
    %p139 = scmp.lt.s32.totalorder %s9, 3
    %p140 = pnand %p138, %p139
    %p141 = pneg %p140
    // Predicated region
    $region29: #{faster_rcnn_forward.8} parent=5 // pred_check
      _
    $region30: #{faster_rcnn_forward.8} parent=5 // pred_check_branch
      %143 = sbr.rel (%p140) target = $region32
    $region31: #{faster_rcnn_forward.8} parent=5 // pred_region
      %s144 = ssub.s32 %s9, 1
      %s145 = smul.u32 16, %s14
      %p146 = scmp.lt.s32.totalorder %s145, 31
      %s147 = scalar_select %p146, %s145, 31
      %s148 = smul.addr %s147, 9
      %s149 = smul.addr %s148, 4
      %s150 = scalar_lea.vmem %s0, %s149
      %p151 = pneg %p35
      %p152 = pneg %p32
      %p153 = pneg %p56
      %p154 = pneg %p53
      %p155 = pneg %p77
      %p156 = pneg %p74
      %p157 = pneg %p103
      %p158 = pneg %p100
      %s159 = smul.u32 16, %s14
      %p160 = scmp.lt.s32.totalorder %s159, 31
      %s161 = scalar_select %p160, %s159, 31
      %s162 = smul.addr %s161, 4
      %s163 = scalar_lea.vmem %s3, %s162
      %s164 = smul.u32 16, %s14
      %p165 = scmp.lt.s32.totalorder %s164, 31
      %s166 = scalar_select %p165, %s164, 31
      %s167 = smul.addr %s166, 9
      %s168 = smul.addr %s167, 4
      %s169 = scalar_lea.vmem %s0, %s168
      %s170 = smul.u32 16, %s14
      %s171 = smul.u32 16, %s14
      %p172 = scmp.lt.s32.totalorder %s171, 31
      %s173 = scalar_select %p172, %s171, 31
      %s174 = smul.addr %s173, 4
      %s175 = scalar_lea.vmem %s3, %s174
      %s176 = smul.u32 16, %s14
      %v177 = vld [vmem:[%s169] sm:$0xff]
      %v178 = vld [vmem:[%s169 + $0x8] sm:$0xff]
      %v179 = vld [vmem:[%s169 + $0x10] sm:$0xff]
      %v180 = vld [vmem:[%s169 + $0x18] sm:$0xff]
      %v181 = vld [vmem:[%s169 + $0x20] sm:$0xf]
      %v182 = vld [vmem:[%s169 + $0x24] sm:$0xff]
      %v183 = vld [vmem:[%s169 + $0x2c] sm:$0xff]
      %v184 = vld [vmem:[%s169 + $0x34] sm:$0xff]
      %v185 = vld [vmem:[%s169 + $0x3c] sm:$0xff]
      %v186 = vld [vmem:[%s169 + $0x44] sm:$0xf]
      %v187 = vld [vmem:[%s169 + $0x48] sm:$0xff]
      %v188 = vld [vmem:[%s169 + $0x50] sm:$0xff]
      %v189 = vld [vmem:[%s169 + $0x58] sm:$0xff]
      %v190 = vld [vmem:[%s169 + $0x60] sm:$0xff]
      %v191 = vld [vmem:[%s169 + $0x68] sm:$0xf]
      %v192 = vld [vmem:[%s169 + $0x6c] sm:$0xff]
      %v193 = vld [vmem:[%s169 + $0x74] sm:$0xff]
      %v194 = vld [vmem:[%s169 + $0x7c] sm:$0xff]
      %v195 = vld [vmem:[%s169 + $0x84] sm:$0xff]
      %v196 = vld [vmem:[%s169 + $0x8c] sm:$0xf]
      %v197 = vld [vmem:[%s169 + $0x90] sm:$0xff]
      %v198 = vld [vmem:[%s169 + $0x98] sm:$0xff]
      %v199 = vld [vmem:[%s169 + $0xa0] sm:$0xff]
      %v200 = vld [vmem:[%s169 + $0xa8] sm:$0xff]
      %v201 = vld [vmem:[%s169 + $0xb0] sm:$0xf]
      %v202 = vld [vmem:[%s169 + $0xb4] sm:$0xff]
      %v203 = vld [vmem:[%s169 + $0xbc] sm:$0xff]
      %v204 = vld [vmem:[%s169 + $0xc4] sm:$0xff]
      %v205 = vld [vmem:[%s169 + $0xcc] sm:$0xff]
      %v206 = vld [vmem:[%s169 + $0xd4] sm:$0xf]
      %v207 = vld [vmem:[%s169 + $0xd8] sm:$0xff]
      %v208 = vld [vmem:[%s169 + $0xe0] sm:$0xff]
      %v209 = vld [vmem:[%s169 + $0xe8] sm:$0xff]
      %v210 = vld [vmem:[%s169 + $0xf0] sm:$0xff]
      %v211 = vld [vmem:[%s169 + $0xf8] sm:$0xf]
      %v212 = vld [vmem:[%s169 + $0xfc] sm:$0xff]
      %v213 = vld [vmem:[%s169 + $0x104] sm:$0xff]
      %v214 = vld [vmem:[%s169 + $0x10c] sm:$0xff]
      %v215 = vld [vmem:[%s169 + $0x114] sm:$0xff]
      %v216 = vld [vmem:[%s169 + $0x11c] sm:$0xf]
      %v217 = vld [vmem:[%s169 + $0x120] sm:$0xff]
      %v218 = vld [vmem:[%s169 + $0x128] sm:$0xff]
      %v219 = vld [vmem:[%s169 + $0x130] sm:$0xff]
      %v220 = vld [vmem:[%s169 + $0x138] sm:$0xff]
      %v221 = vld [vmem:[%s169 + $0x140] sm:$0xf]
      %v222 = vld [vmem:[%s169 + $0x144] sm:$0xff]
      %v223 = vld [vmem:[%s169 + $0x14c] sm:$0xff]
      %v224 = vld [vmem:[%s169 + $0x154] sm:$0xff]
      %v225 = vld [vmem:[%s169 + $0x15c] sm:$0xff]
      %v226 = vld [vmem:[%s169 + $0x164] sm:$0xf]
      %v227 = vld [vmem:[%s169 + $0x168] sm:$0xff]
      %v228 = vld [vmem:[%s169 + $0x170] sm:$0xff]
      %v229 = vld [vmem:[%s169 + $0x178] sm:$0xff]
      %v230 = vld [vmem:[%s169 + $0x180] sm:$0xff]
      %v231 = vld [vmem:[%s169 + $0x188] sm:$0xf]
      %v232 = vld [vmem:[%s169 + $0x18c] sm:$0xff]
      %v233 = vld [vmem:[%s169 + $0x194] sm:$0xff]
      %v234 = vld [vmem:[%s169 + $0x19c] sm:$0xff]
      %v235 = vld [vmem:[%s169 + $0x1a4] sm:$0xff]
      %v236 = vld [vmem:[%s169 + $0x1ac] sm:$0xf]
      %v237 = vld [vmem:[%s169 + $0x1b0] sm:$0xff]
      %v238 = vld [vmem:[%s169 + $0x1b8] sm:$0xff]
      %v239 = vld [vmem:[%s169 + $0x1c0] sm:$0xff]
      %v240 = vld [vmem:[%s169 + $0x1c8] sm:$0xff]
      %v241 = vld [vmem:[%s169 + $0x1d0] sm:$0xf]
      %v242 = vld [vmem:[%s169 + $0x1d4] sm:$0xff]
      %v243 = vld [vmem:[%s169 + $0x1dc] sm:$0xff]
      %v244 = vld [vmem:[%s169 + $0x1e4] sm:$0xff]
      %v245 = vld [vmem:[%s169 + $0x1ec] sm:$0xff]
      %v246 = vld [vmem:[%s169 + $0x1f4] sm:$0xf]
      %v247 = vld [vmem:[%s169 + $0x1f8] sm:$0xff]
      %v248 = vld [vmem:[%s169 + $0x200] sm:$0xff]
      %v249 = vld [vmem:[%s169 + $0x208] sm:$0xff]
      %v250 = vld [vmem:[%s169 + $0x210] sm:$0xff]
      %v251 = vld [vmem:[%s169 + $0x218] sm:$0xf]
      %v252 = vld [vmem:[%s169 + $0x21c] sm:$0xff]
      %v253 = vld [vmem:[%s169 + $0x224] sm:$0xff]
      %v254 = vld [vmem:[%s169 + $0x22c] sm:$0xff]
      %v255 = vld [vmem:[%s169 + $0x234] sm:$0xff]
      %v256 = vld [vmem:[%s169 + $0x23c] sm:$0xf]
      %v257 = vld [vmem:[%s1] sm:$0xf]
      %v258 = vld [vmem:[%s1 + $0x4] sm:$0xf]
      %v259 = vld [vmem:[%s1 + $0x8] sm:$0xf]
      %v260 = vld [vmem:[%s1 + $0xc] sm:$0xf]
      %v261 = vld [vmem:[%s1 + $0x10] sm:$0xf]
      %v262 = vld [vmem:[%s1 + $0x14] sm:$0xf]
      %v263 = vld [vmem:[%s1 + $0x18] sm:$0xf]
      %v264 = vld [vmem:[%s1 + $0x1c] sm:$0xf]
      %v265 = vld [vmem:[%s1 + $0x20] sm:$0xf]
      %v266 = vld [vmem:[%s1 + $0x24] sm:$0xf]
      %v267 = vld [vmem:[%s1 + $0x28] sm:$0xf]
      %v268 = vld [vmem:[%s1 + $0x2c] sm:$0xf]
      %v269 = vld [vmem:[%s1 + $0x30] sm:$0xf]
      %v270 = vld [vmem:[%s1 + $0x34] sm:$0xf]
      %v271 = vld [vmem:[%s1 + $0x38] sm:$0xf]
      %v272 = vld [vmem:[%s1 + $0x3c] sm:$0xf]
      %v273 = vld [vmem:[%s1 + $0x40] sm:$0xf]
      %v274 = vld [vmem:[%s1 + $0x44] sm:$0xf]
      %v275 = vld [vmem:[%s1 + $0x48] sm:$0xf]
      %v276 = vld [vmem:[%s1 + $0x4c] sm:$0xf]
      %v277 = vld [vmem:[%s1 + $0x50] sm:$0xf]
      %v278 = vld [vmem:[%s1 + $0x54] sm:$0xf]
      %v279 = vld [vmem:[%s1 + $0x58] sm:$0xf]
      %v280 = vld [vmem:[%s1 + $0x5c] sm:$0xf]
      %v281 = vld [vmem:[%s1 + $0x60] sm:$0xf]
      %v282 = vld [vmem:[%s1 + $0x64] sm:$0xf]
      %v283 = vld [vmem:[%s1 + $0x68] sm:$0xf]
      %v284 = vld [vmem:[%s1 + $0x6c] sm:$0xf]
      %v285 = vld [vmem:[%s1 + $0x70] sm:$0xf]
      %v286 = vld [vmem:[%s1 + $0x74] sm:$0xf]
      %v287 = vld [vmem:[%s1 + $0x78] sm:$0xf]
      %v288 = vld [vmem:[%s1 + $0x7c] sm:$0xf]
      %v289 = vld [vmem:[%s1 + $0x80] sm:$0xf]
      %v290 = vld [vmem:[%s1 + $0x84] sm:$0xf]
      %v291 = vld [vmem:[%s1 + $0x88] sm:$0xf]
      %v292 = vld [vmem:[%s1 + $0x8c] sm:$0xf]
      %v293 = vld [vmem:[%s1 + $0x90] sm:$0xf]
      %v294 = vld [vmem:[%s1 + $0x94] sm:$0xf]
      %v295 = vld [vmem:[%s1 + $0x98] sm:$0xf]
      %v296 = vld [vmem:[%s1 + $0x9c] sm:$0xf]
      %v297 = vld [vmem:[%s1 + $0xa0] sm:$0xf]
      %v298 = vld [vmem:[%s1 + $0xa4] sm:$0xf]
      %v299 = vld [vmem:[%s1 + $0xa8] sm:$0xf]
      %v300 = vld [vmem:[%s1 + $0xac] sm:$0xf]
      %v301 = vld [vmem:[%s1 + $0xb0] sm:$0xf]
      %v302 = vld [vmem:[%s1 + $0xb4] sm:$0xf]
      %v303 = vld [vmem:[%s1 + $0xb8] sm:$0xf]
      %v304 = vld [vmem:[%s1 + $0xbc] sm:$0xf]
      %v305 = vld [vmem:[%s1 + $0xc0] sm:$0xf]
      %v306 = vld [vmem:[%s1 + $0xc4] sm:$0xf]
      %v307 = vld [vmem:[%s1 + $0xc8] sm:$0xf]
      %v308 = vld [vmem:[%s1 + $0xcc] sm:$0xf]
      %v309 = vld [vmem:[%s1 + $0xd0] sm:$0xf]
      %v310 = vld [vmem:[%s1 + $0xd4] sm:$0xf]
      %v311 = vld [vmem:[%s1 + $0xd8] sm:$0xf]
      %v312 = vld [vmem:[%s1 + $0xdc] sm:$0xf]
      %v313 = vld [vmem:[%s1 + $0xe0] sm:$0xf]
      %v314 = vld [vmem:[%s1 + $0xe4] sm:$0xf]
      %v315 = vld [vmem:[%s1 + $0xe8] sm:$0xf]
      %v316 = vld [vmem:[%s1 + $0xec] sm:$0xf]
      %v317 = vld [vmem:[%s1 + $0xf0] sm:$0xf]
      %v318 = vld [vmem:[%s1 + $0xf4] sm:$0xf]
      %v319 = vld [vmem:[%s1 + $0xf8] sm:$0xf]
      %v320 = vld [vmem:[%s1 + $0xfc] sm:$0xf]
      %v321 = vld [vmem:[%s1 + $0x100] sm:$0xf]
      %v322 = vld [vmem:[%s1 + $0x104] sm:$0xf]
      %v323 = vld [vmem:[%s1 + $0x108] sm:$0xf]
      %v324 = vld [vmem:[%s1 + $0x10c] sm:$0xf]
      %v325 = vld [vmem:[%s1 + $0x110] sm:$0xf]
      %v326 = vld [vmem:[%s1 + $0x114] sm:$0xf]
      %v327 = vld [vmem:[%s1 + $0x118] sm:$0xf]
      %v328 = vld [vmem:[%s1 + $0x11c] sm:$0xf]
      %v329 = vld [vmem:[%s1 + $0x120] sm:$0xf]
      %v330 = vld [vmem:[%s1 + $0x124] sm:$0xf]
      %v331 = vld [vmem:[%s1 + $0x128] sm:$0xf]
      %v332 = vld [vmem:[%s1 + $0x12c] sm:$0xf]
      %v333 = vld [vmem:[%s1 + $0x130] sm:$0xf]
      %v334 = vld [vmem:[%s1 + $0x134] sm:$0xf]
      %v335 = vld [vmem:[%s1 + $0x138] sm:$0xf]
      %v336 = vld [vmem:[%s1 + $0x13c] sm:$0xf]
      %v337 = vld [vmem:[%s1 + $0x140] sm:$0xf]
      %v338 = vld [vmem:[%s1 + $0x144] sm:$0xf]
      %v339 = vld [vmem:[%s1 + $0x148] sm:$0xf]
      %v340 = vld [vmem:[%s1 + $0x14c] sm:$0xf]
      %v341 = vld [vmem:[%s1 + $0x150] sm:$0xf]
      %v342 = vld [vmem:[%s1 + $0x154] sm:$0xf]
      %v343 = vld [vmem:[%s1 + $0x158] sm:$0xf]
      %v344 = vld [vmem:[%s1 + $0x15c] sm:$0xf]
      %v345 = vld [vmem:[%s1 + $0x160] sm:$0xf]
      %v346 = vld [vmem:[%s1 + $0x164] sm:$0xf]
      %v347 = vld [vmem:[%s1 + $0x168] sm:$0xf]
      %v348 = vld [vmem:[%s1 + $0x16c] sm:$0xf]
      %v349 = vld [vmem:[%s1 + $0x170] sm:$0xf]
      %v350 = vld [vmem:[%s1 + $0x174] sm:$0xf]
      %v351 = vld [vmem:[%s1 + $0x178] sm:$0xf]
      %v352 = vld [vmem:[%s1 + $0x17c] sm:$0xf]
      %v353 = vld [vmem:[%s1 + $0x180] sm:$0xf]
      %v354 = vld [vmem:[%s1 + $0x184] sm:$0xf]
      %v355 = vld [vmem:[%s1 + $0x188] sm:$0xf]
      %v356 = vld [vmem:[%s1 + $0x18c] sm:$0xf]
      %v357 = vld [vmem:[%s1 + $0x190] sm:$0xf]
      %v358 = vld [vmem:[%s1 + $0x194] sm:$0xf]
      %v359 = vld [vmem:[%s1 + $0x198] sm:$0xf]
      %v360 = vld [vmem:[%s1 + $0x19c] sm:$0xf]
      %v361 = vld [vmem:[%s1 + $0x1a0] sm:$0xf]
      %v362 = vld [vmem:[%s1 + $0x1a4] sm:$0xf]
      %v363 = vld [vmem:[%s1 + $0x1a8] sm:$0xf]
      %v364 = vld [vmem:[%s1 + $0x1ac] sm:$0xf]
      %v365 = vld [vmem:[%s1 + $0x1b0] sm:$0xf]
      %v366 = vld [vmem:[%s1 + $0x1b4] sm:$0xf]
      %v367 = vld [vmem:[%s1 + $0x1b8] sm:$0xf]
      %v368 = vld [vmem:[%s1 + $0x1bc] sm:$0xf]
      %v369 = vld [vmem:[%s1 + $0x1c0] sm:$0xf]
      %v370 = vld [vmem:[%s1 + $0x1c4] sm:$0xf]
      %v371 = vld [vmem:[%s1 + $0x1c8] sm:$0xf]
      %v372 = vld [vmem:[%s1 + $0x1cc] sm:$0xf]
      %v373 = vld [vmem:[%s1 + $0x1d0] sm:$0xf]
      %v374 = vld [vmem:[%s1 + $0x1d4] sm:$0xf]
      %v375 = vld [vmem:[%s1 + $0x1d8] sm:$0xf]
      %v376 = vld [vmem:[%s1 + $0x1dc] sm:$0xf]
      %v377 = vld [vmem:[%s1 + $0x1e0] sm:$0xf]
      %v378 = vld [vmem:[%s1 + $0x1e4] sm:$0xf]
      %v379 = vld [vmem:[%s1 + $0x1e8] sm:$0xf]
      %v380 = vld [vmem:[%s1 + $0x1ec] sm:$0xf]
      %v381 = vld [vmem:[%s1 + $0x1f0] sm:$0xf]
      %v382 = vld [vmem:[%s1 + $0x1f4] sm:$0xf]
      %v383 = vld [vmem:[%s1 + $0x1f8] sm:$0xf]
      %v384 = vld [vmem:[%s1 + $0x1fc] sm:$0xf]
      %v385 = vld [vmem:[%s1 + $0x200] sm:$0xf]
      %v386 = vld [vmem:[%s1 + $0x204] sm:$0xf]
      %v387 = vld [vmem:[%s1 + $0x208] sm:$0xf]
      %v388 = vld [vmem:[%s1 + $0x20c] sm:$0xf]
      %v389 = vld [vmem:[%s1 + $0x210] sm:$0xf]
      %v390 = vld [vmem:[%s1 + $0x214] sm:$0xf]
      %v391 = vld [vmem:[%s1 + $0x218] sm:$0xf]
      %v392 = vld [vmem:[%s1 + $0x21c] sm:$0xf]
      %v393 = vld [vmem:[%s1 + $0x220] sm:$0xf]
      %v394 = vld [vmem:[%s1 + $0x224] sm:$0xf]
      %v395 = vld [vmem:[%s1 + $0x228] sm:$0xf]
      %v396 = vld [vmem:[%s1 + $0x22c] sm:$0xf]
      %v397 = vld [vmem:[%s1 + $0x230] sm:$0xf]
      %v398 = vld [vmem:[%s1 + $0x234] sm:$0xf]
      %v399 = vld [vmem:[%s1 + $0x238] sm:$0xf]
      %v400 = vld [vmem:[%s1 + $0x23c] sm:$0xf]
      %v401 = vld [vmem:[%s2] sm:$0x1]
      %v403 = vperm.slane %v401, 0
      %v485 = vunpack.c.l.b16 %v177
      %v486 = vunpack.c.h.b16 %v177
      %v487 = vunpack.c.l.b16 %v178
      %v488 = vunpack.c.h.b16 %v178
      %v489 = vunpack.c.l.b16 %v179
      %v490 = vunpack.c.h.b16 %v179
      %v491 = vunpack.c.l.b16 %v180
      %v492 = vunpack.c.h.b16 %v180
      %v493 = vunpack.c.l.b16 %v181
      %v494 = vunpack.c.l.b16 %v182
      %v495 = vunpack.c.h.b16 %v182
      %v496 = vunpack.c.l.b16 %v183
      %v497 = vunpack.c.h.b16 %v183
      %v498 = vunpack.c.l.b16 %v184
      %v499 = vunpack.c.h.b16 %v184
      %v500 = vunpack.c.l.b16 %v185
      %v501 = vunpack.c.h.b16 %v185
      %v502 = vunpack.c.l.b16 %v186
      %v503 = vunpack.c.l.b16 %v187
      %v504 = vunpack.c.h.b16 %v187
      %v505 = vunpack.c.l.b16 %v188
      %v506 = vunpack.c.h.b16 %v188
      %v507 = vunpack.c.l.b16 %v189
      %v508 = vunpack.c.h.b16 %v189
      %v509 = vunpack.c.l.b16 %v190
      %v510 = vunpack.c.h.b16 %v190
      %v511 = vunpack.c.l.b16 %v191
      %v512 = vunpack.c.l.b16 %v192
      %v513 = vunpack.c.h.b16 %v192
      %v514 = vunpack.c.l.b16 %v193
      %v515 = vunpack.c.h.b16 %v193
      %v516 = vunpack.c.l.b16 %v194
      %v517 = vunpack.c.h.b16 %v194
      %v518 = vunpack.c.l.b16 %v195
      %v519 = vunpack.c.h.b16 %v195
      %v520 = vunpack.c.l.b16 %v196
      %v521 = vunpack.c.l.b16 %v197
      %v522 = vunpack.c.h.b16 %v197
      %v523 = vunpack.c.l.b16 %v198
      %v524 = vunpack.c.h.b16 %v198
      %v525 = vunpack.c.l.b16 %v199
      %v526 = vunpack.c.h.b16 %v199
      %v527 = vunpack.c.l.b16 %v200
      %v528 = vunpack.c.h.b16 %v200
      %v529 = vunpack.c.l.b16 %v201
      %v530 = vunpack.c.l.b16 %v202
      %v531 = vunpack.c.h.b16 %v202
      %v532 = vunpack.c.l.b16 %v203
      %v533 = vunpack.c.h.b16 %v203
      %v534 = vunpack.c.l.b16 %v204
      %v535 = vunpack.c.h.b16 %v204
      %v536 = vunpack.c.l.b16 %v205
      %v537 = vunpack.c.h.b16 %v205
      %v538 = vunpack.c.l.b16 %v206
      %v539 = vunpack.c.l.b16 %v207
      %v540 = vunpack.c.h.b16 %v207
      %v541 = vunpack.c.l.b16 %v208
      %v542 = vunpack.c.h.b16 %v208
      %v543 = vunpack.c.l.b16 %v209
      %v544 = vunpack.c.h.b16 %v209
      %v545 = vunpack.c.l.b16 %v210
      %v546 = vunpack.c.h.b16 %v210
      %v547 = vunpack.c.l.b16 %v211
      %v548 = vunpack.c.l.b16 %v212
      %v549 = vunpack.c.h.b16 %v212
      %v550 = vunpack.c.l.b16 %v213
      %v551 = vunpack.c.h.b16 %v213
      %v552 = vunpack.c.l.b16 %v214
      %v553 = vunpack.c.h.b16 %v214
      %v554 = vunpack.c.l.b16 %v215
      %v555 = vunpack.c.h.b16 %v215
      %v556 = vunpack.c.l.b16 %v216
      %v557 = vunpack.c.l.b16 %v217
      %v558 = vunpack.c.h.b16 %v217
      %v559 = vunpack.c.l.b16 %v218
      %v560 = vunpack.c.h.b16 %v218
      %v561 = vunpack.c.l.b16 %v219
      %v562 = vunpack.c.h.b16 %v219
      %v563 = vunpack.c.l.b16 %v220
      %v564 = vunpack.c.h.b16 %v220
      %v565 = vunpack.c.l.b16 %v221
      %v566 = vunpack.c.l.b16 %v222
      %v567 = vunpack.c.h.b16 %v222
      %v568 = vunpack.c.l.b16 %v223
      %v569 = vunpack.c.h.b16 %v223
      %v570 = vunpack.c.l.b16 %v224
      %v571 = vunpack.c.h.b16 %v224
      %v572 = vunpack.c.l.b16 %v225
      %v573 = vunpack.c.h.b16 %v225
      %v574 = vunpack.c.l.b16 %v226
      %v575 = vunpack.c.l.b16 %v227
      %v576 = vunpack.c.h.b16 %v227
      %v577 = vunpack.c.l.b16 %v228
      %v578 = vunpack.c.h.b16 %v228
      %v579 = vunpack.c.l.b16 %v229
      %v580 = vunpack.c.h.b16 %v229
      %v581 = vunpack.c.l.b16 %v230
      %v582 = vunpack.c.h.b16 %v230
      %v583 = vunpack.c.l.b16 %v231
      %v584 = vunpack.c.l.b16 %v232
      %v585 = vunpack.c.h.b16 %v232
      %v586 = vunpack.c.l.b16 %v233
      %v587 = vunpack.c.h.b16 %v233
      %v588 = vunpack.c.l.b16 %v234
      %v589 = vunpack.c.h.b16 %v234
      %v590 = vunpack.c.l.b16 %v235
      %v591 = vunpack.c.h.b16 %v235
      %v592 = vunpack.c.l.b16 %v236
      %v593 = vunpack.c.l.b16 %v237
      %v594 = vunpack.c.h.b16 %v237
      %v595 = vunpack.c.l.b16 %v238
      %v596 = vunpack.c.h.b16 %v238
      %v597 = vunpack.c.l.b16 %v239
      %v598 = vunpack.c.h.b16 %v239
      %v599 = vunpack.c.l.b16 %v240
      %v600 = vunpack.c.h.b16 %v240
      %v601 = vunpack.c.l.b16 %v241
      %v602 = vunpack.c.l.b16 %v242
      %v603 = vunpack.c.h.b16 %v242
      %v604 = vunpack.c.l.b16 %v243
      %v605 = vunpack.c.h.b16 %v243
      %v606 = vunpack.c.l.b16 %v244
      %v607 = vunpack.c.h.b16 %v244
      %v608 = vunpack.c.l.b16 %v245
      %v609 = vunpack.c.h.b16 %v245
      %v610 = vunpack.c.l.b16 %v246
      %v611 = vunpack.c.l.b16 %v247
      %v612 = vunpack.c.h.b16 %v247
      %v613 = vunpack.c.l.b16 %v248
      %v614 = vunpack.c.h.b16 %v248
      %v615 = vunpack.c.l.b16 %v249
      %v616 = vunpack.c.h.b16 %v249
      %v617 = vunpack.c.l.b16 %v250
      %v618 = vunpack.c.h.b16 %v250
      %v619 = vunpack.c.l.b16 %v251
      %v620 = vunpack.c.l.b16 %v252
      %v621 = vunpack.c.h.b16 %v252
      %v622 = vunpack.c.l.b16 %v253
      %v623 = vunpack.c.h.b16 %v253
      %v624 = vunpack.c.l.b16 %v254
      %v625 = vunpack.c.h.b16 %v254
      %v626 = vunpack.c.l.b16 %v255
      %v627 = vunpack.c.h.b16 %v255
      %v628 = vunpack.c.l.b16 %v256
      %v629 = vpack.c.b16 %v494, %v485
      %v630 = vpack.c.b16 %v495, %v486
      %v631 = vpack.c.b16 %v496, %v487
      %v632 = vpack.c.b16 %v497, %v488
      %v633 = vpack.c.b16 %v498, %v489
      %v634 = vpack.c.b16 %v499, %v490
      %v635 = vpack.c.b16 %v500, %v491
      %v636 = vpack.c.b16 %v501, %v492
      %v637 = vpack.c.b16 %v502, %v493
      %v638 = vpack.c.b16 %v512, %v503
      %v639 = vpack.c.b16 %v513, %v504
      %v640 = vpack.c.b16 %v514, %v505
      %v641 = vpack.c.b16 %v515, %v506
      %v642 = vpack.c.b16 %v516, %v507
      %v643 = vpack.c.b16 %v517, %v508
      %v644 = vpack.c.b16 %v518, %v509
      %v645 = vpack.c.b16 %v519, %v510
      %v646 = vpack.c.b16 %v520, %v511
      %v647 = vpack.c.b16 %v530, %v521
      %v648 = vpack.c.b16 %v531, %v522
      %v649 = vpack.c.b16 %v532, %v523
      %v650 = vpack.c.b16 %v533, %v524
      %v651 = vpack.c.b16 %v534, %v525
      %v652 = vpack.c.b16 %v535, %v526
      %v653 = vpack.c.b16 %v536, %v527
      %v654 = vpack.c.b16 %v537, %v528
      %v655 = vpack.c.b16 %v538, %v529
      %v656 = vpack.c.b16 %v548, %v539
      %v657 = vpack.c.b16 %v549, %v540
      %v658 = vpack.c.b16 %v550, %v541
      %v659 = vpack.c.b16 %v551, %v542
      %v660 = vpack.c.b16 %v552, %v543
      %v661 = vpack.c.b16 %v553, %v544
      %v662 = vpack.c.b16 %v554, %v545
      %v663 = vpack.c.b16 %v555, %v546
      %v664 = vpack.c.b16 %v556, %v547
      %v665 = vpack.c.b16 %v566, %v557
      %v666 = vpack.c.b16 %v567, %v558
      %v667 = vpack.c.b16 %v568, %v559
      %v668 = vpack.c.b16 %v569, %v560
      %v669 = vpack.c.b16 %v570, %v561
      %v670 = vpack.c.b16 %v571, %v562
      %v671 = vpack.c.b16 %v572, %v563
      %v672 = vpack.c.b16 %v573, %v564
      %v673 = vpack.c.b16 %v574, %v565
      %v674 = vpack.c.b16 %v584, %v575
      %v675 = vpack.c.b16 %v585, %v576
      %v676 = vpack.c.b16 %v586, %v577
      %v677 = vpack.c.b16 %v587, %v578
      %v678 = vpack.c.b16 %v588, %v579
      %v679 = vpack.c.b16 %v589, %v580
      %v680 = vpack.c.b16 %v590, %v581
      %v681 = vpack.c.b16 %v591, %v582
      %v682 = vpack.c.b16 %v592, %v583
      %v683 = vpack.c.b16 %v602, %v593
      %v684 = vpack.c.b16 %v603, %v594
      %v685 = vpack.c.b16 %v604, %v595
      %v686 = vpack.c.b16 %v605, %v596
      %v687 = vpack.c.b16 %v606, %v597
      %v688 = vpack.c.b16 %v607, %v598
      %v689 = vpack.c.b16 %v608, %v599
      %v690 = vpack.c.b16 %v609, %v600
      %v691 = vpack.c.b16 %v610, %v601
      %v692 = vpack.c.b16 %v620, %v611
      %v693 = vpack.c.b16 %v621, %v612
      %v694 = vpack.c.b16 %v622, %v613
      %v695 = vpack.c.b16 %v623, %v614
      %v696 = vpack.c.b16 %v624, %v615
      %v697 = vpack.c.b16 %v625, %v616
      %v698 = vpack.c.b16 %v626, %v617
      %v699 = vpack.c.b16 %v627, %v618
      %v700 = vpack.c.b16 %v628, %v619
      %v917 = vunpack.c.l.b16 %v257
      %v918 = vunpack.c.l.b16 %v258
      %v919 = vunpack.c.l.b16 %v259
      %v920 = vunpack.c.l.b16 %v260
      %v921 = vunpack.c.l.b16 %v261
      %v922 = vunpack.c.l.b16 %v262
      %v923 = vunpack.c.l.b16 %v263
      %v924 = vunpack.c.l.b16 %v264
      %v925 = vunpack.c.l.b16 %v265
      %v926 = vunpack.c.l.b16 %v266
      %v927 = vunpack.c.l.b16 %v267
      %v928 = vunpack.c.l.b16 %v268
      %v929 = vunpack.c.l.b16 %v269
      %v930 = vunpack.c.l.b16 %v270
      %v931 = vunpack.c.l.b16 %v271
      %v932 = vunpack.c.l.b16 %v272
      %v933 = vunpack.c.l.b16 %v273
      %v934 = vunpack.c.l.b16 %v274
      %v935 = vunpack.c.l.b16 %v275
      %v936 = vunpack.c.l.b16 %v276
      %v937 = vunpack.c.l.b16 %v277
      %v938 = vunpack.c.l.b16 %v278
      %v939 = vunpack.c.l.b16 %v279
      %v940 = vunpack.c.l.b16 %v280
      %v941 = vunpack.c.l.b16 %v281
      %v942 = vunpack.c.l.b16 %v282
      %v943 = vunpack.c.l.b16 %v283
      %v944 = vunpack.c.l.b16 %v284
      %v945 = vunpack.c.l.b16 %v285
      %v946 = vunpack.c.l.b16 %v286
      %v947 = vunpack.c.l.b16 %v287
      %v948 = vunpack.c.l.b16 %v288
      %v949 = vunpack.c.l.b16 %v289
      %v950 = vunpack.c.l.b16 %v290
      %v951 = vunpack.c.l.b16 %v291
      %v952 = vunpack.c.l.b16 %v292
      %v953 = vunpack.c.l.b16 %v293
      %v954 = vunpack.c.l.b16 %v294
      %v955 = vunpack.c.l.b16 %v295
      %v956 = vunpack.c.l.b16 %v296
      %v957 = vunpack.c.l.b16 %v297
      %v958 = vunpack.c.l.b16 %v298
      %v959 = vunpack.c.l.b16 %v299
      %v960 = vunpack.c.l.b16 %v300
      %v961 = vunpack.c.l.b16 %v301
      %v962 = vunpack.c.l.b16 %v302
      %v963 = vunpack.c.l.b16 %v303
      %v964 = vunpack.c.l.b16 %v304
      %v965 = vunpack.c.l.b16 %v305
      %v966 = vunpack.c.l.b16 %v306
      %v967 = vunpack.c.l.b16 %v307
      %v968 = vunpack.c.l.b16 %v308
      %v969 = vunpack.c.l.b16 %v309
      %v970 = vunpack.c.l.b16 %v310
      %v971 = vunpack.c.l.b16 %v311
      %v972 = vunpack.c.l.b16 %v312
      %v973 = vunpack.c.l.b16 %v313
      %v974 = vunpack.c.l.b16 %v314
      %v975 = vunpack.c.l.b16 %v315
      %v976 = vunpack.c.l.b16 %v316
      %v977 = vunpack.c.l.b16 %v317
      %v978 = vunpack.c.l.b16 %v318
      %v979 = vunpack.c.l.b16 %v319
      %v980 = vunpack.c.l.b16 %v320
      %v981 = vunpack.c.l.b16 %v321
      %v982 = vunpack.c.l.b16 %v322
      %v983 = vunpack.c.l.b16 %v323
      %v984 = vunpack.c.l.b16 %v324
      %v985 = vunpack.c.l.b16 %v325
      %v986 = vunpack.c.l.b16 %v326
      %v987 = vunpack.c.l.b16 %v327
      %v988 = vunpack.c.l.b16 %v328
      %v989 = vunpack.c.l.b16 %v329
      %v990 = vunpack.c.l.b16 %v330
      %v991 = vunpack.c.l.b16 %v331
      %v992 = vunpack.c.l.b16 %v332
      %v993 = vunpack.c.l.b16 %v333
      %v994 = vunpack.c.l.b16 %v334
      %v995 = vunpack.c.l.b16 %v335
      %v996 = vunpack.c.l.b16 %v336
      %v997 = vunpack.c.l.b16 %v337
      %v998 = vunpack.c.l.b16 %v338
      %v999 = vunpack.c.l.b16 %v339
      %v1000 = vunpack.c.l.b16 %v340
      %v1001 = vunpack.c.l.b16 %v341
      %v1002 = vunpack.c.l.b16 %v342
      %v1003 = vunpack.c.l.b16 %v343
      %v1004 = vunpack.c.l.b16 %v344
      %v1005 = vunpack.c.l.b16 %v345
      %v1006 = vunpack.c.l.b16 %v346
      %v1007 = vunpack.c.l.b16 %v347
      %v1008 = vunpack.c.l.b16 %v348
      %v1009 = vunpack.c.l.b16 %v349
      %v1010 = vunpack.c.l.b16 %v350
      %v1011 = vunpack.c.l.b16 %v351
      %v1012 = vunpack.c.l.b16 %v352
      %v1013 = vunpack.c.l.b16 %v353
      %v1014 = vunpack.c.l.b16 %v354
      %v1015 = vunpack.c.l.b16 %v355
      %v1016 = vunpack.c.l.b16 %v356
      %v1017 = vunpack.c.l.b16 %v357
      %v1018 = vunpack.c.l.b16 %v358
      %v1019 = vunpack.c.l.b16 %v359
      %v1020 = vunpack.c.l.b16 %v360
      %v1021 = vunpack.c.l.b16 %v361
      %v1022 = vunpack.c.l.b16 %v362
      %v1023 = vunpack.c.l.b16 %v363
      %v1024 = vunpack.c.l.b16 %v364
      %v1025 = vunpack.c.l.b16 %v365
      %v1026 = vunpack.c.l.b16 %v366
      %v1027 = vunpack.c.l.b16 %v367
      %v1028 = vunpack.c.l.b16 %v368
      %v1029 = vunpack.c.l.b16 %v369
      %v1030 = vunpack.c.l.b16 %v370
      %v1031 = vunpack.c.l.b16 %v371
      %v1032 = vunpack.c.l.b16 %v372
      %v1033 = vunpack.c.l.b16 %v373
      %v1034 = vunpack.c.l.b16 %v374
      %v1035 = vunpack.c.l.b16 %v375
      %v1036 = vunpack.c.l.b16 %v376
      %v1037 = vunpack.c.l.b16 %v377
      %v1038 = vunpack.c.l.b16 %v378
      %v1039 = vunpack.c.l.b16 %v379
      %v1040 = vunpack.c.l.b16 %v380
      %v1041 = vunpack.c.l.b16 %v381
      %v1042 = vunpack.c.l.b16 %v382
      %v1043 = vunpack.c.l.b16 %v383
      %v1044 = vunpack.c.l.b16 %v384
      %v1045 = vunpack.c.l.b16 %v385
      %v1046 = vunpack.c.l.b16 %v386
      %v1047 = vunpack.c.l.b16 %v387
      %v1048 = vunpack.c.l.b16 %v388
      %v1049 = vunpack.c.l.b16 %v389
      %v1050 = vunpack.c.l.b16 %v390
      %v1051 = vunpack.c.l.b16 %v391
      %v1052 = vunpack.c.l.b16 %v392
      %v1053 = vunpack.c.l.b16 %v393
      %v1054 = vunpack.c.l.b16 %v394
      %v1055 = vunpack.c.l.b16 %v395
      %v1056 = vunpack.c.l.b16 %v396
      %v1057 = vunpack.c.l.b16 %v397
      %v1058 = vunpack.c.l.b16 %v398
      %v1059 = vunpack.c.l.b16 %v399
      %v1060 = vunpack.c.l.b16 %v400
      %v1061 = vpack.c.b16 %v918, %v917
      %v1062 = vpack.c.b16 %v920, %v919
      %v1063 = vpack.c.b16 %v922, %v921
      %v1064 = vpack.c.b16 %v924, %v923
      %v1065 = vpack.c.b16 %v926, %v925
      %v1066 = vpack.c.b16 %v928, %v927
      %v1067 = vpack.c.b16 %v930, %v929
      %v1068 = vpack.c.b16 %v932, %v931
      %v1069 = vpack.c.b16 %v934, %v933
      %v1070 = vpack.c.b16 %v936, %v935
      %v1071 = vpack.c.b16 %v938, %v937
      %v1072 = vpack.c.b16 %v940, %v939
      %v1073 = vpack.c.b16 %v942, %v941
      %v1074 = vpack.c.b16 %v944, %v943
      %v1075 = vpack.c.b16 %v946, %v945
      %v1076 = vpack.c.b16 %v948, %v947
      %v1077 = vpack.c.b16 %v950, %v949
      %v1078 = vpack.c.b16 %v952, %v951
      %v1079 = vpack.c.b16 %v954, %v953
      %v1080 = vpack.c.b16 %v956, %v955
      %v1081 = vpack.c.b16 %v958, %v957
      %v1082 = vpack.c.b16 %v960, %v959
      %v1083 = vpack.c.b16 %v962, %v961
      %v1084 = vpack.c.b16 %v964, %v963
      %v1085 = vpack.c.b16 %v966, %v965
      %v1086 = vpack.c.b16 %v968, %v967
      %v1087 = vpack.c.b16 %v970, %v969
      %v1088 = vpack.c.b16 %v972, %v971
      %v1089 = vpack.c.b16 %v974, %v973
      %v1090 = vpack.c.b16 %v976, %v975
      %v1091 = vpack.c.b16 %v978, %v977
      %v1092 = vpack.c.b16 %v980, %v979
      %v1093 = vpack.c.b16 %v982, %v981
      %v1094 = vpack.c.b16 %v984, %v983
      %v1095 = vpack.c.b16 %v986, %v985
      %v1096 = vpack.c.b16 %v988, %v987
      %v1097 = vpack.c.b16 %v990, %v989
      %v1098 = vpack.c.b16 %v992, %v991
      %v1099 = vpack.c.b16 %v994, %v993
      %v1100 = vpack.c.b16 %v996, %v995
      %v1101 = vpack.c.b16 %v998, %v997
      %v1102 = vpack.c.b16 %v1000, %v999
      %v1103 = vpack.c.b16 %v1002, %v1001
      %v1104 = vpack.c.b16 %v1004, %v1003
      %v1105 = vpack.c.b16 %v1006, %v1005
      %v1106 = vpack.c.b16 %v1008, %v1007
      %v1107 = vpack.c.b16 %v1010, %v1009
      %v1108 = vpack.c.b16 %v1012, %v1011
      %v1109 = vpack.c.b16 %v1014, %v1013
      %v1110 = vpack.c.b16 %v1016, %v1015
      %v1111 = vpack.c.b16 %v1018, %v1017
      %v1112 = vpack.c.b16 %v1020, %v1019
      %v1113 = vpack.c.b16 %v1022, %v1021
      %v1114 = vpack.c.b16 %v1024, %v1023
      %v1115 = vpack.c.b16 %v1026, %v1025
      %v1116 = vpack.c.b16 %v1028, %v1027
      %v1117 = vpack.c.b16 %v1030, %v1029
      %v1118 = vpack.c.b16 %v1032, %v1031
      %v1119 = vpack.c.b16 %v1034, %v1033
      %v1120 = vpack.c.b16 %v1036, %v1035
      %v1121 = vpack.c.b16 %v1038, %v1037
      %v1122 = vpack.c.b16 %v1040, %v1039
      %v1123 = vpack.c.b16 %v1042, %v1041
      %v1124 = vpack.c.b16 %v1044, %v1043
      %v1125 = vpack.c.b16 %v1046, %v1045
      %v1126 = vpack.c.b16 %v1048, %v1047
      %v1127 = vpack.c.b16 %v1050, %v1049
      %v1128 = vpack.c.b16 %v1052, %v1051
      %v1129 = vpack.c.b16 %v1054, %v1053
      %v1130 = vpack.c.b16 %v1056, %v1055
      %v1131 = vpack.c.b16 %v1058, %v1057
      %v1132 = vpack.c.b16 %v1060, %v1059
      %1205 = vmatpush.bf16.msra.mxu0 %v1068
      %1206 = vmatpush.bf16.msra.mxu0 %v1067
      %1207 = vmatpush.bf16.msra.mxu0 %v1066
      %1208 = vmatpush.bf16.msra.mxu0 %v1065
      %1209 = vmatpush.bf16.msra.mxu0 %v1064
      %1210 = vmatpush.bf16.msra.mxu0 %v1063
      %1211 = vmatpush.bf16.msra.mxu0 %v1062
      %1212 = vmatpush.bf16.msra.mxu0 %v1061
      %1213 = vmatmul.bf16.gmra.mxu0 %v629
      %v1214 = vpop.f32.mrf.mxu0
      %v1215 = vadd.f32 %v403, %v1214
      %v1216 = vpop.f32.mrf.mxu0
      %v1217 = vadd.f32 %v403, %v1216
      %1218 = vmatmul.bf16.gmra.mxu0 %v638
      %v1219 = vpop.f32.mrf.mxu0
      %v1220 = vadd.f32 %v403, %v1219
      %v1221 = vpop.f32.mrf.mxu0
      %v1222 = vadd.f32 %v403, %v1221
      %1223 = vmatmul.bf16.gmra.mxu0 %v647
      %v1224 = vpop.f32.mrf.mxu0
      %v1225 = vadd.f32 %v403, %v1224
      %v1226 = vpop.f32.mrf.mxu0
      %v1227 = vadd.f32 %v403, %v1226
      %1228 = vmatmul.bf16.gmra.mxu0 %v656
      %v1229 = vpop.f32.mrf.mxu0
      %v1230 = vadd.f32 %v403, %v1229
      %v1231 = vpop.f32.mrf.mxu0
      %v1232 = vadd.f32 %v403, %v1231
      %1233 = vmatmul.bf16.gmra.mxu0 %v665
      %v1234 = vpop.f32.mrf.mxu0
      %v1235 = vadd.f32 %v403, %v1234
      %v1236 = vpop.f32.mrf.mxu0
      %v1237 = vadd.f32 %v403, %v1236
      %1238 = vmatmul.bf16.gmra.mxu0 %v674
      %v1239 = vpop.f32.mrf.mxu0
      %v1240 = vadd.f32 %v403, %v1239
      %v1241 = vpop.f32.mrf.mxu0
      %v1242 = vadd.f32 %v403, %v1241
      %1243 = vmatmul.bf16.gmra.mxu0 %v683
      %v1244 = vpop.f32.mrf.mxu0
      %v1245 = vadd.f32 %v403, %v1244
      %v1246 = vpop.f32.mrf.mxu0
      %v1247 = vadd.f32 %v403, %v1246
      %1248 = vmatmul.bf16.gmra.mxu0 %v692
      %v1249 = vpop.f32.mrf.mxu0
      %v1250 = vadd.f32 %v403, %v1249
      %v1251 = vpop.f32.mrf.mxu0
      %v1252 = vadd.f32 %v403, %v1251
      %1253 = vdwg.mxu0
      %1254 = vmatpush.bf16.msra.mxu0 %v1076
      %1255 = vmatpush.bf16.msra.mxu0 %v1075
      %1256 = vmatpush.bf16.msra.mxu0 %v1074
      %1257 = vmatpush.bf16.msra.mxu0 %v1073
      %1258 = vmatpush.bf16.msra.mxu0 %v1072
      %1259 = vmatpush.bf16.msra.mxu0 %v1071
      %1260 = vmatpush.bf16.msra.mxu0 %v1070
      %1261 = vmatpush.bf16.msra.mxu0 %v1069
      %1262 = vmatmul.bf16.gmra.mxu0 %v630
      %v1263 = vpop.f32.mrf.mxu0
      %v1264 = vadd.f32 %v1215, %v1263
      %v1265 = vpop.f32.mrf.mxu0
      %v1266 = vadd.f32 %v1217, %v1265
      %1267 = vmatmul.bf16.gmra.mxu0 %v639
      %v1268 = vpop.f32.mrf.mxu0
      %v1269 = vadd.f32 %v1220, %v1268
      %v1270 = vpop.f32.mrf.mxu0
      %v1271 = vadd.f32 %v1222, %v1270
      %1272 = vmatmul.bf16.gmra.mxu0 %v648
      %v1273 = vpop.f32.mrf.mxu0
      %v1274 = vadd.f32 %v1225, %v1273
      %v1275 = vpop.f32.mrf.mxu0
      %v1276 = vadd.f32 %v1227, %v1275
      %1277 = vmatmul.bf16.gmra.mxu0 %v657
      %v1278 = vpop.f32.mrf.mxu0
      %v1279 = vadd.f32 %v1230, %v1278
      %v1280 = vpop.f32.mrf.mxu0
      %v1281 = vadd.f32 %v1232, %v1280
      %1282 = vmatmul.bf16.gmra.mxu0 %v666
      %v1283 = vpop.f32.mrf.mxu0
      %v1284 = vadd.f32 %v1235, %v1283
      %v1285 = vpop.f32.mrf.mxu0
      %v1286 = vadd.f32 %v1237, %v1285
      %1287 = vmatmul.bf16.gmra.mxu0 %v675
      %v1288 = vpop.f32.mrf.mxu0
      %v1289 = vadd.f32 %v1240, %v1288
      %v1290 = vpop.f32.mrf.mxu0
      %v1291 = vadd.f32 %v1242, %v1290
      %1292 = vmatmul.bf16.gmra.mxu0 %v684
      %v1293 = vpop.f32.mrf.mxu0
      %v1294 = vadd.f32 %v1245, %v1293
      %v1295 = vpop.f32.mrf.mxu0
      %v1296 = vadd.f32 %v1247, %v1295
      %1297 = vmatmul.bf16.gmra.mxu0 %v693
      %v1298 = vpop.f32.mrf.mxu0
      %v1299 = vadd.f32 %v1250, %v1298
      %v1300 = vpop.f32.mrf.mxu0
      %v1301 = vadd.f32 %v1252, %v1300
      %1302 = vdwg.mxu0
      %1303 = vmatpush.bf16.msra.mxu0 %v1084
      %1304 = vmatpush.bf16.msra.mxu0 %v1083
      %1305 = vmatpush.bf16.msra.mxu0 %v1082
      %1306 = vmatpush.bf16.msra.mxu0 %v1081
      %1307 = vmatpush.bf16.msra.mxu0 %v1080
      %1308 = vmatpush.bf16.msra.mxu0 %v1079
      %1309 = vmatpush.bf16.msra.mxu0 %v1078
      %1310 = vmatpush.bf16.msra.mxu0 %v1077
      %1311 = vmatmul.bf16.gmra.mxu0 %v631
      %v1312 = vpop.f32.mrf.mxu0
      %v1313 = vadd.f32 %v1264, %v1312
      %v1314 = vpop.f32.mrf.mxu0
      %v1315 = vadd.f32 %v1266, %v1314
      %1316 = vmatmul.bf16.gmra.mxu0 %v640
      %v1317 = vpop.f32.mrf.mxu0
      %v1318 = vadd.f32 %v1269, %v1317
      %v1319 = vpop.f32.mrf.mxu0
      %v1320 = vadd.f32 %v1271, %v1319
      %1321 = vmatmul.bf16.gmra.mxu0 %v649
      %v1322 = vpop.f32.mrf.mxu0
      %v1323 = vadd.f32 %v1274, %v1322
      %v1324 = vpop.f32.mrf.mxu0
      %v1325 = vadd.f32 %v1276, %v1324
      %1326 = vmatmul.bf16.gmra.mxu0 %v658
      %v1327 = vpop.f32.mrf.mxu0
      %v1328 = vadd.f32 %v1279, %v1327
      %v1329 = vpop.f32.mrf.mxu0
      %v1330 = vadd.f32 %v1281, %v1329
      %1331 = vmatmul.bf16.gmra.mxu0 %v667
      %v1332 = vpop.f32.mrf.mxu0
      %v1333 = vadd.f32 %v1284, %v1332
      %v1334 = vpop.f32.mrf.mxu0
      %v1335 = vadd.f32 %v1286, %v1334
      %1336 = vmatmul.bf16.gmra.mxu0 %v676
      %v1337 = vpop.f32.mrf.mxu0
      %v1338 = vadd.f32 %v1289, %v1337
      %v1339 = vpop.f32.mrf.mxu0
      %v1340 = vadd.f32 %v1291, %v1339
      %1341 = vmatmul.bf16.gmra.mxu0 %v685
      %v1342 = vpop.f32.mrf.mxu0
      %v1343 = vadd.f32 %v1294, %v1342
      %v1344 = vpop.f32.mrf.mxu0
      %v1345 = vadd.f32 %v1296, %v1344
      %1346 = vmatmul.bf16.gmra.mxu0 %v694
      %v1347 = vpop.f32.mrf.mxu0
      %v1348 = vadd.f32 %v1299, %v1347
      %v1349 = vpop.f32.mrf.mxu0
      %v1350 = vadd.f32 %v1301, %v1349
      %1351 = vdwg.mxu0
      %1352 = vmatpush.bf16.msra.mxu0 %v1092
      %1353 = vmatpush.bf16.msra.mxu0 %v1091
      %1354 = vmatpush.bf16.msra.mxu0 %v1090
      %1355 = vmatpush.bf16.msra.mxu0 %v1089
      %1356 = vmatpush.bf16.msra.mxu0 %v1088
      %1357 = vmatpush.bf16.msra.mxu0 %v1087
      %1358 = vmatpush.bf16.msra.mxu0 %v1086
      %1359 = vmatpush.bf16.msra.mxu0 %v1085
      %1360 = vmatmul.bf16.gmra.mxu0 %v632
      %v1361 = vpop.f32.mrf.mxu0
      %v1362 = vadd.f32 %v1313, %v1361
      %v1363 = vpop.f32.mrf.mxu0
      %v1364 = vadd.f32 %v1315, %v1363
      %1365 = vmatmul.bf16.gmra.mxu0 %v641
      %v1366 = vpop.f32.mrf.mxu0
      %v1367 = vadd.f32 %v1318, %v1366
      %v1368 = vpop.f32.mrf.mxu0
      %v1369 = vadd.f32 %v1320, %v1368
      %1370 = vmatmul.bf16.gmra.mxu0 %v650
      %v1371 = vpop.f32.mrf.mxu0
      %v1372 = vadd.f32 %v1323, %v1371
      %v1373 = vpop.f32.mrf.mxu0
      %v1374 = vadd.f32 %v1325, %v1373
      %1375 = vmatmul.bf16.gmra.mxu0 %v659
      %v1376 = vpop.f32.mrf.mxu0
      %v1377 = vadd.f32 %v1328, %v1376
      %v1378 = vpop.f32.mrf.mxu0
      %v1379 = vadd.f32 %v1330, %v1378
      %1380 = vmatmul.bf16.gmra.mxu0 %v668
      %v1381 = vpop.f32.mrf.mxu0
      %v1382 = vadd.f32 %v1333, %v1381
      %v1383 = vpop.f32.mrf.mxu0
      %v1384 = vadd.f32 %v1335, %v1383
      %1385 = vmatmul.bf16.gmra.mxu0 %v677
      %v1386 = vpop.f32.mrf.mxu0
      %v1387 = vadd.f32 %v1338, %v1386
      %v1388 = vpop.f32.mrf.mxu0
      %v1389 = vadd.f32 %v1340, %v1388
      %1390 = vmatmul.bf16.gmra.mxu0 %v686
      %v1391 = vpop.f32.mrf.mxu0
      %v1392 = vadd.f32 %v1343, %v1391
      %v1393 = vpop.f32.mrf.mxu0
      %v1394 = vadd.f32 %v1345, %v1393
      %1395 = vmatmul.bf16.gmra.mxu0 %v695
      %v1396 = vpop.f32.mrf.mxu0
      %v1397 = vadd.f32 %v1348, %v1396
      %v1398 = vpop.f32.mrf.mxu0
      %v1399 = vadd.f32 %v1350, %v1398
      %1400 = vdwg.mxu0
      %1401 = vmatpush.bf16.msra.mxu0 %v1100
      %1402 = vmatpush.bf16.msra.mxu0 %v1099
      %1403 = vmatpush.bf16.msra.mxu0 %v1098
      %1404 = vmatpush.bf16.msra.mxu0 %v1097
      %1405 = vmatpush.bf16.msra.mxu0 %v1096
      %1406 = vmatpush.bf16.msra.mxu0 %v1095
      %1407 = vmatpush.bf16.msra.mxu0 %v1094
      %1408 = vmatpush.bf16.msra.mxu0 %v1093
      %1409 = vmatmul.bf16.gmra.mxu0 %v633
      %v1410 = vpop.f32.mrf.mxu0
      %v1411 = vadd.f32 %v1362, %v1410
      %v1412 = vpop.f32.mrf.mxu0
      %v1413 = vadd.f32 %v1364, %v1412
      %1414 = vmatmul.bf16.gmra.mxu0 %v642
      %v1415 = vpop.f32.mrf.mxu0
      %v1416 = vadd.f32 %v1367, %v1415
      %v1417 = vpop.f32.mrf.mxu0
      %v1418 = vadd.f32 %v1369, %v1417
      %1419 = vmatmul.bf16.gmra.mxu0 %v651
      %v1420 = vpop.f32.mrf.mxu0
      %v1421 = vadd.f32 %v1372, %v1420
      %v1422 = vpop.f32.mrf.mxu0
      %v1423 = vadd.f32 %v1374, %v1422
      %1424 = vmatmul.bf16.gmra.mxu0 %v660
      %v1425 = vpop.f32.mrf.mxu0
      %v1426 = vadd.f32 %v1377, %v1425
      %v1427 = vpop.f32.mrf.mxu0
      %v1428 = vadd.f32 %v1379, %v1427
      %1429 = vmatmul.bf16.gmra.mxu0 %v669
      %v1430 = vpop.f32.mrf.mxu0
      %v1431 = vadd.f32 %v1382, %v1430
      %v1432 = vpop.f32.mrf.mxu0
      %v1433 = vadd.f32 %v1384, %v1432
      %1434 = vmatmul.bf16.gmra.mxu0 %v678
      %v1435 = vpop.f32.mrf.mxu0
      %v1436 = vadd.f32 %v1387, %v1435
      %v1437 = vpop.f32.mrf.mxu0
      %v1438 = vadd.f32 %v1389, %v1437
      %1439 = vmatmul.bf16.gmra.mxu0 %v687
      %v1440 = vpop.f32.mrf.mxu0
      %v1441 = vadd.f32 %v1392, %v1440
      %v1442 = vpop.f32.mrf.mxu0
      %v1443 = vadd.f32 %v1394, %v1442
      %1444 = vmatmul.bf16.gmra.mxu0 %v696
      %v1445 = vpop.f32.mrf.mxu0
      %v1446 = vadd.f32 %v1397, %v1445
      %v1447 = vpop.f32.mrf.mxu0
      %v1448 = vadd.f32 %v1399, %v1447
      %1449 = vdwg.mxu0
      %1450 = vmatpush.bf16.msra.mxu0 %v1108
      %1451 = vmatpush.bf16.msra.mxu0 %v1107
      %1452 = vmatpush.bf16.msra.mxu0 %v1106
      %1453 = vmatpush.bf16.msra.mxu0 %v1105
      %1454 = vmatpush.bf16.msra.mxu0 %v1104
      %1455 = vmatpush.bf16.msra.mxu0 %v1103
      %1456 = vmatpush.bf16.msra.mxu0 %v1102
      %1457 = vmatpush.bf16.msra.mxu0 %v1101
      %1458 = vmatmul.bf16.gmra.mxu0 %v634
      %v1459 = vpop.f32.mrf.mxu0
      %v1460 = vadd.f32 %v1411, %v1459
      %v1461 = vpop.f32.mrf.mxu0
      %v1462 = vadd.f32 %v1413, %v1461
      %1463 = vmatmul.bf16.gmra.mxu0 %v643
      %v1464 = vpop.f32.mrf.mxu0
      %v1465 = vadd.f32 %v1416, %v1464
      %v1466 = vpop.f32.mrf.mxu0
      %v1467 = vadd.f32 %v1418, %v1466
      %1468 = vmatmul.bf16.gmra.mxu0 %v652
      %v1469 = vpop.f32.mrf.mxu0
      %v1470 = vadd.f32 %v1421, %v1469
      %v1471 = vpop.f32.mrf.mxu0
      %v1472 = vadd.f32 %v1423, %v1471
      %1473 = vmatmul.bf16.gmra.mxu0 %v661
      %v1474 = vpop.f32.mrf.mxu0
      %v1475 = vadd.f32 %v1426, %v1474
      %v1476 = vpop.f32.mrf.mxu0
      %v1477 = vadd.f32 %v1428, %v1476
      %1478 = vmatmul.bf16.gmra.mxu0 %v670
      %v1479 = vpop.f32.mrf.mxu0
      %v1480 = vadd.f32 %v1431, %v1479
      %v1481 = vpop.f32.mrf.mxu0
      %v1482 = vadd.f32 %v1433, %v1481
      %1483 = vmatmul.bf16.gmra.mxu0 %v679
      %v1484 = vpop.f32.mrf.mxu0
      %v1485 = vadd.f32 %v1436, %v1484
      %v1486 = vpop.f32.mrf.mxu0
      %v1487 = vadd.f32 %v1438, %v1486
      %1488 = vmatmul.bf16.gmra.mxu0 %v688
      %v1489 = vpop.f32.mrf.mxu0
      %v1490 = vadd.f32 %v1441, %v1489
      %v1491 = vpop.f32.mrf.mxu0
      %v1492 = vadd.f32 %v1443, %v1491
      %1493 = vmatmul.bf16.gmra.mxu0 %v697
      %v1494 = vpop.f32.mrf.mxu0
      %v1495 = vadd.f32 %v1446, %v1494
      %v1496 = vpop.f32.mrf.mxu0
      %v1497 = vadd.f32 %v1448, %v1496
      %1498 = vdwg.mxu0
      %1499 = vmatpush.bf16.msra.mxu0 %v1116
      %1500 = vmatpush.bf16.msra.mxu0 %v1115
      %1501 = vmatpush.bf16.msra.mxu0 %v1114
      %1502 = vmatpush.bf16.msra.mxu0 %v1113
      %1503 = vmatpush.bf16.msra.mxu0 %v1112
      %1504 = vmatpush.bf16.msra.mxu0 %v1111
      %1505 = vmatpush.bf16.msra.mxu0 %v1110
      %1506 = vmatpush.bf16.msra.mxu0 %v1109
      %1507 = vmatmul.bf16.gmra.mxu0 %v635
      %v1508 = vpop.f32.mrf.mxu0
      %v1509 = vadd.f32 %v1460, %v1508
      %v1510 = vpop.f32.mrf.mxu0
      %v1511 = vadd.f32 %v1462, %v1510
      %1512 = vmatmul.bf16.gmra.mxu0 %v644
      %v1513 = vpop.f32.mrf.mxu0
      %v1514 = vadd.f32 %v1465, %v1513
      %v1515 = vpop.f32.mrf.mxu0
      %v1516 = vadd.f32 %v1467, %v1515
      %1517 = vmatmul.bf16.gmra.mxu0 %v653
      %v1518 = vpop.f32.mrf.mxu0
      %v1519 = vadd.f32 %v1470, %v1518
      %v1520 = vpop.f32.mrf.mxu0
      %v1521 = vadd.f32 %v1472, %v1520
      %1522 = vmatmul.bf16.gmra.mxu0 %v662
      %v1523 = vpop.f32.mrf.mxu0
      %v1524 = vadd.f32 %v1475, %v1523
      %v1525 = vpop.f32.mrf.mxu0
      %v1526 = vadd.f32 %v1477, %v1525
      %1527 = vmatmul.bf16.gmra.mxu0 %v671
      %v1528 = vpop.f32.mrf.mxu0
      %v1529 = vadd.f32 %v1480, %v1528
      %v1530 = vpop.f32.mrf.mxu0
      %v1531 = vadd.f32 %v1482, %v1530
      %1532 = vmatmul.bf16.gmra.mxu0 %v680
      %v1533 = vpop.f32.mrf.mxu0
      %v1534 = vadd.f32 %v1485, %v1533
      %v1535 = vpop.f32.mrf.mxu0
      %v1536 = vadd.f32 %v1487, %v1535
      %1537 = vmatmul.bf16.gmra.mxu0 %v689
      %v1538 = vpop.f32.mrf.mxu0
      %v1539 = vadd.f32 %v1490, %v1538
      %v1540 = vpop.f32.mrf.mxu0
      %v1541 = vadd.f32 %v1492, %v1540
      %1542 = vmatmul.bf16.gmra.mxu0 %v698
      %v1543 = vpop.f32.mrf.mxu0
      %v1544 = vadd.f32 %v1495, %v1543
      %v1545 = vpop.f32.mrf.mxu0
      %v1546 = vadd.f32 %v1497, %v1545
      %1547 = vdwg.mxu0
      %1548 = vmatpush.bf16.msra.mxu0 %v1124
      %1549 = vmatpush.bf16.msra.mxu0 %v1123
      %1550 = vmatpush.bf16.msra.mxu0 %v1122
      %1551 = vmatpush.bf16.msra.mxu0 %v1121
      %1552 = vmatpush.bf16.msra.mxu0 %v1120
      %1553 = vmatpush.bf16.msra.mxu0 %v1119
      %1554 = vmatpush.bf16.msra.mxu0 %v1118
      %1555 = vmatpush.bf16.msra.mxu0 %v1117
      %1556 = vmatmul.bf16.gmra.mxu0 %v636
      %v1557 = vpop.f32.mrf.mxu0
      %v1558 = vadd.f32 %v1509, %v1557
      %v1559 = vpop.f32.mrf.mxu0
      %v1560 = vadd.f32 %v1511, %v1559
      %1561 = vmatmul.bf16.gmra.mxu0 %v645
      %v1562 = vpop.f32.mrf.mxu0
      %v1563 = vadd.f32 %v1514, %v1562
      %v1564 = vpop.f32.mrf.mxu0
      %v1565 = vadd.f32 %v1516, %v1564
      %1566 = vmatmul.bf16.gmra.mxu0 %v654
      %v1567 = vpop.f32.mrf.mxu0
      %v1568 = vadd.f32 %v1519, %v1567
      %v1569 = vpop.f32.mrf.mxu0
      %v1570 = vadd.f32 %v1521, %v1569
      %1571 = vmatmul.bf16.gmra.mxu0 %v663
      %v1572 = vpop.f32.mrf.mxu0
      %v1573 = vadd.f32 %v1524, %v1572
      %v1574 = vpop.f32.mrf.mxu0
      %v1575 = vadd.f32 %v1526, %v1574
      %1576 = vmatmul.bf16.gmra.mxu0 %v672
      %v1577 = vpop.f32.mrf.mxu0
      %v1578 = vadd.f32 %v1529, %v1577
      %v1579 = vpop.f32.mrf.mxu0
      %v1580 = vadd.f32 %v1531, %v1579
      %1581 = vmatmul.bf16.gmra.mxu0 %v681
      %v1582 = vpop.f32.mrf.mxu0
      %v1583 = vadd.f32 %v1534, %v1582
      %v1584 = vpop.f32.mrf.mxu0
      %v1585 = vadd.f32 %v1536, %v1584
      %1586 = vmatmul.bf16.gmra.mxu0 %v690
      %v1587 = vpop.f32.mrf.mxu0
      %v1588 = vadd.f32 %v1539, %v1587
      %v1589 = vpop.f32.mrf.mxu0
      %v1590 = vadd.f32 %v1541, %v1589
      %1591 = vmatmul.bf16.gmra.mxu0 %v699
      %v1592 = vpop.f32.mrf.mxu0
      %v1593 = vadd.f32 %v1544, %v1592
      %v1594 = vpop.f32.mrf.mxu0
      %v1595 = vadd.f32 %v1546, %v1594
      %1596 = vdwg.mxu0
      %1597 = vmatpush.bf16.msra.mxu0 %v1132
      %1598 = vmatpush.bf16.msra.mxu0 %v1131
      %1599 = vmatpush.bf16.msra.mxu0 %v1130
      %1600 = vmatpush.bf16.msra.mxu0 %v1129
      %1601 = vmatpush.bf16.msra.mxu0 %v1128
      %1602 = vmatpush.bf16.msra.mxu0 %v1127
      %1603 = vmatpush.bf16.msra.mxu0 %v1126
      %1604 = vmatpush.bf16.msra.mxu0 %v1125
      %1605 = vmatmul.bf16.gmra.mxu0 %v637
      %v1606 = vpop.f32.mrf.mxu0
      %v1607 = vadd.f32 %v1558, %v1606
      %v1608 = vpop.f32.mrf.mxu0
      %v1609 = vadd.f32 %v1560, %v1608
      %1610 = vmatmul.bf16.gmra.mxu0 %v646
      %v1611 = vpop.f32.mrf.mxu0
      %v1612 = vadd.f32 %v1563, %v1611
      %v1613 = vpop.f32.mrf.mxu0
      %v1614 = vadd.f32 %v1565, %v1613
      %1615 = vmatmul.bf16.gmra.mxu0 %v655
      %v1616 = vpop.f32.mrf.mxu0
      %v1617 = vadd.f32 %v1568, %v1616
      %v1618 = vpop.f32.mrf.mxu0
      %v1619 = vadd.f32 %v1570, %v1618
      %1620 = vmatmul.bf16.gmra.mxu0 %v664
      %v1621 = vpop.f32.mrf.mxu0
      %v1622 = vadd.f32 %v1573, %v1621
      %v1623 = vpop.f32.mrf.mxu0
      %v1624 = vadd.f32 %v1575, %v1623
      %1625 = vmatmul.bf16.gmra.mxu0 %v673
      %v1626 = vpop.f32.mrf.mxu0
      %v1627 = vadd.f32 %v1578, %v1626
      %v1628 = vpop.f32.mrf.mxu0
      %v1629 = vadd.f32 %v1580, %v1628
      %1630 = vmatmul.bf16.gmra.mxu0 %v682
      %v1631 = vpop.f32.mrf.mxu0
      %v1632 = vadd.f32 %v1583, %v1631
      %v1633 = vpop.f32.mrf.mxu0
      %v1634 = vadd.f32 %v1585, %v1633
      %1635 = vmatmul.bf16.gmra.mxu0 %v691
      %v1636 = vpop.f32.mrf.mxu0
      %v1637 = vadd.f32 %v1588, %v1636
      %v1638 = vpop.f32.mrf.mxu0
      %v1639 = vadd.f32 %v1590, %v1638
      %1640 = vmatmul.bf16.gmra.mxu0 %v700
      %v1641 = vpop.f32.mrf.mxu0
      %v1642 = vadd.f32 %v1593, %v1641
      %v1643 = vpop.f32.mrf.mxu0
      %v1644 = vadd.f32 %v1595, %v1643
      %1645 = vdwg.mxu0
      %v1646 = vmax.f32 %v1607, 0.0
      %v1647 = vmax.f32 %v1609, 0.0
      %v1648 = vmax.f32 %v1612, 0.0
      %v1649 = vmax.f32 %v1614, 0.0
      %v1650 = vmax.f32 %v1617, 0.0
      %v1651 = vmax.f32 %v1619, 0.0
      %v1652 = vmax.f32 %v1622, 0.0
      %v1653 = vmax.f32 %v1624, 0.0
      %v1654 = vmax.f32 %v1627, 0.0
      %v1655 = vmax.f32 %v1629, 0.0
      %v1656 = vmax.f32 %v1632, 0.0
      %v1657 = vmax.f32 %v1634, 0.0
      %v1658 = vmax.f32 %v1637, 0.0
      %v1659 = vmax.f32 %v1639, 0.0
      %v1660 = vmax.f32 %v1642, 0.0
      %v1661 = vmax.f32 %v1644, 0.0
      %v1662 = vpack.c.bf16 %v1646, %v1646
      %v1663 = vpack.c.bf16 %v1647, %v1647
      %v1664 = vpack.c.bf16 %v1648, %v1648
      %v1665 = vpack.c.bf16 %v1649, %v1649
      %v1666 = vpack.c.bf16 %v1650, %v1650
      %v1667 = vpack.c.bf16 %v1651, %v1651
      %v1668 = vpack.c.bf16 %v1652, %v1652
      %v1669 = vpack.c.bf16 %v1653, %v1653
      %v1670 = vpack.c.bf16 %v1654, %v1654
      %v1671 = vpack.c.bf16 %v1655, %v1655
      %v1672 = vpack.c.bf16 %v1656, %v1656
      %v1673 = vpack.c.bf16 %v1657, %v1657
      %v1674 = vpack.c.bf16 %v1658, %v1658
      %v1675 = vpack.c.bf16 %v1659, %v1659
      %v1676 = vpack.c.bf16 %v1660, %v1660
      %v1677 = vpack.c.bf16 %v1661, %v1661
      %1678 = vst [vmem:[%s175] sm:$0xf] %v1662
      %1679 = vst [vmem:[%s175 + $0x4] sm:$0xf] %v1663
      %1680 = vst [vmem:[%s175 + $0x8] sm:$0xf] %v1664
      %1681 = vst [vmem:[%s175 + $0xc] sm:$0xf] %v1665
      %1682 = vst [vmem:[%s175 + $0x10] sm:$0xf] %v1666
      %1683 = vst [vmem:[%s175 + $0x14] sm:$0xf] %v1667
      %1684 = vst [vmem:[%s175 + $0x18] sm:$0xf] %v1668
      %1685 = vst [vmem:[%s175 + $0x1c] sm:$0xf] %v1669
      %1686 = vst [vmem:[%s175 + $0x20] sm:$0xf] %v1670
      %1687 = vst [vmem:[%s175 + $0x24] sm:$0xf] %v1671
      %1688 = vst [vmem:[%s175 + $0x28] sm:$0xf] %v1672
      %1689 = vst [vmem:[%s175 + $0x2c] sm:$0xf] %v1673
      %1690 = vst [vmem:[%s175 + $0x30] sm:$0xf] %v1674
      %1691 = vst [vmem:[%s175 + $0x34] sm:$0xf] %v1675
      %1692 = vst [vmem:[%s175 + $0x38] sm:$0xf] %v1676
      %1693 = vst [vmem:[%s175 + $0x3c] sm:$0xf] %v1677
      %s1694 = smul.u32 16, %s14
      %p1695 = scmp.lt.s32.totalorder %s1694, 31
      %s1696 = scalar_select %p1695, %s1694, 31
      %s1697 = smul.addr %s1696, 4
      %s1698 = scalar_lea.vmem %s3, %s1697
      // Predicated region
      $region33: #{faster_rcnn_forward.8} parent=31 // pred_check
        %p1699 = pneg %p100
      $region34: #{faster_rcnn_forward.8} parent=31 // pred_check_branch
        %1701 = sbr.rel (%p1699) target = $region36
      $region35: #{faster_rcnn_forward.8} parent=31 // pred_region
        %s1702 = smul.u32 16, %s14
      $region36: #{faster_rcnn_forward.8} parent=31 // pred_fallthru
        _
    $region32: #{faster_rcnn_forward.8} parent=5 // pred_fallthru
      _
    %p1703 = scmp.le.s32.totalorder 2, %s9
    // Predicated region
    $region37: #{faster_rcnn_forward.8} parent=5 // pred_check
      %p1704 = pneg %p1703
    $region38: #{faster_rcnn_forward.8} parent=5 // pred_check_branch
      %1706 = sbr.rel (%p1704) target = $region40
    $region39: #{faster_rcnn_forward.8} parent=5 // pred_region
      %s1707 = ssub.s32 %s9, 2
      // Predicated region
      $region41: #{faster_rcnn_forward.8} parent=39 // pred_check
        %p1708 = pneg %p106
      $region42: #{faster_rcnn_forward.8} parent=39 // pred_check_branch
        %1710 = sbr.rel (%p1708) target = $region44
      $region43: #{faster_rcnn_forward.8} parent=39 // pred_region
        %s1711 = smul.u32 16, %s15
        %p1712 = scmp.lt.s32.totalorder %s1711, 31
        %s1713 = scalar_select %p1712, %s1711, 31
        %s1714 = smul.addr %s1713, 4
        %s1715 = scalar_lea.vmem %s3, %s1714
      $region44: #{faster_rcnn_forward.8} parent=39 // pred_fallthru
        _
    $region40: #{faster_rcnn_forward.8} parent=5 // pred_fallthru
      _
  $region6: #{faster_rcnn_forward.8} parent=0 // loop_footer
    %s13 = sadd.s32 1, %s9
  $region7: #{faster_rcnn_forward.8} parent=0 // loop_footer_branch
    %8 = sbr.rel target = $region3
  $region8: #{faster_rcnn_forward.8} parent=0 // loop_exit
    _

// kernel: faster_rcnn_forward.10
$region0: #{faster_rcnn_forward.10}
  #allocation0 [shape = 'u32[]', space=smem, size = 0x4, offset = 0x4, fixed_abs, tag = 'smem constant byte address 0x4 - core index']
  #allocation1 [shape = 'u32[72,128]{1,0:T(1,128)}', space=vmem, size = 0x9000, scoped, tag = 'internal scratch']
  %s0 = inlined_call_operand.vmem [shape: f32[4,2560], index: 0, kind: input, shape index: {}]
  %s1 = inlined_call_operand.vmem [shape: f32[4,2560], index: 1, kind: input, shape index: {}]
  %s2 = inlined_call_operand.vmem [shape: f32[4,2560], index: 2, kind: output, shape index: {}]
  %s3 = sld [smem:[#allocation0]]
  $region41: #{faster_rcnn_forward.10} parent=0
    _
  %s5 = ssub.s32 1, %s3
  %s6 = scalar_select 0, %s5, %s3
  loop: start=0, step=1, limit=7
  $region2: #{faster_rcnn_forward.10} parent=0 // loop_pre_header
    _
  $region3: #{faster_rcnn_forward.10} parent=0 // loop_header
    %s8 = sphi 0, %s12
    %p9 = scmp.ge.s32.totalorder %s8, 7
    %s18 = sphi 0, %s20
    %s21 = sphi 0, %s18
    %s22 = sphi 0, %s21
    %s38 = sphi 0, %s22
    %s44 = sphi 0, %s46
    %s47 = sphi 0, %s44
    %s48 = sphi 0, %s47
    %s64 = sphi 0, %s48
    %s70 = sphi 0, %s72
    %s73 = sphi 0, %s70
    %s74 = sphi 0, %s73
    %s90 = sphi 0, %s74
  $region4: #{faster_rcnn_forward.10} parent=0 // loop_header_branch
    %11 = sbr.rel (%p9) target = $region8
  $region5: #{faster_rcnn_forward.10} parent=0 // loop_body
    %s13 = ssub.s32 %s8, 1
    %s14 = ssub.s32 %s8, 2
    %s15 = sadd.s32 %s8, 1
    %s16 = ssub.s32 %s8, %s15
    %p17 = scmp.eq.s32.totalorder %s16, 0
    %s19 = sadd.s32 %s18, 1
    %s20 = scalar_select %p17, %s18, %s19
    %p23 = pneg %p17
    %p24 = scmp.eq.s32.totalorder %s8, 4
    %p25 = por %p23, %p24
    %p26 = scmp.ne.s32.totalorder %s18, %s21
    %p27 = scmp.eq.s32.totalorder %s8, 0
    %p28 = por %p26, %p27
    %p29 = scmp.ne.s32.totalorder %s18, %s21
    %p30 = scmp.eq.s32.totalorder %s13, 4
    %p31 = por %p29, %p30
    %p32 = scmp.ne.s32.totalorder %s21, %s22
    %p33 = scmp.eq.s32.totalorder %s13, 0
    %p34 = por %p32, %p33
    %p35 = scmp.ne.s32.totalorder %s21, %s22
    %p36 = scmp.eq.s32.totalorder %s14, 4
    %p37 = por %p35, %p36
    %p39 = scmp.ne.s32.totalorder %s22, %s38
    %p40 = scmp.eq.s32.totalorder %s14, 0
    %p41 = por %p39, %p40
    %s42 = ssub.s32 %s8, %s15
    %p43 = scmp.eq.s32.totalorder %s42, 0
    %s45 = sadd.s32 %s44, 1
    %s46 = scalar_select %p43, %s44, %s45
    %p49 = pneg %p43
    %p50 = scmp.eq.s32.totalorder %s8, 4
    %p51 = por %p49, %p50
    %p52 = scmp.ne.s32.totalorder %s44, %s47
    %p53 = scmp.eq.s32.totalorder %s8, 0
    %p54 = por %p52, %p53
    %p55 = scmp.ne.s32.totalorder %s44, %s47
    %p56 = scmp.eq.s32.totalorder %s13, 4
    %p57 = por %p55, %p56
    %p58 = scmp.ne.s32.totalorder %s47, %s48
    %p59 = scmp.eq.s32.totalorder %s13, 0
    %p60 = por %p58, %p59
    %p61 = scmp.ne.s32.totalorder %s47, %s48
    %p62 = scmp.eq.s32.totalorder %s14, 4
    %p63 = por %p61, %p62
    %p65 = scmp.ne.s32.totalorder %s48, %s64
    %p66 = scmp.eq.s32.totalorder %s14, 0
    %p67 = por %p65, %p66
    %s68 = ssub.s32 %s8, %s15
    %p69 = scmp.eq.s32.totalorder %s68, 0
    %s71 = sadd.s32 %s70, 1
    %s72 = scalar_select %p69, %s70, %s71
    %p75 = pneg %p69
    %p76 = scmp.eq.s32.totalorder %s8, 4
    %p77 = por %p75, %p76
    %p78 = scmp.ne.s32.totalorder %s70, %s73
    %p79 = scmp.eq.s32.totalorder %s8, 0
    %p80 = por %p78, %p79
    %p81 = scmp.ne.s32.totalorder %s70, %s73
    %p82 = scmp.eq.s32.totalorder %s13, 4
    %p83 = por %p81, %p82
    %p84 = scmp.ne.s32.totalorder %s73, %s74
    %p85 = scmp.eq.s32.totalorder %s13, 0
    %p86 = por %p84, %p85
    %p87 = scmp.ne.s32.totalorder %s73, %s74
    %p88 = scmp.eq.s32.totalorder %s14, 4
    %p89 = por %p87, %p88
    %p91 = scmp.ne.s32.totalorder %s74, %s90
    %p92 = scmp.eq.s32.totalorder %s14, 0
    %p93 = por %p91, %p92
    %p94 = scmp.le.s32.totalorder 1, %s8
    %p95 = scmp.lt.s32.totalorder %s8, 6
    %p96 = pnand %p94, %p95
    %p97 = pneg %p96
    // Predicated region
    $region9: #{faster_rcnn_forward.10} parent=5 // pred_check
      _
    $region10: #{faster_rcnn_forward.10} parent=5 // pred_check_branch
      %99 = sbr.rel (%p96) target = $region12
    $region11: #{faster_rcnn_forward.10} parent=5 // pred_region
      %s100 = ssub.s32 %s8, 1
    $region12: #{faster_rcnn_forward.10} parent=5 // pred_fallthru
      _
    %p101 = scmp.lt.s32.totalorder %s8, 5
    // Predicated region
    $region13: #{faster_rcnn_forward.10} parent=5 // pred_check
      %p102 = pneg %p101
    $region14: #{faster_rcnn_forward.10} parent=5 // pred_check_branch
      %104 = sbr.rel (%p102) target = $region16
    $region15: #{faster_rcnn_forward.10} parent=5 // pred_region
      // Predicated region
      $region17: #{faster_rcnn_forward.10} parent=15 // pred_check
        %p105 = pneg %p28
      $region18: #{faster_rcnn_forward.10} parent=15 // pred_check_branch
        %107 = sbr.rel (%p105) target = $region20
      $region19: #{faster_rcnn_forward.10} parent=15 // pred_region
        %s108 = smul.u32 4, %s8
        %p109 = scmp.lt.s32.totalorder %s108, 19
        %s110 = scalar_select %p109, %s108, 19
        %s111 = smul.addr %s110, 4
        %s112 = scalar_lea.vmem %s0, %s111
        %s113 = smul.u32 4, %s8
      $region20: #{faster_rcnn_forward.10} parent=15 // pred_fallthru
        _
      // Predicated region
      $region21: #{faster_rcnn_forward.10} parent=15 // pred_check
        %p114 = pneg %p54
      $region22: #{faster_rcnn_forward.10} parent=15 // pred_check_branch
        %116 = sbr.rel (%p114) target = $region24
      $region23: #{faster_rcnn_forward.10} parent=15 // pred_region
        %s117 = smul.u32 4, %s8
        %p118 = scmp.lt.s32.totalorder %s117, 19
        %s119 = scalar_select %p118, %s117, 19
        %s120 = smul.addr %s119, 4
        %s121 = scalar_lea.vmem %s1, %s120
        %s122 = smul.u32 4, %s8
      $region24: #{faster_rcnn_forward.10} parent=15 // pred_fallthru
        _
    $region16: #{faster_rcnn_forward.10} parent=5 // pred_fallthru
      _
    %p123 = scmp.le.s32.totalorder 1, %s8
    %p124 = scmp.lt.s32.totalorder %s8, 6
    %p125 = pnand %p123, %p124
    %p126 = pneg %p125
    // Predicated region
    $region25: #{faster_rcnn_forward.10} parent=5 // pred_check
      _
    $region26: #{faster_rcnn_forward.10} parent=5 // pred_check_branch
      %128 = sbr.rel (%p125) target = $region28
    $region27: #{faster_rcnn_forward.10} parent=5 // pred_region
      %s129 = ssub.s32 %s8, 1
      %s130 = smul.u32 4, %s13
      %p131 = scmp.lt.s32.totalorder %s130, 19
      %s132 = scalar_select %p131, %s130, 19
      %s133 = smul.addr %s132, 4
      %s134 = scalar_lea.vmem %s0, %s133
      %p135 = pneg %p34
      %p136 = pneg %p31
      %s137 = smul.u32 4, %s13
      %p138 = scmp.lt.s32.totalorder %s137, 19
      %s139 = scalar_select %p138, %s137, 19
      %s140 = smul.addr %s139, 4
      %s141 = scalar_lea.vmem %s1, %s140
      %p142 = pneg %p60
      %p143 = pneg %p57
      %p144 = pneg %p86
      %p145 = pneg %p83
      %s146 = smul.u32 4, %s13
      %p147 = scmp.lt.s32.totalorder %s146, 19
      %s148 = scalar_select %p147, %s146, 19
      %s149 = smul.addr %s148, 4
      %s150 = scalar_lea.vmem %s2, %s149
      %s151 = smul.u32 4, %s13
      %p152 = scmp.lt.s32.totalorder %s151, 19
      %s153 = scalar_select %p152, %s151, 19
      %s154 = smul.addr %s153, 4
      %s155 = scalar_lea.vmem %s0, %s154
      %s156 = smul.u32 4, %s13
      %s157 = smul.u32 4, %s13
      %p158 = scmp.lt.s32.totalorder %s157, 19
      %s159 = scalar_select %p158, %s157, 19
      %s160 = smul.addr %s159, 4
      %s161 = scalar_lea.vmem %s1, %s160
      %s162 = smul.u32 4, %s13
      %s163 = smul.u32 4, %s13
      %p164 = scmp.lt.s32.totalorder %s163, 19
      %s165 = scalar_select %p164, %s163, 19
      %s166 = smul.addr %s165, 4
      %s167 = scalar_lea.vmem %s2, %s166
      %s168 = smul.u32 4, %s13
      %v169 = vld [vmem:[%s155] sm:$0xff]
      %v170 = vld [vmem:[%s155 + $0x8] sm:$0xff]
      %v171 = vld [vmem:[%s161] sm:$0xff]
      %v172 = vld [vmem:[%s161 + $0x8] sm:$0xff]
      %v175 = vrot.slane %v169, 6
      %v176 = vrot.slane %v170, 6
      %v179 = vsub.f32 %v169, %v175
      %v180 = vsub.f32 %v170, %v176
      %v181 = vmul.f32 %v179, 0.5
      %v182 = vmul.f32 %v180, 0.5
      %v185 = vrot.slane %v181, 6
      %v186 = vrot.slane %v185, 4
      %v187 = vrot.slane %v182, 6
      %v188 = vrot.slane %v187, 4
      %v191 = vadd.f32 %v169, %v186
      %v192 = vadd.f32 %v170, %v188
      %v195 = vrot.slane %v179, 6
      %v196 = vrot.slane %v195, 4
      %v197 = vrot.slane %v180, 6
      %v198 = vrot.slane %v197, 4
      %v201 = vmul.f32 %v171, %v196
      %v202 = vmul.f32 %v172, %v198
      %v203 = vadd.f32 %v201, %v191
      %v204 = vadd.f32 %v202, %v192
      %v205 = vmin.f32 %v171, 4.1351666
      %v206 = vmin.f32 %v172, 4.1351666
      %v207 = vmul.f32 %v205, 1.442695
      %v208 = vpow.pop %v207
      %v209 = vmul.f32 %v206, 1.442695
      %v210 = vpow.pop %v209
      %v211 = vmul.f32 %v208, %v179
      %v212 = vmul.f32 %v210, %v180
      %v213 = vmul.f32 %v211, 0.5
      %v214 = vmul.f32 %v212, 0.5
      %v217 = vrot.slane %v213, 6
      %v218 = vrot.slane %v217, 4
      %v219 = vrot.slane %v214, 6
      %v220 = vrot.slane %v219, 4
      %v223 = vsub.f32 %v203, %v218
      %v224 = vsub.f32 %v204, %v220
      %v225 = vmax.f32 %v223, 0.0
      %v226 = vmax.f32 %v224, 0.0
      %v227 = vmin.f32 %v225, 32.0
      %v228 = vmin.f32 %v226, 32.0
      %v231 = vrot.slane %v227, 3
      %v232 = vrot.slane %v228, 6
      %v233 = vrot.slane %v228, 1
      %vm234 = vcmask 1040384
      %v235 = vsel %vm234, %v227, %v231
      %vm236 = vcmask 1042434
      %v237 = vsel %vm236, %v232, %v233
      %vm238 = vcmask 1041408
      %v239 = vsel %vm238, %v235, %v237
      %v241 = vlaneseq
      %vm242 = vcmp.ge.s32.totalorder %v241, 0
      %vm243 = vcmp.lt.s32.totalorder %v241, 512
      %vm244 = vmand %vm242, %vm243
      %245 = vst.msk [vmem:[%s167] ss:$4 sm:$0xf] %vm244, %v239
      %246 = vst [vmem:[#allocation1] sm:$0xff] %v227
      %247 = vst [vmem:[#allocation1 + $0x8] sm:$0xff] %v228
      %s248 = scalar_lea.vmem [#allocation1], 1
      %v249 = vld [vmem:[%s248] ss:$4 sm:$0xff]
      %s251 = scalar_lea.vmem %s167, 1
      %252 = vst.msk [vmem:[%s251] ss:$4 sm:$0xf] %vm244, %v249
      %v253 = vadd.f32 %v203, %v218
      %v254 = vadd.f32 %v204, %v220
      %v255 = vmax.f32 %v253, 0.0
      %v256 = vmax.f32 %v254, 0.0
      %v257 = vmin.f32 %v255, 32.0
      %v258 = vmin.f32 %v256, 32.0
      %v261 = vrot.slane %v257, 3
      %v262 = vrot.slane %v258, 6
      %v263 = vrot.slane %v258, 1
      %v264 = vsel %vm234, %v257, %v261
      %v265 = vsel %vm236, %v262, %v263
      %v266 = vsel %vm238, %v264, %v265
      %s268 = scalar_lea.vmem %s167, 2
      %269 = vst.msk [vmem:[%s268] ss:$4 sm:$0xf] %vm244, %v266
      %270 = vst [vmem:[#allocation1] sm:$0xff] %v257
      %271 = vst [vmem:[#allocation1 + $0x8] sm:$0xff] %v258
      %s272 = scalar_lea.vmem [#allocation1], 1
      %v273 = vld [vmem:[%s272] ss:$4 sm:$0xff]
      %s275 = scalar_lea.vmem %s167, 3
      %276 = vst.msk [vmem:[%s275] ss:$4 sm:$0xf] %vm244, %v273
      %s277 = smul.u32 4, %s13
      %p278 = scmp.lt.s32.totalorder %s277, 19
      %s279 = scalar_select %p278, %s277, 19
      %s280 = smul.addr %s279, 4
      %s281 = scalar_lea.vmem %s2, %s280
      // Predicated region
      $region29: #{faster_rcnn_forward.10} parent=27 // pred_check
        %p282 = pneg %p83
      $region30: #{faster_rcnn_forward.10} parent=27 // pred_check_branch
        %284 = sbr.rel (%p282) target = $region32
      $region31: #{faster_rcnn_forward.10} parent=27 // pred_region
        %s285 = smul.u32 4, %s13
      $region32: #{faster_rcnn_forward.10} parent=27 // pred_fallthru
        _
    $region28: #{faster_rcnn_forward.10} parent=5 // pred_fallthru
      _
    %p286 = scmp.le.s32.totalorder 2, %s8
    // Predicated region
    $region33: #{faster_rcnn_forward.10} parent=5 // pred_check
      %p287 = pneg %p286
    $region34: #{faster_rcnn_forward.10} parent=5 // pred_check_branch
      %289 = sbr.rel (%p287) target = $region36
    $region35: #{faster_rcnn_forward.10} parent=5 // pred_region
      %s290 = ssub.s32 %s8, 2
      // Predicated region
      $region37: #{faster_rcnn_forward.10} parent=35 // pred_check
        %p291 = pneg %p89
      $region38: #{faster_rcnn_forward.10} parent=35 // pred_check_branch
        %293 = sbr.rel (%p291) target = $region40
      $region39: #{faster_rcnn_forward.10} parent=35 // pred_region
        %s294 = smul.u32 4, %s14
        %p295 = scmp.lt.s32.totalorder %s294, 19
        %s296 = scalar_select %p295, %s294, 19
        %s297 = smul.addr %s296, 4
        %s298 = scalar_lea.vmem %s2, %s297
      $region40: #{faster_rcnn_forward.10} parent=35 // pred_fallthru
        _
    $region36: #{faster_rcnn_forward.10} parent=5 // pred_fallthru
      _
  $region6: #{faster_rcnn_forward.10} parent=0 // loop_footer
    %s12 = sadd.s32 1, %s8
  $region7: #{faster_rcnn_forward.10} parent=0 // loop_footer_branch
    %7 = sbr.rel target = $region3
  $region8: #{faster_rcnn_forward.10} parent=0 // loop_exit
    _

// kernel: faster_rcnn_forward.12
$region0: #{faster_rcnn_forward.12}
  #allocation0 [shape = 'u32[]', space=smem, size = 0x4, offset = 0x4, fixed_abs, tag = 'smem constant byte address 0x4 - core index']
  #allocation1 [shape = 'u32[72,128]{1,0:T(1,128)}', space=vmem, size = 0x9000, scoped, tag = 'internal scratch']
  %s0 = inlined_call_operand.vmem [shape: bf16[16,128], index: 0, kind: input, shape index: {}]
  %s1 = inlined_call_operand.vmem [shape: bf16[128,128], index: 1, kind: input, shape index: {}]
  %s2 = inlined_call_operand.vmem [shape: f32[1,128], index: 2, kind: input, shape index: {}]
  %s3 = inlined_call_operand.vmem [shape: bf16[16,128], index: 3, kind: output, shape index: {}]
  %s4 = sld [smem:[#allocation0]]
  $region22: #{faster_rcnn_forward.12} parent=0
    _
  %s6 = ssub.s32 1, %s4
  %s7 = scalar_select 0, %s6, %s4
  // Predicated region
  $region2: #{faster_rcnn_forward.12} parent=0 // pred_check
    _
  $region3: #{faster_rcnn_forward.12} parent=0 // pred_check_branch
    %9 = sbr.rel (0) target = $region5
  $region4: #{faster_rcnn_forward.12} parent=0 // pred_region
    _
  $region5: #{faster_rcnn_forward.12} parent=0 // pred_fallthru
    _
  // Predicated region
  $region6: #{faster_rcnn_forward.12} parent=0 // pred_check
    _
  $region7: #{faster_rcnn_forward.12} parent=0 // pred_check_branch
    %11 = sbr.rel (0) target = $region9
  $region8: #{faster_rcnn_forward.12} parent=0 // pred_region
    _
  $region9: #{faster_rcnn_forward.12} parent=0 // pred_fallthru
    _
  // Predicated region
  $region10: #{faster_rcnn_forward.12} parent=0 // pred_check
    _
  $region11: #{faster_rcnn_forward.12} parent=0 // pred_check_branch
    %13 = sbr.rel (0) target = $region13
  $region12: #{faster_rcnn_forward.12} parent=0 // pred_region
    _
  $region13: #{faster_rcnn_forward.12} parent=0 // pred_fallthru
    _
  %v14 = vld [vmem:[%s0] sm:$0xf]
  %v15 = vld [vmem:[%s0 + $0x4] sm:$0xf]
  %v16 = vld [vmem:[%s1] sm:$0xf]
  %v17 = vld [vmem:[%s1 + $0x4] sm:$0xf]
  %v18 = vld [vmem:[%s1 + $0x8] sm:$0xf]
  %v19 = vld [vmem:[%s1 + $0xc] sm:$0xf]
  %v20 = vld [vmem:[%s1 + $0x10] sm:$0xf]
  %v21 = vld [vmem:[%s1 + $0x14] sm:$0xf]
  %v22 = vld [vmem:[%s1 + $0x18] sm:$0xf]
  %v23 = vld [vmem:[%s1 + $0x1c] sm:$0xf]
  %v24 = vld [vmem:[%s1 + $0x20] sm:$0xf]
  %v25 = vld [vmem:[%s1 + $0x24] sm:$0xf]
  %v26 = vld [vmem:[%s1 + $0x28] sm:$0xf]
  %v27 = vld [vmem:[%s1 + $0x2c] sm:$0xf]
  %v28 = vld [vmem:[%s1 + $0x30] sm:$0xf]
  %v29 = vld [vmem:[%s1 + $0x34] sm:$0xf]
  %v30 = vld [vmem:[%s1 + $0x38] sm:$0xf]
  %v31 = vld [vmem:[%s1 + $0x3c] sm:$0xf]
  %v32 = vld [vmem:[%s2] sm:$0x1]
  %v34 = vperm.slane %v32, 0
  %v38 = vunpack.c.l.b16 %v14
  %v39 = vunpack.c.l.b16 %v15
  %v40 = vpack.c.b16 %v39, %v38
  %v58 = vunpack.c.l.b16 %v16
  %v59 = vunpack.c.l.b16 %v17
  %v60 = vunpack.c.l.b16 %v18
  %v61 = vunpack.c.l.b16 %v19
  %v62 = vunpack.c.l.b16 %v20
  %v63 = vunpack.c.l.b16 %v21
  %v64 = vunpack.c.l.b16 %v22
  %v65 = vunpack.c.l.b16 %v23
  %v66 = vunpack.c.l.b16 %v24
  %v67 = vunpack.c.l.b16 %v25
  %v68 = vunpack.c.l.b16 %v26
  %v69 = vunpack.c.l.b16 %v27
  %v70 = vunpack.c.l.b16 %v28
  %v71 = vunpack.c.l.b16 %v29
  %v72 = vunpack.c.l.b16 %v30
  %v73 = vunpack.c.l.b16 %v31
  %v74 = vpack.c.b16 %v59, %v58
  %v75 = vpack.c.b16 %v61, %v60
  %v76 = vpack.c.b16 %v63, %v62
  %v77 = vpack.c.b16 %v65, %v64
  %v78 = vpack.c.b16 %v67, %v66
  %v79 = vpack.c.b16 %v69, %v68
  %v80 = vpack.c.b16 %v71, %v70
  %v81 = vpack.c.b16 %v73, %v72
  %90 = vmatpush.bf16.msra.mxu0 %v81
  %91 = vmatpush.bf16.msra.mxu0 %v80
  %92 = vmatpush.bf16.msra.mxu0 %v79
  %93 = vmatpush.bf16.msra.mxu0 %v78
  %94 = vmatpush.bf16.msra.mxu0 %v77
  %95 = vmatpush.bf16.msra.mxu0 %v76
  %96 = vmatpush.bf16.msra.mxu0 %v75
  %97 = vmatpush.bf16.msra.mxu0 %v74
  %98 = vmatmul.bf16.gmra.mxu0 %v40
  %v99 = vpop.f32.mrf.mxu0
  %v100 = vadd.f32 %v34, %v99
  %v101 = vpop.f32.mrf.mxu0
  %v102 = vadd.f32 %v34, %v101
  %103 = vdwg.mxu0
  %v104 = vmax.f32 %v100, 0.0
  %v105 = vmax.f32 %v102, 0.0
  %v106 = vpack.c.bf16 %v104, %v104
  %v107 = vpack.c.bf16 %v105, %v105
  %108 = vst [vmem:[%s3] sm:$0xf] %v106
  %109 = vst [vmem:[%s3 + $0x4] sm:$0xf] %v107
  // Predicated region
  $region14: #{faster_rcnn_forward.12} parent=0 // pred_check
    _
  $region15: #{faster_rcnn_forward.12} parent=0 // pred_check_branch
    %111 = sbr.rel (0) target = $region17
  $region16: #{faster_rcnn_forward.12} parent=0 // pred_region
    _
  $region17: #{faster_rcnn_forward.12} parent=0 // pred_fallthru
    _
  // Predicated region
  $region18: #{faster_rcnn_forward.12} parent=0 // pred_check
    _
  $region19: #{faster_rcnn_forward.12} parent=0 // pred_check_branch
    %113 = sbr.rel (0) target = $region21
  $region20: #{faster_rcnn_forward.12} parent=0 // pred_region
    _
  $region21: #{faster_rcnn_forward.12} parent=0 // pred_fallthru
    _

// kernel: faster_rcnn_forward.13
$region0: #{faster_rcnn_forward.13}
  #allocation0 [shape = 'u32[]', space=smem, size = 0x4, offset = 0x4, fixed_abs, tag = 'smem constant byte address 0x4 - core index']
  #allocation1 [shape = 'u32[72,128]{1,0:T(1,128)}', space=vmem, size = 0x9000, scoped, tag = 'internal scratch']
  %s0 = inlined_call_operand.vmem [shape: bf16[16,128], index: 0, kind: input, shape index: {}]
  %s1 = inlined_call_operand.vmem [shape: bf16[128,128], index: 1, kind: input, shape index: {}]
  %s2 = inlined_call_operand.vmem [shape: f32[1,128], index: 2, kind: input, shape index: {}]
  %s3 = inlined_call_operand.vmem [shape: f32[16,128], index: 3, kind: output, shape index: {}]
  %s4 = sld [smem:[#allocation0]]
  $region22: #{faster_rcnn_forward.13} parent=0
    _
  %s6 = ssub.s32 1, %s4
  %s7 = scalar_select 0, %s6, %s4
  // Predicated region
  $region2: #{faster_rcnn_forward.13} parent=0 // pred_check
    _
  $region3: #{faster_rcnn_forward.13} parent=0 // pred_check_branch
    %9 = sbr.rel (0) target = $region5
  $region4: #{faster_rcnn_forward.13} parent=0 // pred_region
    _
  $region5: #{faster_rcnn_forward.13} parent=0 // pred_fallthru
    _
  // Predicated region
  $region6: #{faster_rcnn_forward.13} parent=0 // pred_check
    _
  $region7: #{faster_rcnn_forward.13} parent=0 // pred_check_branch
    %11 = sbr.rel (0) target = $region9
  $region8: #{faster_rcnn_forward.13} parent=0 // pred_region
    _
  $region9: #{faster_rcnn_forward.13} parent=0 // pred_fallthru
    _
  // Predicated region
  $region10: #{faster_rcnn_forward.13} parent=0 // pred_check
    _
  $region11: #{faster_rcnn_forward.13} parent=0 // pred_check_branch
    %13 = sbr.rel (0) target = $region13
  $region12: #{faster_rcnn_forward.13} parent=0 // pred_region
    _
  $region13: #{faster_rcnn_forward.13} parent=0 // pred_fallthru
    _
  %v14 = vld [vmem:[%s0] sm:$0xf]
  %v15 = vld [vmem:[%s0 + $0x4] sm:$0xf]
  %v16 = vld [vmem:[%s1] sm:$0xf]
  %v17 = vld [vmem:[%s1 + $0x4] sm:$0xf]
  %v18 = vld [vmem:[%s1 + $0x8] sm:$0xf]
  %v19 = vld [vmem:[%s1 + $0xc] sm:$0xf]
  %v20 = vld [vmem:[%s1 + $0x10] sm:$0xf]
  %v21 = vld [vmem:[%s1 + $0x14] sm:$0xf]
  %v22 = vld [vmem:[%s1 + $0x18] sm:$0xf]
  %v23 = vld [vmem:[%s1 + $0x1c] sm:$0xf]
  %v24 = vld [vmem:[%s1 + $0x20] sm:$0xf]
  %v25 = vld [vmem:[%s1 + $0x24] sm:$0xf]
  %v26 = vld [vmem:[%s1 + $0x28] sm:$0xf]
  %v27 = vld [vmem:[%s1 + $0x2c] sm:$0xf]
  %v28 = vld [vmem:[%s1 + $0x30] sm:$0xf]
  %v29 = vld [vmem:[%s1 + $0x34] sm:$0xf]
  %v30 = vld [vmem:[%s1 + $0x38] sm:$0xf]
  %v31 = vld [vmem:[%s1 + $0x3c] sm:$0xf]
  %v32 = vld [vmem:[%s2] sm:$0x1]
  %v34 = vperm.slane %v32, 0
  %v38 = vunpack.c.l.b16 %v14
  %v39 = vunpack.c.l.b16 %v15
  %v40 = vpack.c.b16 %v39, %v38
  %v58 = vunpack.c.l.b16 %v16
  %v59 = vunpack.c.l.b16 %v17
  %v60 = vunpack.c.l.b16 %v18
  %v61 = vunpack.c.l.b16 %v19
  %v62 = vunpack.c.l.b16 %v20
  %v63 = vunpack.c.l.b16 %v21
  %v64 = vunpack.c.l.b16 %v22
  %v65 = vunpack.c.l.b16 %v23
  %v66 = vunpack.c.l.b16 %v24
  %v67 = vunpack.c.l.b16 %v25
  %v68 = vunpack.c.l.b16 %v26
  %v69 = vunpack.c.l.b16 %v27
  %v70 = vunpack.c.l.b16 %v28
  %v71 = vunpack.c.l.b16 %v29
  %v72 = vunpack.c.l.b16 %v30
  %v73 = vunpack.c.l.b16 %v31
  %v74 = vpack.c.b16 %v59, %v58
  %v75 = vpack.c.b16 %v61, %v60
  %v76 = vpack.c.b16 %v63, %v62
  %v77 = vpack.c.b16 %v65, %v64
  %v78 = vpack.c.b16 %v67, %v66
  %v79 = vpack.c.b16 %v69, %v68
  %v80 = vpack.c.b16 %v71, %v70
  %v81 = vpack.c.b16 %v73, %v72
  %90 = vmatpush.bf16.msra.mxu0 %v81
  %91 = vmatpush.bf16.msra.mxu0 %v80
  %92 = vmatpush.bf16.msra.mxu0 %v79
  %93 = vmatpush.bf16.msra.mxu0 %v78
  %94 = vmatpush.bf16.msra.mxu0 %v77
  %95 = vmatpush.bf16.msra.mxu0 %v76
  %96 = vmatpush.bf16.msra.mxu0 %v75
  %97 = vmatpush.bf16.msra.mxu0 %v74
  %98 = vmatmul.bf16.gmra.mxu0 %v40
  %v99 = vpop.f32.mrf.mxu0
  %v100 = vadd.f32 %v34, %v99
  %v101 = vpop.f32.mrf.mxu0
  %v102 = vadd.f32 %v34, %v101
  %103 = vdwg.mxu0
  %104 = vst [vmem:[%s3] sm:$0xff] %v100
  %105 = vst [vmem:[%s3 + $0x8] sm:$0xff] %v102
  // Predicated region
  $region14: #{faster_rcnn_forward.13} parent=0 // pred_check
    _
  $region15: #{faster_rcnn_forward.13} parent=0 // pred_check_branch
    %107 = sbr.rel (0) target = $region17
  $region16: #{faster_rcnn_forward.13} parent=0 // pred_region
    _
  $region17: #{faster_rcnn_forward.13} parent=0 // pred_fallthru
    _
  // Predicated region
  $region18: #{faster_rcnn_forward.13} parent=0 // pred_check
    _
  $region19: #{faster_rcnn_forward.13} parent=0 // pred_check_branch
    %109 = sbr.rel (0) target = $region21
  $region20: #{faster_rcnn_forward.13} parent=0 // pred_region
    _
  $region21: #{faster_rcnn_forward.13} parent=0 // pred_fallthru
    _

// kernel: faster_rcnn_forward.11
$region0: #{faster_rcnn_forward.11}
  #allocation0 [shape = 'u32[]', space=smem, size = 0x4, offset = 0x4, fixed_abs, tag = 'smem constant byte address 0x4 - core index']
  #allocation1 [shape = 'u32[72,128]{1,0:T(1,128)}', space=vmem, size = 0x9000, scoped, tag = 'internal scratch']
  %s0 = inlined_call_operand.vmem [shape: bf16[16,6272], index: 0, kind: input, shape index: {}]
  %s1 = inlined_call_operand.vmem [shape: bf16[6272,128], index: 1, kind: input, shape index: {}]
  %s2 = inlined_call_operand.vmem [shape: f32[1,128], index: 2, kind: input, shape index: {}]
  %s3 = inlined_call_operand.vmem [shape: bf16[16,128], index: 3, kind: output, shape index: {}]
  %s4 = sld [smem:[#allocation0]]
  $region22: #{faster_rcnn_forward.11} parent=0
    _
  %s6 = ssub.s32 1, %s4
  %s7 = scalar_select 0, %s6, %s4
  // Predicated region
  $region2: #{faster_rcnn_forward.11} parent=0 // pred_check
    _
  $region3: #{faster_rcnn_forward.11} parent=0 // pred_check_branch
    %9 = sbr.rel (0) target = $region5
  $region4: #{faster_rcnn_forward.11} parent=0 // pred_region
    _
  $region5: #{faster_rcnn_forward.11} parent=0 // pred_fallthru
    _
  // Predicated region
  $region6: #{faster_rcnn_forward.11} parent=0 // pred_check
    _
  $region7: #{faster_rcnn_forward.11} parent=0 // pred_check_branch
    %11 = sbr.rel (0) target = $region9
  $region8: #{faster_rcnn_forward.11} parent=0 // pred_region
    _
  $region9: #{faster_rcnn_forward.11} parent=0 // pred_fallthru
    _
  // Predicated region
  $region10: #{faster_rcnn_forward.11} parent=0 // pred_check
    _
  $region11: #{faster_rcnn_forward.11} parent=0 // pred_check_branch
    %13 = sbr.rel (0) target = $region13
  $region12: #{faster_rcnn_forward.11} parent=0 // pred_region
    _
  $region13: #{faster_rcnn_forward.11} parent=0 // pred_fallthru
    _
  %v14 = vld [vmem:[%s0] sm:$0xff]
  %v15 = vld [vmem:[%s0 + $0x8] sm:$0xff]
  %v16 = vld [vmem:[%s0 + $0x10] sm:$0xff]
  %v17 = vld [vmem:[%s0 + $0x18] sm:$0xff]
  %v18 = vld [vmem:[%s0 + $0x20] sm:$0xff]
  %v19 = vld [vmem:[%s0 + $0x28] sm:$0xff]
  %v20 = vld [vmem:[%s0 + $0x30] sm:$0xff]
  %v21 = vld [vmem:[%s0 + $0x38] sm:$0xff]
  %v22 = vld [vmem:[%s0 + $0x40] sm:$0xff]
  %v23 = vld [vmem:[%s0 + $0x48] sm:$0xff]
  %v24 = vld [vmem:[%s0 + $0x50] sm:$0xff]
  %v25 = vld [vmem:[%s0 + $0x58] sm:$0xff]
  %v26 = vld [vmem:[%s0 + $0x60] sm:$0xff]
  %v27 = vld [vmem:[%s0 + $0x68] sm:$0xff]
  %v28 = vld [vmem:[%s0 + $0x70] sm:$0xff]
  %v29 = vld [vmem:[%s0 + $0x78] sm:$0xff]
  %v30 = vld [vmem:[%s0 + $0x80] sm:$0xff]
  %v31 = vld [vmem:[%s0 + $0x88] sm:$0xff]
  %v32 = vld [vmem:[%s0 + $0x90] sm:$0xff]
  %v33 = vld [vmem:[%s0 + $0x98] sm:$0xff]
  %v34 = vld [vmem:[%s0 + $0xa0] sm:$0xff]
  %v35 = vld [vmem:[%s0 + $0xa8] sm:$0xff]
  %v36 = vld [vmem:[%s0 + $0xb0] sm:$0xff]
  %v37 = vld [vmem:[%s0 + $0xb8] sm:$0xff]
  %v38 = vld [vmem:[%s0 + $0xc0] sm:$0xf]
  %v39 = vld [vmem:[%s0 + $0xc4] sm:$0xff]
  %v40 = vld [vmem:[%s0 + $0xcc] sm:$0xff]
  %v41 = vld [vmem:[%s0 + $0xd4] sm:$0xff]
  %v42 = vld [vmem:[%s0 + $0xdc] sm:$0xff]
  %v43 = vld [vmem:[%s0 + $0xe4] sm:$0xff]
  %v44 = vld [vmem:[%s0 + $0xec] sm:$0xff]
  %v45 = vld [vmem:[%s0 + $0xf4] sm:$0xff]
  %v46 = vld [vmem:[%s0 + $0xfc] sm:$0xff]
  %v47 = vld [vmem:[%s0 + $0x104] sm:$0xff]
  %v48 = vld [vmem:[%s0 + $0x10c] sm:$0xff]
  %v49 = vld [vmem:[%s0 + $0x114] sm:$0xff]
  %v50 = vld [vmem:[%s0 + $0x11c] sm:$0xff]
  %v51 = vld [vmem:[%s0 + $0x124] sm:$0xff]
  %v52 = vld [vmem:[%s0 + $0x12c] sm:$0xff]
  %v53 = vld [vmem:[%s0 + $0x134] sm:$0xff]
  %v54 = vld [vmem:[%s0 + $0x13c] sm:$0xff]
  %v55 = vld [vmem:[%s0 + $0x144] sm:$0xff]
  %v56 = vld [vmem:[%s0 + $0x14c] sm:$0xff]
  %v57 = vld [vmem:[%s0 + $0x154] sm:$0xff]
  %v58 = vld [vmem:[%s0 + $0x15c] sm:$0xff]
  %v59 = vld [vmem:[%s0 + $0x164] sm:$0xff]
  %v60 = vld [vmem:[%s0 + $0x16c] sm:$0xff]
  %v61 = vld [vmem:[%s0 + $0x174] sm:$0xff]
  %v62 = vld [vmem:[%s0 + $0x17c] sm:$0xff]
  %v63 = vld [vmem:[%s0 + $0x184] sm:$0xf]
  %v64 = vld [vmem:[%s1] sm:$0xf]
  %v65 = vld [vmem:[%s1 + $0x4] sm:$0xf]
  %v66 = vld [vmem:[%s1 + $0x8] sm:$0xf]
  %v67 = vld [vmem:[%s1 + $0xc] sm:$0xf]
  %v68 = vld [vmem:[%s1 + $0x10] sm:$0xf]
  %v69 = vld [vmem:[%s1 + $0x14] sm:$0xf]
  %v70 = vld [vmem:[%s1 + $0x18] sm:$0xf]
  %v71 = vld [vmem:[%s1 + $0x1c] sm:$0xf]
  %v72 = vld [vmem:[%s1 + $0x20] sm:$0xf]
  %v73 = vld [vmem:[%s1 + $0x24] sm:$0xf]
  %v74 = vld [vmem:[%s1 + $0x28] sm:$0xf]
  %v75 = vld [vmem:[%s1 + $0x2c] sm:$0xf]
  %v76 = vld [vmem:[%s1 + $0x30] sm:$0xf]
  %v77 = vld [vmem:[%s1 + $0x34] sm:$0xf]
  %v78 = vld [vmem:[%s1 + $0x38] sm:$0xf]
  %v79 = vld [vmem:[%s1 + $0x3c] sm:$0xf]
  %v80 = vld [vmem:[%s1 + $0x40] sm:$0xf]
  %v81 = vld [vmem:[%s1 + $0x44] sm:$0xf]
  %v82 = vld [vmem:[%s1 + $0x48] sm:$0xf]
  %v83 = vld [vmem:[%s1 + $0x4c] sm:$0xf]
  %v84 = vld [vmem:[%s1 + $0x50] sm:$0xf]
  %v85 = vld [vmem:[%s1 + $0x54] sm:$0xf]
  %v86 = vld [vmem:[%s1 + $0x58] sm:$0xf]
  %v87 = vld [vmem:[%s1 + $0x5c] sm:$0xf]
  %v88 = vld [vmem:[%s1 + $0x60] sm:$0xf]
  %v89 = vld [vmem:[%s1 + $0x64] sm:$0xf]
  %v90 = vld [vmem:[%s1 + $0x68] sm:$0xf]
  %v91 = vld [vmem:[%s1 + $0x6c] sm:$0xf]
  %v92 = vld [vmem:[%s1 + $0x70] sm:$0xf]
  %v93 = vld [vmem:[%s1 + $0x74] sm:$0xf]
  %v94 = vld [vmem:[%s1 + $0x78] sm:$0xf]
  %v95 = vld [vmem:[%s1 + $0x7c] sm:$0xf]
  %v96 = vld [vmem:[%s1 + $0x80] sm:$0xf]
  %v97 = vld [vmem:[%s1 + $0x84] sm:$0xf]
  %v98 = vld [vmem:[%s1 + $0x88] sm:$0xf]
  %v99 = vld [vmem:[%s1 + $0x8c] sm:$0xf]
  %v100 = vld [vmem:[%s1 + $0x90] sm:$0xf]
  %v101 = vld [vmem:[%s1 + $0x94] sm:$0xf]
  %v102 = vld [vmem:[%s1 + $0x98] sm:$0xf]
  %v103 = vld [vmem:[%s1 + $0x9c] sm:$0xf]
  %v104 = vld [vmem:[%s1 + $0xa0] sm:$0xf]
  %v105 = vld [vmem:[%s1 + $0xa4] sm:$0xf]
  %v106 = vld [vmem:[%s1 + $0xa8] sm:$0xf]
  %v107 = vld [vmem:[%s1 + $0xac] sm:$0xf]
  %v108 = vld [vmem:[%s1 + $0xb0] sm:$0xf]
  %v109 = vld [vmem:[%s1 + $0xb4] sm:$0xf]
  %v110 = vld [vmem:[%s1 + $0xb8] sm:$0xf]
  %v111 = vld [vmem:[%s1 + $0xbc] sm:$0xf]
  %v112 = vld [vmem:[%s1 + $0xc0] sm:$0xf]
  %v113 = vld [vmem:[%s1 + $0xc4] sm:$0xf]
  %v114 = vld [vmem:[%s1 + $0xc8] sm:$0xf]
  %v115 = vld [vmem:[%s1 + $0xcc] sm:$0xf]
  %v116 = vld [vmem:[%s1 + $0xd0] sm:$0xf]
  %v117 = vld [vmem:[%s1 + $0xd4] sm:$0xf]
  %v118 = vld [vmem:[%s1 + $0xd8] sm:$0xf]
  %v119 = vld [vmem:[%s1 + $0xdc] sm:$0xf]
  %v120 = vld [vmem:[%s1 + $0xe0] sm:$0xf]
  %v121 = vld [vmem:[%s1 + $0xe4] sm:$0xf]
  %v122 = vld [vmem:[%s1 + $0xe8] sm:$0xf]
  %v123 = vld [vmem:[%s1 + $0xec] sm:$0xf]
  %v124 = vld [vmem:[%s1 + $0xf0] sm:$0xf]
  %v125 = vld [vmem:[%s1 + $0xf4] sm:$0xf]
  %v126 = vld [vmem:[%s1 + $0xf8] sm:$0xf]
  %v127 = vld [vmem:[%s1 + $0xfc] sm:$0xf]
  %v128 = vld [vmem:[%s1 + $0x100] sm:$0xf]
  %v129 = vld [vmem:[%s1 + $0x104] sm:$0xf]
  %v130 = vld [vmem:[%s1 + $0x108] sm:$0xf]
  %v131 = vld [vmem:[%s1 + $0x10c] sm:$0xf]
  %v132 = vld [vmem:[%s1 + $0x110] sm:$0xf]
  %v133 = vld [vmem:[%s1 + $0x114] sm:$0xf]
  %v134 = vld [vmem:[%s1 + $0x118] sm:$0xf]
  %v135 = vld [vmem:[%s1 + $0x11c] sm:$0xf]
  %v136 = vld [vmem:[%s1 + $0x120] sm:$0xf]
  %v137 = vld [vmem:[%s1 + $0x124] sm:$0xf]
  %v138 = vld [vmem:[%s1 + $0x128] sm:$0xf]
  %v139 = vld [vmem:[%s1 + $0x12c] sm:$0xf]
  %v140 = vld [vmem:[%s1 + $0x130] sm:$0xf]
  %v141 = vld [vmem:[%s1 + $0x134] sm:$0xf]
  %v142 = vld [vmem:[%s1 + $0x138] sm:$0xf]
  %v143 = vld [vmem:[%s1 + $0x13c] sm:$0xf]
  %v144 = vld [vmem:[%s1 + $0x140] sm:$0xf]
  %v145 = vld [vmem:[%s1 + $0x144] sm:$0xf]
  %v146 = vld [vmem:[%s1 + $0x148] sm:$0xf]
  %v147 = vld [vmem:[%s1 + $0x14c] sm:$0xf]
  %v148 = vld [vmem:[%s1 + $0x150] sm:$0xf]
  %v149 = vld [vmem:[%s1 + $0x154] sm:$0xf]
  %v150 = vld [vmem:[%s1 + $0x158] sm:$0xf]
  %v151 = vld [vmem:[%s1 + $0x15c] sm:$0xf]
  %v152 = vld [vmem:[%s1 + $0x160] sm:$0xf]
  %v153 = vld [vmem:[%s1 + $0x164] sm:$0xf]
  %v154 = vld [vmem:[%s1 + $0x168] sm:$0xf]
  %v155 = vld [vmem:[%s1 + $0x16c] sm:$0xf]
  %v156 = vld [vmem:[%s1 + $0x170] sm:$0xf]
  %v157 = vld [vmem:[%s1 + $0x174] sm:$0xf]
  %v158 = vld [vmem:[%s1 + $0x178] sm:$0xf]
  %v159 = vld [vmem:[%s1 + $0x17c] sm:$0xf]
  %v160 = vld [vmem:[%s1 + $0x180] sm:$0xf]
  %v161 = vld [vmem:[%s1 + $0x184] sm:$0xf]
  %v162 = vld [vmem:[%s1 + $0x188] sm:$0xf]
  %v163 = vld [vmem:[%s1 + $0x18c] sm:$0xf]
  %v164 = vld [vmem:[%s1 + $0x190] sm:$0xf]
  %v165 = vld [vmem:[%s1 + $0x194] sm:$0xf]
  %v166 = vld [vmem:[%s1 + $0x198] sm:$0xf]
  %v167 = vld [vmem:[%s1 + $0x19c] sm:$0xf]
  %v168 = vld [vmem:[%s1 + $0x1a0] sm:$0xf]
  %v169 = vld [vmem:[%s1 + $0x1a4] sm:$0xf]
  %v170 = vld [vmem:[%s1 + $0x1a8] sm:$0xf]
  %v171 = vld [vmem:[%s1 + $0x1ac] sm:$0xf]
  %v172 = vld [vmem:[%s1 + $0x1b0] sm:$0xf]
  %v173 = vld [vmem:[%s1 + $0x1b4] sm:$0xf]
  %v174 = vld [vmem:[%s1 + $0x1b8] sm:$0xf]
  %v175 = vld [vmem:[%s1 + $0x1bc] sm:$0xf]
  %v176 = vld [vmem:[%s1 + $0x1c0] sm:$0xf]
  %v177 = vld [vmem:[%s1 + $0x1c4] sm:$0xf]
  %v178 = vld [vmem:[%s1 + $0x1c8] sm:$0xf]
  %v179 = vld [vmem:[%s1 + $0x1cc] sm:$0xf]
  %v180 = vld [vmem:[%s1 + $0x1d0] sm:$0xf]
  %v181 = vld [vmem:[%s1 + $0x1d4] sm:$0xf]
  %v182 = vld [vmem:[%s1 + $0x1d8] sm:$0xf]
  %v183 = vld [vmem:[%s1 + $0x1dc] sm:$0xf]
  %v184 = vld [vmem:[%s1 + $0x1e0] sm:$0xf]
  %v185 = vld [vmem:[%s1 + $0x1e4] sm:$0xf]
  %v186 = vld [vmem:[%s1 + $0x1e8] sm:$0xf]
  %v187 = vld [vmem:[%s1 + $0x1ec] sm:$0xf]
  %v188 = vld [vmem:[%s1 + $0x1f0] sm:$0xf]
  %v189 = vld [vmem:[%s1 + $0x1f4] sm:$0xf]
  %v190 = vld [vmem:[%s1 + $0x1f8] sm:$0xf]
  %v191 = vld [vmem:[%s1 + $0x1fc] sm:$0xf]
  %v192 = vld [vmem:[%s1 + $0x200] sm:$0xf]
  %v193 = vld [vmem:[%s1 + $0x204] sm:$0xf]
  %v194 = vld [vmem:[%s1 + $0x208] sm:$0xf]
  %v195 = vld [vmem:[%s1 + $0x20c] sm:$0xf]
  %v196 = vld [vmem:[%s1 + $0x210] sm:$0xf]
  %v197 = vld [vmem:[%s1 + $0x214] sm:$0xf]
  %v198 = vld [vmem:[%s1 + $0x218] sm:$0xf]
  %v199 = vld [vmem:[%s1 + $0x21c] sm:$0xf]
  %v200 = vld [vmem:[%s1 + $0x220] sm:$0xf]
  %v201 = vld [vmem:[%s1 + $0x224] sm:$0xf]
  %v202 = vld [vmem:[%s1 + $0x228] sm:$0xf]
  %v203 = vld [vmem:[%s1 + $0x22c] sm:$0xf]
  %v204 = vld [vmem:[%s1 + $0x230] sm:$0xf]
  %v205 = vld [vmem:[%s1 + $0x234] sm:$0xf]
  %v206 = vld [vmem:[%s1 + $0x238] sm:$0xf]
  %v207 = vld [vmem:[%s1 + $0x23c] sm:$0xf]
  %v208 = vld [vmem:[%s1 + $0x240] sm:$0xf]
  %v209 = vld [vmem:[%s1 + $0x244] sm:$0xf]
  %v210 = vld [vmem:[%s1 + $0x248] sm:$0xf]
  %v211 = vld [vmem:[%s1 + $0x24c] sm:$0xf]
  %v212 = vld [vmem:[%s1 + $0x250] sm:$0xf]
  %v213 = vld [vmem:[%s1 + $0x254] sm:$0xf]
  %v214 = vld [vmem:[%s1 + $0x258] sm:$0xf]
  %v215 = vld [vmem:[%s1 + $0x25c] sm:$0xf]
  %v216 = vld [vmem:[%s1 + $0x260] sm:$0xf]
  %v217 = vld [vmem:[%s1 + $0x264] sm:$0xf]
  %v218 = vld [vmem:[%s1 + $0x268] sm:$0xf]
  %v219 = vld [vmem:[%s1 + $0x26c] sm:$0xf]
  %v220 = vld [vmem:[%s1 + $0x270] sm:$0xf]
  %v221 = vld [vmem:[%s1 + $0x274] sm:$0xf]
  %v222 = vld [vmem:[%s1 + $0x278] sm:$0xf]
  %v223 = vld [vmem:[%s1 + $0x27c] sm:$0xf]
  %v224 = vld [vmem:[%s1 + $0x280] sm:$0xf]
  %v225 = vld [vmem:[%s1 + $0x284] sm:$0xf]
  %v226 = vld [vmem:[%s1 + $0x288] sm:$0xf]
  %v227 = vld [vmem:[%s1 + $0x28c] sm:$0xf]
  %v228 = vld [vmem:[%s1 + $0x290] sm:$0xf]
  %v229 = vld [vmem:[%s1 + $0x294] sm:$0xf]
  %v230 = vld [vmem:[%s1 + $0x298] sm:$0xf]
  %v231 = vld [vmem:[%s1 + $0x29c] sm:$0xf]
  %v232 = vld [vmem:[%s1 + $0x2a0] sm:$0xf]
  %v233 = vld [vmem:[%s1 + $0x2a4] sm:$0xf]
  %v234 = vld [vmem:[%s1 + $0x2a8] sm:$0xf]
  %v235 = vld [vmem:[%s1 + $0x2ac] sm:$0xf]
  %v236 = vld [vmem:[%s1 + $0x2b0] sm:$0xf]
  %v237 = vld [vmem:[%s1 + $0x2b4] sm:$0xf]
  %v238 = vld [vmem:[%s1 + $0x2b8] sm:$0xf]
  %v239 = vld [vmem:[%s1 + $0x2bc] sm:$0xf]
  %v240 = vld [vmem:[%s1 + $0x2c0] sm:$0xf]
  %v241 = vld [vmem:[%s1 + $0x2c4] sm:$0xf]
  %v242 = vld [vmem:[%s1 + $0x2c8] sm:$0xf]
  %v243 = vld [vmem:[%s1 + $0x2cc] sm:$0xf]
  %v244 = vld [vmem:[%s1 + $0x2d0] sm:$0xf]
  %v245 = vld [vmem:[%s1 + $0x2d4] sm:$0xf]
  %v246 = vld [vmem:[%s1 + $0x2d8] sm:$0xf]
  %v247 = vld [vmem:[%s1 + $0x2dc] sm:$0xf]
  %v248 = vld [vmem:[%s1 + $0x2e0] sm:$0xf]
  %v249 = vld [vmem:[%s1 + $0x2e4] sm:$0xf]
  %v250 = vld [vmem:[%s1 + $0x2e8] sm:$0xf]
  %v251 = vld [vmem:[%s1 + $0x2ec] sm:$0xf]
  %v252 = vld [vmem:[%s1 + $0x2f0] sm:$0xf]
  %v253 = vld [vmem:[%s1 + $0x2f4] sm:$0xf]
  %v254 = vld [vmem:[%s1 + $0x2f8] sm:$0xf]
  %v255 = vld [vmem:[%s1 + $0x2fc] sm:$0xf]
  %v256 = vld [vmem:[%s1 + $0x300] sm:$0xf]
  %v257 = vld [vmem:[%s1 + $0x304] sm:$0xf]
  %v258 = vld [vmem:[%s1 + $0x308] sm:$0xf]
  %v259 = vld [vmem:[%s1 + $0x30c] sm:$0xf]
  %v260 = vld [vmem:[%s1 + $0x310] sm:$0xf]
  %v261 = vld [vmem:[%s1 + $0x314] sm:$0xf]
  %v262 = vld [vmem:[%s1 + $0x318] sm:$0xf]
  %v263 = vld [vmem:[%s1 + $0x31c] sm:$0xf]
  %v264 = vld [vmem:[%s1 + $0x320] sm:$0xf]
  %v265 = vld [vmem:[%s1 + $0x324] sm:$0xf]
  %v266 = vld [vmem:[%s1 + $0x328] sm:$0xf]
  %v267 = vld [vmem:[%s1 + $0x32c] sm:$0xf]
  %v268 = vld [vmem:[%s1 + $0x330] sm:$0xf]
  %v269 = vld [vmem:[%s1 + $0x334] sm:$0xf]
  %v270 = vld [vmem:[%s1 + $0x338] sm:$0xf]
  %v271 = vld [vmem:[%s1 + $0x33c] sm:$0xf]
  %v272 = vld [vmem:[%s1 + $0x340] sm:$0xf]
  %v273 = vld [vmem:[%s1 + $0x344] sm:$0xf]
  %v274 = vld [vmem:[%s1 + $0x348] sm:$0xf]
  %v275 = vld [vmem:[%s1 + $0x34c] sm:$0xf]
  %v276 = vld [vmem:[%s1 + $0x350] sm:$0xf]
  %v277 = vld [vmem:[%s1 + $0x354] sm:$0xf]
  %v278 = vld [vmem:[%s1 + $0x358] sm:$0xf]
  %v279 = vld [vmem:[%s1 + $0x35c] sm:$0xf]
  %v280 = vld [vmem:[%s1 + $0x360] sm:$0xf]
  %v281 = vld [vmem:[%s1 + $0x364] sm:$0xf]
  %v282 = vld [vmem:[%s1 + $0x368] sm:$0xf]
  %v283 = vld [vmem:[%s1 + $0x36c] sm:$0xf]
  %v284 = vld [vmem:[%s1 + $0x370] sm:$0xf]
  %v285 = vld [vmem:[%s1 + $0x374] sm:$0xf]
  %v286 = vld [vmem:[%s1 + $0x378] sm:$0xf]
  %v287 = vld [vmem:[%s1 + $0x37c] sm:$0xf]
  %v288 = vld [vmem:[%s1 + $0x380] sm:$0xf]
  %v289 = vld [vmem:[%s1 + $0x384] sm:$0xf]
  %v290 = vld [vmem:[%s1 + $0x388] sm:$0xf]
  %v291 = vld [vmem:[%s1 + $0x38c] sm:$0xf]
  %v292 = vld [vmem:[%s1 + $0x390] sm:$0xf]
  %v293 = vld [vmem:[%s1 + $0x394] sm:$0xf]
  %v294 = vld [vmem:[%s1 + $0x398] sm:$0xf]
  %v295 = vld [vmem:[%s1 + $0x39c] sm:$0xf]
  %v296 = vld [vmem:[%s1 + $0x3a0] sm:$0xf]
  %v297 = vld [vmem:[%s1 + $0x3a4] sm:$0xf]
  %v298 = vld [vmem:[%s1 + $0x3a8] sm:$0xf]
  %v299 = vld [vmem:[%s1 + $0x3ac] sm:$0xf]
  %v300 = vld [vmem:[%s1 + $0x3b0] sm:$0xf]
  %v301 = vld [vmem:[%s1 + $0x3b4] sm:$0xf]
  %v302 = vld [vmem:[%s1 + $0x3b8] sm:$0xf]
  %v303 = vld [vmem:[%s1 + $0x3bc] sm:$0xf]
  %v304 = vld [vmem:[%s1 + $0x3c0] sm:$0xf]
  %v305 = vld [vmem:[%s1 + $0x3c4] sm:$0xf]
  %v306 = vld [vmem:[%s1 + $0x3c8] sm:$0xf]
  %v307 = vld [vmem:[%s1 + $0x3cc] sm:$0xf]
  %v308 = vld [vmem:[%s1 + $0x3d0] sm:$0xf]
  %v309 = vld [vmem:[%s1 + $0x3d4] sm:$0xf]
  %v310 = vld [vmem:[%s1 + $0x3d8] sm:$0xf]
  %v311 = vld [vmem:[%s1 + $0x3dc] sm:$0xf]
  %v312 = vld [vmem:[%s1 + $0x3e0] sm:$0xf]
  %v313 = vld [vmem:[%s1 + $0x3e4] sm:$0xf]
  %v314 = vld [vmem:[%s1 + $0x3e8] sm:$0xf]
  %v315 = vld [vmem:[%s1 + $0x3ec] sm:$0xf]
  %v316 = vld [vmem:[%s1 + $0x3f0] sm:$0xf]
  %v317 = vld [vmem:[%s1 + $0x3f4] sm:$0xf]
  %v318 = vld [vmem:[%s1 + $0x3f8] sm:$0xf]
  %v319 = vld [vmem:[%s1 + $0x3fc] sm:$0xf]
  %v320 = vld [vmem:[%s1 + $0x400] sm:$0xf]
  %v321 = vld [vmem:[%s1 + $0x404] sm:$0xf]
  %v322 = vld [vmem:[%s1 + $0x408] sm:$0xf]
  %v323 = vld [vmem:[%s1 + $0x40c] sm:$0xf]
  %v324 = vld [vmem:[%s1 + $0x410] sm:$0xf]
  %v325 = vld [vmem:[%s1 + $0x414] sm:$0xf]
  %v326 = vld [vmem:[%s1 + $0x418] sm:$0xf]
  %v327 = vld [vmem:[%s1 + $0x41c] sm:$0xf]
  %v328 = vld [vmem:[%s1 + $0x420] sm:$0xf]
  %v329 = vld [vmem:[%s1 + $0x424] sm:$0xf]
  %v330 = vld [vmem:[%s1 + $0x428] sm:$0xf]
  %v331 = vld [vmem:[%s1 + $0x42c] sm:$0xf]
  %v332 = vld [vmem:[%s1 + $0x430] sm:$0xf]
  %v333 = vld [vmem:[%s1 + $0x434] sm:$0xf]
  %v334 = vld [vmem:[%s1 + $0x438] sm:$0xf]
  %v335 = vld [vmem:[%s1 + $0x43c] sm:$0xf]
  %v336 = vld [vmem:[%s1 + $0x440] sm:$0xf]
  %v337 = vld [vmem:[%s1 + $0x444] sm:$0xf]
  %v338 = vld [vmem:[%s1 + $0x448] sm:$0xf]
  %v339 = vld [vmem:[%s1 + $0x44c] sm:$0xf]
  %v340 = vld [vmem:[%s1 + $0x450] sm:$0xf]
  %v341 = vld [vmem:[%s1 + $0x454] sm:$0xf]
  %v342 = vld [vmem:[%s1 + $0x458] sm:$0xf]
  %v343 = vld [vmem:[%s1 + $0x45c] sm:$0xf]
  %v344 = vld [vmem:[%s1 + $0x460] sm:$0xf]
  %v345 = vld [vmem:[%s1 + $0x464] sm:$0xf]
  %v346 = vld [vmem:[%s1 + $0x468] sm:$0xf]
  %v347 = vld [vmem:[%s1 + $0x46c] sm:$0xf]
  %v348 = vld [vmem:[%s1 + $0x470] sm:$0xf]
  %v349 = vld [vmem:[%s1 + $0x474] sm:$0xf]
  %v350 = vld [vmem:[%s1 + $0x478] sm:$0xf]
  %v351 = vld [vmem:[%s1 + $0x47c] sm:$0xf]
  %v352 = vld [vmem:[%s1 + $0x480] sm:$0xf]
  %v353 = vld [vmem:[%s1 + $0x484] sm:$0xf]
  %v354 = vld [vmem:[%s1 + $0x488] sm:$0xf]
  %v355 = vld [vmem:[%s1 + $0x48c] sm:$0xf]
  %v356 = vld [vmem:[%s1 + $0x490] sm:$0xf]
  %v357 = vld [vmem:[%s1 + $0x494] sm:$0xf]
  %v358 = vld [vmem:[%s1 + $0x498] sm:$0xf]
  %v359 = vld [vmem:[%s1 + $0x49c] sm:$0xf]
  %v360 = vld [vmem:[%s1 + $0x4a0] sm:$0xf]
  %v361 = vld [vmem:[%s1 + $0x4a4] sm:$0xf]
  %v362 = vld [vmem:[%s1 + $0x4a8] sm:$0xf]
  %v363 = vld [vmem:[%s1 + $0x4ac] sm:$0xf]
  %v364 = vld [vmem:[%s1 + $0x4b0] sm:$0xf]
  %v365 = vld [vmem:[%s1 + $0x4b4] sm:$0xf]
  %v366 = vld [vmem:[%s1 + $0x4b8] sm:$0xf]
  %v367 = vld [vmem:[%s1 + $0x4bc] sm:$0xf]
  %v368 = vld [vmem:[%s1 + $0x4c0] sm:$0xf]
  %v369 = vld [vmem:[%s1 + $0x4c4] sm:$0xf]
  %v370 = vld [vmem:[%s1 + $0x4c8] sm:$0xf]
  %v371 = vld [vmem:[%s1 + $0x4cc] sm:$0xf]
  %v372 = vld [vmem:[%s1 + $0x4d0] sm:$0xf]
  %v373 = vld [vmem:[%s1 + $0x4d4] sm:$0xf]
  %v374 = vld [vmem:[%s1 + $0x4d8] sm:$0xf]
  %v375 = vld [vmem:[%s1 + $0x4dc] sm:$0xf]
  %v376 = vld [vmem:[%s1 + $0x4e0] sm:$0xf]
  %v377 = vld [vmem:[%s1 + $0x4e4] sm:$0xf]
  %v378 = vld [vmem:[%s1 + $0x4e8] sm:$0xf]
  %v379 = vld [vmem:[%s1 + $0x4ec] sm:$0xf]
  %v380 = vld [vmem:[%s1 + $0x4f0] sm:$0xf]
  %v381 = vld [vmem:[%s1 + $0x4f4] sm:$0xf]
  %v382 = vld [vmem:[%s1 + $0x4f8] sm:$0xf]
  %v383 = vld [vmem:[%s1 + $0x4fc] sm:$0xf]
  %v384 = vld [vmem:[%s1 + $0x500] sm:$0xf]
  %v385 = vld [vmem:[%s1 + $0x504] sm:$0xf]
  %v386 = vld [vmem:[%s1 + $0x508] sm:$0xf]
  %v387 = vld [vmem:[%s1 + $0x50c] sm:$0xf]
  %v388 = vld [vmem:[%s1 + $0x510] sm:$0xf]
  %v389 = vld [vmem:[%s1 + $0x514] sm:$0xf]
  %v390 = vld [vmem:[%s1 + $0x518] sm:$0xf]
  %v391 = vld [vmem:[%s1 + $0x51c] sm:$0xf]
  %v392 = vld [vmem:[%s1 + $0x520] sm:$0xf]
  %v393 = vld [vmem:[%s1 + $0x524] sm:$0xf]
  %v394 = vld [vmem:[%s1 + $0x528] sm:$0xf]
  %v395 = vld [vmem:[%s1 + $0x52c] sm:$0xf]
  %v396 = vld [vmem:[%s1 + $0x530] sm:$0xf]
  %v397 = vld [vmem:[%s1 + $0x534] sm:$0xf]
  %v398 = vld [vmem:[%s1 + $0x538] sm:$0xf]
  %v399 = vld [vmem:[%s1 + $0x53c] sm:$0xf]
  %v400 = vld [vmem:[%s1 + $0x540] sm:$0xf]
  %v401 = vld [vmem:[%s1 + $0x544] sm:$0xf]
  %v402 = vld [vmem:[%s1 + $0x548] sm:$0xf]
  %v403 = vld [vmem:[%s1 + $0x54c] sm:$0xf]
  %v404 = vld [vmem:[%s1 + $0x550] sm:$0xf]
  %v405 = vld [vmem:[%s1 + $0x554] sm:$0xf]
  %v406 = vld [vmem:[%s1 + $0x558] sm:$0xf]
  %v407 = vld [vmem:[%s1 + $0x55c] sm:$0xf]
  %v408 = vld [vmem:[%s1 + $0x560] sm:$0xf]
  %v409 = vld [vmem:[%s1 + $0x564] sm:$0xf]
  %v410 = vld [vmem:[%s1 + $0x568] sm:$0xf]
  %v411 = vld [vmem:[%s1 + $0x56c] sm:$0xf]
  %v412 = vld [vmem:[%s1 + $0x570] sm:$0xf]
  %v413 = vld [vmem:[%s1 + $0x574] sm:$0xf]
  %v414 = vld [vmem:[%s1 + $0x578] sm:$0xf]
  %v415 = vld [vmem:[%s1 + $0x57c] sm:$0xf]
  %v416 = vld [vmem:[%s1 + $0x580] sm:$0xf]
  %v417 = vld [vmem:[%s1 + $0x584] sm:$0xf]
  %v418 = vld [vmem:[%s1 + $0x588] sm:$0xf]
  %v419 = vld [vmem:[%s1 + $0x58c] sm:$0xf]
  %v420 = vld [vmem:[%s1 + $0x590] sm:$0xf]
  %v421 = vld [vmem:[%s1 + $0x594] sm:$0xf]
  %v422 = vld [vmem:[%s1 + $0x598] sm:$0xf]
  %v423 = vld [vmem:[%s1 + $0x59c] sm:$0xf]
  %v424 = vld [vmem:[%s1 + $0x5a0] sm:$0xf]
  %v425 = vld [vmem:[%s1 + $0x5a4] sm:$0xf]
  %v426 = vld [vmem:[%s1 + $0x5a8] sm:$0xf]
  %v427 = vld [vmem:[%s1 + $0x5ac] sm:$0xf]
  %v428 = vld [vmem:[%s1 + $0x5b0] sm:$0xf]
  %v429 = vld [vmem:[%s1 + $0x5b4] sm:$0xf]
  %v430 = vld [vmem:[%s1 + $0x5b8] sm:$0xf]
  %v431 = vld [vmem:[%s1 + $0x5bc] sm:$0xf]
  %v432 = vld [vmem:[%s1 + $0x5c0] sm:$0xf]
  %v433 = vld [vmem:[%s1 + $0x5c4] sm:$0xf]
  %v434 = vld [vmem:[%s1 + $0x5c8] sm:$0xf]
  %v435 = vld [vmem:[%s1 + $0x5cc] sm:$0xf]
  %v436 = vld [vmem:[%s1 + $0x5d0] sm:$0xf]
  %v437 = vld [vmem:[%s1 + $0x5d4] sm:$0xf]
  %v438 = vld [vmem:[%s1 + $0x5d8] sm:$0xf]
  %v439 = vld [vmem:[%s1 + $0x5dc] sm:$0xf]
  %v440 = vld [vmem:[%s1 + $0x5e0] sm:$0xf]
  %v441 = vld [vmem:[%s1 + $0x5e4] sm:$0xf]
  %v442 = vld [vmem:[%s1 + $0x5e8] sm:$0xf]
  %v443 = vld [vmem:[%s1 + $0x5ec] sm:$0xf]
  %v444 = vld [vmem:[%s1 + $0x5f0] sm:$0xf]
  %v445 = vld [vmem:[%s1 + $0x5f4] sm:$0xf]
  %v446 = vld [vmem:[%s1 + $0x5f8] sm:$0xf]
  %v447 = vld [vmem:[%s1 + $0x5fc] sm:$0xf]
  %v448 = vld [vmem:[%s1 + $0x600] sm:$0xf]
  %v449 = vld [vmem:[%s1 + $0x604] sm:$0xf]
  %v450 = vld [vmem:[%s1 + $0x608] sm:$0xf]
  %v451 = vld [vmem:[%s1 + $0x60c] sm:$0xf]
  %v452 = vld [vmem:[%s1 + $0x610] sm:$0xf]
  %v453 = vld [vmem:[%s1 + $0x614] sm:$0xf]
  %v454 = vld [vmem:[%s1 + $0x618] sm:$0xf]
  %v455 = vld [vmem:[%s1 + $0x61c] sm:$0xf]
  %v456 = vld [vmem:[%s1 + $0x620] sm:$0xf]
  %v457 = vld [vmem:[%s1 + $0x624] sm:$0xf]
  %v458 = vld [vmem:[%s1 + $0x628] sm:$0xf]
  %v459 = vld [vmem:[%s1 + $0x62c] sm:$0xf]
  %v460 = vld [vmem:[%s1 + $0x630] sm:$0xf]
  %v461 = vld [vmem:[%s1 + $0x634] sm:$0xf]
  %v462 = vld [vmem:[%s1 + $0x638] sm:$0xf]
  %v463 = vld [vmem:[%s1 + $0x63c] sm:$0xf]
  %v464 = vld [vmem:[%s1 + $0x640] sm:$0xf]
  %v465 = vld [vmem:[%s1 + $0x644] sm:$0xf]
  %v466 = vld [vmem:[%s1 + $0x648] sm:$0xf]
  %v467 = vld [vmem:[%s1 + $0x64c] sm:$0xf]
  %v468 = vld [vmem:[%s1 + $0x650] sm:$0xf]
  %v469 = vld [vmem:[%s1 + $0x654] sm:$0xf]
  %v470 = vld [vmem:[%s1 + $0x658] sm:$0xf]
  %v471 = vld [vmem:[%s1 + $0x65c] sm:$0xf]
  %v472 = vld [vmem:[%s1 + $0x660] sm:$0xf]
  %v473 = vld [vmem:[%s1 + $0x664] sm:$0xf]
  %v474 = vld [vmem:[%s1 + $0x668] sm:$0xf]
  %v475 = vld [vmem:[%s1 + $0x66c] sm:$0xf]
  %v476 = vld [vmem:[%s1 + $0x670] sm:$0xf]
  %v477 = vld [vmem:[%s1 + $0x674] sm:$0xf]
  %v478 = vld [vmem:[%s1 + $0x678] sm:$0xf]
  %v479 = vld [vmem:[%s1 + $0x67c] sm:$0xf]
  %v480 = vld [vmem:[%s1 + $0x680] sm:$0xf]
  %v481 = vld [vmem:[%s1 + $0x684] sm:$0xf]
  %v482 = vld [vmem:[%s1 + $0x688] sm:$0xf]
  %v483 = vld [vmem:[%s1 + $0x68c] sm:$0xf]
  %v484 = vld [vmem:[%s1 + $0x690] sm:$0xf]
  %v485 = vld [vmem:[%s1 + $0x694] sm:$0xf]
  %v486 = vld [vmem:[%s1 + $0x698] sm:$0xf]
  %v487 = vld [vmem:[%s1 + $0x69c] sm:$0xf]
  %v488 = vld [vmem:[%s1 + $0x6a0] sm:$0xf]
  %v489 = vld [vmem:[%s1 + $0x6a4] sm:$0xf]
  %v490 = vld [vmem:[%s1 + $0x6a8] sm:$0xf]
  %v491 = vld [vmem:[%s1 + $0x6ac] sm:$0xf]
  %v492 = vld [vmem:[%s1 + $0x6b0] sm:$0xf]
  %v493 = vld [vmem:[%s1 + $0x6b4] sm:$0xf]
  %v494 = vld [vmem:[%s1 + $0x6b8] sm:$0xf]
  %v495 = vld [vmem:[%s1 + $0x6bc] sm:$0xf]
  %v496 = vld [vmem:[%s1 + $0x6c0] sm:$0xf]
  %v497 = vld [vmem:[%s1 + $0x6c4] sm:$0xf]
  %v498 = vld [vmem:[%s1 + $0x6c8] sm:$0xf]
  %v499 = vld [vmem:[%s1 + $0x6cc] sm:$0xf]
  %v500 = vld [vmem:[%s1 + $0x6d0] sm:$0xf]
  %v501 = vld [vmem:[%s1 + $0x6d4] sm:$0xf]
  %v502 = vld [vmem:[%s1 + $0x6d8] sm:$0xf]
  %v503 = vld [vmem:[%s1 + $0x6dc] sm:$0xf]
  %v504 = vld [vmem:[%s1 + $0x6e0] sm:$0xf]
  %v505 = vld [vmem:[%s1 + $0x6e4] sm:$0xf]
  %v506 = vld [vmem:[%s1 + $0x6e8] sm:$0xf]
  %v507 = vld [vmem:[%s1 + $0x6ec] sm:$0xf]
  %v508 = vld [vmem:[%s1 + $0x6f0] sm:$0xf]
  %v509 = vld [vmem:[%s1 + $0x6f4] sm:$0xf]
  %v510 = vld [vmem:[%s1 + $0x6f8] sm:$0xf]
  %v511 = vld [vmem:[%s1 + $0x6fc] sm:$0xf]
  %v512 = vld [vmem:[%s1 + $0x700] sm:$0xf]
  %v513 = vld [vmem:[%s1 + $0x704] sm:$0xf]
  %v514 = vld [vmem:[%s1 + $0x708] sm:$0xf]
  %v515 = vld [vmem:[%s1 + $0x70c] sm:$0xf]
  %v516 = vld [vmem:[%s1 + $0x710] sm:$0xf]
  %v517 = vld [vmem:[%s1 + $0x714] sm:$0xf]
  %v518 = vld [vmem:[%s1 + $0x718] sm:$0xf]
  %v519 = vld [vmem:[%s1 + $0x71c] sm:$0xf]
  %v520 = vld [vmem:[%s1 + $0x720] sm:$0xf]
  %v521 = vld [vmem:[%s1 + $0x724] sm:$0xf]
  %v522 = vld [vmem:[%s1 + $0x728] sm:$0xf]
  %v523 = vld [vmem:[%s1 + $0x72c] sm:$0xf]
  %v524 = vld [vmem:[%s1 + $0x730] sm:$0xf]
  %v525 = vld [vmem:[%s1 + $0x734] sm:$0xf]
  %v526 = vld [vmem:[%s1 + $0x738] sm:$0xf]
  %v527 = vld [vmem:[%s1 + $0x73c] sm:$0xf]
  %v528 = vld [vmem:[%s1 + $0x740] sm:$0xf]
  %v529 = vld [vmem:[%s1 + $0x744] sm:$0xf]
  %v530 = vld [vmem:[%s1 + $0x748] sm:$0xf]
  %v531 = vld [vmem:[%s1 + $0x74c] sm:$0xf]
  %v532 = vld [vmem:[%s1 + $0x750] sm:$0xf]
  %v533 = vld [vmem:[%s1 + $0x754] sm:$0xf]
  %v534 = vld [vmem:[%s1 + $0x758] sm:$0xf]
  %v535 = vld [vmem:[%s1 + $0x75c] sm:$0xf]
  %v536 = vld [vmem:[%s1 + $0x760] sm:$0xf]
  %v537 = vld [vmem:[%s1 + $0x764] sm:$0xf]
  %v538 = vld [vmem:[%s1 + $0x768] sm:$0xf]
  %v539 = vld [vmem:[%s1 + $0x76c] sm:$0xf]
  %v540 = vld [vmem:[%s1 + $0x770] sm:$0xf]
  %v541 = vld [vmem:[%s1 + $0x774] sm:$0xf]
  %v542 = vld [vmem:[%s1 + $0x778] sm:$0xf]
  %v543 = vld [vmem:[%s1 + $0x77c] sm:$0xf]
  %v544 = vld [vmem:[%s1 + $0x780] sm:$0xf]
  %v545 = vld [vmem:[%s1 + $0x784] sm:$0xf]
  %v546 = vld [vmem:[%s1 + $0x788] sm:$0xf]
  %v547 = vld [vmem:[%s1 + $0x78c] sm:$0xf]
  %v548 = vld [vmem:[%s1 + $0x790] sm:$0xf]
  %v549 = vld [vmem:[%s1 + $0x794] sm:$0xf]
  %v550 = vld [vmem:[%s1 + $0x798] sm:$0xf]
  %v551 = vld [vmem:[%s1 + $0x79c] sm:$0xf]
  %v552 = vld [vmem:[%s1 + $0x7a0] sm:$0xf]
  %v553 = vld [vmem:[%s1 + $0x7a4] sm:$0xf]
  %v554 = vld [vmem:[%s1 + $0x7a8] sm:$0xf]
  %v555 = vld [vmem:[%s1 + $0x7ac] sm:$0xf]
  %v556 = vld [vmem:[%s1 + $0x7b0] sm:$0xf]
  %v557 = vld [vmem:[%s1 + $0x7b4] sm:$0xf]
  %v558 = vld [vmem:[%s1 + $0x7b8] sm:$0xf]
  %v559 = vld [vmem:[%s1 + $0x7bc] sm:$0xf]
  %v560 = vld [vmem:[%s1 + $0x7c0] sm:$0xf]
  %v561 = vld [vmem:[%s1 + $0x7c4] sm:$0xf]
  %v562 = vld [vmem:[%s1 + $0x7c8] sm:$0xf]
  %v563 = vld [vmem:[%s1 + $0x7cc] sm:$0xf]
  %v564 = vld [vmem:[%s1 + $0x7d0] sm:$0xf]
  %v565 = vld [vmem:[%s1 + $0x7d4] sm:$0xf]
  %v566 = vld [vmem:[%s1 + $0x7d8] sm:$0xf]
  %v567 = vld [vmem:[%s1 + $0x7dc] sm:$0xf]
  %v568 = vld [vmem:[%s1 + $0x7e0] sm:$0xf]
  %v569 = vld [vmem:[%s1 + $0x7e4] sm:$0xf]
  %v570 = vld [vmem:[%s1 + $0x7e8] sm:$0xf]
  %v571 = vld [vmem:[%s1 + $0x7ec] sm:$0xf]
  %v572 = vld [vmem:[%s1 + $0x7f0] sm:$0xf]
  %v573 = vld [vmem:[%s1 + $0x7f4] sm:$0xf]
  %v574 = vld [vmem:[%s1 + $0x7f8] sm:$0xf]
  %v575 = vld [vmem:[%s1 + $0x7fc] sm:$0xf]
  %v576 = vld [vmem:[%s1 + $0x800] sm:$0xf]
  %v577 = vld [vmem:[%s1 + $0x804] sm:$0xf]
  %v578 = vld [vmem:[%s1 + $0x808] sm:$0xf]
  %v579 = vld [vmem:[%s1 + $0x80c] sm:$0xf]
  %v580 = vld [vmem:[%s1 + $0x810] sm:$0xf]
  %v581 = vld [vmem:[%s1 + $0x814] sm:$0xf]
  %v582 = vld [vmem:[%s1 + $0x818] sm:$0xf]
  %v583 = vld [vmem:[%s1 + $0x81c] sm:$0xf]
  %v584 = vld [vmem:[%s1 + $0x820] sm:$0xf]
  %v585 = vld [vmem:[%s1 + $0x824] sm:$0xf]
  %v586 = vld [vmem:[%s1 + $0x828] sm:$0xf]
  %v587 = vld [vmem:[%s1 + $0x82c] sm:$0xf]
  %v588 = vld [vmem:[%s1 + $0x830] sm:$0xf]
  %v589 = vld [vmem:[%s1 + $0x834] sm:$0xf]
  %v590 = vld [vmem:[%s1 + $0x838] sm:$0xf]
  %v591 = vld [vmem:[%s1 + $0x83c] sm:$0xf]
  %v592 = vld [vmem:[%s1 + $0x840] sm:$0xf]
  %v593 = vld [vmem:[%s1 + $0x844] sm:$0xf]
  %v594 = vld [vmem:[%s1 + $0x848] sm:$0xf]
  %v595 = vld [vmem:[%s1 + $0x84c] sm:$0xf]
  %v596 = vld [vmem:[%s1 + $0x850] sm:$0xf]
  %v597 = vld [vmem:[%s1 + $0x854] sm:$0xf]
  %v598 = vld [vmem:[%s1 + $0x858] sm:$0xf]
  %v599 = vld [vmem:[%s1 + $0x85c] sm:$0xf]
  %v600 = vld [vmem:[%s1 + $0x860] sm:$0xf]
  %v601 = vld [vmem:[%s1 + $0x864] sm:$0xf]
  %v602 = vld [vmem:[%s1 + $0x868] sm:$0xf]
  %v603 = vld [vmem:[%s1 + $0x86c] sm:$0xf]
  %v604 = vld [vmem:[%s1 + $0x870] sm:$0xf]
  %v605 = vld [vmem:[%s1 + $0x874] sm:$0xf]
  %v606 = vld [vmem:[%s1 + $0x878] sm:$0xf]
  %v607 = vld [vmem:[%s1 + $0x87c] sm:$0xf]
  %v608 = vld [vmem:[%s1 + $0x880] sm:$0xf]
  %v609 = vld [vmem:[%s1 + $0x884] sm:$0xf]
  %v610 = vld [vmem:[%s1 + $0x888] sm:$0xf]
  %v611 = vld [vmem:[%s1 + $0x88c] sm:$0xf]
  %v612 = vld [vmem:[%s1 + $0x890] sm:$0xf]
  %v613 = vld [vmem:[%s1 + $0x894] sm:$0xf]
  %v614 = vld [vmem:[%s1 + $0x898] sm:$0xf]
  %v615 = vld [vmem:[%s1 + $0x89c] sm:$0xf]
  %v616 = vld [vmem:[%s1 + $0x8a0] sm:$0xf]
  %v617 = vld [vmem:[%s1 + $0x8a4] sm:$0xf]
  %v618 = vld [vmem:[%s1 + $0x8a8] sm:$0xf]
  %v619 = vld [vmem:[%s1 + $0x8ac] sm:$0xf]
  %v620 = vld [vmem:[%s1 + $0x8b0] sm:$0xf]
  %v621 = vld [vmem:[%s1 + $0x8b4] sm:$0xf]
  %v622 = vld [vmem:[%s1 + $0x8b8] sm:$0xf]
  %v623 = vld [vmem:[%s1 + $0x8bc] sm:$0xf]
  %v624 = vld [vmem:[%s1 + $0x8c0] sm:$0xf]
  %v625 = vld [vmem:[%s1 + $0x8c4] sm:$0xf]
  %v626 = vld [vmem:[%s1 + $0x8c8] sm:$0xf]
  %v627 = vld [vmem:[%s1 + $0x8cc] sm:$0xf]
  %v628 = vld [vmem:[%s1 + $0x8d0] sm:$0xf]
  %v629 = vld [vmem:[%s1 + $0x8d4] sm:$0xf]
  %v630 = vld [vmem:[%s1 + $0x8d8] sm:$0xf]
  %v631 = vld [vmem:[%s1 + $0x8dc] sm:$0xf]
  %v632 = vld [vmem:[%s1 + $0x8e0] sm:$0xf]
  %v633 = vld [vmem:[%s1 + $0x8e4] sm:$0xf]
  %v634 = vld [vmem:[%s1 + $0x8e8] sm:$0xf]
  %v635 = vld [vmem:[%s1 + $0x8ec] sm:$0xf]
  %v636 = vld [vmem:[%s1 + $0x8f0] sm:$0xf]
  %v637 = vld [vmem:[%s1 + $0x8f4] sm:$0xf]
  %v638 = vld [vmem:[%s1 + $0x8f8] sm:$0xf]
  %v639 = vld [vmem:[%s1 + $0x8fc] sm:$0xf]
  %v640 = vld [vmem:[%s1 + $0x900] sm:$0xf]
  %v641 = vld [vmem:[%s1 + $0x904] sm:$0xf]
  %v642 = vld [vmem:[%s1 + $0x908] sm:$0xf]
  %v643 = vld [vmem:[%s1 + $0x90c] sm:$0xf]
  %v644 = vld [vmem:[%s1 + $0x910] sm:$0xf]
  %v645 = vld [vmem:[%s1 + $0x914] sm:$0xf]
  %v646 = vld [vmem:[%s1 + $0x918] sm:$0xf]
  %v647 = vld [vmem:[%s1 + $0x91c] sm:$0xf]
  %v648 = vld [vmem:[%s1 + $0x920] sm:$0xf]
  %v649 = vld [vmem:[%s1 + $0x924] sm:$0xf]
  %v650 = vld [vmem:[%s1 + $0x928] sm:$0xf]
  %v651 = vld [vmem:[%s1 + $0x92c] sm:$0xf]
  %v652 = vld [vmem:[%s1 + $0x930] sm:$0xf]
  %v653 = vld [vmem:[%s1 + $0x934] sm:$0xf]
  %v654 = vld [vmem:[%s1 + $0x938] sm:$0xf]
  %v655 = vld [vmem:[%s1 + $0x93c] sm:$0xf]
  %v656 = vld [vmem:[%s1 + $0x940] sm:$0xf]
  %v657 = vld [vmem:[%s1 + $0x944] sm:$0xf]
  %v658 = vld [vmem:[%s1 + $0x948] sm:$0xf]
  %v659 = vld [vmem:[%s1 + $0x94c] sm:$0xf]
  %v660 = vld [vmem:[%s1 + $0x950] sm:$0xf]
  %v661 = vld [vmem:[%s1 + $0x954] sm:$0xf]
  %v662 = vld [vmem:[%s1 + $0x958] sm:$0xf]
  %v663 = vld [vmem:[%s1 + $0x95c] sm:$0xf]
  %v664 = vld [vmem:[%s1 + $0x960] sm:$0xf]
  %v665 = vld [vmem:[%s1 + $0x964] sm:$0xf]
  %v666 = vld [vmem:[%s1 + $0x968] sm:$0xf]
  %v667 = vld [vmem:[%s1 + $0x96c] sm:$0xf]
  %v668 = vld [vmem:[%s1 + $0x970] sm:$0xf]
  %v669 = vld [vmem:[%s1 + $0x974] sm:$0xf]
  %v670 = vld [vmem:[%s1 + $0x978] sm:$0xf]
  %v671 = vld [vmem:[%s1 + $0x97c] sm:$0xf]
  %v672 = vld [vmem:[%s1 + $0x980] sm:$0xf]
  %v673 = vld [vmem:[%s1 + $0x984] sm:$0xf]
  %v674 = vld [vmem:[%s1 + $0x988] sm:$0xf]
  %v675 = vld [vmem:[%s1 + $0x98c] sm:$0xf]
  %v676 = vld [vmem:[%s1 + $0x990] sm:$0xf]
  %v677 = vld [vmem:[%s1 + $0x994] sm:$0xf]
  %v678 = vld [vmem:[%s1 + $0x998] sm:$0xf]
  %v679 = vld [vmem:[%s1 + $0x99c] sm:$0xf]
  %v680 = vld [vmem:[%s1 + $0x9a0] sm:$0xf]
  %v681 = vld [vmem:[%s1 + $0x9a4] sm:$0xf]
  %v682 = vld [vmem:[%s1 + $0x9a8] sm:$0xf]
  %v683 = vld [vmem:[%s1 + $0x9ac] sm:$0xf]
  %v684 = vld [vmem:[%s1 + $0x9b0] sm:$0xf]
  %v685 = vld [vmem:[%s1 + $0x9b4] sm:$0xf]
  %v686 = vld [vmem:[%s1 + $0x9b8] sm:$0xf]
  %v687 = vld [vmem:[%s1 + $0x9bc] sm:$0xf]
  %v688 = vld [vmem:[%s1 + $0x9c0] sm:$0xf]
  %v689 = vld [vmem:[%s1 + $0x9c4] sm:$0xf]
  %v690 = vld [vmem:[%s1 + $0x9c8] sm:$0xf]
  %v691 = vld [vmem:[%s1 + $0x9cc] sm:$0xf]
  %v692 = vld [vmem:[%s1 + $0x9d0] sm:$0xf]
  %v693 = vld [vmem:[%s1 + $0x9d4] sm:$0xf]
  %v694 = vld [vmem:[%s1 + $0x9d8] sm:$0xf]
  %v695 = vld [vmem:[%s1 + $0x9dc] sm:$0xf]
  %v696 = vld [vmem:[%s1 + $0x9e0] sm:$0xf]
  %v697 = vld [vmem:[%s1 + $0x9e4] sm:$0xf]
  %v698 = vld [vmem:[%s1 + $0x9e8] sm:$0xf]
  %v699 = vld [vmem:[%s1 + $0x9ec] sm:$0xf]
  %v700 = vld [vmem:[%s1 + $0x9f0] sm:$0xf]
  %v701 = vld [vmem:[%s1 + $0x9f4] sm:$0xf]
  %v702 = vld [vmem:[%s1 + $0x9f8] sm:$0xf]
  %v703 = vld [vmem:[%s1 + $0x9fc] sm:$0xf]
  %v704 = vld [vmem:[%s1 + $0xa00] sm:$0xf]
  %v705 = vld [vmem:[%s1 + $0xa04] sm:$0xf]
  %v706 = vld [vmem:[%s1 + $0xa08] sm:$0xf]
  %v707 = vld [vmem:[%s1 + $0xa0c] sm:$0xf]
  %v708 = vld [vmem:[%s1 + $0xa10] sm:$0xf]
  %v709 = vld [vmem:[%s1 + $0xa14] sm:$0xf]
  %v710 = vld [vmem:[%s1 + $0xa18] sm:$0xf]
  %v711 = vld [vmem:[%s1 + $0xa1c] sm:$0xf]
  %v712 = vld [vmem:[%s1 + $0xa20] sm:$0xf]
  %v713 = vld [vmem:[%s1 + $0xa24] sm:$0xf]
  %v714 = vld [vmem:[%s1 + $0xa28] sm:$0xf]
  %v715 = vld [vmem:[%s1 + $0xa2c] sm:$0xf]
  %v716 = vld [vmem:[%s1 + $0xa30] sm:$0xf]
  %v717 = vld [vmem:[%s1 + $0xa34] sm:$0xf]
  %v718 = vld [vmem:[%s1 + $0xa38] sm:$0xf]
  %v719 = vld [vmem:[%s1 + $0xa3c] sm:$0xf]
  %v720 = vld [vmem:[%s1 + $0xa40] sm:$0xf]
  %v721 = vld [vmem:[%s1 + $0xa44] sm:$0xf]
  %v722 = vld [vmem:[%s1 + $0xa48] sm:$0xf]
  %v723 = vld [vmem:[%s1 + $0xa4c] sm:$0xf]
  %v724 = vld [vmem:[%s1 + $0xa50] sm:$0xf]
  %v725 = vld [vmem:[%s1 + $0xa54] sm:$0xf]
  %v726 = vld [vmem:[%s1 + $0xa58] sm:$0xf]
  %v727 = vld [vmem:[%s1 + $0xa5c] sm:$0xf]
  %v728 = vld [vmem:[%s1 + $0xa60] sm:$0xf]
  %v729 = vld [vmem:[%s1 + $0xa64] sm:$0xf]
  %v730 = vld [vmem:[%s1 + $0xa68] sm:$0xf]
  %v731 = vld [vmem:[%s1 + $0xa6c] sm:$0xf]
  %v732 = vld [vmem:[%s1 + $0xa70] sm:$0xf]
  %v733 = vld [vmem:[%s1 + $0xa74] sm:$0xf]
  %v734 = vld [vmem:[%s1 + $0xa78] sm:$0xf]
  %v735 = vld [vmem:[%s1 + $0xa7c] sm:$0xf]
  %v736 = vld [vmem:[%s1 + $0xa80] sm:$0xf]
  %v737 = vld [vmem:[%s1 + $0xa84] sm:$0xf]
  %v738 = vld [vmem:[%s1 + $0xa88] sm:$0xf]
  %v739 = vld [vmem:[%s1 + $0xa8c] sm:$0xf]
  %v740 = vld [vmem:[%s1 + $0xa90] sm:$0xf]
  %v741 = vld [vmem:[%s1 + $0xa94] sm:$0xf]
  %v742 = vld [vmem:[%s1 + $0xa98] sm:$0xf]
  %v743 = vld [vmem:[%s1 + $0xa9c] sm:$0xf]
  %v744 = vld [vmem:[%s1 + $0xaa0] sm:$0xf]
  %v745 = vld [vmem:[%s1 + $0xaa4] sm:$0xf]
  %v746 = vld [vmem:[%s1 + $0xaa8] sm:$0xf]
  %v747 = vld [vmem:[%s1 + $0xaac] sm:$0xf]
  %v748 = vld [vmem:[%s1 + $0xab0] sm:$0xf]
  %v749 = vld [vmem:[%s1 + $0xab4] sm:$0xf]
  %v750 = vld [vmem:[%s1 + $0xab8] sm:$0xf]
  %v751 = vld [vmem:[%s1 + $0xabc] sm:$0xf]
  %v752 = vld [vmem:[%s1 + $0xac0] sm:$0xf]
  %v753 = vld [vmem:[%s1 + $0xac4] sm:$0xf]
  %v754 = vld [vmem:[%s1 + $0xac8] sm:$0xf]
  %v755 = vld [vmem:[%s1 + $0xacc] sm:$0xf]
  %v756 = vld [vmem:[%s1 + $0xad0] sm:$0xf]
  %v757 = vld [vmem:[%s1 + $0xad4] sm:$0xf]
  %v758 = vld [vmem:[%s1 + $0xad8] sm:$0xf]
  %v759 = vld [vmem:[%s1 + $0xadc] sm:$0xf]
  %v760 = vld [vmem:[%s1 + $0xae0] sm:$0xf]
  %v761 = vld [vmem:[%s1 + $0xae4] sm:$0xf]
  %v762 = vld [vmem:[%s1 + $0xae8] sm:$0xf]
  %v763 = vld [vmem:[%s1 + $0xaec] sm:$0xf]
  %v764 = vld [vmem:[%s1 + $0xaf0] sm:$0xf]
  %v765 = vld [vmem:[%s1 + $0xaf4] sm:$0xf]
  %v766 = vld [vmem:[%s1 + $0xaf8] sm:$0xf]
  %v767 = vld [vmem:[%s1 + $0xafc] sm:$0xf]
  %v768 = vld [vmem:[%s1 + $0xb00] sm:$0xf]
  %v769 = vld [vmem:[%s1 + $0xb04] sm:$0xf]
  %v770 = vld [vmem:[%s1 + $0xb08] sm:$0xf]
  %v771 = vld [vmem:[%s1 + $0xb0c] sm:$0xf]
  %v772 = vld [vmem:[%s1 + $0xb10] sm:$0xf]
  %v773 = vld [vmem:[%s1 + $0xb14] sm:$0xf]
  %v774 = vld [vmem:[%s1 + $0xb18] sm:$0xf]
  %v775 = vld [vmem:[%s1 + $0xb1c] sm:$0xf]
  %v776 = vld [vmem:[%s1 + $0xb20] sm:$0xf]
  %v777 = vld [vmem:[%s1 + $0xb24] sm:$0xf]
  %v778 = vld [vmem:[%s1 + $0xb28] sm:$0xf]
  %v779 = vld [vmem:[%s1 + $0xb2c] sm:$0xf]
  %v780 = vld [vmem:[%s1 + $0xb30] sm:$0xf]
  %v781 = vld [vmem:[%s1 + $0xb34] sm:$0xf]
  %v782 = vld [vmem:[%s1 + $0xb38] sm:$0xf]
  %v783 = vld [vmem:[%s1 + $0xb3c] sm:$0xf]
  %v784 = vld [vmem:[%s1 + $0xb40] sm:$0xf]
  %v785 = vld [vmem:[%s1 + $0xb44] sm:$0xf]
  %v786 = vld [vmem:[%s1 + $0xb48] sm:$0xf]
  %v787 = vld [vmem:[%s1 + $0xb4c] sm:$0xf]
  %v788 = vld [vmem:[%s1 + $0xb50] sm:$0xf]
  %v789 = vld [vmem:[%s1 + $0xb54] sm:$0xf]
  %v790 = vld [vmem:[%s1 + $0xb58] sm:$0xf]
  %v791 = vld [vmem:[%s1 + $0xb5c] sm:$0xf]
  %v792 = vld [vmem:[%s1 + $0xb60] sm:$0xf]
  %v793 = vld [vmem:[%s1 + $0xb64] sm:$0xf]
  %v794 = vld [vmem:[%s1 + $0xb68] sm:$0xf]
  %v795 = vld [vmem:[%s1 + $0xb6c] sm:$0xf]
  %v796 = vld [vmem:[%s1 + $0xb70] sm:$0xf]
  %v797 = vld [vmem:[%s1 + $0xb74] sm:$0xf]
  %v798 = vld [vmem:[%s1 + $0xb78] sm:$0xf]
  %v799 = vld [vmem:[%s1 + $0xb7c] sm:$0xf]
  %v800 = vld [vmem:[%s1 + $0xb80] sm:$0xf]
  %v801 = vld [vmem:[%s1 + $0xb84] sm:$0xf]
  %v802 = vld [vmem:[%s1 + $0xb88] sm:$0xf]
  %v803 = vld [vmem:[%s1 + $0xb8c] sm:$0xf]
  %v804 = vld [vmem:[%s1 + $0xb90] sm:$0xf]
  %v805 = vld [vmem:[%s1 + $0xb94] sm:$0xf]
  %v806 = vld [vmem:[%s1 + $0xb98] sm:$0xf]
  %v807 = vld [vmem:[%s1 + $0xb9c] sm:$0xf]
  %v808 = vld [vmem:[%s1 + $0xba0] sm:$0xf]
  %v809 = vld [vmem:[%s1 + $0xba4] sm:$0xf]
  %v810 = vld [vmem:[%s1 + $0xba8] sm:$0xf]
  %v811 = vld [vmem:[%s1 + $0xbac] sm:$0xf]
  %v812 = vld [vmem:[%s1 + $0xbb0] sm:$0xf]
  %v813 = vld [vmem:[%s1 + $0xbb4] sm:$0xf]
  %v814 = vld [vmem:[%s1 + $0xbb8] sm:$0xf]
  %v815 = vld [vmem:[%s1 + $0xbbc] sm:$0xf]
  %v816 = vld [vmem:[%s1 + $0xbc0] sm:$0xf]
  %v817 = vld [vmem:[%s1 + $0xbc4] sm:$0xf]
  %v818 = vld [vmem:[%s1 + $0xbc8] sm:$0xf]
  %v819 = vld [vmem:[%s1 + $0xbcc] sm:$0xf]
  %v820 = vld [vmem:[%s1 + $0xbd0] sm:$0xf]
  %v821 = vld [vmem:[%s1 + $0xbd4] sm:$0xf]
  %v822 = vld [vmem:[%s1 + $0xbd8] sm:$0xf]
  %v823 = vld [vmem:[%s1 + $0xbdc] sm:$0xf]
  %v824 = vld [vmem:[%s1 + $0xbe0] sm:$0xf]
  %v825 = vld [vmem:[%s1 + $0xbe4] sm:$0xf]
  %v826 = vld [vmem:[%s1 + $0xbe8] sm:$0xf]
  %v827 = vld [vmem:[%s1 + $0xbec] sm:$0xf]
  %v828 = vld [vmem:[%s1 + $0xbf0] sm:$0xf]
  %v829 = vld [vmem:[%s1 + $0xbf4] sm:$0xf]
  %v830 = vld [vmem:[%s1 + $0xbf8] sm:$0xf]
  %v831 = vld [vmem:[%s1 + $0xbfc] sm:$0xf]
  %v832 = vld [vmem:[%s1 + $0xc00] sm:$0xf]
  %v833 = vld [vmem:[%s1 + $0xc04] sm:$0xf]
  %v834 = vld [vmem:[%s1 + $0xc08] sm:$0xf]
  %v835 = vld [vmem:[%s1 + $0xc0c] sm:$0xf]
  %v836 = vld [vmem:[%s1 + $0xc10] sm:$0xf]
  %v837 = vld [vmem:[%s1 + $0xc14] sm:$0xf]
  %v838 = vld [vmem:[%s1 + $0xc18] sm:$0xf]
  %v839 = vld [vmem:[%s1 + $0xc1c] sm:$0xf]
  %v840 = vld [vmem:[%s1 + $0xc20] sm:$0xf]
  %v841 = vld [vmem:[%s1 + $0xc24] sm:$0xf]
  %v842 = vld [vmem:[%s1 + $0xc28] sm:$0xf]
  %v843 = vld [vmem:[%s1 + $0xc2c] sm:$0xf]
  %v844 = vld [vmem:[%s1 + $0xc30] sm:$0xf]
  %v845 = vld [vmem:[%s1 + $0xc34] sm:$0xf]
  %v846 = vld [vmem:[%s1 + $0xc38] sm:$0xf]
  %v847 = vld [vmem:[%s1 + $0xc3c] sm:$0xf]
  %v848 = vld [vmem:[%s2] sm:$0x1]
  %v850 = vperm.slane %v848, 0
  %v902 = vunpack.c.l.b16 %v14
  %v903 = vunpack.c.h.b16 %v14
  %v904 = vunpack.c.l.b16 %v15
  %v905 = vunpack.c.h.b16 %v15
  %v906 = vunpack.c.l.b16 %v16
  %v907 = vunpack.c.h.b16 %v16
  %v908 = vunpack.c.l.b16 %v17
  %v909 = vunpack.c.h.b16 %v17
  %v910 = vunpack.c.l.b16 %v18
  %v911 = vunpack.c.h.b16 %v18
  %v912 = vunpack.c.l.b16 %v19
  %v913 = vunpack.c.h.b16 %v19
  %v914 = vunpack.c.l.b16 %v20
  %v915 = vunpack.c.h.b16 %v20
  %v916 = vunpack.c.l.b16 %v21
  %v917 = vunpack.c.h.b16 %v21
  %v918 = vunpack.c.l.b16 %v22
  %v919 = vunpack.c.h.b16 %v22
  %v920 = vunpack.c.l.b16 %v23
  %v921 = vunpack.c.h.b16 %v23
  %v922 = vunpack.c.l.b16 %v24
  %v923 = vunpack.c.h.b16 %v24
  %v924 = vunpack.c.l.b16 %v25
  %v925 = vunpack.c.h.b16 %v25
  %v926 = vunpack.c.l.b16 %v26
  %v927 = vunpack.c.h.b16 %v26
  %v928 = vunpack.c.l.b16 %v27
  %v929 = vunpack.c.h.b16 %v27
  %v930 = vunpack.c.l.b16 %v28
  %v931 = vunpack.c.h.b16 %v28
  %v932 = vunpack.c.l.b16 %v29
  %v933 = vunpack.c.h.b16 %v29
  %v934 = vunpack.c.l.b16 %v30
  %v935 = vunpack.c.h.b16 %v30
  %v936 = vunpack.c.l.b16 %v31
  %v937 = vunpack.c.h.b16 %v31
  %v938 = vunpack.c.l.b16 %v32
  %v939 = vunpack.c.h.b16 %v32
  %v940 = vunpack.c.l.b16 %v33
  %v941 = vunpack.c.h.b16 %v33
  %v942 = vunpack.c.l.b16 %v34
  %v943 = vunpack.c.h.b16 %v34
  %v944 = vunpack.c.l.b16 %v35
  %v945 = vunpack.c.h.b16 %v35
  %v946 = vunpack.c.l.b16 %v36
  %v947 = vunpack.c.h.b16 %v36
  %v948 = vunpack.c.l.b16 %v37
  %v949 = vunpack.c.h.b16 %v37
  %v950 = vunpack.c.l.b16 %v38
  %v951 = vunpack.c.l.b16 %v39
  %v952 = vunpack.c.h.b16 %v39
  %v953 = vunpack.c.l.b16 %v40
  %v954 = vunpack.c.h.b16 %v40
  %v955 = vunpack.c.l.b16 %v41
  %v956 = vunpack.c.h.b16 %v41
  %v957 = vunpack.c.l.b16 %v42
  %v958 = vunpack.c.h.b16 %v42
  %v959 = vunpack.c.l.b16 %v43
  %v960 = vunpack.c.h.b16 %v43
  %v961 = vunpack.c.l.b16 %v44
  %v962 = vunpack.c.h.b16 %v44
  %v963 = vunpack.c.l.b16 %v45
  %v964 = vunpack.c.h.b16 %v45
  %v965 = vunpack.c.l.b16 %v46
  %v966 = vunpack.c.h.b16 %v46
  %v967 = vunpack.c.l.b16 %v47
  %v968 = vunpack.c.h.b16 %v47
  %v969 = vunpack.c.l.b16 %v48
  %v970 = vunpack.c.h.b16 %v48
  %v971 = vunpack.c.l.b16 %v49
  %v972 = vunpack.c.h.b16 %v49
  %v973 = vunpack.c.l.b16 %v50
  %v974 = vunpack.c.h.b16 %v50
  %v975 = vunpack.c.l.b16 %v51
  %v976 = vunpack.c.h.b16 %v51
  %v977 = vunpack.c.l.b16 %v52
  %v978 = vunpack.c.h.b16 %v52
  %v979 = vunpack.c.l.b16 %v53
  %v980 = vunpack.c.h.b16 %v53
  %v981 = vunpack.c.l.b16 %v54
  %v982 = vunpack.c.h.b16 %v54
  %v983 = vunpack.c.l.b16 %v55
  %v984 = vunpack.c.h.b16 %v55
  %v985 = vunpack.c.l.b16 %v56
  %v986 = vunpack.c.h.b16 %v56
  %v987 = vunpack.c.l.b16 %v57
  %v988 = vunpack.c.h.b16 %v57
  %v989 = vunpack.c.l.b16 %v58
  %v990 = vunpack.c.h.b16 %v58
  %v991 = vunpack.c.l.b16 %v59
  %v992 = vunpack.c.h.b16 %v59
  %v993 = vunpack.c.l.b16 %v60
  %v994 = vunpack.c.h.b16 %v60
  %v995 = vunpack.c.l.b16 %v61
  %v996 = vunpack.c.h.b16 %v61
  %v997 = vunpack.c.l.b16 %v62
  %v998 = vunpack.c.h.b16 %v62
  %v999 = vunpack.c.l.b16 %v63
  %v1000 = vpack.c.b16 %v951, %v902
  %v1001 = vpack.c.b16 %v952, %v903
  %v1002 = vpack.c.b16 %v953, %v904
  %v1003 = vpack.c.b16 %v954, %v905
  %v1004 = vpack.c.b16 %v955, %v906
  %v1005 = vpack.c.b16 %v956, %v907
  %v1006 = vpack.c.b16 %v957, %v908
  %v1007 = vpack.c.b16 %v958, %v909
  %v1008 = vpack.c.b16 %v959, %v910
  %v1009 = vpack.c.b16 %v960, %v911
  %v1010 = vpack.c.b16 %v961, %v912
  %v1011 = vpack.c.b16 %v962, %v913
  %v1012 = vpack.c.b16 %v963, %v914
  %v1013 = vpack.c.b16 %v964, %v915
  %v1014 = vpack.c.b16 %v965, %v916
  %v1015 = vpack.c.b16 %v966, %v917
  %v1016 = vpack.c.b16 %v967, %v918
  %v1017 = vpack.c.b16 %v968, %v919
  %v1018 = vpack.c.b16 %v969, %v920
  %v1019 = vpack.c.b16 %v970, %v921
  %v1020 = vpack.c.b16 %v971, %v922
  %v1021 = vpack.c.b16 %v972, %v923
  %v1022 = vpack.c.b16 %v973, %v924
  %v1023 = vpack.c.b16 %v974, %v925
  %v1024 = vpack.c.b16 %v975, %v926
  %v1025 = vpack.c.b16 %v976, %v927
  %v1026 = vpack.c.b16 %v977, %v928
  %v1027 = vpack.c.b16 %v978, %v929
  %v1028 = vpack.c.b16 %v979, %v930
  %v1029 = vpack.c.b16 %v980, %v931
  %v1030 = vpack.c.b16 %v981, %v932
  %v1031 = vpack.c.b16 %v982, %v933
  %v1032 = vpack.c.b16 %v983, %v934
  %v1033 = vpack.c.b16 %v984, %v935
  %v1034 = vpack.c.b16 %v985, %v936
  %v1035 = vpack.c.b16 %v986, %v937
  %v1036 = vpack.c.b16 %v987, %v938
  %v1037 = vpack.c.b16 %v988, %v939
  %v1038 = vpack.c.b16 %v989, %v940
  %v1039 = vpack.c.b16 %v990, %v941
  %v1040 = vpack.c.b16 %v991, %v942
  %v1041 = vpack.c.b16 %v992, %v943
  %v1042 = vpack.c.b16 %v993, %v944
  %v1043 = vpack.c.b16 %v994, %v945
  %v1044 = vpack.c.b16 %v995, %v946
  %v1045 = vpack.c.b16 %v996, %v947
  %v1046 = vpack.c.b16 %v997, %v948
  %v1047 = vpack.c.b16 %v998, %v949
  %v1048 = vpack.c.b16 %v999, %v950
  %v1882 = vunpack.c.l.b16 %v64
  %v1883 = vunpack.c.l.b16 %v65
  %v1884 = vunpack.c.l.b16 %v66
  %v1885 = vunpack.c.l.b16 %v67
  %v1886 = vunpack.c.l.b16 %v68
  %v1887 = vunpack.c.l.b16 %v69
  %v1888 = vunpack.c.l.b16 %v70
  %v1889 = vunpack.c.l.b16 %v71
  %v1890 = vunpack.c.l.b16 %v72
  %v1891 = vunpack.c.l.b16 %v73
  %v1892 = vunpack.c.l.b16 %v74
  %v1893 = vunpack.c.l.b16 %v75
  %v1894 = vunpack.c.l.b16 %v76
  %v1895 = vunpack.c.l.b16 %v77
  %v1896 = vunpack.c.l.b16 %v78
  %v1897 = vunpack.c.l.b16 %v79
  %v1898 = vunpack.c.l.b16 %v80
  %v1899 = vunpack.c.l.b16 %v81
  %v1900 = vunpack.c.l.b16 %v82
  %v1901 = vunpack.c.l.b16 %v83
  %v1902 = vunpack.c.l.b16 %v84
  %v1903 = vunpack.c.l.b16 %v85
  %v1904 = vunpack.c.l.b16 %v86
  %v1905 = vunpack.c.l.b16 %v87
  %v1906 = vunpack.c.l.b16 %v88
  %v1907 = vunpack.c.l.b16 %v89
  %v1908 = vunpack.c.l.b16 %v90
  %v1909 = vunpack.c.l.b16 %v91
  %v1910 = vunpack.c.l.b16 %v92
  %v1911 = vunpack.c.l.b16 %v93
  %v1912 = vunpack.c.l.b16 %v94
  %v1913 = vunpack.c.l.b16 %v95
  %v1914 = vunpack.c.l.b16 %v96
  %v1915 = vunpack.c.l.b16 %v97
  %v1916 = vunpack.c.l.b16 %v98
  %v1917 = vunpack.c.l.b16 %v99
  %v1918 = vunpack.c.l.b16 %v100
  %v1919 = vunpack.c.l.b16 %v101
  %v1920 = vunpack.c.l.b16 %v102
  %v1921 = vunpack.c.l.b16 %v103
  %v1922 = vunpack.c.l.b16 %v104
  %v1923 = vunpack.c.l.b16 %v105
  %v1924 = vunpack.c.l.b16 %v106
  %v1925 = vunpack.c.l.b16 %v107
  %v1926 = vunpack.c.l.b16 %v108
  %v1927 = vunpack.c.l.b16 %v109
  %v1928 = vunpack.c.l.b16 %v110
  %v1929 = vunpack.c.l.b16 %v111
  %v1930 = vunpack.c.l.b16 %v112
  %v1931 = vunpack.c.l.b16 %v113
  %v1932 = vunpack.c.l.b16 %v114
  %v1933 = vunpack.c.l.b16 %v115
  %v1934 = vunpack.c.l.b16 %v116
  %v1935 = vunpack.c.l.b16 %v117
  %v1936 = vunpack.c.l.b16 %v118
  %v1937 = vunpack.c.l.b16 %v119
  %v1938 = vunpack.c.l.b16 %v120
  %v1939 = vunpack.c.l.b16 %v121
  %v1940 = vunpack.c.l.b16 %v122
  %v1941 = vunpack.c.l.b16 %v123
  %v1942 = vunpack.c.l.b16 %v124
  %v1943 = vunpack.c.l.b16 %v125
  %v1944 = vunpack.c.l.b16 %v126
  %v1945 = vunpack.c.l.b16 %v127
  %v1946 = vunpack.c.l.b16 %v128
  %v1947 = vunpack.c.l.b16 %v129
  %v1948 = vunpack.c.l.b16 %v130
  %v1949 = vunpack.c.l.b16 %v131
  %v1950 = vunpack.c.l.b16 %v132
  %v1951 = vunpack.c.l.b16 %v133
  %v1952 = vunpack.c.l.b16 %v134
  %v1953 = vunpack.c.l.b16 %v135
  %v1954 = vunpack.c.l.b16 %v136
  %v1955 = vunpack.c.l.b16 %v137
  %v1956 = vunpack.c.l.b16 %v138
  %v1957 = vunpack.c.l.b16 %v139
  %v1958 = vunpack.c.l.b16 %v140
  %v1959 = vunpack.c.l.b16 %v141
  %v1960 = vunpack.c.l.b16 %v142
  %v1961 = vunpack.c.l.b16 %v143
  %v1962 = vunpack.c.l.b16 %v144
  %v1963 = vunpack.c.l.b16 %v145
  %v1964 = vunpack.c.l.b16 %v146
  %v1965 = vunpack.c.l.b16 %v147
  %v1966 = vunpack.c.l.b16 %v148
  %v1967 = vunpack.c.l.b16 %v149
  %v1968 = vunpack.c.l.b16 %v150
  %v1969 = vunpack.c.l.b16 %v151
  %v1970 = vunpack.c.l.b16 %v152
  %v1971 = vunpack.c.l.b16 %v153
  %v1972 = vunpack.c.l.b16 %v154
  %v1973 = vunpack.c.l.b16 %v155
  %v1974 = vunpack.c.l.b16 %v156
  %v1975 = vunpack.c.l.b16 %v157
  %v1976 = vunpack.c.l.b16 %v158
  %v1977 = vunpack.c.l.b16 %v159
  %v1978 = vunpack.c.l.b16 %v160
  %v1979 = vunpack.c.l.b16 %v161
  %v1980 = vunpack.c.l.b16 %v162
  %v1981 = vunpack.c.l.b16 %v163
  %v1982 = vunpack.c.l.b16 %v164
  %v1983 = vunpack.c.l.b16 %v165
  %v1984 = vunpack.c.l.b16 %v166
  %v1985 = vunpack.c.l.b16 %v167
  %v1986 = vunpack.c.l.b16 %v168
  %v1987 = vunpack.c.l.b16 %v169
  %v1988 = vunpack.c.l.b16 %v170
  %v1989 = vunpack.c.l.b16 %v171
  %v1990 = vunpack.c.l.b16 %v172
  %v1991 = vunpack.c.l.b16 %v173
  %v1992 = vunpack.c.l.b16 %v174
  %v1993 = vunpack.c.l.b16 %v175
  %v1994 = vunpack.c.l.b16 %v176
  %v1995 = vunpack.c.l.b16 %v177
  %v1996 = vunpack.c.l.b16 %v178
  %v1997 = vunpack.c.l.b16 %v179
  %v1998 = vunpack.c.l.b16 %v180
  %v1999 = vunpack.c.l.b16 %v181
  %v2000 = vunpack.c.l.b16 %v182
  %v2001 = vunpack.c.l.b16 %v183
  %v2002 = vunpack.c.l.b16 %v184
  %v2003 = vunpack.c.l.b16 %v185
  %v2004 = vunpack.c.l.b16 %v186
  %v2005 = vunpack.c.l.b16 %v187
  %v2006 = vunpack.c.l.b16 %v188
  %v2007 = vunpack.c.l.b16 %v189
  %v2008 = vunpack.c.l.b16 %v190
  %v2009 = vunpack.c.l.b16 %v191
  %v2010 = vunpack.c.l.b16 %v192
  %v2011 = vunpack.c.l.b16 %v193
  %v2012 = vunpack.c.l.b16 %v194
  %v2013 = vunpack.c.l.b16 %v195
  %v2014 = vunpack.c.l.b16 %v196
  %v2015 = vunpack.c.l.b16 %v197
  %v2016 = vunpack.c.l.b16 %v198
  %v2017 = vunpack.c.l.b16 %v199
  %v2018 = vunpack.c.l.b16 %v200
  %v2019 = vunpack.c.l.b16 %v201
  %v2020 = vunpack.c.l.b16 %v202
  %v2021 = vunpack.c.l.b16 %v203
  %v2022 = vunpack.c.l.b16 %v204
  %v2023 = vunpack.c.l.b16 %v205
  %v2024 = vunpack.c.l.b16 %v206
  %v2025 = vunpack.c.l.b16 %v207
  %v2026 = vunpack.c.l.b16 %v208
  %v2027 = vunpack.c.l.b16 %v209
  %v2028 = vunpack.c.l.b16 %v210
  %v2029 = vunpack.c.l.b16 %v211
  %v2030 = vunpack.c.l.b16 %v212
  %v2031 = vunpack.c.l.b16 %v213
  %v2032 = vunpack.c.l.b16 %v214
  %v2033 = vunpack.c.l.b16 %v215
  %v2034 = vunpack.c.l.b16 %v216
  %v2035 = vunpack.c.l.b16 %v217
  %v2036 = vunpack.c.l.b16 %v218
  %v2037 = vunpack.c.l.b16 %v219
  %v2038 = vunpack.c.l.b16 %v220
  %v2039 = vunpack.c.l.b16 %v221
  %v2040 = vunpack.c.l.b16 %v222
  %v2041 = vunpack.c.l.b16 %v223
  %v2042 = vunpack.c.l.b16 %v224
  %v2043 = vunpack.c.l.b16 %v225
  %v2044 = vunpack.c.l.b16 %v226
  %v2045 = vunpack.c.l.b16 %v227
  %v2046 = vunpack.c.l.b16 %v228
  %v2047 = vunpack.c.l.b16 %v229
  %v2048 = vunpack.c.l.b16 %v230
  %v2049 = vunpack.c.l.b16 %v231
  %v2050 = vunpack.c.l.b16 %v232
  %v2051 = vunpack.c.l.b16 %v233
  %v2052 = vunpack.c.l.b16 %v234
  %v2053 = vunpack.c.l.b16 %v235
  %v2054 = vunpack.c.l.b16 %v236
  %v2055 = vunpack.c.l.b16 %v237
  %v2056 = vunpack.c.l.b16 %v238
  %v2057 = vunpack.c.l.b16 %v239
  %v2058 = vunpack.c.l.b16 %v240
  %v2059 = vunpack.c.l.b16 %v241
  %v2060 = vunpack.c.l.b16 %v242
  %v2061 = vunpack.c.l.b16 %v243
  %v2062 = vunpack.c.l.b16 %v244
  %v2063 = vunpack.c.l.b16 %v245
  %v2064 = vunpack.c.l.b16 %v246
  %v2065 = vunpack.c.l.b16 %v247
  %v2066 = vunpack.c.l.b16 %v248
  %v2067 = vunpack.c.l.b16 %v249
  %v2068 = vunpack.c.l.b16 %v250
  %v2069 = vunpack.c.l.b16 %v251
  %v2070 = vunpack.c.l.b16 %v252
  %v2071 = vunpack.c.l.b16 %v253
  %v2072 = vunpack.c.l.b16 %v254
  %v2073 = vunpack.c.l.b16 %v255
  %v2074 = vunpack.c.l.b16 %v256
  %v2075 = vunpack.c.l.b16 %v257
  %v2076 = vunpack.c.l.b16 %v258
  %v2077 = vunpack.c.l.b16 %v259
  %v2078 = vunpack.c.l.b16 %v260
  %v2079 = vunpack.c.l.b16 %v261
  %v2080 = vunpack.c.l.b16 %v262
  %v2081 = vunpack.c.l.b16 %v263
  %v2082 = vunpack.c.l.b16 %v264
  %v2083 = vunpack.c.l.b16 %v265
  %v2084 = vunpack.c.l.b16 %v266
  %v2085 = vunpack.c.l.b16 %v267
  %v2086 = vunpack.c.l.b16 %v268
  %v2087 = vunpack.c.l.b16 %v269
  %v2088 = vunpack.c.l.b16 %v270
  %v2089 = vunpack.c.l.b16 %v271
  %v2090 = vunpack.c.l.b16 %v272
  %v2091 = vunpack.c.l.b16 %v273
  %v2092 = vunpack.c.l.b16 %v274
  %v2093 = vunpack.c.l.b16 %v275
  %v2094 = vunpack.c.l.b16 %v276
  %v2095 = vunpack.c.l.b16 %v277
  %v2096 = vunpack.c.l.b16 %v278
  %v2097 = vunpack.c.l.b16 %v279
  %v2098 = vunpack.c.l.b16 %v280
  %v2099 = vunpack.c.l.b16 %v281
  %v2100 = vunpack.c.l.b16 %v282
  %v2101 = vunpack.c.l.b16 %v283
  %v2102 = vunpack.c.l.b16 %v284
  %v2103 = vunpack.c.l.b16 %v285
  %v2104 = vunpack.c.l.b16 %v286
  %v2105 = vunpack.c.l.b16 %v287
  %v2106 = vunpack.c.l.b16 %v288
  %v2107 = vunpack.c.l.b16 %v289
  %v2108 = vunpack.c.l.b16 %v290
  %v2109 = vunpack.c.l.b16 %v291
  %v2110 = vunpack.c.l.b16 %v292
  %v2111 = vunpack.c.l.b16 %v293
  %v2112 = vunpack.c.l.b16 %v294
  %v2113 = vunpack.c.l.b16 %v295
  %v2114 = vunpack.c.l.b16 %v296
  %v2115 = vunpack.c.l.b16 %v297
  %v2116 = vunpack.c.l.b16 %v298
  %v2117 = vunpack.c.l.b16 %v299
  %v2118 = vunpack.c.l.b16 %v300
  %v2119 = vunpack.c.l.b16 %v301
  %v2120 = vunpack.c.l.b16 %v302
  %v2121 = vunpack.c.l.b16 %v303
  %v2122 = vunpack.c.l.b16 %v304
  %v2123 = vunpack.c.l.b16 %v305
  %v2124 = vunpack.c.l.b16 %v306
  %v2125 = vunpack.c.l.b16 %v307
  %v2126 = vunpack.c.l.b16 %v308
  %v2127 = vunpack.c.l.b16 %v309
  %v2128 = vunpack.c.l.b16 %v310
  %v2129 = vunpack.c.l.b16 %v311
  %v2130 = vunpack.c.l.b16 %v312
  %v2131 = vunpack.c.l.b16 %v313
  %v2132 = vunpack.c.l.b16 %v314
  %v2133 = vunpack.c.l.b16 %v315
  %v2134 = vunpack.c.l.b16 %v316
  %v2135 = vunpack.c.l.b16 %v317
  %v2136 = vunpack.c.l.b16 %v318
  %v2137 = vunpack.c.l.b16 %v319
  %v2138 = vunpack.c.l.b16 %v320
  %v2139 = vunpack.c.l.b16 %v321
  %v2140 = vunpack.c.l.b16 %v322
  %v2141 = vunpack.c.l.b16 %v323
  %v2142 = vunpack.c.l.b16 %v324
  %v2143 = vunpack.c.l.b16 %v325
  %v2144 = vunpack.c.l.b16 %v326
  %v2145 = vunpack.c.l.b16 %v327
  %v2146 = vunpack.c.l.b16 %v328
  %v2147 = vunpack.c.l.b16 %v329
  %v2148 = vunpack.c.l.b16 %v330
  %v2149 = vunpack.c.l.b16 %v331
  %v2150 = vunpack.c.l.b16 %v332
  %v2151 = vunpack.c.l.b16 %v333
  %v2152 = vunpack.c.l.b16 %v334
  %v2153 = vunpack.c.l.b16 %v335
  %v2154 = vunpack.c.l.b16 %v336
  %v2155 = vunpack.c.l.b16 %v337
  %v2156 = vunpack.c.l.b16 %v338
  %v2157 = vunpack.c.l.b16 %v339
  %v2158 = vunpack.c.l.b16 %v340
  %v2159 = vunpack.c.l.b16 %v341
  %v2160 = vunpack.c.l.b16 %v342
  %v2161 = vunpack.c.l.b16 %v343
  %v2162 = vunpack.c.l.b16 %v344
  %v2163 = vunpack.c.l.b16 %v345
  %v2164 = vunpack.c.l.b16 %v346
  %v2165 = vunpack.c.l.b16 %v347
  %v2166 = vunpack.c.l.b16 %v348
  %v2167 = vunpack.c.l.b16 %v349
  %v2168 = vunpack.c.l.b16 %v350
  %v2169 = vunpack.c.l.b16 %v351
  %v2170 = vunpack.c.l.b16 %v352
  %v2171 = vunpack.c.l.b16 %v353
  %v2172 = vunpack.c.l.b16 %v354
  %v2173 = vunpack.c.l.b16 %v355
  %v2174 = vunpack.c.l.b16 %v356
  %v2175 = vunpack.c.l.b16 %v357
  %v2176 = vunpack.c.l.b16 %v358
  %v2177 = vunpack.c.l.b16 %v359
  %v2178 = vunpack.c.l.b16 %v360
  %v2179 = vunpack.c.l.b16 %v361
  %v2180 = vunpack.c.l.b16 %v362
  %v2181 = vunpack.c.l.b16 %v363
  %v2182 = vunpack.c.l.b16 %v364
  %v2183 = vunpack.c.l.b16 %v365
  %v2184 = vunpack.c.l.b16 %v366
  %v2185 = vunpack.c.l.b16 %v367
  %v2186 = vunpack.c.l.b16 %v368
  %v2187 = vunpack.c.l.b16 %v369
  %v2188 = vunpack.c.l.b16 %v370
  %v2189 = vunpack.c.l.b16 %v371
  %v2190 = vunpack.c.l.b16 %v372
  %v2191 = vunpack.c.l.b16 %v373
  %v2192 = vunpack.c.l.b16 %v374
  %v2193 = vunpack.c.l.b16 %v375
  %v2194 = vunpack.c.l.b16 %v376
  %v2195 = vunpack.c.l.b16 %v377
  %v2196 = vunpack.c.l.b16 %v378
  %v2197 = vunpack.c.l.b16 %v379
  %v2198 = vunpack.c.l.b16 %v380
  %v2199 = vunpack.c.l.b16 %v381
  %v2200 = vunpack.c.l.b16 %v382
  %v2201 = vunpack.c.l.b16 %v383
  %v2202 = vunpack.c.l.b16 %v384
  %v2203 = vunpack.c.l.b16 %v385
  %v2204 = vunpack.c.l.b16 %v386
  %v2205 = vunpack.c.l.b16 %v387
  %v2206 = vunpack.c.l.b16 %v388
  %v2207 = vunpack.c.l.b16 %v389
  %v2208 = vunpack.c.l.b16 %v390
  %v2209 = vunpack.c.l.b16 %v391
  %v2210 = vunpack.c.l.b16 %v392
  %v2211 = vunpack.c.l.b16 %v393
  %v2212 = vunpack.c.l.b16 %v394
  %v2213 = vunpack.c.l.b16 %v395
  %v2214 = vunpack.c.l.b16 %v396
  %v2215 = vunpack.c.l.b16 %v397
  %v2216 = vunpack.c.l.b16 %v398
  %v2217 = vunpack.c.l.b16 %v399
  %v2218 = vunpack.c.l.b16 %v400
  %v2219 = vunpack.c.l.b16 %v401
  %v2220 = vunpack.c.l.b16 %v402
  %v2221 = vunpack.c.l.b16 %v403
  %v2222 = vunpack.c.l.b16 %v404
  %v2223 = vunpack.c.l.b16 %v405
  %v2224 = vunpack.c.l.b16 %v406
  %v2225 = vunpack.c.l.b16 %v407
  %v2226 = vunpack.c.l.b16 %v408
  %v2227 = vunpack.c.l.b16 %v409
  %v2228 = vunpack.c.l.b16 %v410
  %v2229 = vunpack.c.l.b16 %v411
  %v2230 = vunpack.c.l.b16 %v412
  %v2231 = vunpack.c.l.b16 %v413
  %v2232 = vunpack.c.l.b16 %v414
  %v2233 = vunpack.c.l.b16 %v415
  %v2234 = vunpack.c.l.b16 %v416
  %v2235 = vunpack.c.l.b16 %v417
  %v2236 = vunpack.c.l.b16 %v418
  %v2237 = vunpack.c.l.b16 %v419
  %v2238 = vunpack.c.l.b16 %v420
  %v2239 = vunpack.c.l.b16 %v421
  %v2240 = vunpack.c.l.b16 %v422
  %v2241 = vunpack.c.l.b16 %v423
  %v2242 = vunpack.c.l.b16 %v424
  %v2243 = vunpack.c.l.b16 %v425
  %v2244 = vunpack.c.l.b16 %v426
  %v2245 = vunpack.c.l.b16 %v427
  %v2246 = vunpack.c.l.b16 %v428
  %v2247 = vunpack.c.l.b16 %v429
  %v2248 = vunpack.c.l.b16 %v430
  %v2249 = vunpack.c.l.b16 %v431
  %v2250 = vunpack.c.l.b16 %v432
  %v2251 = vunpack.c.l.b16 %v433
  %v2252 = vunpack.c.l.b16 %v434
  %v2253 = vunpack.c.l.b16 %v435
  %v2254 = vunpack.c.l.b16 %v436
  %v2255 = vunpack.c.l.b16 %v437
  %v2256 = vunpack.c.l.b16 %v438
  %v2257 = vunpack.c.l.b16 %v439
  %v2258 = vunpack.c.l.b16 %v440
  %v2259 = vunpack.c.l.b16 %v441
  %v2260 = vunpack.c.l.b16 %v442
  %v2261 = vunpack.c.l.b16 %v443
  %v2262 = vunpack.c.l.b16 %v444
  %v2263 = vunpack.c.l.b16 %v445
  %v2264 = vunpack.c.l.b16 %v446
  %v2265 = vunpack.c.l.b16 %v447
  %v2266 = vunpack.c.l.b16 %v448
  %v2267 = vunpack.c.l.b16 %v449
  %v2268 = vunpack.c.l.b16 %v450
  %v2269 = vunpack.c.l.b16 %v451
  %v2270 = vunpack.c.l.b16 %v452
  %v2271 = vunpack.c.l.b16 %v453
  %v2272 = vunpack.c.l.b16 %v454
  %v2273 = vunpack.c.l.b16 %v455
  %v2274 = vunpack.c.l.b16 %v456
  %v2275 = vunpack.c.l.b16 %v457
  %v2276 = vunpack.c.l.b16 %v458
  %v2277 = vunpack.c.l.b16 %v459
  %v2278 = vunpack.c.l.b16 %v460
  %v2279 = vunpack.c.l.b16 %v461
  %v2280 = vunpack.c.l.b16 %v462
  %v2281 = vunpack.c.l.b16 %v463
  %v2282 = vunpack.c.l.b16 %v464
  %v2283 = vunpack.c.l.b16 %v465
  %v2284 = vunpack.c.l.b16 %v466
  %v2285 = vunpack.c.l.b16 %v467
  %v2286 = vunpack.c.l.b16 %v468
  %v2287 = vunpack.c.l.b16 %v469
  %v2288 = vunpack.c.l.b16 %v470
  %v2289 = vunpack.c.l.b16 %v471
  %v2290 = vunpack.c.l.b16 %v472
  %v2291 = vunpack.c.l.b16 %v473
  %v2292 = vunpack.c.l.b16 %v474
  %v2293 = vunpack.c.l.b16 %v475
  %v2294 = vunpack.c.l.b16 %v476
  %v2295 = vunpack.c.l.b16 %v477
  %v2296 = vunpack.c.l.b16 %v478
  %v2297 = vunpack.c.l.b16 %v479
  %v2298 = vunpack.c.l.b16 %v480
  %v2299 = vunpack.c.l.b16 %v481
  %v2300 = vunpack.c.l.b16 %v482
  %v2301 = vunpack.c.l.b16 %v483
  %v2302 = vunpack.c.l.b16 %v484
  %v2303 = vunpack.c.l.b16 %v485
  %v2304 = vunpack.c.l.b16 %v486
  %v2305 = vunpack.c.l.b16 %v487
  %v2306 = vunpack.c.l.b16 %v488
  %v2307 = vunpack.c.l.b16 %v489
  %v2308 = vunpack.c.l.b16 %v490
  %v2309 = vunpack.c.l.b16 %v491
  %v2310 = vunpack.c.l.b16 %v492
  %v2311 = vunpack.c.l.b16 %v493
  %v2312 = vunpack.c.l.b16 %v494
  %v2313 = vunpack.c.l.b16 %v495
  %v2314 = vunpack.c.l.b16 %v496
  %v2315 = vunpack.c.l.b16 %v497
  %v2316 = vunpack.c.l.b16 %v498
  %v2317 = vunpack.c.l.b16 %v499
  %v2318 = vunpack.c.l.b16 %v500
  %v2319 = vunpack.c.l.b16 %v501
  %v2320 = vunpack.c.l.b16 %v502
  %v2321 = vunpack.c.l.b16 %v503
  %v2322 = vunpack.c.l.b16 %v504
  %v2323 = vunpack.c.l.b16 %v505
  %v2324 = vunpack.c.l.b16 %v506
  %v2325 = vunpack.c.l.b16 %v507
  %v2326 = vunpack.c.l.b16 %v508
  %v2327 = vunpack.c.l.b16 %v509
  %v2328 = vunpack.c.l.b16 %v510
  %v2329 = vunpack.c.l.b16 %v511
  %v2330 = vunpack.c.l.b16 %v512
  %v2331 = vunpack.c.l.b16 %v513
  %v2332 = vunpack.c.l.b16 %v514
  %v2333 = vunpack.c.l.b16 %v515
  %v2334 = vunpack.c.l.b16 %v516
  %v2335 = vunpack.c.l.b16 %v517
  %v2336 = vunpack.c.l.b16 %v518
  %v2337 = vunpack.c.l.b16 %v519
  %v2338 = vunpack.c.l.b16 %v520
  %v2339 = vunpack.c.l.b16 %v521
  %v2340 = vunpack.c.l.b16 %v522
  %v2341 = vunpack.c.l.b16 %v523
  %v2342 = vunpack.c.l.b16 %v524
  %v2343 = vunpack.c.l.b16 %v525
  %v2344 = vunpack.c.l.b16 %v526
  %v2345 = vunpack.c.l.b16 %v527
  %v2346 = vunpack.c.l.b16 %v528
  %v2347 = vunpack.c.l.b16 %v529
  %v2348 = vunpack.c.l.b16 %v530
  %v2349 = vunpack.c.l.b16 %v531
  %v2350 = vunpack.c.l.b16 %v532
  %v2351 = vunpack.c.l.b16 %v533
  %v2352 = vunpack.c.l.b16 %v534
  %v2353 = vunpack.c.l.b16 %v535
  %v2354 = vunpack.c.l.b16 %v536
  %v2355 = vunpack.c.l.b16 %v537
  %v2356 = vunpack.c.l.b16 %v538
  %v2357 = vunpack.c.l.b16 %v539
  %v2358 = vunpack.c.l.b16 %v540
  %v2359 = vunpack.c.l.b16 %v541
  %v2360 = vunpack.c.l.b16 %v542
  %v2361 = vunpack.c.l.b16 %v543
  %v2362 = vunpack.c.l.b16 %v544
  %v2363 = vunpack.c.l.b16 %v545
  %v2364 = vunpack.c.l.b16 %v546
  %v2365 = vunpack.c.l.b16 %v547
  %v2366 = vunpack.c.l.b16 %v548
  %v2367 = vunpack.c.l.b16 %v549
  %v2368 = vunpack.c.l.b16 %v550
  %v2369 = vunpack.c.l.b16 %v551
  %v2370 = vunpack.c.l.b16 %v552
  %v2371 = vunpack.c.l.b16 %v553
  %v2372 = vunpack.c.l.b16 %v554
  %v2373 = vunpack.c.l.b16 %v555
  %v2374 = vunpack.c.l.b16 %v556
  %v2375 = vunpack.c.l.b16 %v557
  %v2376 = vunpack.c.l.b16 %v558
  %v2377 = vunpack.c.l.b16 %v559
  %v2378 = vunpack.c.l.b16 %v560
  %v2379 = vunpack.c.l.b16 %v561
  %v2380 = vunpack.c.l.b16 %v562
  %v2381 = vunpack.c.l.b16 %v563
  %v2382 = vunpack.c.l.b16 %v564
  %v2383 = vunpack.c.l.b16 %v565
  %v2384 = vunpack.c.l.b16 %v566
  %v2385 = vunpack.c.l.b16 %v567
  %v2386 = vunpack.c.l.b16 %v568
  %v2387 = vunpack.c.l.b16 %v569
  %v2388 = vunpack.c.l.b16 %v570
  %v2389 = vunpack.c.l.b16 %v571
  %v2390 = vunpack.c.l.b16 %v572
  %v2391 = vunpack.c.l.b16 %v573
  %v2392 = vunpack.c.l.b16 %v574
  %v2393 = vunpack.c.l.b16 %v575
  %v2394 = vunpack.c.l.b16 %v576
  %v2395 = vunpack.c.l.b16 %v577
  %v2396 = vunpack.c.l.b16 %v578
  %v2397 = vunpack.c.l.b16 %v579
  %v2398 = vunpack.c.l.b16 %v580
  %v2399 = vunpack.c.l.b16 %v581
  %v2400 = vunpack.c.l.b16 %v582
  %v2401 = vunpack.c.l.b16 %v583
  %v2402 = vunpack.c.l.b16 %v584
  %v2403 = vunpack.c.l.b16 %v585
  %v2404 = vunpack.c.l.b16 %v586
  %v2405 = vunpack.c.l.b16 %v587
  %v2406 = vunpack.c.l.b16 %v588
  %v2407 = vunpack.c.l.b16 %v589
  %v2408 = vunpack.c.l.b16 %v590
  %v2409 = vunpack.c.l.b16 %v591
  %v2410 = vunpack.c.l.b16 %v592
  %v2411 = vunpack.c.l.b16 %v593
  %v2412 = vunpack.c.l.b16 %v594
  %v2413 = vunpack.c.l.b16 %v595
  %v2414 = vunpack.c.l.b16 %v596
  %v2415 = vunpack.c.l.b16 %v597
  %v2416 = vunpack.c.l.b16 %v598
  %v2417 = vunpack.c.l.b16 %v599
  %v2418 = vunpack.c.l.b16 %v600
  %v2419 = vunpack.c.l.b16 %v601
  %v2420 = vunpack.c.l.b16 %v602
  %v2421 = vunpack.c.l.b16 %v603
  %v2422 = vunpack.c.l.b16 %v604
  %v2423 = vunpack.c.l.b16 %v605
  %v2424 = vunpack.c.l.b16 %v606
  %v2425 = vunpack.c.l.b16 %v607
  %v2426 = vunpack.c.l.b16 %v608
  %v2427 = vunpack.c.l.b16 %v609
  %v2428 = vunpack.c.l.b16 %v610
  %v2429 = vunpack.c.l.b16 %v611
  %v2430 = vunpack.c.l.b16 %v612
  %v2431 = vunpack.c.l.b16 %v613
  %v2432 = vunpack.c.l.b16 %v614
  %v2433 = vunpack.c.l.b16 %v615
  %v2434 = vunpack.c.l.b16 %v616
  %v2435 = vunpack.c.l.b16 %v617
  %v2436 = vunpack.c.l.b16 %v618
  %v2437 = vunpack.c.l.b16 %v619
  %v2438 = vunpack.c.l.b16 %v620
  %v2439 = vunpack.c.l.b16 %v621
  %v2440 = vunpack.c.l.b16 %v622
  %v2441 = vunpack.c.l.b16 %v623
  %v2442 = vunpack.c.l.b16 %v624
  %v2443 = vunpack.c.l.b16 %v625
  %v2444 = vunpack.c.l.b16 %v626
  %v2445 = vunpack.c.l.b16 %v627
  %v2446 = vunpack.c.l.b16 %v628
  %v2447 = vunpack.c.l.b16 %v629
  %v2448 = vunpack.c.l.b16 %v630
  %v2449 = vunpack.c.l.b16 %v631
  %v2450 = vunpack.c.l.b16 %v632
  %v2451 = vunpack.c.l.b16 %v633
  %v2452 = vunpack.c.l.b16 %v634
  %v2453 = vunpack.c.l.b16 %v635
  %v2454 = vunpack.c.l.b16 %v636
  %v2455 = vunpack.c.l.b16 %v637
  %v2456 = vunpack.c.l.b16 %v638
  %v2457 = vunpack.c.l.b16 %v639
  %v2458 = vunpack.c.l.b16 %v640
  %v2459 = vunpack.c.l.b16 %v641
  %v2460 = vunpack.c.l.b16 %v642
  %v2461 = vunpack.c.l.b16 %v643
  %v2462 = vunpack.c.l.b16 %v644
  %v2463 = vunpack.c.l.b16 %v645
  %v2464 = vunpack.c.l.b16 %v646
  %v2465 = vunpack.c.l.b16 %v647
  %v2466 = vunpack.c.l.b16 %v648
  %v2467 = vunpack.c.l.b16 %v649
  %v2468 = vunpack.c.l.b16 %v650
  %v2469 = vunpack.c.l.b16 %v651
  %v2470 = vunpack.c.l.b16 %v652
  %v2471 = vunpack.c.l.b16 %v653
  %v2472 = vunpack.c.l.b16 %v654
  %v2473 = vunpack.c.l.b16 %v655
  %v2474 = vunpack.c.l.b16 %v656
  %v2475 = vunpack.c.l.b16 %v657
  %v2476 = vunpack.c.l.b16 %v658
  %v2477 = vunpack.c.l.b16 %v659
  %v2478 = vunpack.c.l.b16 %v660
  %v2479 = vunpack.c.l.b16 %v661
  %v2480 = vunpack.c.l.b16 %v662
  %v2481 = vunpack.c.l.b16 %v663
  %v2482 = vunpack.c.l.b16 %v664
  %v2483 = vunpack.c.l.b16 %v665
  %v2484 = vunpack.c.l.b16 %v666
  %v2485 = vunpack.c.l.b16 %v667
  %v2486 = vunpack.c.l.b16 %v668
  %v2487 = vunpack.c.l.b16 %v669
  %v2488 = vunpack.c.l.b16 %v670
  %v2489 = vunpack.c.l.b16 %v671
  %v2490 = vunpack.c.l.b16 %v672
  %v2491 = vunpack.c.l.b16 %v673
  %v2492 = vunpack.c.l.b16 %v674
  %v2493 = vunpack.c.l.b16 %v675
  %v2494 = vunpack.c.l.b16 %v676
  %v2495 = vunpack.c.l.b16 %v677
  %v2496 = vunpack.c.l.b16 %v678
  %v2497 = vunpack.c.l.b16 %v679
  %v2498 = vunpack.c.l.b16 %v680
  %v2499 = vunpack.c.l.b16 %v681
  %v2500 = vunpack.c.l.b16 %v682
  %v2501 = vunpack.c.l.b16 %v683
  %v2502 = vunpack.c.l.b16 %v684
  %v2503 = vunpack.c.l.b16 %v685
  %v2504 = vunpack.c.l.b16 %v686
  %v2505 = vunpack.c.l.b16 %v687
  %v2506 = vunpack.c.l.b16 %v688
  %v2507 = vunpack.c.l.b16 %v689
  %v2508 = vunpack.c.l.b16 %v690
  %v2509 = vunpack.c.l.b16 %v691
  %v2510 = vunpack.c.l.b16 %v692
  %v2511 = vunpack.c.l.b16 %v693
  %v2512 = vunpack.c.l.b16 %v694
  %v2513 = vunpack.c.l.b16 %v695
  %v2514 = vunpack.c.l.b16 %v696
  %v2515 = vunpack.c.l.b16 %v697
  %v2516 = vunpack.c.l.b16 %v698
  %v2517 = vunpack.c.l.b16 %v699
  %v2518 = vunpack.c.l.b16 %v700
  %v2519 = vunpack.c.l.b16 %v701
  %v2520 = vunpack.c.l.b16 %v702
  %v2521 = vunpack.c.l.b16 %v703
  %v2522 = vunpack.c.l.b16 %v704
  %v2523 = vunpack.c.l.b16 %v705
  %v2524 = vunpack.c.l.b16 %v706
  %v2525 = vunpack.c.l.b16 %v707
  %v2526 = vunpack.c.l.b16 %v708
  %v2527 = vunpack.c.l.b16 %v709
  %v2528 = vunpack.c.l.b16 %v710
  %v2529 = vunpack.c.l.b16 %v711
  %v2530 = vunpack.c.l.b16 %v712
  %v2531 = vunpack.c.l.b16 %v713
  %v2532 = vunpack.c.l.b16 %v714
  %v2533 = vunpack.c.l.b16 %v715
  %v2534 = vunpack.c.l.b16 %v716
  %v2535 = vunpack.c.l.b16 %v717
  %v2536 = vunpack.c.l.b16 %v718
  %v2537 = vunpack.c.l.b16 %v719
  %v2538 = vunpack.c.l.b16 %v720
  %v2539 = vunpack.c.l.b16 %v721
  %v2540 = vunpack.c.l.b16 %v722
  %v2541 = vunpack.c.l.b16 %v723
  %v2542 = vunpack.c.l.b16 %v724
  %v2543 = vunpack.c.l.b16 %v725
  %v2544 = vunpack.c.l.b16 %v726
  %v2545 = vunpack.c.l.b16 %v727
  %v2546 = vunpack.c.l.b16 %v728
  %v2547 = vunpack.c.l.b16 %v729
  %v2548 = vunpack.c.l.b16 %v730
  %v2549 = vunpack.c.l.b16 %v731
  %v2550 = vunpack.c.l.b16 %v732
  %v2551 = vunpack.c.l.b16 %v733
  %v2552 = vunpack.c.l.b16 %v734
  %v2553 = vunpack.c.l.b16 %v735
  %v2554 = vunpack.c.l.b16 %v736
  %v2555 = vunpack.c.l.b16 %v737
  %v2556 = vunpack.c.l.b16 %v738
  %v2557 = vunpack.c.l.b16 %v739
  %v2558 = vunpack.c.l.b16 %v740
  %v2559 = vunpack.c.l.b16 %v741
  %v2560 = vunpack.c.l.b16 %v742
  %v2561 = vunpack.c.l.b16 %v743
  %v2562 = vunpack.c.l.b16 %v744
  %v2563 = vunpack.c.l.b16 %v745
  %v2564 = vunpack.c.l.b16 %v746
  %v2565 = vunpack.c.l.b16 %v747
  %v2566 = vunpack.c.l.b16 %v748
  %v2567 = vunpack.c.l.b16 %v749
  %v2568 = vunpack.c.l.b16 %v750
  %v2569 = vunpack.c.l.b16 %v751
  %v2570 = vunpack.c.l.b16 %v752
  %v2571 = vunpack.c.l.b16 %v753
  %v2572 = vunpack.c.l.b16 %v754
  %v2573 = vunpack.c.l.b16 %v755
  %v2574 = vunpack.c.l.b16 %v756
  %v2575 = vunpack.c.l.b16 %v757
  %v2576 = vunpack.c.l.b16 %v758
  %v2577 = vunpack.c.l.b16 %v759
  %v2578 = vunpack.c.l.b16 %v760
  %v2579 = vunpack.c.l.b16 %v761
  %v2580 = vunpack.c.l.b16 %v762
  %v2581 = vunpack.c.l.b16 %v763
  %v2582 = vunpack.c.l.b16 %v764
  %v2583 = vunpack.c.l.b16 %v765
  %v2584 = vunpack.c.l.b16 %v766
  %v2585 = vunpack.c.l.b16 %v767
  %v2586 = vunpack.c.l.b16 %v768
  %v2587 = vunpack.c.l.b16 %v769
  %v2588 = vunpack.c.l.b16 %v770
  %v2589 = vunpack.c.l.b16 %v771
  %v2590 = vunpack.c.l.b16 %v772
  %v2591 = vunpack.c.l.b16 %v773
  %v2592 = vunpack.c.l.b16 %v774
  %v2593 = vunpack.c.l.b16 %v775
  %v2594 = vunpack.c.l.b16 %v776
  %v2595 = vunpack.c.l.b16 %v777
  %v2596 = vunpack.c.l.b16 %v778
  %v2597 = vunpack.c.l.b16 %v779
  %v2598 = vunpack.c.l.b16 %v780
  %v2599 = vunpack.c.l.b16 %v781
  %v2600 = vunpack.c.l.b16 %v782
  %v2601 = vunpack.c.l.b16 %v783
  %v2602 = vunpack.c.l.b16 %v784
  %v2603 = vunpack.c.l.b16 %v785
  %v2604 = vunpack.c.l.b16 %v786
  %v2605 = vunpack.c.l.b16 %v787
  %v2606 = vunpack.c.l.b16 %v788
  %v2607 = vunpack.c.l.b16 %v789
  %v2608 = vunpack.c.l.b16 %v790
  %v2609 = vunpack.c.l.b16 %v791
  %v2610 = vunpack.c.l.b16 %v792
  %v2611 = vunpack.c.l.b16 %v793
  %v2612 = vunpack.c.l.b16 %v794
  %v2613 = vunpack.c.l.b16 %v795
  %v2614 = vunpack.c.l.b16 %v796
  %v2615 = vunpack.c.l.b16 %v797
  %v2616 = vunpack.c.l.b16 %v798
  %v2617 = vunpack.c.l.b16 %v799
  %v2618 = vunpack.c.l.b16 %v800
  %v2619 = vunpack.c.l.b16 %v801
  %v2620 = vunpack.c.l.b16 %v802
  %v2621 = vunpack.c.l.b16 %v803
  %v2622 = vunpack.c.l.b16 %v804
  %v2623 = vunpack.c.l.b16 %v805
  %v2624 = vunpack.c.l.b16 %v806
  %v2625 = vunpack.c.l.b16 %v807
  %v2626 = vunpack.c.l.b16 %v808
  %v2627 = vunpack.c.l.b16 %v809
  %v2628 = vunpack.c.l.b16 %v810
  %v2629 = vunpack.c.l.b16 %v811
  %v2630 = vunpack.c.l.b16 %v812
  %v2631 = vunpack.c.l.b16 %v813
  %v2632 = vunpack.c.l.b16 %v814
  %v2633 = vunpack.c.l.b16 %v815
  %v2634 = vunpack.c.l.b16 %v816
  %v2635 = vunpack.c.l.b16 %v817
  %v2636 = vunpack.c.l.b16 %v818
  %v2637 = vunpack.c.l.b16 %v819
  %v2638 = vunpack.c.l.b16 %v820
  %v2639 = vunpack.c.l.b16 %v821
  %v2640 = vunpack.c.l.b16 %v822
  %v2641 = vunpack.c.l.b16 %v823
  %v2642 = vunpack.c.l.b16 %v824
  %v2643 = vunpack.c.l.b16 %v825
  %v2644 = vunpack.c.l.b16 %v826
  %v2645 = vunpack.c.l.b16 %v827
  %v2646 = vunpack.c.l.b16 %v828
  %v2647 = vunpack.c.l.b16 %v829
  %v2648 = vunpack.c.l.b16 %v830
  %v2649 = vunpack.c.l.b16 %v831
  %v2650 = vunpack.c.l.b16 %v832
  %v2651 = vunpack.c.l.b16 %v833
  %v2652 = vunpack.c.l.b16 %v834
  %v2653 = vunpack.c.l.b16 %v835
  %v2654 = vunpack.c.l.b16 %v836
  %v2655 = vunpack.c.l.b16 %v837
  %v2656 = vunpack.c.l.b16 %v838
  %v2657 = vunpack.c.l.b16 %v839
  %v2658 = vunpack.c.l.b16 %v840
  %v2659 = vunpack.c.l.b16 %v841
  %v2660 = vunpack.c.l.b16 %v842
  %v2661 = vunpack.c.l.b16 %v843
  %v2662 = vunpack.c.l.b16 %v844
  %v2663 = vunpack.c.l.b16 %v845
  %v2664 = vunpack.c.l.b16 %v846
  %v2665 = vunpack.c.l.b16 %v847
  %v2666 = vpack.c.b16 %v1883, %v1882
  %v2667 = vpack.c.b16 %v1885, %v1884
  %v2668 = vpack.c.b16 %v1887, %v1886
  %v2669 = vpack.c.b16 %v1889, %v1888
  %v2670 = vpack.c.b16 %v1891, %v1890
  %v2671 = vpack.c.b16 %v1893, %v1892
  %v2672 = vpack.c.b16 %v1895, %v1894
  %v2673 = vpack.c.b16 %v1897, %v1896
  %v2674 = vpack.c.b16 %v1899, %v1898
  %v2675 = vpack.c.b16 %v1901, %v1900
  %v2676 = vpack.c.b16 %v1903, %v1902
  %v2677 = vpack.c.b16 %v1905, %v1904
  %v2678 = vpack.c.b16 %v1907, %v1906
  %v2679 = vpack.c.b16 %v1909, %v1908
  %v2680 = vpack.c.b16 %v1911, %v1910
  %v2681 = vpack.c.b16 %v1913, %v1912
  %v2682 = vpack.c.b16 %v1915, %v1914
  %v2683 = vpack.c.b16 %v1917, %v1916
  %v2684 = vpack.c.b16 %v1919, %v1918
  %v2685 = vpack.c.b16 %v1921, %v1920
  %v2686 = vpack.c.b16 %v1923, %v1922
  %v2687 = vpack.c.b16 %v1925, %v1924
  %v2688 = vpack.c.b16 %v1927, %v1926
  %v2689 = vpack.c.b16 %v1929, %v1928
  %v2690 = vpack.c.b16 %v1931, %v1930
  %v2691 = vpack.c.b16 %v1933, %v1932
  %v2692 = vpack.c.b16 %v1935, %v1934
  %v2693 = vpack.c.b16 %v1937, %v1936
  %v2694 = vpack.c.b16 %v1939, %v1938
  %v2695 = vpack.c.b16 %v1941, %v1940
  %v2696 = vpack.c.b16 %v1943, %v1942
  %v2697 = vpack.c.b16 %v1945, %v1944
  %v2698 = vpack.c.b16 %v1947, %v1946
  %v2699 = vpack.c.b16 %v1949, %v1948
  %v2700 = vpack.c.b16 %v1951, %v1950
  %v2701 = vpack.c.b16 %v1953, %v1952
  %v2702 = vpack.c.b16 %v1955, %v1954
  %v2703 = vpack.c.b16 %v1957, %v1956
  %v2704 = vpack.c.b16 %v1959, %v1958
  %v2705 = vpack.c.b16 %v1961, %v1960
  %v2706 = vpack.c.b16 %v1963, %v1962
  %v2707 = vpack.c.b16 %v1965, %v1964
  %v2708 = vpack.c.b16 %v1967, %v1966
  %v2709 = vpack.c.b16 %v1969, %v1968
  %v2710 = vpack.c.b16 %v1971, %v1970
  %v2711 = vpack.c.b16 %v1973, %v1972
  %v2712 = vpack.c.b16 %v1975, %v1974
  %v2713 = vpack.c.b16 %v1977, %v1976
  %v2714 = vpack.c.b16 %v1979, %v1978
  %v2715 = vpack.c.b16 %v1981, %v1980
  %v2716 = vpack.c.b16 %v1983, %v1982
  %v2717 = vpack.c.b16 %v1985, %v1984
  %v2718 = vpack.c.b16 %v1987, %v1986
  %v2719 = vpack.c.b16 %v1989, %v1988
  %v2720 = vpack.c.b16 %v1991, %v1990
  %v2721 = vpack.c.b16 %v1993, %v1992
  %v2722 = vpack.c.b16 %v1995, %v1994
  %v2723 = vpack.c.b16 %v1997, %v1996
  %v2724 = vpack.c.b16 %v1999, %v1998
  %v2725 = vpack.c.b16 %v2001, %v2000
  %v2726 = vpack.c.b16 %v2003, %v2002
  %v2727 = vpack.c.b16 %v2005, %v2004
  %v2728 = vpack.c.b16 %v2007, %v2006
  %v2729 = vpack.c.b16 %v2009, %v2008
  %v2730 = vpack.c.b16 %v2011, %v2010
  %v2731 = vpack.c.b16 %v2013, %v2012
  %v2732 = vpack.c.b16 %v2015, %v2014
  %v2733 = vpack.c.b16 %v2017, %v2016
  %v2734 = vpack.c.b16 %v2019, %v2018
  %v2735 = vpack.c.b16 %v2021, %v2020
  %v2736 = vpack.c.b16 %v2023, %v2022
  %v2737 = vpack.c.b16 %v2025, %v2024
  %v2738 = vpack.c.b16 %v2027, %v2026
  %v2739 = vpack.c.b16 %v2029, %v2028
  %v2740 = vpack.c.b16 %v2031, %v2030
  %v2741 = vpack.c.b16 %v2033, %v2032
  %v2742 = vpack.c.b16 %v2035, %v2034
  %v2743 = vpack.c.b16 %v2037, %v2036
  %v2744 = vpack.c.b16 %v2039, %v2038
  %v2745 = vpack.c.b16 %v2041, %v2040
  %v2746 = vpack.c.b16 %v2043, %v2042
  %v2747 = vpack.c.b16 %v2045, %v2044
  %v2748 = vpack.c.b16 %v2047, %v2046
  %v2749 = vpack.c.b16 %v2049, %v2048
  %v2750 = vpack.c.b16 %v2051, %v2050
  %v2751 = vpack.c.b16 %v2053, %v2052
  %v2752 = vpack.c.b16 %v2055, %v2054
  %v2753 = vpack.c.b16 %v2057, %v2056
  %v2754 = vpack.c.b16 %v2059, %v2058
  %v2755 = vpack.c.b16 %v2061, %v2060
  %v2756 = vpack.c.b16 %v2063, %v2062
  %v2757 = vpack.c.b16 %v2065, %v2064
  %v2758 = vpack.c.b16 %v2067, %v2066
  %v2759 = vpack.c.b16 %v2069, %v2068
  %v2760 = vpack.c.b16 %v2071, %v2070
  %v2761 = vpack.c.b16 %v2073, %v2072
  %v2762 = vpack.c.b16 %v2075, %v2074
  %v2763 = vpack.c.b16 %v2077, %v2076
  %v2764 = vpack.c.b16 %v2079, %v2078
  %v2765 = vpack.c.b16 %v2081, %v2080
  %v2766 = vpack.c.b16 %v2083, %v2082
  %v2767 = vpack.c.b16 %v2085, %v2084
  %v2768 = vpack.c.b16 %v2087, %v2086
  %v2769 = vpack.c.b16 %v2089, %v2088
  %v2770 = vpack.c.b16 %v2091, %v2090
  %v2771 = vpack.c.b16 %v2093, %v2092
  %v2772 = vpack.c.b16 %v2095, %v2094
  %v2773 = vpack.c.b16 %v2097, %v2096
  %v2774 = vpack.c.b16 %v2099, %v2098
  %v2775 = vpack.c.b16 %v2101, %v2100
  %v2776 = vpack.c.b16 %v2103, %v2102
  %v2777 = vpack.c.b16 %v2105, %v2104
  %v2778 = vpack.c.b16 %v2107, %v2106
  %v2779 = vpack.c.b16 %v2109, %v2108
  %v2780 = vpack.c.b16 %v2111, %v2110
  %v2781 = vpack.c.b16 %v2113, %v2112
  %v2782 = vpack.c.b16 %v2115, %v2114
  %v2783 = vpack.c.b16 %v2117, %v2116
  %v2784 = vpack.c.b16 %v2119, %v2118
  %v2785 = vpack.c.b16 %v2121, %v2120
  %v2786 = vpack.c.b16 %v2123, %v2122
  %v2787 = vpack.c.b16 %v2125, %v2124
  %v2788 = vpack.c.b16 %v2127, %v2126
  %v2789 = vpack.c.b16 %v2129, %v2128
  %v2790 = vpack.c.b16 %v2131, %v2130
  %v2791 = vpack.c.b16 %v2133, %v2132
  %v2792 = vpack.c.b16 %v2135, %v2134
  %v2793 = vpack.c.b16 %v2137, %v2136
  %v2794 = vpack.c.b16 %v2139, %v2138
  %v2795 = vpack.c.b16 %v2141, %v2140
  %v2796 = vpack.c.b16 %v2143, %v2142
  %v2797 = vpack.c.b16 %v2145, %v2144
  %v2798 = vpack.c.b16 %v2147, %v2146
  %v2799 = vpack.c.b16 %v2149, %v2148
  %v2800 = vpack.c.b16 %v2151, %v2150
  %v2801 = vpack.c.b16 %v2153, %v2152
  %v2802 = vpack.c.b16 %v2155, %v2154
  %v2803 = vpack.c.b16 %v2157, %v2156
  %v2804 = vpack.c.b16 %v2159, %v2158
  %v2805 = vpack.c.b16 %v2161, %v2160
  %v2806 = vpack.c.b16 %v2163, %v2162
  %v2807 = vpack.c.b16 %v2165, %v2164
  %v2808 = vpack.c.b16 %v2167, %v2166
  %v2809 = vpack.c.b16 %v2169, %v2168
  %v2810 = vpack.c.b16 %v2171, %v2170
  %v2811 = vpack.c.b16 %v2173, %v2172
  %v2812 = vpack.c.b16 %v2175, %v2174
  %v2813 = vpack.c.b16 %v2177, %v2176
  %v2814 = vpack.c.b16 %v2179, %v2178
  %v2815 = vpack.c.b16 %v2181, %v2180
  %v2816 = vpack.c.b16 %v2183, %v2182
  %v2817 = vpack.c.b16 %v2185, %v2184
  %v2818 = vpack.c.b16 %v2187, %v2186
  %v2819 = vpack.c.b16 %v2189, %v2188
  %v2820 = vpack.c.b16 %v2191, %v2190
  %v2821 = vpack.c.b16 %v2193, %v2192
  %v2822 = vpack.c.b16 %v2195, %v2194
  %v2823 = vpack.c.b16 %v2197, %v2196
  %v2824 = vpack.c.b16 %v2199, %v2198
  %v2825 = vpack.c.b16 %v2201, %v2200
  %v2826 = vpack.c.b16 %v2203, %v2202
  %v2827 = vpack.c.b16 %v2205, %v2204
  %v2828 = vpack.c.b16 %v2207, %v2206
  %v2829 = vpack.c.b16 %v2209, %v2208
  %v2830 = vpack.c.b16 %v2211, %v2210
  %v2831 = vpack.c.b16 %v2213, %v2212
  %v2832 = vpack.c.b16 %v2215, %v2214
  %v2833 = vpack.c.b16 %v2217, %v2216
  %v2834 = vpack.c.b16 %v2219, %v2218
  %v2835 = vpack.c.b16 %v2221, %v2220
  %v2836 = vpack.c.b16 %v2223, %v2222
  %v2837 = vpack.c.b16 %v2225, %v2224
  %v2838 = vpack.c.b16 %v2227, %v2226
  %v2839 = vpack.c.b16 %v2229, %v2228
  %v2840 = vpack.c.b16 %v2231, %v2230
  %v2841 = vpack.c.b16 %v2233, %v2232
  %v2842 = vpack.c.b16 %v2235, %v2234
  %v2843 = vpack.c.b16 %v2237, %v2236
  %v2844 = vpack.c.b16 %v2239, %v2238
  %v2845 = vpack.c.b16 %v2241, %v2240
  %v2846 = vpack.c.b16 %v2243, %v2242
  %v2847 = vpack.c.b16 %v2245, %v2244
  %v2848 = vpack.c.b16 %v2247, %v2246
  %v2849 = vpack.c.b16 %v2249, %v2248
  %v2850 = vpack.c.b16 %v2251, %v2250
  %v2851 = vpack.c.b16 %v2253, %v2252
  %v2852 = vpack.c.b16 %v2255, %v2254
  %v2853 = vpack.c.b16 %v2257, %v2256
  %v2854 = vpack.c.b16 %v2259, %v2258
  %v2855 = vpack.c.b16 %v2261, %v2260
  %v2856 = vpack.c.b16 %v2263, %v2262
  %v2857 = vpack.c.b16 %v2265, %v2264
  %v2858 = vpack.c.b16 %v2267, %v2266
  %v2859 = vpack.c.b16 %v2269, %v2268
  %v2860 = vpack.c.b16 %v2271, %v2270
  %v2861 = vpack.c.b16 %v2273, %v2272
  %v2862 = vpack.c.b16 %v2275, %v2274
  %v2863 = vpack.c.b16 %v2277, %v2276
  %v2864 = vpack.c.b16 %v2279, %v2278
  %v2865 = vpack.c.b16 %v2281, %v2280
  %v2866 = vpack.c.b16 %v2283, %v2282
  %v2867 = vpack.c.b16 %v2285, %v2284
  %v2868 = vpack.c.b16 %v2287, %v2286
  %v2869 = vpack.c.b16 %v2289, %v2288
  %v2870 = vpack.c.b16 %v2291, %v2290
  %v2871 = vpack.c.b16 %v2293, %v2292
  %v2872 = vpack.c.b16 %v2295, %v2294
  %v2873 = vpack.c.b16 %v2297, %v2296
  %v2874 = vpack.c.b16 %v2299, %v2298
  %v2875 = vpack.c.b16 %v2301, %v2300
  %v2876 = vpack.c.b16 %v2303, %v2302
  %v2877 = vpack.c.b16 %v2305, %v2304
  %v2878 = vpack.c.b16 %v2307, %v2306
  %v2879 = vpack.c.b16 %v2309, %v2308
  %v2880 = vpack.c.b16 %v2311, %v2310
  %v2881 = vpack.c.b16 %v2313, %v2312
  %v2882 = vpack.c.b16 %v2315, %v2314
  %v2883 = vpack.c.b16 %v2317, %v2316
  %v2884 = vpack.c.b16 %v2319, %v2318
  %v2885 = vpack.c.b16 %v2321, %v2320
  %v2886 = vpack.c.b16 %v2323, %v2322
  %v2887 = vpack.c.b16 %v2325, %v2324
  %v2888 = vpack.c.b16 %v2327, %v2326
  %v2889 = vpack.c.b16 %v2329, %v2328
  %v2890 = vpack.c.b16 %v2331, %v2330
  %v2891 = vpack.c.b16 %v2333, %v2332
  %v2892 = vpack.c.b16 %v2335, %v2334
  %v2893 = vpack.c.b16 %v2337, %v2336
  %v2894 = vpack.c.b16 %v2339, %v2338
  %v2895 = vpack.c.b16 %v2341, %v2340
  %v2896 = vpack.c.b16 %v2343, %v2342
  %v2897 = vpack.c.b16 %v2345, %v2344
  %v2898 = vpack.c.b16 %v2347, %v2346
  %v2899 = vpack.c.b16 %v2349, %v2348
  %v2900 = vpack.c.b16 %v2351, %v2350
  %v2901 = vpack.c.b16 %v2353, %v2352
  %v2902 = vpack.c.b16 %v2355, %v2354
  %v2903 = vpack.c.b16 %v2357, %v2356
  %v2904 = vpack.c.b16 %v2359, %v2358
  %v2905 = vpack.c.b16 %v2361, %v2360
  %v2906 = vpack.c.b16 %v2363, %v2362
  %v2907 = vpack.c.b16 %v2365, %v2364
  %v2908 = vpack.c.b16 %v2367, %v2366
  %v2909 = vpack.c.b16 %v2369, %v2368
  %v2910 = vpack.c.b16 %v2371, %v2370
  %v2911 = vpack.c.b16 %v2373, %v2372
  %v2912 = vpack.c.b16 %v2375, %v2374
  %v2913 = vpack.c.b16 %v2377, %v2376
  %v2914 = vpack.c.b16 %v2379, %v2378
  %v2915 = vpack.c.b16 %v2381, %v2380
  %v2916 = vpack.c.b16 %v2383, %v2382
  %v2917 = vpack.c.b16 %v2385, %v2384
  %v2918 = vpack.c.b16 %v2387, %v2386
  %v2919 = vpack.c.b16 %v2389, %v2388
  %v2920 = vpack.c.b16 %v2391, %v2390
  %v2921 = vpack.c.b16 %v2393, %v2392
  %v2922 = vpack.c.b16 %v2395, %v2394
  %v2923 = vpack.c.b16 %v2397, %v2396
  %v2924 = vpack.c.b16 %v2399, %v2398
  %v2925 = vpack.c.b16 %v2401, %v2400
  %v2926 = vpack.c.b16 %v2403, %v2402
  %v2927 = vpack.c.b16 %v2405, %v2404
  %v2928 = vpack.c.b16 %v2407, %v2406
  %v2929 = vpack.c.b16 %v2409, %v2408
  %v2930 = vpack.c.b16 %v2411, %v2410
  %v2931 = vpack.c.b16 %v2413, %v2412
  %v2932 = vpack.c.b16 %v2415, %v2414
  %v2933 = vpack.c.b16 %v2417, %v2416
  %v2934 = vpack.c.b16 %v2419, %v2418
  %v2935 = vpack.c.b16 %v2421, %v2420
  %v2936 = vpack.c.b16 %v2423, %v2422
  %v2937 = vpack.c.b16 %v2425, %v2424
  %v2938 = vpack.c.b16 %v2427, %v2426
  %v2939 = vpack.c.b16 %v2429, %v2428
  %v2940 = vpack.c.b16 %v2431, %v2430
  %v2941 = vpack.c.b16 %v2433, %v2432
  %v2942 = vpack.c.b16 %v2435, %v2434
  %v2943 = vpack.c.b16 %v2437, %v2436
  %v2944 = vpack.c.b16 %v2439, %v2438
  %v2945 = vpack.c.b16 %v2441, %v2440
  %v2946 = vpack.c.b16 %v2443, %v2442
  %v2947 = vpack.c.b16 %v2445, %v2444
  %v2948 = vpack.c.b16 %v2447, %v2446
  %v2949 = vpack.c.b16 %v2449, %v2448
  %v2950 = vpack.c.b16 %v2451, %v2450
  %v2951 = vpack.c.b16 %v2453, %v2452
  %v2952 = vpack.c.b16 %v2455, %v2454
  %v2953 = vpack.c.b16 %v2457, %v2456
  %v2954 = vpack.c.b16 %v2459, %v2458
  %v2955 = vpack.c.b16 %v2461, %v2460
  %v2956 = vpack.c.b16 %v2463, %v2462
  %v2957 = vpack.c.b16 %v2465, %v2464
  %v2958 = vpack.c.b16 %v2467, %v2466
  %v2959 = vpack.c.b16 %v2469, %v2468
  %v2960 = vpack.c.b16 %v2471, %v2470
  %v2961 = vpack.c.b16 %v2473, %v2472
  %v2962 = vpack.c.b16 %v2475, %v2474
  %v2963 = vpack.c.b16 %v2477, %v2476
  %v2964 = vpack.c.b16 %v2479, %v2478
  %v2965 = vpack.c.b16 %v2481, %v2480
  %v2966 = vpack.c.b16 %v2483, %v2482
  %v2967 = vpack.c.b16 %v2485, %v2484
  %v2968 = vpack.c.b16 %v2487, %v2486
  %v2969 = vpack.c.b16 %v2489, %v2488
  %v2970 = vpack.c.b16 %v2491, %v2490
  %v2971 = vpack.c.b16 %v2493, %v2492
  %v2972 = vpack.c.b16 %v2495, %v2494
  %v2973 = vpack.c.b16 %v2497, %v2496
  %v2974 = vpack.c.b16 %v2499, %v2498
  %v2975 = vpack.c.b16 %v2501, %v2500
  %v2976 = vpack.c.b16 %v2503, %v2502
  %v2977 = vpack.c.b16 %v2505, %v2504
  %v2978 = vpack.c.b16 %v2507, %v2506
  %v2979 = vpack.c.b16 %v2509, %v2508
  %v2980 = vpack.c.b16 %v2511, %v2510
  %v2981 = vpack.c.b16 %v2513, %v2512
  %v2982 = vpack.c.b16 %v2515, %v2514
  %v2983 = vpack.c.b16 %v2517, %v2516
  %v2984 = vpack.c.b16 %v2519, %v2518
  %v2985 = vpack.c.b16 %v2521, %v2520
  %v2986 = vpack.c.b16 %v2523, %v2522
  %v2987 = vpack.c.b16 %v2525, %v2524
  %v2988 = vpack.c.b16 %v2527, %v2526
  %v2989 = vpack.c.b16 %v2529, %v2528
  %v2990 = vpack.c.b16 %v2531, %v2530
  %v2991 = vpack.c.b16 %v2533, %v2532
  %v2992 = vpack.c.b16 %v2535, %v2534
  %v2993 = vpack.c.b16 %v2537, %v2536
  %v2994 = vpack.c.b16 %v2539, %v2538
  %v2995 = vpack.c.b16 %v2541, %v2540
  %v2996 = vpack.c.b16 %v2543, %v2542
  %v2997 = vpack.c.b16 %v2545, %v2544
  %v2998 = vpack.c.b16 %v2547, %v2546
  %v2999 = vpack.c.b16 %v2549, %v2548
  %v3000 = vpack.c.b16 %v2551, %v2550
  %v3001 = vpack.c.b16 %v2553, %v2552
  %v3002 = vpack.c.b16 %v2555, %v2554
  %v3003 = vpack.c.b16 %v2557, %v2556
  %v3004 = vpack.c.b16 %v2559, %v2558
  %v3005 = vpack.c.b16 %v2561, %v2560
  %v3006 = vpack.c.b16 %v2563, %v2562
  %v3007 = vpack.c.b16 %v2565, %v2564
  %v3008 = vpack.c.b16 %v2567, %v2566
  %v3009 = vpack.c.b16 %v2569, %v2568
  %v3010 = vpack.c.b16 %v2571, %v2570
  %v3011 = vpack.c.b16 %v2573, %v2572
  %v3012 = vpack.c.b16 %v2575, %v2574
  %v3013 = vpack.c.b16 %v2577, %v2576
  %v3014 = vpack.c.b16 %v2579, %v2578
  %v3015 = vpack.c.b16 %v2581, %v2580
  %v3016 = vpack.c.b16 %v2583, %v2582
  %v3017 = vpack.c.b16 %v2585, %v2584
  %v3018 = vpack.c.b16 %v2587, %v2586
  %v3019 = vpack.c.b16 %v2589, %v2588
  %v3020 = vpack.c.b16 %v2591, %v2590
  %v3021 = vpack.c.b16 %v2593, %v2592
  %v3022 = vpack.c.b16 %v2595, %v2594
  %v3023 = vpack.c.b16 %v2597, %v2596
  %v3024 = vpack.c.b16 %v2599, %v2598
  %v3025 = vpack.c.b16 %v2601, %v2600
  %v3026 = vpack.c.b16 %v2603, %v2602
  %v3027 = vpack.c.b16 %v2605, %v2604
  %v3028 = vpack.c.b16 %v2607, %v2606
  %v3029 = vpack.c.b16 %v2609, %v2608
  %v3030 = vpack.c.b16 %v2611, %v2610
  %v3031 = vpack.c.b16 %v2613, %v2612
  %v3032 = vpack.c.b16 %v2615, %v2614
  %v3033 = vpack.c.b16 %v2617, %v2616
  %v3034 = vpack.c.b16 %v2619, %v2618
  %v3035 = vpack.c.b16 %v2621, %v2620
  %v3036 = vpack.c.b16 %v2623, %v2622
  %v3037 = vpack.c.b16 %v2625, %v2624
  %v3038 = vpack.c.b16 %v2627, %v2626
  %v3039 = vpack.c.b16 %v2629, %v2628
  %v3040 = vpack.c.b16 %v2631, %v2630
  %v3041 = vpack.c.b16 %v2633, %v2632
  %v3042 = vpack.c.b16 %v2635, %v2634
  %v3043 = vpack.c.b16 %v2637, %v2636
  %v3044 = vpack.c.b16 %v2639, %v2638
  %v3045 = vpack.c.b16 %v2641, %v2640
  %v3046 = vpack.c.b16 %v2643, %v2642
  %v3047 = vpack.c.b16 %v2645, %v2644
  %v3048 = vpack.c.b16 %v2647, %v2646
  %v3049 = vpack.c.b16 %v2649, %v2648
  %v3050 = vpack.c.b16 %v2651, %v2650
  %v3051 = vpack.c.b16 %v2653, %v2652
  %v3052 = vpack.c.b16 %v2655, %v2654
  %v3053 = vpack.c.b16 %v2657, %v2656
  %v3054 = vpack.c.b16 %v2659, %v2658
  %v3055 = vpack.c.b16 %v2661, %v2660
  %v3056 = vpack.c.b16 %v2663, %v2662
  %v3057 = vpack.c.b16 %v2665, %v2664
  %3450 = vmatpush.bf16.msra.mxu0 %v2673
  %3451 = vmatpush.bf16.msra.mxu0 %v2672
  %3452 = vmatpush.bf16.msra.mxu0 %v2671
  %3453 = vmatpush.bf16.msra.mxu0 %v2670
  %3454 = vmatpush.bf16.msra.mxu0 %v2669
  %3455 = vmatpush.bf16.msra.mxu0 %v2668
  %3456 = vmatpush.bf16.msra.mxu0 %v2667
  %3457 = vmatpush.bf16.msra.mxu0 %v2666
  %3458 = vmatmul.bf16.gmra.mxu0 %v1000
  %v3459 = vpop.f32.mrf.mxu0
  %v3460 = vadd.f32 %v850, %v3459
  %v3461 = vpop.f32.mrf.mxu0
  %v3462 = vadd.f32 %v850, %v3461
  %3463 = vdwg.mxu0
  %3464 = vmatpush.bf16.msra.mxu0 %v2681
  %3465 = vmatpush.bf16.msra.mxu0 %v2680
  %3466 = vmatpush.bf16.msra.mxu0 %v2679
  %3467 = vmatpush.bf16.msra.mxu0 %v2678
  %3468 = vmatpush.bf16.msra.mxu0 %v2677
  %3469 = vmatpush.bf16.msra.mxu0 %v2676
  %3470 = vmatpush.bf16.msra.mxu0 %v2675
  %3471 = vmatpush.bf16.msra.mxu0 %v2674
  %3472 = vmatmul.bf16.gmra.mxu0 %v1001
  %v3473 = vpop.f32.mrf.mxu0
  %v3474 = vadd.f32 %v3460, %v3473
  %v3475 = vpop.f32.mrf.mxu0
  %v3476 = vadd.f32 %v3462, %v3475
  %3477 = vdwg.mxu0
  %3478 = vmatpush.bf16.msra.mxu0 %v2689
  %3479 = vmatpush.bf16.msra.mxu0 %v2688
  %3480 = vmatpush.bf16.msra.mxu0 %v2687
  %3481 = vmatpush.bf16.msra.mxu0 %v2686
  %3482 = vmatpush.bf16.msra.mxu0 %v2685
  %3483 = vmatpush.bf16.msra.mxu0 %v2684
  %3484 = vmatpush.bf16.msra.mxu0 %v2683
  %3485 = vmatpush.bf16.msra.mxu0 %v2682
  %3486 = vmatmul.bf16.gmra.mxu0 %v1002
  %v3487 = vpop.f32.mrf.mxu0
  %v3488 = vadd.f32 %v3474, %v3487
  %v3489 = vpop.f32.mrf.mxu0
  %v3490 = vadd.f32 %v3476, %v3489
  %3491 = vdwg.mxu0
  %3492 = vmatpush.bf16.msra.mxu0 %v2697
  %3493 = vmatpush.bf16.msra.mxu0 %v2696
  %3494 = vmatpush.bf16.msra.mxu0 %v2695
  %3495 = vmatpush.bf16.msra.mxu0 %v2694
  %3496 = vmatpush.bf16.msra.mxu0 %v2693
  %3497 = vmatpush.bf16.msra.mxu0 %v2692
  %3498 = vmatpush.bf16.msra.mxu0 %v2691
  %3499 = vmatpush.bf16.msra.mxu0 %v2690
  %3500 = vmatmul.bf16.gmra.mxu0 %v1003
  %v3501 = vpop.f32.mrf.mxu0
  %v3502 = vadd.f32 %v3488, %v3501
  %v3503 = vpop.f32.mrf.mxu0
  %v3504 = vadd.f32 %v3490, %v3503
  %3505 = vdwg.mxu0
  %3506 = vmatpush.bf16.msra.mxu0 %v2705
  %3507 = vmatpush.bf16.msra.mxu0 %v2704
  %3508 = vmatpush.bf16.msra.mxu0 %v2703
  %3509 = vmatpush.bf16.msra.mxu0 %v2702
  %3510 = vmatpush.bf16.msra.mxu0 %v2701
  %3511 = vmatpush.bf16.msra.mxu0 %v2700
  %3512 = vmatpush.bf16.msra.mxu0 %v2699
  %3513 = vmatpush.bf16.msra.mxu0 %v2698
  %3514 = vmatmul.bf16.gmra.mxu0 %v1004
  %v3515 = vpop.f32.mrf.mxu0
  %v3516 = vadd.f32 %v3502, %v3515
  %v3517 = vpop.f32.mrf.mxu0
  %v3518 = vadd.f32 %v3504, %v3517
  %3519 = vdwg.mxu0
  %3520 = vmatpush.bf16.msra.mxu0 %v2713
  %3521 = vmatpush.bf16.msra.mxu0 %v2712
  %3522 = vmatpush.bf16.msra.mxu0 %v2711
  %3523 = vmatpush.bf16.msra.mxu0 %v2710
  %3524 = vmatpush.bf16.msra.mxu0 %v2709
  %3525 = vmatpush.bf16.msra.mxu0 %v2708
  %3526 = vmatpush.bf16.msra.mxu0 %v2707
  %3527 = vmatpush.bf16.msra.mxu0 %v2706
  %3528 = vmatmul.bf16.gmra.mxu0 %v1005
  %v3529 = vpop.f32.mrf.mxu0
  %v3530 = vadd.f32 %v3516, %v3529
  %v3531 = vpop.f32.mrf.mxu0
  %v3532 = vadd.f32 %v3518, %v3531
  %3533 = vdwg.mxu0
  %3534 = vmatpush.bf16.msra.mxu0 %v2721
  %3535 = vmatpush.bf16.msra.mxu0 %v2720
  %3536 = vmatpush.bf16.msra.mxu0 %v2719
  %3537 = vmatpush.bf16.msra.mxu0 %v2718
  %3538 = vmatpush.bf16.msra.mxu0 %v2717
  %3539 = vmatpush.bf16.msra.mxu0 %v2716
  %3540 = vmatpush.bf16.msra.mxu0 %v2715
  %3541 = vmatpush.bf16.msra.mxu0 %v2714
  %3542 = vmatmul.bf16.gmra.mxu0 %v1006
  %v3543 = vpop.f32.mrf.mxu0
  %v3544 = vadd.f32 %v3530, %v3543
  %v3545 = vpop.f32.mrf.mxu0
  %v3546 = vadd.f32 %v3532, %v3545
  %3547 = vdwg.mxu0
  %3548 = vmatpush.bf16.msra.mxu0 %v2729
  %3549 = vmatpush.bf16.msra.mxu0 %v2728
  %3550 = vmatpush.bf16.msra.mxu0 %v2727
  %3551 = vmatpush.bf16.msra.mxu0 %v2726
  %3552 = vmatpush.bf16.msra.mxu0 %v2725
  %3553 = vmatpush.bf16.msra.mxu0 %v2724
  %3554 = vmatpush.bf16.msra.mxu0 %v2723
  %3555 = vmatpush.bf16.msra.mxu0 %v2722
  %3556 = vmatmul.bf16.gmra.mxu0 %v1007
  %v3557 = vpop.f32.mrf.mxu0
  %v3558 = vadd.f32 %v3544, %v3557
  %v3559 = vpop.f32.mrf.mxu0
  %v3560 = vadd.f32 %v3546, %v3559
  %3561 = vdwg.mxu0
  %3562 = vmatpush.bf16.msra.mxu0 %v2737
  %3563 = vmatpush.bf16.msra.mxu0 %v2736
  %3564 = vmatpush.bf16.msra.mxu0 %v2735
  %3565 = vmatpush.bf16.msra.mxu0 %v2734
  %3566 = vmatpush.bf16.msra.mxu0 %v2733
  %3567 = vmatpush.bf16.msra.mxu0 %v2732
  %3568 = vmatpush.bf16.msra.mxu0 %v2731
  %3569 = vmatpush.bf16.msra.mxu0 %v2730
  %3570 = vmatmul.bf16.gmra.mxu0 %v1008
  %v3571 = vpop.f32.mrf.mxu0
  %v3572 = vadd.f32 %v3558, %v3571
  %v3573 = vpop.f32.mrf.mxu0
  %v3574 = vadd.f32 %v3560, %v3573
  %3575 = vdwg.mxu0
  %3576 = vmatpush.bf16.msra.mxu0 %v2745
  %3577 = vmatpush.bf16.msra.mxu0 %v2744
  %3578 = vmatpush.bf16.msra.mxu0 %v2743
  %3579 = vmatpush.bf16.msra.mxu0 %v2742
  %3580 = vmatpush.bf16.msra.mxu0 %v2741
  %3581 = vmatpush.bf16.msra.mxu0 %v2740
  %3582 = vmatpush.bf16.msra.mxu0 %v2739
  %3583 = vmatpush.bf16.msra.mxu0 %v2738
  %3584 = vmatmul.bf16.gmra.mxu0 %v1009
  %v3585 = vpop.f32.mrf.mxu0
  %v3586 = vadd.f32 %v3572, %v3585
  %v3587 = vpop.f32.mrf.mxu0
  %v3588 = vadd.f32 %v3574, %v3587
  %3589 = vdwg.mxu0
  %3590 = vmatpush.bf16.msra.mxu0 %v2753
  %3591 = vmatpush.bf16.msra.mxu0 %v2752
  %3592 = vmatpush.bf16.msra.mxu0 %v2751
  %3593 = vmatpush.bf16.msra.mxu0 %v2750
  %3594 = vmatpush.bf16.msra.mxu0 %v2749
  %3595 = vmatpush.bf16.msra.mxu0 %v2748
  %3596 = vmatpush.bf16.msra.mxu0 %v2747
  %3597 = vmatpush.bf16.msra.mxu0 %v2746
  %3598 = vmatmul.bf16.gmra.mxu0 %v1010
  %v3599 = vpop.f32.mrf.mxu0
  %v3600 = vadd.f32 %v3586, %v3599
  %v3601 = vpop.f32.mrf.mxu0
  %v3602 = vadd.f32 %v3588, %v3601
  %3603 = vdwg.mxu0
  %3604 = vmatpush.bf16.msra.mxu0 %v2761
  %3605 = vmatpush.bf16.msra.mxu0 %v2760
  %3606 = vmatpush.bf16.msra.mxu0 %v2759
  %3607 = vmatpush.bf16.msra.mxu0 %v2758
  %3608 = vmatpush.bf16.msra.mxu0 %v2757
  %3609 = vmatpush.bf16.msra.mxu0 %v2756
  %3610 = vmatpush.bf16.msra.mxu0 %v2755
  %3611 = vmatpush.bf16.msra.mxu0 %v2754
  %3612 = vmatmul.bf16.gmra.mxu0 %v1011
  %v3613 = vpop.f32.mrf.mxu0
  %v3614 = vadd.f32 %v3600, %v3613
  %v3615 = vpop.f32.mrf.mxu0
  %v3616 = vadd.f32 %v3602, %v3615
  %3617 = vdwg.mxu0
  %3618 = vmatpush.bf16.msra.mxu0 %v2769
  %3619 = vmatpush.bf16.msra.mxu0 %v2768
  %3620 = vmatpush.bf16.msra.mxu0 %v2767
  %3621 = vmatpush.bf16.msra.mxu0 %v2766
  %3622 = vmatpush.bf16.msra.mxu0 %v2765
  %3623 = vmatpush.bf16.msra.mxu0 %v2764
  %3624 = vmatpush.bf16.msra.mxu0 %v2763
  %3625 = vmatpush.bf16.msra.mxu0 %v2762
  %3626 = vmatmul.bf16.gmra.mxu0 %v1012
  %v3627 = vpop.f32.mrf.mxu0
  %v3628 = vadd.f32 %v3614, %v3627
  %v3629 = vpop.f32.mrf.mxu0
  %v3630 = vadd.f32 %v3616, %v3629
  %3631 = vdwg.mxu0
  %3632 = vmatpush.bf16.msra.mxu0 %v2777
  %3633 = vmatpush.bf16.msra.mxu0 %v2776
  %3634 = vmatpush.bf16.msra.mxu0 %v2775
  %3635 = vmatpush.bf16.msra.mxu0 %v2774
  %3636 = vmatpush.bf16.msra.mxu0 %v2773
  %3637 = vmatpush.bf16.msra.mxu0 %v2772
  %3638 = vmatpush.bf16.msra.mxu0 %v2771
  %3639 = vmatpush.bf16.msra.mxu0 %v2770
  %3640 = vmatmul.bf16.gmra.mxu0 %v1013
  %v3641 = vpop.f32.mrf.mxu0
  %v3642 = vadd.f32 %v3628, %v3641
  %v3643 = vpop.f32.mrf.mxu0
  %v3644 = vadd.f32 %v3630, %v3643
  %3645 = vdwg.mxu0
  %3646 = vmatpush.bf16.msra.mxu0 %v2785
  %3647 = vmatpush.bf16.msra.mxu0 %v2784
  %3648 = vmatpush.bf16.msra.mxu0 %v2783
  %3649 = vmatpush.bf16.msra.mxu0 %v2782
  %3650 = vmatpush.bf16.msra.mxu0 %v2781
  %3651 = vmatpush.bf16.msra.mxu0 %v2780
  %3652 = vmatpush.bf16.msra.mxu0 %v2779
  %3653 = vmatpush.bf16.msra.mxu0 %v2778
  %3654 = vmatmul.bf16.gmra.mxu0 %v1014
  %v3655 = vpop.f32.mrf.mxu0
  %v3656 = vadd.f32 %v3642, %v3655
  %v3657 = vpop.f32.mrf.mxu0
  %v3658 = vadd.f32 %v3644, %v3657
  %3659 = vdwg.mxu0
  %3660 = vmatpush.bf16.msra.mxu0 %v2793
  %3661 = vmatpush.bf16.msra.mxu0 %v2792
  %3662 = vmatpush.bf16.msra.mxu0 %v2791
  %3663 = vmatpush.bf16.msra.mxu0 %v2790
  %3664 = vmatpush.bf16.msra.mxu0 %v2789
  %3665 = vmatpush.bf16.msra.mxu0 %v2788
  %3666 = vmatpush.bf16.msra.mxu0 %v2787
  %3667 = vmatpush.bf16.msra.mxu0 %v2786
  %3668 = vmatmul.bf16.gmra.mxu0 %v1015
  %v3669 = vpop.f32.mrf.mxu0
  %v3670 = vadd.f32 %v3656, %v3669
  %v3671 = vpop.f32.mrf.mxu0
  %v3672 = vadd.f32 %v3658, %v3671
  %3673 = vdwg.mxu0
  %3674 = vmatpush.bf16.msra.mxu0 %v2801
  %3675 = vmatpush.bf16.msra.mxu0 %v2800
  %3676 = vmatpush.bf16.msra.mxu0 %v2799
  %3677 = vmatpush.bf16.msra.mxu0 %v2798
  %3678 = vmatpush.bf16.msra.mxu0 %v2797
  %3679 = vmatpush.bf16.msra.mxu0 %v2796
  %3680 = vmatpush.bf16.msra.mxu0 %v2795
  %3681 = vmatpush.bf16.msra.mxu0 %v2794
  %3682 = vmatmul.bf16.gmra.mxu0 %v1016
  %v3683 = vpop.f32.mrf.mxu0
  %v3684 = vadd.f32 %v3670, %v3683
  %v3685 = vpop.f32.mrf.mxu0
  %v3686 = vadd.f32 %v3672, %v3685
  %3687 = vdwg.mxu0
  %3688 = vmatpush.bf16.msra.mxu0 %v2809
  %3689 = vmatpush.bf16.msra.mxu0 %v2808
  %3690 = vmatpush.bf16.msra.mxu0 %v2807
  %3691 = vmatpush.bf16.msra.mxu0 %v2806
  %3692 = vmatpush.bf16.msra.mxu0 %v2805
  %3693 = vmatpush.bf16.msra.mxu0 %v2804
  %3694 = vmatpush.bf16.msra.mxu0 %v2803
  %3695 = vmatpush.bf16.msra.mxu0 %v2802
  %3696 = vmatmul.bf16.gmra.mxu0 %v1017
  %v3697 = vpop.f32.mrf.mxu0
  %v3698 = vadd.f32 %v3684, %v3697
  %v3699 = vpop.f32.mrf.mxu0
  %v3700 = vadd.f32 %v3686, %v3699
  %3701 = vdwg.mxu0
  %3702 = vmatpush.bf16.msra.mxu0 %v2817
  %3703 = vmatpush.bf16.msra.mxu0 %v2816
  %3704 = vmatpush.bf16.msra.mxu0 %v2815
  %3705 = vmatpush.bf16.msra.mxu0 %v2814
  %3706 = vmatpush.bf16.msra.mxu0 %v2813
  %3707 = vmatpush.bf16.msra.mxu0 %v2812
  %3708 = vmatpush.bf16.msra.mxu0 %v2811
  %3709 = vmatpush.bf16.msra.mxu0 %v2810
  %3710 = vmatmul.bf16.gmra.mxu0 %v1018
  %v3711 = vpop.f32.mrf.mxu0
  %v3712 = vadd.f32 %v3698, %v3711
  %v3713 = vpop.f32.mrf.mxu0
  %v3714 = vadd.f32 %v3700, %v3713
  %3715 = vdwg.mxu0
  %3716 = vmatpush.bf16.msra.mxu0 %v2825
  %3717 = vmatpush.bf16.msra.mxu0 %v2824
  %3718 = vmatpush.bf16.msra.mxu0 %v2823
  %3719 = vmatpush.bf16.msra.mxu0 %v2822
  %3720 = vmatpush.bf16.msra.mxu0 %v2821
  %3721 = vmatpush.bf16.msra.mxu0 %v2820
  %3722 = vmatpush.bf16.msra.mxu0 %v2819
  %3723 = vmatpush.bf16.msra.mxu0 %v2818
  %3724 = vmatmul.bf16.gmra.mxu0 %v1019
  %v3725 = vpop.f32.mrf.mxu0
  %v3726 = vadd.f32 %v3712, %v3725
  %v3727 = vpop.f32.mrf.mxu0
  %v3728 = vadd.f32 %v3714, %v3727
  %3729 = vdwg.mxu0
  %3730 = vmatpush.bf16.msra.mxu0 %v2833
  %3731 = vmatpush.bf16.msra.mxu0 %v2832
  %3732 = vmatpush.bf16.msra.mxu0 %v2831
  %3733 = vmatpush.bf16.msra.mxu0 %v2830
  %3734 = vmatpush.bf16.msra.mxu0 %v2829
  %3735 = vmatpush.bf16.msra.mxu0 %v2828
  %3736 = vmatpush.bf16.msra.mxu0 %v2827
  %3737 = vmatpush.bf16.msra.mxu0 %v2826
  %3738 = vmatmul.bf16.gmra.mxu0 %v1020
  %v3739 = vpop.f32.mrf.mxu0
  %v3740 = vadd.f32 %v3726, %v3739
  %v3741 = vpop.f32.mrf.mxu0
  %v3742 = vadd.f32 %v3728, %v3741
  %3743 = vdwg.mxu0
  %3744 = vmatpush.bf16.msra.mxu0 %v2841
  %3745 = vmatpush.bf16.msra.mxu0 %v2840
  %3746 = vmatpush.bf16.msra.mxu0 %v2839
  %3747 = vmatpush.bf16.msra.mxu0 %v2838
  %3748 = vmatpush.bf16.msra.mxu0 %v2837
  %3749 = vmatpush.bf16.msra.mxu0 %v2836
  %3750 = vmatpush.bf16.msra.mxu0 %v2835
  %3751 = vmatpush.bf16.msra.mxu0 %v2834
  %3752 = vmatmul.bf16.gmra.mxu0 %v1021
  %v3753 = vpop.f32.mrf.mxu0
  %v3754 = vadd.f32 %v3740, %v3753
  %v3755 = vpop.f32.mrf.mxu0
  %v3756 = vadd.f32 %v3742, %v3755
  %3757 = vdwg.mxu0
  %3758 = vmatpush.bf16.msra.mxu0 %v2849
  %3759 = vmatpush.bf16.msra.mxu0 %v2848
  %3760 = vmatpush.bf16.msra.mxu0 %v2847
  %3761 = vmatpush.bf16.msra.mxu0 %v2846
  %3762 = vmatpush.bf16.msra.mxu0 %v2845
  %3763 = vmatpush.bf16.msra.mxu0 %v2844
  %3764 = vmatpush.bf16.msra.mxu0 %v2843
  %3765 = vmatpush.bf16.msra.mxu0 %v2842
  %3766 = vmatmul.bf16.gmra.mxu0 %v1022
  %v3767 = vpop.f32.mrf.mxu0
  %v3768 = vadd.f32 %v3754, %v3767
  %v3769 = vpop.f32.mrf.mxu0
  %v3770 = vadd.f32 %v3756, %v3769
  %3771 = vdwg.mxu0
  %3772 = vmatpush.bf16.msra.mxu0 %v2857
  %3773 = vmatpush.bf16.msra.mxu0 %v2856
  %3774 = vmatpush.bf16.msra.mxu0 %v2855
  %3775 = vmatpush.bf16.msra.mxu0 %v2854
  %3776 = vmatpush.bf16.msra.mxu0 %v2853
  %3777 = vmatpush.bf16.msra.mxu0 %v2852
  %3778 = vmatpush.bf16.msra.mxu0 %v2851
  %3779 = vmatpush.bf16.msra.mxu0 %v2850
  %3780 = vmatmul.bf16.gmra.mxu0 %v1023
  %v3781 = vpop.f32.mrf.mxu0
  %v3782 = vadd.f32 %v3768, %v3781
  %v3783 = vpop.f32.mrf.mxu0
  %v3784 = vadd.f32 %v3770, %v3783
  %3785 = vdwg.mxu0
  %3786 = vmatpush.bf16.msra.mxu0 %v2865
  %3787 = vmatpush.bf16.msra.mxu0 %v2864
  %3788 = vmatpush.bf16.msra.mxu0 %v2863
  %3789 = vmatpush.bf16.msra.mxu0 %v2862
  %3790 = vmatpush.bf16.msra.mxu0 %v2861
  %3791 = vmatpush.bf16.msra.mxu0 %v2860
  %3792 = vmatpush.bf16.msra.mxu0 %v2859
  %3793 = vmatpush.bf16.msra.mxu0 %v2858
  %3794 = vmatmul.bf16.gmra.mxu0 %v1024
  %v3795 = vpop.f32.mrf.mxu0
  %v3796 = vadd.f32 %v3782, %v3795
  %v3797 = vpop.f32.mrf.mxu0
  %v3798 = vadd.f32 %v3784, %v3797
  %3799 = vdwg.mxu0
  %3800 = vmatpush.bf16.msra.mxu0 %v2873
  %3801 = vmatpush.bf16.msra.mxu0 %v2872
  %3802 = vmatpush.bf16.msra.mxu0 %v2871
  %3803 = vmatpush.bf16.msra.mxu0 %v2870
  %3804 = vmatpush.bf16.msra.mxu0 %v2869
  %3805 = vmatpush.bf16.msra.mxu0 %v2868
  %3806 = vmatpush.bf16.msra.mxu0 %v2867
  %3807 = vmatpush.bf16.msra.mxu0 %v2866
  %3808 = vmatmul.bf16.gmra.mxu0 %v1025
  %v3809 = vpop.f32.mrf.mxu0
  %v3810 = vadd.f32 %v3796, %v3809
  %v3811 = vpop.f32.mrf.mxu0
  %v3812 = vadd.f32 %v3798, %v3811
  %3813 = vdwg.mxu0
  %3814 = vmatpush.bf16.msra.mxu0 %v2881
  %3815 = vmatpush.bf16.msra.mxu0 %v2880
  %3816 = vmatpush.bf16.msra.mxu0 %v2879
  %3817 = vmatpush.bf16.msra.mxu0 %v2878
  %3818 = vmatpush.bf16.msra.mxu0 %v2877
  %3819 = vmatpush.bf16.msra.mxu0 %v2876
  %3820 = vmatpush.bf16.msra.mxu0 %v2875
  %3821 = vmatpush.bf16.msra.mxu0 %v2874
  %3822 = vmatmul.bf16.gmra.mxu0 %v1026
  %v3823 = vpop.f32.mrf.mxu0
  %v3824 = vadd.f32 %v3810, %v3823
  %v3825 = vpop.f32.mrf.mxu0
  %v3826 = vadd.f32 %v3812, %v3825
  %3827 = vdwg.mxu0
  %3828 = vmatpush.bf16.msra.mxu0 %v2889
  %3829 = vmatpush.bf16.msra.mxu0 %v2888
  %3830 = vmatpush.bf16.msra.mxu0 %v2887
  %3831 = vmatpush.bf16.msra.mxu0 %v2886
  %3832 = vmatpush.bf16.msra.mxu0 %v2885
  %3833 = vmatpush.bf16.msra.mxu0 %v2884
  %3834 = vmatpush.bf16.msra.mxu0 %v2883
  %3835 = vmatpush.bf16.msra.mxu0 %v2882
  %3836 = vmatmul.bf16.gmra.mxu0 %v1027
  %v3837 = vpop.f32.mrf.mxu0
  %v3838 = vadd.f32 %v3824, %v3837
  %v3839 = vpop.f32.mrf.mxu0
  %v3840 = vadd.f32 %v3826, %v3839
  %3841 = vdwg.mxu0
  %3842 = vmatpush.bf16.msra.mxu0 %v2897
  %3843 = vmatpush.bf16.msra.mxu0 %v2896
  %3844 = vmatpush.bf16.msra.mxu0 %v2895
  %3845 = vmatpush.bf16.msra.mxu0 %v2894
  %3846 = vmatpush.bf16.msra.mxu0 %v2893
  %3847 = vmatpush.bf16.msra.mxu0 %v2892
  %3848 = vmatpush.bf16.msra.mxu0 %v2891
  %3849 = vmatpush.bf16.msra.mxu0 %v2890
  %3850 = vmatmul.bf16.gmra.mxu0 %v1028
  %v3851 = vpop.f32.mrf.mxu0
  %v3852 = vadd.f32 %v3838, %v3851
  %v3853 = vpop.f32.mrf.mxu0
  %v3854 = vadd.f32 %v3840, %v3853
  %3855 = vdwg.mxu0
  %3856 = vmatpush.bf16.msra.mxu0 %v2905
  %3857 = vmatpush.bf16.msra.mxu0 %v2904
  %3858 = vmatpush.bf16.msra.mxu0 %v2903
  %3859 = vmatpush.bf16.msra.mxu0 %v2902
  %3860 = vmatpush.bf16.msra.mxu0 %v2901
  %3861 = vmatpush.bf16.msra.mxu0 %v2900
  %3862 = vmatpush.bf16.msra.mxu0 %v2899
  %3863 = vmatpush.bf16.msra.mxu0 %v2898
  %3864 = vmatmul.bf16.gmra.mxu0 %v1029
  %v3865 = vpop.f32.mrf.mxu0
  %v3866 = vadd.f32 %v3852, %v3865
  %v3867 = vpop.f32.mrf.mxu0
  %v3868 = vadd.f32 %v3854, %v3867
  %3869 = vdwg.mxu0
  %3870 = vmatpush.bf16.msra.mxu0 %v2913
  %3871 = vmatpush.bf16.msra.mxu0 %v2912
  %3872 = vmatpush.bf16.msra.mxu0 %v2911
  %3873 = vmatpush.bf16.msra.mxu0 %v2910
  %3874 = vmatpush.bf16.msra.mxu0 %v2909
  %3875 = vmatpush.bf16.msra.mxu0 %v2908
  %3876 = vmatpush.bf16.msra.mxu0 %v2907
  %3877 = vmatpush.bf16.msra.mxu0 %v2906
  %3878 = vmatmul.bf16.gmra.mxu0 %v1030
  %v3879 = vpop.f32.mrf.mxu0
  %v3880 = vadd.f32 %v3866, %v3879
  %v3881 = vpop.f32.mrf.mxu0
  %v3882 = vadd.f32 %v3868, %v3881
  %3883 = vdwg.mxu0
  %3884 = vmatpush.bf16.msra.mxu0 %v2921
  %3885 = vmatpush.bf16.msra.mxu0 %v2920
  %3886 = vmatpush.bf16.msra.mxu0 %v2919
  %3887 = vmatpush.bf16.msra.mxu0 %v2918
  %3888 = vmatpush.bf16.msra.mxu0 %v2917
  %3889 = vmatpush.bf16.msra.mxu0 %v2916
  %3890 = vmatpush.bf16.msra.mxu0 %v2915
  %3891 = vmatpush.bf16.msra.mxu0 %v2914
  %3892 = vmatmul.bf16.gmra.mxu0 %v1031
  %v3893 = vpop.f32.mrf.mxu0
  %v3894 = vadd.f32 %v3880, %v3893
  %v3895 = vpop.f32.mrf.mxu0
  %v3896 = vadd.f32 %v3882, %v3895
  %3897 = vdwg.mxu0
  %3898 = vmatpush.bf16.msra.mxu0 %v2929
  %3899 = vmatpush.bf16.msra.mxu0 %v2928
  %3900 = vmatpush.bf16.msra.mxu0 %v2927
  %3901 = vmatpush.bf16.msra.mxu0 %v2926
  %3902 = vmatpush.bf16.msra.mxu0 %v2925
  %3903 = vmatpush.bf16.msra.mxu0 %v2924
  %3904 = vmatpush.bf16.msra.mxu0 %v2923
  %3905 = vmatpush.bf16.msra.mxu0 %v2922
  %3906 = vmatmul.bf16.gmra.mxu0 %v1032
  %v3907 = vpop.f32.mrf.mxu0
  %v3908 = vadd.f32 %v3894, %v3907
  %v3909 = vpop.f32.mrf.mxu0
  %v3910 = vadd.f32 %v3896, %v3909
  %3911 = vdwg.mxu0
  %3912 = vmatpush.bf16.msra.mxu0 %v2937
  %3913 = vmatpush.bf16.msra.mxu0 %v2936
  %3914 = vmatpush.bf16.msra.mxu0 %v2935
  %3915 = vmatpush.bf16.msra.mxu0 %v2934
  %3916 = vmatpush.bf16.msra.mxu0 %v2933
  %3917 = vmatpush.bf16.msra.mxu0 %v2932
  %3918 = vmatpush.bf16.msra.mxu0 %v2931
  %3919 = vmatpush.bf16.msra.mxu0 %v2930
  %3920 = vmatmul.bf16.gmra.mxu0 %v1033
  %v3921 = vpop.f32.mrf.mxu0
  %v3922 = vadd.f32 %v3908, %v3921
  %v3923 = vpop.f32.mrf.mxu0
  %v3924 = vadd.f32 %v3910, %v3923
  %3925 = vdwg.mxu0
  %3926 = vmatpush.bf16.msra.mxu0 %v2945
  %3927 = vmatpush.bf16.msra.mxu0 %v2944
  %3928 = vmatpush.bf16.msra.mxu0 %v2943
  %3929 = vmatpush.bf16.msra.mxu0 %v2942
  %3930 = vmatpush.bf16.msra.mxu0 %v2941
  %3931 = vmatpush.bf16.msra.mxu0 %v2940
  %3932 = vmatpush.bf16.msra.mxu0 %v2939
  %3933 = vmatpush.bf16.msra.mxu0 %v2938
  %3934 = vmatmul.bf16.gmra.mxu0 %v1034
  %v3935 = vpop.f32.mrf.mxu0
  %v3936 = vadd.f32 %v3922, %v3935
  %v3937 = vpop.f32.mrf.mxu0
  %v3938 = vadd.f32 %v3924, %v3937
  %3939 = vdwg.mxu0
  %3940 = vmatpush.bf16.msra.mxu0 %v2953
  %3941 = vmatpush.bf16.msra.mxu0 %v2952
  %3942 = vmatpush.bf16.msra.mxu0 %v2951
  %3943 = vmatpush.bf16.msra.mxu0 %v2950
  %3944 = vmatpush.bf16.msra.mxu0 %v2949
  %3945 = vmatpush.bf16.msra.mxu0 %v2948
  %3946 = vmatpush.bf16.msra.mxu0 %v2947
  %3947 = vmatpush.bf16.msra.mxu0 %v2946
  %3948 = vmatmul.bf16.gmra.mxu0 %v1035
  %v3949 = vpop.f32.mrf.mxu0
  %v3950 = vadd.f32 %v3936, %v3949
  %v3951 = vpop.f32.mrf.mxu0
  %v3952 = vadd.f32 %v3938, %v3951
  %3953 = vdwg.mxu0
  %3954 = vmatpush.bf16.msra.mxu0 %v2961
  %3955 = vmatpush.bf16.msra.mxu0 %v2960
  %3956 = vmatpush.bf16.msra.mxu0 %v2959
  %3957 = vmatpush.bf16.msra.mxu0 %v2958
  %3958 = vmatpush.bf16.msra.mxu0 %v2957
  %3959 = vmatpush.bf16.msra.mxu0 %v2956
  %3960 = vmatpush.bf16.msra.mxu0 %v2955
  %3961 = vmatpush.bf16.msra.mxu0 %v2954
  %3962 = vmatmul.bf16.gmra.mxu0 %v1036
  %v3963 = vpop.f32.mrf.mxu0
  %v3964 = vadd.f32 %v3950, %v3963
  %v3965 = vpop.f32.mrf.mxu0
  %v3966 = vadd.f32 %v3952, %v3965
  %3967 = vdwg.mxu0
  %3968 = vmatpush.bf16.msra.mxu0 %v2969
  %3969 = vmatpush.bf16.msra.mxu0 %v2968
  %3970 = vmatpush.bf16.msra.mxu0 %v2967
  %3971 = vmatpush.bf16.msra.mxu0 %v2966
  %3972 = vmatpush.bf16.msra.mxu0 %v2965
  %3973 = vmatpush.bf16.msra.mxu0 %v2964
  %3974 = vmatpush.bf16.msra.mxu0 %v2963
  %3975 = vmatpush.bf16.msra.mxu0 %v2962
  %3976 = vmatmul.bf16.gmra.mxu0 %v1037
  %v3977 = vpop.f32.mrf.mxu0
  %v3978 = vadd.f32 %v3964, %v3977
  %v3979 = vpop.f32.mrf.mxu0
  %v3980 = vadd.f32 %v3966, %v3979
  %3981 = vdwg.mxu0
  %3982 = vmatpush.bf16.msra.mxu0 %v2977
  %3983 = vmatpush.bf16.msra.mxu0 %v2976
  %3984 = vmatpush.bf16.msra.mxu0 %v2975
  %3985 = vmatpush.bf16.msra.mxu0 %v2974
  %3986 = vmatpush.bf16.msra.mxu0 %v2973
  %3987 = vmatpush.bf16.msra.mxu0 %v2972
  %3988 = vmatpush.bf16.msra.mxu0 %v2971
  %3989 = vmatpush.bf16.msra.mxu0 %v2970
  %3990 = vmatmul.bf16.gmra.mxu0 %v1038
  %v3991 = vpop.f32.mrf.mxu0
  %v3992 = vadd.f32 %v3978, %v3991
  %v3993 = vpop.f32.mrf.mxu0
  %v3994 = vadd.f32 %v3980, %v3993
  %3995 = vdwg.mxu0
  %3996 = vmatpush.bf16.msra.mxu0 %v2985
  %3997 = vmatpush.bf16.msra.mxu0 %v2984
  %3998 = vmatpush.bf16.msra.mxu0 %v2983
  %3999 = vmatpush.bf16.msra.mxu0 %v2982
  %4000 = vmatpush.bf16.msra.mxu0 %v2981
  %4001 = vmatpush.bf16.msra.mxu0 %v2980
  %4002 = vmatpush.bf16.msra.mxu0 %v2979
  %4003 = vmatpush.bf16.msra.mxu0 %v2978
  %4004 = vmatmul.bf16.gmra.mxu0 %v1039
  %v4005 = vpop.f32.mrf.mxu0
  %v4006 = vadd.f32 %v3992, %v4005
  %v4007 = vpop.f32.mrf.mxu0
  %v4008 = vadd.f32 %v3994, %v4007
  %4009 = vdwg.mxu0
  %4010 = vmatpush.bf16.msra.mxu0 %v2993
  %4011 = vmatpush.bf16.msra.mxu0 %v2992
  %4012 = vmatpush.bf16.msra.mxu0 %v2991
  %4013 = vmatpush.bf16.msra.mxu0 %v2990
  %4014 = vmatpush.bf16.msra.mxu0 %v2989
  %4015 = vmatpush.bf16.msra.mxu0 %v2988
  %4016 = vmatpush.bf16.msra.mxu0 %v2987
  %4017 = vmatpush.bf16.msra.mxu0 %v2986
  %4018 = vmatmul.bf16.gmra.mxu0 %v1040
  %v4019 = vpop.f32.mrf.mxu0
  %v4020 = vadd.f32 %v4006, %v4019
  %v4021 = vpop.f32.mrf.mxu0
  %v4022 = vadd.f32 %v4008, %v4021
  %4023 = vdwg.mxu0
  %4024 = vmatpush.bf16.msra.mxu0 %v3001
  %4025 = vmatpush.bf16.msra.mxu0 %v3000
  %4026 = vmatpush.bf16.msra.mxu0 %v2999
  %4027 = vmatpush.bf16.msra.mxu0 %v2998
  %4028 = vmatpush.bf16.msra.mxu0 %v2997
  %4029 = vmatpush.bf16.msra.mxu0 %v2996
  %4030 = vmatpush.bf16.msra.mxu0 %v2995
  %4031 = vmatpush.bf16.msra.mxu0 %v2994
  %4032 = vmatmul.bf16.gmra.mxu0 %v1041
  %v4033 = vpop.f32.mrf.mxu0
  %v4034 = vadd.f32 %v4020, %v4033
  %v4035 = vpop.f32.mrf.mxu0
  %v4036 = vadd.f32 %v4022, %v4035
  %4037 = vdwg.mxu0
  %4038 = vmatpush.bf16.msra.mxu0 %v3009
  %4039 = vmatpush.bf16.msra.mxu0 %v3008
  %4040 = vmatpush.bf16.msra.mxu0 %v3007
  %4041 = vmatpush.bf16.msra.mxu0 %v3006
  %4042 = vmatpush.bf16.msra.mxu0 %v3005
  %4043 = vmatpush.bf16.msra.mxu0 %v3004
  %4044 = vmatpush.bf16.msra.mxu0 %v3003
  %4045 = vmatpush.bf16.msra.mxu0 %v3002
  %4046 = vmatmul.bf16.gmra.mxu0 %v1042
  %v4047 = vpop.f32.mrf.mxu0
  %v4048 = vadd.f32 %v4034, %v4047
  %v4049 = vpop.f32.mrf.mxu0
  %v4050 = vadd.f32 %v4036, %v4049
  %4051 = vdwg.mxu0
  %4052 = vmatpush.bf16.msra.mxu0 %v3017
  %4053 = vmatpush.bf16.msra.mxu0 %v3016
  %4054 = vmatpush.bf16.msra.mxu0 %v3015
  %4055 = vmatpush.bf16.msra.mxu0 %v3014
  %4056 = vmatpush.bf16.msra.mxu0 %v3013
  %4057 = vmatpush.bf16.msra.mxu0 %v3012
  %4058 = vmatpush.bf16.msra.mxu0 %v3011
  %4059 = vmatpush.bf16.msra.mxu0 %v3010
  %4060 = vmatmul.bf16.gmra.mxu0 %v1043
  %v4061 = vpop.f32.mrf.mxu0
  %v4062 = vadd.f32 %v4048, %v4061
  %v4063 = vpop.f32.mrf.mxu0
  %v4064 = vadd.f32 %v4050, %v4063
  %4065 = vdwg.mxu0
  %4066 = vmatpush.bf16.msra.mxu0 %v3025
  %4067 = vmatpush.bf16.msra.mxu0 %v3024
  %4068 = vmatpush.bf16.msra.mxu0 %v3023
  %4069 = vmatpush.bf16.msra.mxu0 %v3022
  %4070 = vmatpush.bf16.msra.mxu0 %v3021
  %4071 = vmatpush.bf16.msra.mxu0 %v3020
  %4072 = vmatpush.bf16.msra.mxu0 %v3019
  %4073 = vmatpush.bf16.msra.mxu0 %v3018
  %4074 = vmatmul.bf16.gmra.mxu0 %v1044
  %v4075 = vpop.f32.mrf.mxu0
  %v4076 = vadd.f32 %v4062, %v4075
  %v4077 = vpop.f32.mrf.mxu0
  %v4078 = vadd.f32 %v4064, %v4077
  %4079 = vdwg.mxu0
  %4080 = vmatpush.bf16.msra.mxu0 %v3033
  %4081 = vmatpush.bf16.msra.mxu0 %v3032
  %4082 = vmatpush.bf16.msra.mxu0 %v3031
  %4083 = vmatpush.bf16.msra.mxu0 %v3030
  %4084 = vmatpush.bf16.msra.mxu0 %v3029
  %4085 = vmatpush.bf16.msra.mxu0 %v3028
  %4086 = vmatpush.bf16.msra.mxu0 %v3027
  %4087 = vmatpush.bf16.msra.mxu0 %v3026
  %4088 = vmatmul.bf16.gmra.mxu0 %v1045
  %v4089 = vpop.f32.mrf.mxu0
  %v4090 = vadd.f32 %v4076, %v4089
  %v4091 = vpop.f32.mrf.mxu0
  %v4092 = vadd.f32 %v4078, %v4091
  %4093 = vdwg.mxu0
  %4094 = vmatpush.bf16.msra.mxu0 %v3041
  %4095 = vmatpush.bf16.msra.mxu0 %v3040
  %4096 = vmatpush.bf16.msra.mxu0 %v3039
  %4097 = vmatpush.bf16.msra.mxu0 %v3038
  %4098 = vmatpush.bf16.msra.mxu0 %v3037
  %4099 = vmatpush.bf16.msra.mxu0 %v3036
  %4100 = vmatpush.bf16.msra.mxu0 %v3035
  %4101 = vmatpush.bf16.msra.mxu0 %v3034
  %4102 = vmatmul.bf16.gmra.mxu0 %v1046
  %v4103 = vpop.f32.mrf.mxu0
  %v4104 = vadd.f32 %v4090, %v4103
  %v4105 = vpop.f32.mrf.mxu0
  %v4106 = vadd.f32 %v4092, %v4105
  %4107 = vdwg.mxu0
  %4108 = vmatpush.bf16.msra.mxu0 %v3049
  %4109 = vmatpush.bf16.msra.mxu0 %v3048
  %4110 = vmatpush.bf16.msra.mxu0 %v3047
  %4111 = vmatpush.bf16.msra.mxu0 %v3046
  %4112 = vmatpush.bf16.msra.mxu0 %v3045
  %4113 = vmatpush.bf16.msra.mxu0 %v3044
  %4114 = vmatpush.bf16.msra.mxu0 %v3043
  %4115 = vmatpush.bf16.msra.mxu0 %v3042
  %4116 = vmatmul.bf16.gmra.mxu0 %v1047
  %v4117 = vpop.f32.mrf.mxu0
  %v4118 = vadd.f32 %v4104, %v4117
  %v4119 = vpop.f32.mrf.mxu0
  %v4120 = vadd.f32 %v4106, %v4119
  %4121 = vdwg.mxu0
  %4122 = vmatpush.bf16.msra.mxu0 %v3057
  %4123 = vmatpush.bf16.msra.mxu0 %v3056
  %4124 = vmatpush.bf16.msra.mxu0 %v3055
  %4125 = vmatpush.bf16.msra.mxu0 %v3054
  %4126 = vmatpush.bf16.msra.mxu0 %v3053
  %4127 = vmatpush.bf16.msra.mxu0 %v3052
  %4128 = vmatpush.bf16.msra.mxu0 %v3051
  %4129 = vmatpush.bf16.msra.mxu0 %v3050
  %4130 = vmatmul.bf16.gmra.mxu0 %v1048
  %v4131 = vpop.f32.mrf.mxu0
  %v4132 = vadd.f32 %v4118, %v4131
  %v4133 = vpop.f32.mrf.mxu0
  %v4134 = vadd.f32 %v4120, %v4133
  %4135 = vdwg.mxu0
  %v4136 = vmax.f32 %v4132, 0.0
  %v4137 = vmax.f32 %v4134, 0.0
  %v4138 = vpack.c.bf16 %v4136, %v4136
  %v4139 = vpack.c.bf16 %v4137, %v4137
  %4140 = vst [vmem:[%s3] sm:$0xf] %v4138
  %4141 = vst [vmem:[%s3 + $0x4] sm:$0xf] %v4139
  // Predicated region
  $region14: #{faster_rcnn_forward.11} parent=0 // pred_check
    _
  $region15: #{faster_rcnn_forward.11} parent=0 // pred_check_branch
    %4143 = sbr.rel (0) target = $region17
  $region16: #{faster_rcnn_forward.11} parent=0 // pred_region
    _
  $region17: #{faster_rcnn_forward.11} parent=0 // pred_fallthru
    _
  // Predicated region
  $region18: #{faster_rcnn_forward.11} parent=0 // pred_check
    _
  $region19: #{faster_rcnn_forward.11} parent=0 // pred_check_branch
    %4145 = sbr.rel (0) target = $region21
  $region20: #{faster_rcnn_forward.11} parent=0 // pred_region
    _
  $region21: #{faster_rcnn_forward.11} parent=0 // pred_fallthru
    _

</llo_original>
